<compile_context>
chip_gen: v6e
topology: v6e:2x2x1
jax: 0.10.0
libtpu: 0.0.40
codegen_flags: <defaults>
</compile_context>

<pallas_src>
import functools

import jax
import jax.numpy as jnp
from jax.experimental import pallas as pl
from jax.experimental.pallas import tpu as pltpu


# ---------------------------------------------------------------------------
# Fused kernel: ConditionalGroupNorm + SiLU + 3x3 Conv2d + TemporalConv3D.
# One grid step = one frame; frame t-1 is emitted while frame t is convolved.
# ---------------------------------------------------------------------------
def _block_fused_kernel(tm_ref,                           # SMEM: (bs, T) merge coeffs
                        x_ref,                            # (1, 1, Cin, H*W) NCHW frame
                        scale_ref, shift_ref,             # (1, T, Cin) each (per video)
                        gmat_ref,                         # (Cin, Cin) f32 group matrix
                        w9_ref, b_ref,                    # (9, Cin, Cout) bf16, (1, Cout)
                        wtc_ref, bt_ref,                  # (3*Cout, Cout) bf16, (1, Cout)
                        o_ref,                            # (1, 1, Cout, H*W)
                        xpad_scr, y_scr,                  # VMEM scratch
                        *, T, H, W, eps=1e-5):
    b = pl.program_id(0)
    t = pl.program_id(1)          # frame being 2-D convolved; frame t-1 is emitted
    Cin = x_ref.shape[2]
    Cout = o_ref.shape[2]
    npix = H * W

    # ---- per-video init: zero conv-pad rim + rolling temporal buffer -------
    @pl.when(t == 0)
    def _():
        xpad_scr[...] = jnp.zeros(xpad_scr.shape, xpad_scr.dtype)
        y_scr[...] = jnp.zeros(y_scr.shape, y_scr.dtype)

    # ---- stage 1: GroupNorm + SiLU + 3x3 conv of frame t -> y_scr[t % 3] ---
    @pl.when(t < T)
    def _():
        x_cf = x_ref[0, 0].astype(jnp.float32)             # (Cin, npix), NCHW layout
        xt = x_cf.T                                        # (npix, Cin)  XLU transpose
        gmat = gmat_ref[...]
        csum = jnp.sum(xt, axis=0, keepdims=True)                        # (1, Cin)
        mean_c = jnp.dot(csum, gmat, preferred_element_type=jnp.float32)
        xc = xt - mean_c
        cssq = jnp.sum(xc * xc, axis=0, keepdims=True)
        var_c = jnp.dot(cssq, gmat, preferred_element_type=jnp.float32)

        tt = jnp.minimum(t, T - 1)
        scale = scale_ref[0, pl.ds(tt, 1)].astype(jnp.float32) + 1.0     # (1, Cin)
        shift = shift_ref[0, pl.ds(tt, 1)].astype(jnp.float32)
        y = xc * (jax.lax.rsqrt(var_c + eps) * scale) + shift
        y = y * jax.nn.sigmoid(y)                                        # SiLU

        # Interior lives at rows [1, H], cols [8, 8+W): sublane-aligned write;
        # the zero rim (rows 0 / H+1, cols 7 / W+8) provides the SAME padding.
        xpad_scr[1:H + 1, 8:8 + W, :] = (
            y.reshape(H, W, Cin).astype(xpad_scr.dtype))

        acc = jnp.zeros((npix, Cout), jnp.float32)
        for k in range(9):                                 # 9 accumulated tap matmuls
            dy, dx = k // 3, k % 3
            tap = xpad_scr[dy:dy + H, 7 + dx:7 + dx + W, :].reshape(npix, Cin)
            acc = acc + jnp.dot(tap, w9_ref[k],
                                preferred_element_type=jnp.float32)
        conv = acc + b_ref[...].astype(jnp.float32)        # (npix, Cout)
        y_scr[t % 3] = conv.astype(y_scr.dtype)            # bf16 staging (rolling slot)

    @pl.when(t == T)                                       # tail step: "frame T" = zeros
    def _():
        y_scr[T % 3] = jnp.zeros((npix, Cout), y_scr.dtype)

    # ---- stage 2: temporal (3,1,1) conv + merge of frame f = t - 1 ---------
    # At t == 0 this produces a throwaway value for out-block (b, 0); it is
    # overwritten at t == 1, which maps to the same (still resident) out block.
    f = jnp.maximum(t - 1, 0)
    prev = y_scr[(t + 1) % 3]                              # frame f-1 (zero-padded)
    cur = y_scr[(t + 2) % 3]                               # frame f   (2-D conv out)
    nxt = y_scr[t % 3]                                     # frame f+1 (zero-padded)
    tcat = jnp.concatenate([prev, cur, nxt], axis=-1)      # (npix, 3*Cout) bf16
    tout = jnp.dot(tcat, wtc_ref[...], preferred_element_type=jnp.float32)
    tout = tout + bt_ref[...].astype(jnp.float32)
    tm = tm_ref[b, f]                                      # SMEM scalar
    res = (1.0 - tm) * cur.astype(jnp.float32) + tm * tout
    o_ref[0, 0] = res.T.astype(o_ref.dtype)                # lane-dense (Cout, npix)


def _vmem_limit_bytes():
    # ~96 MiB on 128 MiB parts (v5e/v6e), ~48 MiB on 64 MiB parts (v7x).
    try:
        cap = int(pltpu.get_tpu_info().vmem_capacity_bytes)
    except Exception:
        cap = 64 * 1024 * 1024
    return int(min(96 * 1024 * 1024, cap * 3 // 4))


# ---------------------------------------------------------------------------
# Block forward (Pallas) and plain-JAX reference.
# ---------------------------------------------------------------------------
def block_forward(params, x_nchw, time_embed, bs, temporal_mask, norm_groups):
    N, Cin, H, W = x_nchw.shape
    T = N // bs
    npix = H * W
    Cout = params["proj_b"].shape[0]

    # ConditionalGroupNorm context MLP (tiny; plain-JAX glue).
    ctx = jax.nn.silu(time_embed) @ params["ctx_w"] + params["ctx_b"]    # (N, 2*Cin)
    scale = ctx[:, :Cin].reshape(bs, T, Cin)
    shift = ctx[:, Cin:].reshape(bs, T, Cin)

    # TemporalConv3D merge coefficients (trace-time mask downsampling,
    # faithful to TemporalConv3D.forward).
    mask = temporal_mask
    while mask.shape[0] > N:
        mask = mask[::2]
    tm = (params["temporal_merge"][0] * mask.astype(jnp.float32)).reshape(bs, T)

    # NCHW kept as-is: free reshape only (channels-first layout inside kernel).
    x = x_nchw.reshape(bs, T, Cin, npix)

    # GroupNorm group-aggregation matrix (hoisted out of the kernel).
    cpg = Cin // norm_groups
    gid = jnp.arange(Cin, dtype=jnp.int32) // cpg
    gmat = jnp.where(gid[:, None] == gid[None, :],
                     1.0 / (cpg * npix), 0.0).astype(jnp.float32)

    w9 = params["proj_w"].reshape(9, Cin, Cout).astype(jnp.bfloat16)     # tap dy*3+dx
    b2 = params["proj_b"].reshape(1, Cout).astype(jnp.float32)
    wtc = params["tproj_w"].reshape(3 * Cout, Cout).astype(jnp.bfloat16)
    bt2 = params["tproj_b"].reshape(1, Cout).astype(jnp.float32)

    kernel = functools.partial(_block_fused_kernel, T=T, H=H, W=W)
    out = pl.pallas_call(
        kernel,
        out_shape=jax.ShapeDtypeStruct((bs, T, Cout, npix), x_nchw.dtype),
        grid_spec=pltpu.PrefetchScalarGridSpec(
            num_scalar_prefetch=1,                         # tm -> SMEM scalars
            grid=(bs, T + 1),
            in_specs=[
                pl.BlockSpec((1, 1, Cin, npix),
                             lambda b, t, tm: (b, jnp.minimum(t, T - 1), 0, 0)),
                pl.BlockSpec((1, T, Cin), lambda b, t, tm: (b, 0, 0)),
                pl.BlockSpec((1, T, Cin), lambda b, t, tm: (b, 0, 0)),
                pl.BlockSpec((Cin, Cin), lambda b, t, tm: (0, 0)),
                pl.BlockSpec((9, Cin, Cout), lambda b, t, tm: (0, 0, 0)),
                pl.BlockSpec((1, Cout), lambda b, t, tm: (0, 0)),
                pl.BlockSpec((3 * Cout, Cout), lambda b, t, tm: (0, 0)),
                pl.BlockSpec((1, Cout), lambda b, t, tm: (0, 0)),
            ],
            out_specs=pl.BlockSpec(
                (1, 1, Cout, npix),
                lambda b, t, tm: (b, jnp.maximum(t - 1, 0), 0, 0)),
            scratch_shapes=[
                pltpu.VMEM((H + 2, W + 9, Cin), jnp.bfloat16),   # padded frame
                pltpu.VMEM((3, npix, Cout), jnp.bfloat16),       # rolling conv frames
            ],
        ),
        compiler_params=pltpu.CompilerParams(
            dimension_semantics=("parallel", "arbitrary"),
            vmem_limit_bytes=_vmem_limit_bytes(),
        ),
    )(tm, x, scale, shift, gmat, w9, b2, wtc, bt2)
    return out.reshape(N, Cout, H, W)                      # NCHW, free reshape


def reference_forward(params, x, time_embed, bs, temporal_mask, groups):
    N, C, H, W = x.shape
    ctx = jax.nn.silu(time_embed) @ params["ctx_w"] + params["ctx_b"]
    scale = ctx[:, :C][:, :, None, None]
    shift = ctx[:, C:][:, :, None, None]
    xg = x.reshape(N, groups, C // groups, H, W)
    mean = xg.mean(axis=(2, 3, 4), keepdims=True)
    var = ((xg - mean) ** 2).mean(axis=(2, 3, 4), keepdims=True)
    xn = ((xg - mean) / jnp.sqrt(var + 1e-5)).reshape(N, C, H, W)
    y = xn * (scale + 1.0) + shift
    y = jax.nn.silu(y)
    y_nhwc = jnp.transpose(y, (0, 2, 3, 1))
    conv = jax.lax.conv_general_dilated(
        y_nhwc, params["proj_w"], (1, 1), "SAME",
        dimension_numbers=("NHWC", "HWIO", "NHWC")) + params["proj_b"]
    Cout = conv.shape[-1]
    T = N // bs
    x5 = conv.reshape(bs, T, H, W, Cout)
    xpad = jnp.pad(x5, ((0, 0), (1, 1), (0, 0), (0, 0), (0, 0)))
    out = jnp.zeros_like(x5)
    for kt in range(3):
        out = out + jnp.einsum("bthwc,cd->bthwd", xpad[:, kt:kt + T],
                               params["tproj_w"][kt])
    out = out + params["tproj_b"]
    mask = temporal_mask
    while mask.shape[0] > N:
        mask = mask[::2]
    tm = (params["temporal_merge"][0] * mask).reshape(bs, T, 1, 1, 1)
    res = ((1.0 - tm) * x5 + tm * out).reshape(N, H, W, Cout)
    return jnp.transpose(res, (0, 3, 1, 2))


if __name__ == "__main__":
    key = jax.random.PRNGKey(0)
    bs, T = 2, 4
    N = bs * T
    Cin, Cout, D, groups = 32, 64, 32, 8
    H = W = 16
    ks = jax.random.split(key, 9)

    x = jax.random.normal(ks[0], (N, Cin, H, W), jnp.float32)
    time_embed = jax.random.normal(ks[1], (N, D), jnp.float32)
    temporal_mask = (jax.random.uniform(ks[2], (N,)) > 0.5).astype(jnp.float32)

    # Deterministic synthetic parameters (shapes per Block.__init__); the module's
    # zero-inits (context_mlp / temporal conv / merge) are replaced by small random
    # values so the kernel computes something non-trivial.
    params = {
        "ctx_w": 0.1 * jax.random.normal(ks[3], (D, 2 * Cin), jnp.float32),
        "ctx_b": 0.1 * jax.random.normal(ks[4], (2 * Cin,), jnp.float32),
        "proj_w": 0.1 * jax.random.normal(ks[5], (3, 3, Cin, Cout), jnp.float32),
        "proj_b": 0.1 * jax.random.normal(ks[6], (Cout,), jnp.float32),
        "temporal_merge": jnp.array([0.5], jnp.float32),
        "tproj_w": 0.1 * jax.random.normal(ks[7], (3, Cout, Cout), jnp.float32),
        "tproj_b": 0.1 * jax.random.normal(ks[8], (Cout,), jnp.float32),
    }

    out = block_forward(params, x, time_embed, bs, temporal_mask, groups)
    out = jax.block_until_ready(out)
    assert out.shape == (N, Cout, H, W), out.shape

    ref = reference_forward(params, x, time_embed, bs, temporal_mask, groups)
    err = float(jnp.max(jnp.abs(out - ref)))
    # bf16 MXU operands / bf16 staging scratch (f32 accumulation) vs f32 reference.
    assert jnp.allclose(out, ref, atol=5e-2, rtol=5e-2), f"max abs err {err}"
    print("KERNEL_OK")
</pallas_src>

<mosaic_0001>
module attributes {stable_mosaic.version = 11 : i64} {
  func.func @_block_fused_kernel(%arg0: i32, %arg1: i32, %arg2: memref<2x4xf32, #tpu.memory_space<smem>>, %arg3: memref<1x1x32x256xf32, #tpu.memory_space<vmem>>, %arg4: memref<1x4x32xf32, #tpu.memory_space<vmem>>, %arg5: memref<1x4x32xf32, #tpu.memory_space<vmem>>, %arg6: memref<32x32xf32, #tpu.memory_space<vmem>>, %arg7: memref<9x32x64xbf16, #tpu.memory_space<vmem>>, %arg8: memref<1x64xf32, #tpu.memory_space<vmem>>, %arg9: memref<192x64xbf16, #tpu.memory_space<vmem>>, %arg10: memref<1x64xf32, #tpu.memory_space<vmem>>, %arg11: memref<1x1x64x256xf32, #tpu.memory_space<vmem>>, %arg12: memref<18x25x32xbf16, #tpu.memory_space<vmem>>, %arg13: memref<3x256x64xbf16, #tpu.memory_space<vmem>>) attributes {dimension_semantics = [#tpu.dimension_semantics<parallel>, #tpu.dimension_semantics<arbitrary>], iteration_bounds = array<i64: 2, 5>, scalar_prefetch = 1 : i64, scratch_operands = 2 : i64, tpu.core_type = #tpu.core_type<tc>, window_params = [{transform_indices = @transform_0, window_bounds = array<i64: 1, 1, 32, 256>}, {transform_indices = @transform_1, window_bounds = array<i64: 1, 4, 32>}, {transform_indices = @transform_2, window_bounds = array<i64: 1, 4, 32>}, {pipeline_mode = #tpu.pipeline_mode<synchronous>, transform_indices = @transform_3, window_bounds = array<i64: 32, 32>}, {pipeline_mode = #tpu.pipeline_mode<synchronous>, transform_indices = @transform_4, window_bounds = array<i64: 9, 32, 64>}, {pipeline_mode = #tpu.pipeline_mode<synchronous>, transform_indices = @transform_5, window_bounds = array<i64: 1, 64>}, {pipeline_mode = #tpu.pipeline_mode<synchronous>, transform_indices = @transform_6, window_bounds = array<i64: 192, 64>}, {pipeline_mode = #tpu.pipeline_mode<synchronous>, transform_indices = @transform_7, window_bounds = array<i64: 1, 64>}, {transform_indices = @transform_8, window_bounds = array<i64: 1, 1, 64, 256>}]} {
    %c0_i32 = arith.constant 0 : i32
    %0 = arith.cmpi eq, %arg1, %c0_i32 : i32
    %1 = arith.extui %0 : i1 to i32
    %c0_i32_0 = arith.constant 0 : i32
    %2 = arith.cmpi ne, %1, %c0_i32_0 : i32
    scf.if %2 {
      %cst_37 = arith.constant 0.000000e+00 : bf16
      %72 = vector.broadcast %cst_37 : bf16 to vector<18x25x32xbf16>
      %c0_38 = arith.constant 0 : index
      %c0_39 = arith.constant 0 : index
      %c0_40 = arith.constant 0 : index
      %73 = vector.load %arg12[%c0_38, %c0_39, %c0_40] : memref<18x25x32xbf16, #tpu.memory_space<vmem>>, vector<18x25x32xbf16>
      tpu.vector_store %arg12[%c0_38, %c0_39, %c0_40], %72 {strides = array<i32>} : memref<18x25x32xbf16, #tpu.memory_space<vmem>>, vector<18x25x32xbf16>,
      %cst_41 = arith.constant 0.000000e+00 : bf16
      %74 = vector.broadcast %cst_41 : bf16 to vector<3x256x64xbf16>
      %c0_42 = arith.constant 0 : index
      %c0_43 = arith.constant 0 : index
      %c0_44 = arith.constant 0 : index
      %75 = vector.load %arg13[%c0_42, %c0_43, %c0_44] : memref<3x256x64xbf16, #tpu.memory_space<vmem>>, vector<3x256x64xbf16>
      tpu.vector_store %arg13[%c0_42, %c0_43, %c0_44], %74 {strides = array<i32>} : memref<3x256x64xbf16, #tpu.memory_space<vmem>>, vector<3x256x64xbf16>,
    } else {
    }
    %c4_i32 = arith.constant 4 : i32
    %3 = arith.cmpi slt, %arg1, %c4_i32 : i32
    %4 = arith.extui %3 : i1 to i32
    %c0_i32_1 = arith.constant 0 : i32
    %5 = arith.cmpi ne, %4, %c0_i32_1 : i32
    scf.if %5 {
      %c0_37 = arith.constant 0 : index
      %c0_38 = arith.constant 0 : index
      %c0_39 = arith.constant 0 : index
      %c0_40 = arith.constant 0 : index
      %72 = vector.load %arg3[%c0_37, %c0_38, %c0_39, %c0_40] : memref<1x1x32x256xf32, #tpu.memory_space<vmem>>, vector<1x1x32x256xf32>
      %73 = vector.shape_cast %72 : vector<1x1x32x256xf32> to vector<32x256xf32>
      %74 = tpu.transpose %73, [1, 0] : vector<32x256xf32> -> vector<256x32xf32>
      %c0_41 = arith.constant 0 : index
      %c0_42 = arith.constant 0 : index
      %75 = vector.load %arg6[%c0_41, %c0_42] : memref<32x32xf32, #tpu.memory_space<vmem>>, vector<32x32xf32>
      %cst_43 = arith.constant dense<0.000000e+00> : vector<32xf32>
      %76 = vector.multi_reduction <add>, %74, %cst_43 [0] : vector<256x32xf32> to vector<32xf32>
      %77 = vector.shape_cast %76 : vector<32xf32> to vector<1x32xf32>
      %cst_44 = arith.constant dense<0.000000e+00> : vector<1x32xf32>
      %78 = tpu.matmul %77, %75, %cst_44 {dimension_numbers = #tpu.dot_dimension_numbers<[1], [0], [0], [1], [0, 0, 1, 1], [], []>} : vector<1x32xf32>, vector<32x32xf32>, vector<1x32xf32> -> vector<1x32xf32>
      %79 = vector.broadcast %78 : vector<1x32xf32> to vector<256x32xf32>
      %80 = arith.subf %74, %79 : vector<256x32xf32>
      %81 = arith.mulf %80, %80 : vector<256x32xf32>
      %cst_45 = arith.constant dense<0.000000e+00> : vector<32xf32>
      %82 = vector.multi_reduction <add>, %81, %cst_45 [0] : vector<256x32xf32> to vector<32xf32>
      %83 = vector.shape_cast %82 : vector<32xf32> to vector<1x32xf32>
      %cst_46 = arith.constant dense<0.000000e+00> : vector<1x32xf32>
      %84 = tpu.matmul %83, %75, %cst_46 {dimension_numbers = #tpu.dot_dimension_numbers<[1], [0], [0], [1], [0, 0, 1, 1], [], []>} : vector<1x32xf32>, vector<32x32xf32>, vector<1x32xf32> -> vector<1x32xf32>
      %c3_i32_47 = arith.constant 3 : i32
      %85 = arith.minsi %arg1, %c3_i32_47 : i32
      %c0_48 = arith.constant 0 : index
      %86 = arith.index_cast %85 : i32 to index
      %c0_49 = arith.constant 0 : index
      %87 = vector.load %arg4[%c0_48, %86, %c0_49] : memref<1x4x32xf32, #tpu.memory_space<vmem>>, vector<1x1x32xf32>
      %88 = vector.shape_cast %87 : vector<1x1x32xf32> to vector<1x32xf32>
      %cst_50 = arith.constant 1.000000e+00 : f32
      %89 = vector.broadcast %cst_50 : f32 to vector<1x32xf32>
      %90 = arith.addf %88, %89 : vector<1x32xf32>
      %c0_51 = arith.constant 0 : index
      %91 = arith.index_cast %85 : i32 to index
      %c0_52 = arith.constant 0 : index
      %92 = vector.load %arg5[%c0_51, %91, %c0_52] : memref<1x4x32xf32, #tpu.memory_space<vmem>>, vector<1x1x32xf32>
      %93 = vector.shape_cast %92 : vector<1x1x32xf32> to vector<1x32xf32>
      %cst_53 = arith.constant 9.99999974E-6 : f32
      %94 = vector.broadcast %cst_53 : f32 to vector<1x32xf32>
      %95 = arith.addf %84, %94 : vector<1x32xf32>
      %96 = math.rsqrt %95 : vector<1x32xf32>
      %97 = arith.mulf %96, %90 : vector<1x32xf32>
      %98 = vector.broadcast %97 : vector<1x32xf32> to vector<256x32xf32>
      %99 = arith.mulf %80, %98 : vector<256x32xf32>
      %100 = vector.broadcast %93 : vector<1x32xf32> to vector<256x32xf32>
      %101 = arith.addf %99, %100 : vector<256x32xf32>
      %102 = arith.negf %101 : vector<256x32xf32>
      %103 = math.exp %102 : vector<256x32xf32>
      %cst_54 = arith.constant 1.000000e+00 : f32
      %104 = vector.broadcast %cst_54 : f32 to vector<256x32xf32>
      %105 = arith.addf %104, %103 : vector<256x32xf32>
      %106 = arith.divf %104, %105 : vector<256x32xf32>
      %107 = arith.mulf %101, %106 : vector<256x32xf32>
      %108 = vector.shape_cast %107 : vector<256x32xf32> to vector<16x16x32xf32>
      %109 = arith.truncf %108 : vector<16x16x32xf32> to vector<16x16x32xbf16>
      %c1 = arith.constant 1 : index
      %c8 = arith.constant 8 : index
      %c0_55 = arith.constant 0 : index
      %110 = vector.load %arg12[%c1, %c8, %c0_55] : memref<18x25x32xbf16, #tpu.memory_space<vmem>>, vector<16x16x32xbf16>
      tpu.vector_store %arg12[%c1, %c8, %c0_55], %109 {strides = array<i32>} : memref<18x25x32xbf16, #tpu.memory_space<vmem>>, vector<16x16x32xbf16>,
      %cst_56 = arith.constant 0.000000e+00 : f32
      %111 = vector.broadcast %cst_56 : f32 to vector<256x64xf32>
      %c0_57 = arith.constant 0 : index
      %c7 = arith.constant 7 : index
      %c0_58 = arith.constant 0 : index
      %112 = vector.load %arg12[%c0_57, %c7, %c0_58] : memref<18x25x32xbf16, #tpu.memory_space<vmem>>, vector<16x16x32xbf16>
      %113 = vector.shape_cast %112 : vector<16x16x32xbf16> to vector<256x32xbf16>
      %c0_59 = arith.constant 0 : index
      %c0_60 = arith.constant 0 : index
      %c0_61 = arith.constant 0 : index
      %114 = vector.load %arg7[%c0_59, %c0_60, %c0_61] : memref<9x32x64xbf16, #tpu.memory_space<vmem>>, vector<1x32x64xbf16>
      %115 = vector.shape_cast %114 : vector<1x32x64xbf16> to vector<32x64xbf16>
      %cst_62 = arith.constant dense<0.000000e+00> : vector<256x64xf32>
      %116 = tpu.matmul %113, %115, %cst_62 {dimension_numbers = #tpu.dot_dimension_numbers<[1], [0], [0], [1], [0, 0, 1, 1], [], []>} : vector<256x32xbf16>, vector<32x64xbf16>, vector<256x64xf32> -> vector<256x64xf32>
      %117 = arith.addf %111, %116 : vector<256x64xf32>
      %c0_63 = arith.constant 0 : index
      %c8_64 = arith.constant 8 : index
      %c0_65 = arith.constant 0 : index
      %118 = vector.load %arg12[%c0_63, %c8_64, %c0_65] : memref<18x25x32xbf16, #tpu.memory_space<vmem>>, vector<16x16x32xbf16>
      %119 = vector.shape_cast %118 : vector<16x16x32xbf16> to vector<256x32xbf16>
      %c1_66 = arith.constant 1 : index
      %c0_67 = arith.constant 0 : index
      %c0_68 = arith.constant 0 : index
      %120 = vector.load %arg7[%c1_66, %c0_67, %c0_68] : memref<9x32x64xbf16, #tpu.memory_space<vmem>>, vector<1x32x64xbf16>
      %121 = vector.shape_cast %120 : vector<1x32x64xbf16> to vector<32x64xbf16>
      %cst_69 = arith.constant dense<0.000000e+00> : vector<256x64xf32>
      %122 = tpu.matmul %119, %121, %cst_69 {dimension_numbers = #tpu.dot_dimension_numbers<[1], [0], [0], [1], [0, 0, 1, 1], [], []>} : vector<256x32xbf16>, vector<32x64xbf16>, vector<256x64xf32> -> vector<256x64xf32>
      %123 = arith.addf %117, %122 : vector<256x64xf32>
      %c0_70 = arith.constant 0 : index
      %c9 = arith.constant 9 : index
      %c0_71 = arith.constant 0 : index
      %124 = vector.load %arg12[%c0_70, %c9, %c0_71] : memref<18x25x32xbf16, #tpu.memory_space<vmem>>, vector<16x16x32xbf16>
      %125 = vector.shape_cast %124 : vector<16x16x32xbf16> to vector<256x32xbf16>
      %c2 = arith.constant 2 : index
      %c0_72 = arith.constant 0 : index
      %c0_73 = arith.constant 0 : index
      %126 = vector.load %arg7[%c2, %c0_72, %c0_73] : memref<9x32x64xbf16, #tpu.memory_space<vmem>>, vector<1x32x64xbf16>
      %127 = vector.shape_cast %126 : vector<1x32x64xbf16> to vector<32x64xbf16>
      %cst_74 = arith.constant dense<0.000000e+00> : vector<256x64xf32>
      %128 = tpu.matmul %125, %127, %cst_74 {dimension_numbers = #tpu.dot_dimension_numbers<[1], [0], [0], [1], [0, 0, 1, 1], [], []>} : vector<256x32xbf16>, vector<32x64xbf16>, vector<256x64xf32> -> vector<256x64xf32>
      %129 = arith.addf %123, %128 : vector<256x64xf32>
      %c1_75 = arith.constant 1 : index
      %c7_76 = arith.constant 7 : index
      %c0_77 = arith.constant 0 : index
      %130 = vector.load %arg12[%c1_75, %c7_76, %c0_77] : memref<18x25x32xbf16, #tpu.memory_space<vmem>>, vector<16x16x32xbf16>
      %131 = vector.shape_cast %130 : vector<16x16x32xbf16> to vector<256x32xbf16>
      %c3 = arith.constant 3 : index
      %c0_78 = arith.constant 0 : index
      %c0_79 = arith.constant 0 : index
      %132 = vector.load %arg7[%c3, %c0_78, %c0_79] : memref<9x32x64xbf16, #tpu.memory_space<vmem>>, vector<1x32x64xbf16>
      %133 = vector.shape_cast %132 : vector<1x32x64xbf16> to vector<32x64xbf16>
      %cst_80 = arith.constant dense<0.000000e+00> : vector<256x64xf32>
      %134 = tpu.matmul %131, %133, %cst_80 {dimension_numbers = #tpu.dot_dimension_numbers<[1], [0], [0], [1], [0, 0, 1, 1], [], []>} : vector<256x32xbf16>, vector<32x64xbf16>, vector<256x64xf32> -> vector<256x64xf32>
      %135 = arith.addf %129, %134 : vector<256x64xf32>
      %c1_81 = arith.constant 1 : index
      %c8_82 = arith.constant 8 : index
      %c0_83 = arith.constant 0 : index
      %136 = vector.load %arg12[%c1_81, %c8_82, %c0_83] : memref<18x25x32xbf16, #tpu.memory_space<vmem>>, vector<16x16x32xbf16>
      %137 = vector.shape_cast %136 : vector<16x16x32xbf16> to vector<256x32xbf16>
      %c4 = arith.constant 4 : index
      %c0_84 = arith.constant 0 : index
      %c0_85 = arith.constant 0 : index
      %138 = vector.load %arg7[%c4, %c0_84, %c0_85] : memref<9x32x64xbf16, #tpu.memory_space<vmem>>, vector<1x32x64xbf16>
      %139 = vector.shape_cast %138 : vector<1x32x64xbf16> to vector<32x64xbf16>
      %cst_86 = arith.constant dense<0.000000e+00> : vector<256x64xf32>
      %140 = tpu.matmul %137, %139, %cst_86 {dimension_numbers = #tpu.dot_dimension_numbers<[1], [0], [0], [1], [0, 0, 1, 1], [], []>} : vector<256x32xbf16>, vector<32x64xbf16>, vector<256x64xf32> -> vector<256x64xf32>
      %141 = arith.addf %135, %140 : vector<256x64xf32>
      %c1_87 = arith.constant 1 : index
      %c9_88 = arith.constant 9 : index
      %c0_89 = arith.constant 0 : index
      %142 = vector.load %arg12[%c1_87, %c9_88, %c0_89] : memref<18x25x32xbf16, #tpu.memory_space<vmem>>, vector<16x16x32xbf16>
      %143 = vector.shape_cast %142 : vector<16x16x32xbf16> to vector<256x32xbf16>
      %c5 = arith.constant 5 : index
      %c0_90 = arith.constant 0 : index
      %c0_91 = arith.constant 0 : index
      %144 = vector.load %arg7[%c5, %c0_90, %c0_91] : memref<9x32x64xbf16, #tpu.memory_space<vmem>>, vector<1x32x64xbf16>
      %145 = vector.shape_cast %144 : vector<1x32x64xbf16> to vector<32x64xbf16>
      %cst_92 = arith.constant dense<0.000000e+00> : vector<256x64xf32>
      %146 = tpu.matmul %143, %145, %cst_92 {dimension_numbers = #tpu.dot_dimension_numbers<[1], [0], [0], [1], [0, 0, 1, 1], [], []>} : vector<256x32xbf16>, vector<32x64xbf16>, vector<256x64xf32> -> vector<256x64xf32>
      %147 = arith.addf %141, %146 : vector<256x64xf32>
      %c2_93 = arith.constant 2 : index
      %c7_94 = arith.constant 7 : index
      %c0_95 = arith.constant 0 : index
      %148 = vector.load %arg12[%c2_93, %c7_94, %c0_95] : memref<18x25x32xbf16, #tpu.memory_space<vmem>>, vector<16x16x32xbf16>
      %149 = vector.shape_cast %148 : vector<16x16x32xbf16> to vector<256x32xbf16>
      %c6 = arith.constant 6 : index
      %c0_96 = arith.constant 0 : index
      %c0_97 = arith.constant 0 : index
      %150 = vector.load %arg7[%c6, %c0_96, %c0_97] : memref<9x32x64xbf16, #tpu.memory_space<vmem>>, vector<1x32x64xbf16>
      %151 = vector.shape_cast %150 : vector<1x32x64xbf16> to vector<32x64xbf16>
      %cst_98 = arith.constant dense<0.000000e+00> : vector<256x64xf32>
      %152 = tpu.matmul %149, %151, %cst_98 {dimension_numbers = #tpu.dot_dimension_numbers<[1], [0], [0], [1], [0, 0, 1, 1], [], []>} : vector<256x32xbf16>, vector<32x64xbf16>, vector<256x64xf32> -> vector<256x64xf32>
      %153 = arith.addf %147, %152 : vector<256x64xf32>
      %c2_99 = arith.constant 2 : index
      %c8_100 = arith.constant 8 : index
      %c0_101 = arith.constant 0 : index
      %154 = vector.load %arg12[%c2_99, %c8_100, %c0_101] : memref<18x25x32xbf16, #tpu.memory_space<vmem>>, vector<16x16x32xbf16>
      %155 = vector.shape_cast %154 : vector<16x16x32xbf16> to vector<256x32xbf16>
      %c7_102 = arith.constant 7 : index
      %c0_103 = arith.constant 0 : index
      %c0_104 = arith.constant 0 : index
      %156 = vector.load %arg7[%c7_102, %c0_103, %c0_104] : memref<9x32x64xbf16, #tpu.memory_space<vmem>>, vector<1x32x64xbf16>
      %157 = vector.shape_cast %156 : vector<1x32x64xbf16> to vector<32x64xbf16>
      %cst_105 = arith.constant dense<0.000000e+00> : vector<256x64xf32>
      %158 = tpu.matmul %155, %157, %cst_105 {dimension_numbers = #tpu.dot_dimension_numbers<[1], [0], [0], [1], [0, 0, 1, 1], [], []>} : vector<256x32xbf16>, vector<32x64xbf16>, vector<256x64xf32> -> vector<256x64xf32>
      %159 = arith.addf %153, %158 : vector<256x64xf32>
      %c2_106 = arith.constant 2 : index
      %c9_107 = arith.constant 9 : index
      %c0_108 = arith.constant 0 : index
      %160 = vector.load %arg12[%c2_106, %c9_107, %c0_108] : memref<18x25x32xbf16, #tpu.memory_space<vmem>>, vector<16x16x32xbf16>
      %161 = vector.shape_cast %160 : vector<16x16x32xbf16> to vector<256x32xbf16>
      %c8_109 = arith.constant 8 : index
      %c0_110 = arith.constant 0 : index
      %c0_111 = arith.constant 0 : index
      %162 = vector.load %arg7[%c8_109, %c0_110, %c0_111] : memref<9x32x64xbf16, #tpu.memory_space<vmem>>, vector<1x32x64xbf16>
      %163 = vector.shape_cast %162 : vector<1x32x64xbf16> to vector<32x64xbf16>
      %cst_112 = arith.constant dense<0.000000e+00> : vector<256x64xf32>
      %164 = tpu.matmul %161, %163, %cst_112 {dimension_numbers = #tpu.dot_dimension_numbers<[1], [0], [0], [1], [0, 0, 1, 1], [], []>} : vector<256x32xbf16>, vector<32x64xbf16>, vector<256x64xf32> -> vector<256x64xf32>
      %165 = arith.addf %159, %164 : vector<256x64xf32>
      %c0_113 = arith.constant 0 : index
      %c0_114 = arith.constant 0 : index
      %166 = vector.load %arg8[%c0_113, %c0_114] : memref<1x64xf32, #tpu.memory_space<vmem>>, vector<1x64xf32>
      %167 = vector.broadcast %166 : vector<1x64xf32> to vector<256x64xf32>
      %168 = arith.addf %165, %167 : vector<256x64xf32>
      %169 = arith.truncf %168 : vector<256x64xf32> to vector<256x64xbf16>
      %c3_i32_115 = arith.constant 3 : i32
      %c0_i32_116 = arith.constant 0 : i32
      %170 = arith.cmpi eq, %c3_i32_115, %c0_i32_116 : i32
      %c1_i32_117 = arith.constant 1 : i32
      %171 = arith.select %170, %c1_i32_117, %c3_i32_115 : i32
      %172 = arith.remsi %arg1, %171 : i32
      %c0_i32_118 = arith.constant 0 : i32
      %173 = arith.cmpi ne, %172, %c0_i32_118 : i32
      %c0_i32_119 = arith.constant 0 : i32
      %174 = arith.cmpi slt, %172, %c0_i32_119 : i32
      %c0_i32_120 = arith.constant 0 : i32
      %175 = arith.cmpi slt, %171, %c0_i32_120 : i32
      %176 = arith.xori %174, %175 : i1
      %177 = arith.andi %176, %173 : i1
      %178 = arith.addi %172, %171 : i32
      %179 = arith.select %177, %178, %172 : i32
      %180 = arith.index_cast %179 : i32 to index
      %c0_121 = arith.constant 0 : index
      %c0_122 = arith.constant 0 : index
      %181 = vector.load %arg13[%180, %c0_121, %c0_122] : memref<3x256x64xbf16, #tpu.memory_space<vmem>>, vector<1x256x64xbf16>
      %182 = vector.shape_cast %181 : vector<1x256x64xbf16> to vector<256x64xbf16>
      %183 = vector.shape_cast %169 : vector<256x64xbf16> to vector<1x256x64xbf16>
      tpu.vector_store %arg13[%180, %c0_121, %c0_122], %183 {strides = array<i32>} : memref<3x256x64xbf16, #tpu.memory_space<vmem>>, vector<1x256x64xbf16>,
    } else {
    }
    %c4_i32_2 = arith.constant 4 : i32
    %6 = arith.cmpi eq, %arg1, %c4_i32_2 : i32
    %7 = arith.extui %6 : i1 to i32
    %c0_i32_3 = arith.constant 0 : i32
    %8 = arith.cmpi ne, %7, %c0_i32_3 : i32
    scf.if %8 {
      %cst_37 = arith.constant 0.000000e+00 : bf16
      %72 = vector.broadcast %cst_37 : bf16 to vector<256x64xbf16>
      %c1 = arith.constant 1 : index
      %c0_38 = arith.constant 0 : index
      %c0_39 = arith.constant 0 : index
      %73 = vector.load %arg13[%c1, %c0_38, %c0_39] : memref<3x256x64xbf16, #tpu.memory_space<vmem>>, vector<1x256x64xbf16>
      %74 = vector.shape_cast %73 : vector<1x256x64xbf16> to vector<256x64xbf16>
      %75 = vector.shape_cast %72 : vector<256x64xbf16> to vector<1x256x64xbf16>
      tpu.vector_store %arg13[%c1, %c0_38, %c0_39], %75 {strides = array<i32>} : memref<3x256x64xbf16, #tpu.memory_space<vmem>>, vector<1x256x64xbf16>,
    } else {
    }
    %c1_i32 = arith.constant 1 : i32
    %9 = arith.subi %arg1, %c1_i32 : i32
    %c0_i32_4 = arith.constant 0 : i32
    %10 = arith.maxsi %9, %c0_i32_4 : i32
    %c1_i32_5 = arith.constant 1 : i32
    %11 = arith.addi %arg1, %c1_i32_5 : i32
    %c3_i32 = arith.constant 3 : i32
    %c0_i32_6 = arith.constant 0 : i32
    %12 = arith.cmpi eq, %c3_i32, %c0_i32_6 : i32
    %c1_i32_7 = arith.constant 1 : i32
    %13 = arith.select %12, %c1_i32_7, %c3_i32 : i32
    %14 = arith.remsi %11, %13 : i32
    %c0_i32_8 = arith.constant 0 : i32
    %15 = arith.cmpi ne, %14, %c0_i32_8 : i32
    %c0_i32_9 = arith.constant 0 : i32
    %16 = arith.cmpi slt, %14, %c0_i32_9 : i32
    %c0_i32_10 = arith.constant 0 : i32
    %17 = arith.cmpi slt, %13, %c0_i32_10 : i32
    %18 = arith.xori %16, %17 : i1
    %19 = arith.andi %18, %15 : i1
    %20 = arith.addi %14, %13 : i32
    %21 = arith.select %19, %20, %14 : i32
    %22 = arith.index_cast %21 : i32 to index
    %c0 = arith.constant 0 : index
    %c0_11 = arith.constant 0 : index
    %23 = vector.load %arg13[%22, %c0, %c0_11] : memref<3x256x64xbf16, #tpu.memory_space<vmem>>, vector<1x256x64xbf16>
    %24 = vector.shape_cast %23 : vector<1x256x64xbf16> to vector<256x64xbf16>
    %c2_i32 = arith.constant 2 : i32
    %25 = arith.addi %arg1, %c2_i32 : i32
    %c3_i32_12 = arith.constant 3 : i32
    %c0_i32_13 = arith.constant 0 : i32
    %26 = arith.cmpi eq, %c3_i32_12, %c0_i32_13 : i32
    %c1_i32_14 = arith.constant 1 : i32
    %27 = arith.select %26, %c1_i32_14, %c3_i32_12 : i32
    %28 = arith.remsi %25, %27 : i32
    %c0_i32_15 = arith.constant 0 : i32
    %29 = arith.cmpi ne, %28, %c0_i32_15 : i32
    %c0_i32_16 = arith.constant 0 : i32
    %30 = arith.cmpi slt, %28, %c0_i32_16 : i32
    %c0_i32_17 = arith.constant 0 : i32
    %31 = arith.cmpi slt, %27, %c0_i32_17 : i32
    %32 = arith.xori %30, %31 : i1
    %33 = arith.andi %32, %29 : i1
    %34 = arith.addi %28, %27 : i32
    %35 = arith.select %33, %34, %28 : i32
    %36 = arith.index_cast %35 : i32 to index
    %c0_18 = arith.constant 0 : index
    %c0_19 = arith.constant 0 : index
    %37 = vector.load %arg13[%36, %c0_18, %c0_19] : memref<3x256x64xbf16, #tpu.memory_space<vmem>>, vector<1x256x64xbf16>
    %38 = vector.shape_cast %37 : vector<1x256x64xbf16> to vector<256x64xbf16>
    %c3_i32_20 = arith.constant 3 : i32
    %c0_i32_21 = arith.constant 0 : i32
    %39 = arith.cmpi eq, %c3_i32_20, %c0_i32_21 : i32
    %c1_i32_22 = arith.constant 1 : i32
    %40 = arith.select %39, %c1_i32_22, %c3_i32_20 : i32
    %41 = arith.remsi %arg1, %40 : i32
    %c0_i32_23 = arith.constant 0 : i32
    %42 = arith.cmpi ne, %41, %c0_i32_23 : i32
    %c0_i32_24 = arith.constant 0 : i32
    %43 = arith.cmpi slt, %41, %c0_i32_24 : i32
    %c0_i32_25 = arith.constant 0 : i32
    %44 = arith.cmpi slt, %40, %c0_i32_25 : i32
    %45 = arith.xori %43, %44 : i1
    %46 = arith.andi %45, %42 : i1
    %47 = arith.addi %41, %40 : i32
    %48 = arith.select %46, %47, %41 : i32
    %49 = arith.index_cast %48 : i32 to index
    %c0_26 = arith.constant 0 : index
    %c0_27 = arith.constant 0 : index
    %50 = vector.load %arg13[%49, %c0_26, %c0_27] : memref<3x256x64xbf16, #tpu.memory_space<vmem>>, vector<1x256x64xbf16>
    %51 = vector.shape_cast %50 : vector<1x256x64xbf16> to vector<256x64xbf16>
    %52 = tpu.concatenate %24, %38, %51 in 1 : vector<256x64xbf16>, vector<256x64xbf16>, vector<256x64xbf16> -> vector<256x192xbf16>
    %c0_28 = arith.constant 0 : index
    %c0_29 = arith.constant 0 : index
    %53 = vector.load %arg9[%c0_28, %c0_29] : memref<192x64xbf16, #tpu.memory_space<vmem>>, vector<192x64xbf16>
    %cst = arith.constant dense<0.000000e+00> : vector<256x64xf32>
    %54 = tpu.matmul %52, %53, %cst {dimension_numbers = #tpu.dot_dimension_numbers<[1], [0], [0], [1], [0, 0, 1, 1], [], []>} : vector<256x192xbf16>, vector<192x64xbf16>, vector<256x64xf32> -> vector<256x64xf32>
    %c0_30 = arith.constant 0 : index
    %c0_31 = arith.constant 0 : index
    %55 = vector.load %arg10[%c0_30, %c0_31] : memref<1x64xf32, #tpu.memory_space<vmem>>, vector<1x64xf32>
    %56 = vector.broadcast %55 : vector<1x64xf32> to vector<256x64xf32>
    %57 = arith.addf %54, %56 : vector<256x64xf32>
    %58 = arith.index_cast %arg0 : i32 to index
    %59 = arith.index_cast %10 : i32 to index
    %60 = memref.load %arg2[%58, %59] : memref<2x4xf32, #tpu.memory_space<smem>>
    %cst_32 = arith.constant 1.000000e+00 : f32
    %61 = arith.subf %cst_32, %60 : f32
    %62 = arith.extf %38 : vector<256x64xbf16> to vector<256x64xf32>
    %63 = vector.broadcast %61 : f32 to vector<256x64xf32>
    %64 = arith.mulf %63, %62 : vector<256x64xf32>
    %65 = vector.broadcast %60 : f32 to vector<256x64xf32>
    %66 = arith.mulf %65, %57 : vector<256x64xf32>
    %67 = arith.addf %64, %66 : vector<256x64xf32>
    %68 = tpu.transpose %67, [1, 0] : vector<256x64xf32> -> vector<64x256xf32>
    %c0_33 = arith.constant 0 : index
    %c0_34 = arith.constant 0 : index
    %c0_35 = arith.constant 0 : index
    %c0_36 = arith.constant 0 : index
    %69 = vector.load %arg11[%c0_33, %c0_34, %c0_35, %c0_36] : memref<1x1x64x256xf32, #tpu.memory_space<vmem>>, vector<1x1x64x256xf32>
    %70 = vector.shape_cast %69 : vector<1x1x64x256xf32> to vector<64x256xf32>
    %71 = vector.shape_cast %68 : vector<64x256xf32> to vector<1x1x64x256xf32>
    tpu.vector_store %arg11[%c0_33, %c0_34, %c0_35, %c0_36], %71 {strides = array<i32>} : memref<1x1x64x256xf32, #tpu.memory_space<vmem>>, vector<1x1x64x256xf32>,
    return
  }
  func.func @transform_0(%arg0: i32, %arg1: i32, %arg2: memref<2x4xf32, #tpu.memory_space<smem>>) -> (i32, i32, i32, i32) {
    %c3_i32 = arith.constant 3 : i32
    %0 = arith.minsi %arg1, %c3_i32 : i32
    %c0_i32 = arith.constant 0 : i32
    %c0_i32_0 = arith.constant 0 : i32
    %c0_i32_1 = arith.constant 0 : i32
    return %arg0, %0, %c0_i32, %c0_i32_0 : i32, i32, i32, i32
  }
  func.func @transform_1(%arg0: i32, %arg1: i32, %arg2: memref<2x4xf32, #tpu.memory_space<smem>>) -> (i32, i32, i32) {
    %c0_i32 = arith.constant 0 : i32
    %c0_i32_0 = arith.constant 0 : i32
    %c0_i32_1 = arith.constant 0 : i32
    return %arg0, %c0_i32, %c0_i32_0 : i32, i32, i32
  }
  func.func @transform_2(%arg0: i32, %arg1: i32, %arg2: memref<2x4xf32, #tpu.memory_space<smem>>) -> (i32, i32, i32) {
    %c0_i32 = arith.constant 0 : i32
    %c0_i32_0 = arith.constant 0 : i32
    %c0_i32_1 = arith.constant 0 : i32
    return %arg0, %c0_i32, %c0_i32_0 : i32, i32, i32
  }
  func.func @transform_3(%arg0: i32, %arg1: i32, %arg2: memref<2x4xf32, #tpu.memory_space<smem>>) -> (i32, i32) {
    %c0_i32 = arith.constant 0 : i32
    %c0_i32_0 = arith.constant 0 : i32
    %c0_i32_1 = arith.constant 0 : i32
    return %c0_i32, %c0_i32_0 : i32, i32
  }
  func.func @transform_4(%arg0: i32, %arg1: i32, %arg2: memref<2x4xf32, #tpu.memory_space<smem>>) -> (i32, i32, i32) {
    %c0_i32 = arith.constant 0 : i32
    %c0_i32_0 = arith.constant 0 : i32
    %c0_i32_1 = arith.constant 0 : i32
    %c0_i32_2 = arith.constant 0 : i32
    return %c0_i32, %c0_i32_0, %c0_i32_1 : i32, i32, i32
  }
  func.func @transform_5(%arg0: i32, %arg1: i32, %arg2: memref<2x4xf32, #tpu.memory_space<smem>>) -> (i32, i32) {
    %c0_i32 = arith.constant 0 : i32
    %c0_i32_0 = arith.constant 0 : i32
    %c0_i32_1 = arith.constant 0 : i32
    return %c0_i32, %c0_i32_0 : i32, i32
  }
  func.func @transform_6(%arg0: i32, %arg1: i32, %arg2: memref<2x4xf32, #tpu.memory_space<smem>>) -> (i32, i32) {
    %c0_i32 = arith.constant 0 : i32
    %c0_i32_0 = arith.constant 0 : i32
    %c0_i32_1 = arith.constant 0 : i32
    return %c0_i32, %c0_i32_0 : i32, i32
  }
  func.func @transform_7(%arg0: i32, %arg1: i32, %arg2: memref<2x4xf32, #tpu.memory_space<smem>>) -> (i32, i32) {
    %c0_i32 = arith.constant 0 : i32
    %c0_i32_0 = arith.constant 0 : i32
    %c0_i32_1 = arith.constant 0 : i32
    return %c0_i32, %c0_i32_0 : i32, i32
  }
  func.func @transform_8(%arg0: i32, %arg1: i32, %arg2: memref<2x4xf32, #tpu.memory_space<smem>>) -> (i32, i32, i32, i32) {
    %c1_i32 = arith.constant 1 : i32
    %0 = arith.subi %arg1, %c1_i32 : i32
    %c0_i32 = arith.constant 0 : i32
    %1 = arith.maxsi %0, %c0_i32 : i32
    %c0_i32_0 = arith.constant 0 : i32
    %c0_i32_1 = arith.constant 0 : i32
    %c0_i32_2 = arith.constant 0 : i32
    return %arg0, %1, %c0_i32_0, %c0_i32_1 : i32, i32, i32, i32
  }
}

</mosaic_0001>

<llo_original>
// kernel: tpu_custom_call.1
$region0: #{tpu_custom_call.1}
  #allocation0 [shape = 'u32[]', space=smem, size = 0x4, offset = 0x4, fixed_abs, tag = 'smem constant byte address 0x4 - core index']
  #allocation1 [shape = 'u32[144,128]{1,0:T(1,128)}', space=vmem, size = 0x12000, scoped, tag = 'internal scratch']
  #allocation2 [shape = 'bf16[18,25,32]{2,1,0:T(8,128)(2,1)}', space=vmem, size = 0x24000, scoped, tag = 'scratch operand']
  #allocation3 [shape = 'bf16[3,256,64]{2,1,0:T(8,128)(2,1)}', space=vmem, size = 0x30000, scoped, tag = 'scratch operand']
  #allocation4 [shape = 's32[1]{0}', space=sflag, size = 0x4, scoped, tag = 'scoped memory for tpu_custom_call.1']
  #allocation5 [shape = 'u8[1024]{0}', space=smem, size = 0x400, scoped, tag = 'prefetched SMEM operand 0']
  %s0 = inlined_call_operand.vmem [shape: f32[2,4], index: 0, kind: input, shape index: {}]
  %s1 = inlined_call_operand.hbm [shape: f32[2,4,32,256], index: 1, kind: input, shape index: {}]
  %s2 = inlined_call_operand.vmem [shape: f32[2,4,32], index: 2, kind: input, shape index: {}]
  %s3 = inlined_call_operand.vmem [shape: f32[2,4,32], index: 3, kind: input, shape index: {}]
  %s4 = inlined_call_operand.hbm [shape: f32[32,32], index: 4, kind: input, shape index: {}]
  %s5 = inlined_call_operand.vmem [shape: bf16[9,32,64], index: 5, kind: input, shape index: {}]
  %s6 = inlined_call_operand.vmem [shape: f32[1,64], index: 6, kind: input, shape index: {}]
  %s7 = inlined_call_operand.vmem [shape: bf16[192,64], index: 7, kind: input, shape index: {}]
  %s8 = inlined_call_operand.vmem [shape: f32[1,64], index: 8, kind: input, shape index: {}]
  %s9 = inlined_call_operand.hbm [shape: f32[2,4,64,256], index: 9, kind: output, shape index: {}]
  %s10 = sld [smem:[#allocation0]]
  $region85: #{tpu_custom_call.1} parent=0
    _
  %s12 = ssub.s32 1, %s10
  %s13 = scalar_select 0, %s12, %s10
  %s14 = sshll.u32 %s0, 4
  %s15 = int_to_ptr.vmem [resolvable:$true] %s14
  %17 = dma.vmem_to_smem %s15, 32, [#allocation5], [#allocation4]
  %18 = dma.done [#allocation4], 32
  %19 = sfence
  $region1: #{tpu_custom_call.1} parent=0
    #allocation6 [shape = 'u8[65536]{0}', space=vmem, size = 0x10000, scoped, tag = 'input window, operand 1']
    #allocation7 [shape = 's32[2]{0}', space=sflag, size = 0x8, scoped, tag = 'scoped memory for tpu_custom_call.1']
    #allocation8 [shape = 's32[2]{0}', space=sflag, size = 0x8, scoped, tag = 'scoped memory for tpu_custom_call.1']
    #allocation9 [shape = 'u8[16384]{0}', space=vmem, size = 0x4000, scoped, tag = 'input window, operand 4, single buffered']
    #allocation10 [shape = 's32[1]{0}', space=sflag, size = 0x4, scoped, tag = 'scoped memory for tpu_custom_call.1']
    #allocation11 [shape = 'u8[131072]{0}', space=vmem, size = 0x20000, scoped, tag = 'output window, operand 0']
    %20 = vsyncpa [#allocation7], 0
    %s21 = scalar_lea.sflag [#allocation7], 1
    %22 = vsyncpa %s21, 0
    %23 = vsyncpa [#allocation10], 0
    %24 = vsyncpa [#allocation8], 0
    %s25 = scalar_lea.sflag [#allocation8], 1
    %26 = vsyncpa %s25, 0
    loop: start=0, step=1, limit=12
    $region2: #{tpu_custom_call.1} parent=1 // loop_pre_header
      _
    $region3: #{tpu_custom_call.1} parent=1 // loop_header
      %s28 = sphi 0, %s32
      %p29 = scmp.ge.s32.totalorder %s28, 12
      %s35 = sphi 0, %s47
      %s36 = sphi 0, %s43
      %s37 = sphi 0, %s35
      %s38 = sphi 0, %s36
      %s39 = sphi 0, %s37
      %s40 = sphi 0, %s38
      %s56 = sphi 0, %s58
      %s59 = sphi 0, %s56
      %s60 = sphi 0, %s59
      %s76 = sphi 0, %s60
      %s82 = sphi 0, %s84
      %s85 = sphi 0, %s82
      %s86 = sphi 0, %s85
      %s102 = sphi 0, %s86
      %s108 = sphi 0, %s110
      %s111 = sphi 0, %s108
      %s112 = sphi 0, %s111
      %s128 = sphi 0, %s112
      %s132 = sphi 0, %s132
      %s134 = sphi 0, %s132
      %s135 = sphi 0, %s134
      %s149 = sphi 0, %s135
      %s153 = sphi 0, %s153
      %s155 = sphi 0, %s153
      %s156 = sphi 0, %s155
      %s170 = sphi 0, %s156
      %s174 = sphi 0, %s174
      %s176 = sphi 0, %s174
      %s177 = sphi 0, %s176
      %s191 = sphi 0, %s177
      %s195 = sphi 0, %s195
      %s197 = sphi 0, %s195
      %s198 = sphi 0, %s197
      %s212 = sphi 0, %s198
      %s216 = sphi 0, %s216
      %s218 = sphi 0, %s216
      %s219 = sphi 0, %s218
      %s233 = sphi 0, %s219
      %s247 = sphi 0, %s249
      %s250 = sphi 0, %s247
      %s251 = sphi 0, %s250
      %s267 = sphi 0, %s251
    $region4: #{tpu_custom_call.1} parent=1 // loop_header_branch
      %31 = sbr.rel (%p29) target = $region8
    $region5: #{tpu_custom_call.1} parent=1 // loop_body
      %s33 = ssub.s32 %s28, 1
      %s34 = ssub.s32 %s28, 2
      %s41 = sadd.s32 1, %s36
      %p42 = scmp.ge.s32.totalorder %s41, 5
      %s43 = scalar_select %p42, 0, %s41
      %s44 = sadd.s32 1, %s35
      %s45 = scalar_select %p42, %s44, %s35
      %p46 = scmp.ge.s32.totalorder %s45, 2
      %s47 = scalar_select %p46, 0, %s45
      %p48 = scmp.lt.s32.totalorder %s36, 3
      %s49 = scalar_select %p48, %s36, 3
      %p50 = scmp.lt.s32.totalorder %s43, 3
      %s51 = scalar_select %p50, %s43, 3
      %s52 = ssub.s32 %s35, %s47
      %s53 = ssub.s32 %s49, %s51
      %s54 = sor.u32 %s52, %s53
      %p55 = scmp.eq.s32.totalorder %s54, 0
      %s57 = sadd.s32 %s56, 1
      %s58 = scalar_select %p55, %s56, %s57
      %p61 = pneg %p55
      %p62 = scmp.eq.s32.totalorder %s28, 9
      %p63 = por %p61, %p62
      %p64 = scmp.ne.s32.totalorder %s56, %s59
      %p65 = scmp.eq.s32.totalorder %s28, 0
      %p66 = por %p64, %p65
      %p67 = scmp.ne.s32.totalorder %s56, %s59
      %p68 = scmp.eq.s32.totalorder %s33, 9
      %p69 = por %p67, %p68
      %p70 = scmp.ne.s32.totalorder %s59, %s60
      %p71 = scmp.eq.s32.totalorder %s33, 0
      %p72 = por %p70, %p71
      %p73 = scmp.ne.s32.totalorder %s59, %s60
      %p74 = scmp.eq.s32.totalorder %s34, 9
      %p75 = por %p73, %p74
      %p77 = scmp.ne.s32.totalorder %s60, %s76
      %p78 = scmp.eq.s32.totalorder %s34, 0
      %p79 = por %p77, %p78
      %s80 = ssub.s32 %s35, %s47
      %p81 = scmp.eq.s32.totalorder %s80, 0
      %s83 = sadd.s32 %s82, 1
      %s84 = scalar_select %p81, %s82, %s83
      %p87 = pneg %p81
      %p88 = scmp.eq.s32.totalorder %s28, 9
      %p89 = por %p87, %p88
      %p90 = scmp.ne.s32.totalorder %s82, %s85
      %p91 = scmp.eq.s32.totalorder %s28, 0
      %p92 = por %p90, %p91
      %p93 = scmp.ne.s32.totalorder %s82, %s85
      %p94 = scmp.eq.s32.totalorder %s33, 9
      %p95 = por %p93, %p94
      %p96 = scmp.ne.s32.totalorder %s85, %s86
      %p97 = scmp.eq.s32.totalorder %s33, 0
      %p98 = por %p96, %p97
      %p99 = scmp.ne.s32.totalorder %s85, %s86
      %p100 = scmp.eq.s32.totalorder %s34, 9
      %p101 = por %p99, %p100
      %p103 = scmp.ne.s32.totalorder %s86, %s102
      %p104 = scmp.eq.s32.totalorder %s34, 0
      %p105 = por %p103, %p104
      %s106 = ssub.s32 %s35, %s47
      %p107 = scmp.eq.s32.totalorder %s106, 0
      %s109 = sadd.s32 %s108, 1
      %s110 = scalar_select %p107, %s108, %s109
      %p113 = pneg %p107
      %p114 = scmp.eq.s32.totalorder %s28, 9
      %p115 = por %p113, %p114
      %p116 = scmp.ne.s32.totalorder %s108, %s111
      %p117 = scmp.eq.s32.totalorder %s28, 0
      %p118 = por %p116, %p117
      %p119 = scmp.ne.s32.totalorder %s108, %s111
      %p120 = scmp.eq.s32.totalorder %s33, 9
      %p121 = por %p119, %p120
      %p122 = scmp.ne.s32.totalorder %s111, %s112
      %p123 = scmp.eq.s32.totalorder %s33, 0
      %p124 = por %p122, %p123
      %p125 = scmp.ne.s32.totalorder %s111, %s112
      %p126 = scmp.eq.s32.totalorder %s34, 9
      %p127 = por %p125, %p126
      %p129 = scmp.ne.s32.totalorder %s112, %s128
      %p130 = scmp.eq.s32.totalorder %s34, 0
      %p131 = por %p129, %p130
      %s133 = sadd.s32 %s132, 1
      %p136 = scmp.eq.s32.totalorder %s28, 9
      %p137 = scmp.ne.s32.totalorder %s132, %s134
      %p138 = scmp.eq.s32.totalorder %s28, 0
      %p139 = por %p137, %p138
      %p140 = scmp.ne.s32.totalorder %s132, %s134
      %p141 = scmp.eq.s32.totalorder %s33, 9
      %p142 = por %p140, %p141
      %p143 = scmp.ne.s32.totalorder %s134, %s135
      %p144 = scmp.eq.s32.totalorder %s33, 0
      %p145 = por %p143, %p144
      %p146 = scmp.ne.s32.totalorder %s134, %s135
      %p147 = scmp.eq.s32.totalorder %s34, 9
      %p148 = por %p146, %p147
      %p150 = scmp.ne.s32.totalorder %s135, %s149
      %p151 = scmp.eq.s32.totalorder %s34, 0
      %p152 = por %p150, %p151
      %s154 = sadd.s32 %s153, 1
      %p157 = scmp.eq.s32.totalorder %s28, 9
      %p158 = scmp.ne.s32.totalorder %s153, %s155
      %p159 = scmp.eq.s32.totalorder %s28, 0
      %p160 = por %p158, %p159
      %p161 = scmp.ne.s32.totalorder %s153, %s155
      %p162 = scmp.eq.s32.totalorder %s33, 9
      %p163 = por %p161, %p162
      %p164 = scmp.ne.s32.totalorder %s155, %s156
      %p165 = scmp.eq.s32.totalorder %s33, 0
      %p166 = por %p164, %p165
      %p167 = scmp.ne.s32.totalorder %s155, %s156
      %p168 = scmp.eq.s32.totalorder %s34, 9
      %p169 = por %p167, %p168
      %p171 = scmp.ne.s32.totalorder %s156, %s170
      %p172 = scmp.eq.s32.totalorder %s34, 0
      %p173 = por %p171, %p172
      %s175 = sadd.s32 %s174, 1
      %p178 = scmp.eq.s32.totalorder %s28, 9
      %p179 = scmp.ne.s32.totalorder %s174, %s176
      %p180 = scmp.eq.s32.totalorder %s28, 0
      %p181 = por %p179, %p180
      %p182 = scmp.ne.s32.totalorder %s174, %s176
      %p183 = scmp.eq.s32.totalorder %s33, 9
      %p184 = por %p182, %p183
      %p185 = scmp.ne.s32.totalorder %s176, %s177
      %p186 = scmp.eq.s32.totalorder %s33, 0
      %p187 = por %p185, %p186
      %p188 = scmp.ne.s32.totalorder %s176, %s177
      %p189 = scmp.eq.s32.totalorder %s34, 9
      %p190 = por %p188, %p189
      %p192 = scmp.ne.s32.totalorder %s177, %s191
      %p193 = scmp.eq.s32.totalorder %s34, 0
      %p194 = por %p192, %p193
      %s196 = sadd.s32 %s195, 1
      %p199 = scmp.eq.s32.totalorder %s28, 9
      %p200 = scmp.ne.s32.totalorder %s195, %s197
      %p201 = scmp.eq.s32.totalorder %s28, 0
      %p202 = por %p200, %p201
      %p203 = scmp.ne.s32.totalorder %s195, %s197
      %p204 = scmp.eq.s32.totalorder %s33, 9
      %p205 = por %p203, %p204
      %p206 = scmp.ne.s32.totalorder %s197, %s198
      %p207 = scmp.eq.s32.totalorder %s33, 0
      %p208 = por %p206, %p207
      %p209 = scmp.ne.s32.totalorder %s197, %s198
      %p210 = scmp.eq.s32.totalorder %s34, 9
      %p211 = por %p209, %p210
      %p213 = scmp.ne.s32.totalorder %s198, %s212
      %p214 = scmp.eq.s32.totalorder %s34, 0
      %p215 = por %p213, %p214
      %s217 = sadd.s32 %s216, 1
      %p220 = scmp.eq.s32.totalorder %s28, 9
      %p221 = scmp.ne.s32.totalorder %s216, %s218
      %p222 = scmp.eq.s32.totalorder %s28, 0
      %p223 = por %p221, %p222
      %p224 = scmp.ne.s32.totalorder %s216, %s218
      %p225 = scmp.eq.s32.totalorder %s33, 9
      %p226 = por %p224, %p225
      %p227 = scmp.ne.s32.totalorder %s218, %s219
      %p228 = scmp.eq.s32.totalorder %s33, 0
      %p229 = por %p227, %p228
      %p230 = scmp.ne.s32.totalorder %s218, %s219
      %p231 = scmp.eq.s32.totalorder %s34, 9
      %p232 = por %p230, %p231
      %p234 = scmp.ne.s32.totalorder %s219, %s233
      %p235 = scmp.eq.s32.totalorder %s34, 0
      %p236 = por %p234, %p235
      %s237 = ssub.s32 %s36, 1
      %p238 = scmp.gt.s32.totalorder %s237, 0
      %s239 = scalar_select %p238, %s237, 0
      %s240 = ssub.s32 %s43, 1
      %p241 = scmp.gt.s32.totalorder %s240, 0
      %s242 = scalar_select %p241, %s240, 0
      %s243 = ssub.s32 %s35, %s47
      %s244 = ssub.s32 %s239, %s242
      %s245 = sor.u32 %s243, %s244
      %p246 = scmp.eq.s32.totalorder %s245, 0
      %s248 = sadd.s32 %s247, 1
      %s249 = scalar_select %p246, %s247, %s248
      %p252 = pneg %p246
      %p253 = scmp.eq.s32.totalorder %s28, 9
      %p254 = por %p252, %p253
      %p255 = scmp.ne.s32.totalorder %s247, %s250
      %p256 = scmp.eq.s32.totalorder %s28, 0
      %p257 = por %p255, %p256
      %p258 = scmp.ne.s32.totalorder %s247, %s250
      %p259 = scmp.eq.s32.totalorder %s33, 9
      %p260 = por %p258, %p259
      %p261 = scmp.ne.s32.totalorder %s250, %s251
      %p262 = scmp.eq.s32.totalorder %s33, 0
      %p263 = por %p261, %p262
      %p264 = scmp.ne.s32.totalorder %s250, %s251
      %p265 = scmp.eq.s32.totalorder %s34, 9
      %p266 = por %p264, %p265
      %p268 = scmp.ne.s32.totalorder %s251, %s267
      %p269 = scmp.eq.s32.totalorder %s34, 0
      %p270 = por %p268, %p269
      %p271 = scmp.le.s32.totalorder 1, %s28
      %p272 = scmp.lt.s32.totalorder %s28, 11
      %p273 = pnand %p271, %p272
      %p274 = pneg %p273
      // Predicated region
      $region9: #{tpu_custom_call.1} parent=5 // pred_check
        _
      $region10: #{tpu_custom_call.1} parent=5 // pred_check_branch
        %276 = sbr.rel (%p273) target = $region12
      $region11: #{tpu_custom_call.1} parent=5 // pred_region
        %s277 = ssub.s32 %s28, 1
        // Predicated region
        $region13: #{tpu_custom_call.1} parent=11 // pred_check
          %p278 = pneg %p145
        $region14: #{tpu_custom_call.1} parent=11 // pred_check_branch
          %280 = sbr.rel (%p278) target = $region16
        $region15: #{tpu_custom_call.1} parent=11 // pred_region
          %s282 = ssub.s32 512, 512
          %283 = vsyncadd [#allocation10], %s282
          %s284 = sshll.u32 [#allocation9], 4
          %s285 = int_to_ptr.vmem [resolvable:$true] %s284
          %290 = dma.hbm_to_vmem [thread:$0]  %s4, 512, %s285, [#allocation10], 128, 128, 8
        $region16: #{tpu_custom_call.1} parent=11 // pred_fallthru
          _
        // Predicated region
        $region17: #{tpu_custom_call.1} parent=11 // pred_check
          %p291 = pneg %p166
        $region18: #{tpu_custom_call.1} parent=11 // pred_check_branch
          %293 = sbr.rel (%p291) target = $region20
        $region19: #{tpu_custom_call.1} parent=11 // pred_region
          _
        $region20: #{tpu_custom_call.1} parent=11 // pred_fallthru
          _
        // Predicated region
        $region21: #{tpu_custom_call.1} parent=11 // pred_check
          %p294 = pneg %p187
        $region22: #{tpu_custom_call.1} parent=11 // pred_check_branch
          %296 = sbr.rel (%p294) target = $region24
        $region23: #{tpu_custom_call.1} parent=11 // pred_region
          _
        $region24: #{tpu_custom_call.1} parent=11 // pred_fallthru
          _
        // Predicated region
        $region25: #{tpu_custom_call.1} parent=11 // pred_check
          %p297 = pneg %p208
        $region26: #{tpu_custom_call.1} parent=11 // pred_check_branch
          %299 = sbr.rel (%p297) target = $region28
        $region27: #{tpu_custom_call.1} parent=11 // pred_region
          _
        $region28: #{tpu_custom_call.1} parent=11 // pred_fallthru
          _
        // Predicated region
        $region29: #{tpu_custom_call.1} parent=11 // pred_check
          %p300 = pneg %p229
        $region30: #{tpu_custom_call.1} parent=11 // pred_check_branch
          %302 = sbr.rel (%p300) target = $region32
        $region31: #{tpu_custom_call.1} parent=11 // pred_region
          _
        $region32: #{tpu_custom_call.1} parent=11 // pred_fallthru
          _
      $region12: #{tpu_custom_call.1} parent=5 // pred_fallthru
        _
      %p303 = scmp.lt.s32.totalorder %s28, 10
      // Predicated region
      $region33: #{tpu_custom_call.1} parent=5 // pred_check
        %p304 = pneg %p303
      $region34: #{tpu_custom_call.1} parent=5 // pred_check_branch
        %306 = sbr.rel (%p304) target = $region36
      $region35: #{tpu_custom_call.1} parent=5 // pred_region
        // Predicated region
        $region37: #{tpu_custom_call.1} parent=35 // pred_check
          %p307 = pneg %p66
        $region38: #{tpu_custom_call.1} parent=35 // pred_check_branch
          %309 = sbr.rel (%p307) target = $region40
        $region39: #{tpu_custom_call.1} parent=35 // pred_region
          %s310 = sand.u32 %s56, 1
          %s311 = scalar_lea.sflag [#allocation7], %s310
          %s312 = sand.u32 %s56, 1
          %s313 = smul.addr %s312, 64
          %s314 = scalar_lea.vmem [#allocation6], %s313
          %p315 = scmp.lt.s32.totalorder %s36, 3
          %s316 = scalar_select %p315, %s36, 3
          %s318 = ssub.s32 1024, 1024
          %319 = vsyncadd %s311, %s318
          %s320 = smul.addr %s316, 8
          %s321 = smul.addr %s35, 32
          %s322 = sadd.s32 %s320, %s321
          %s323 = smul.addr %s322, 128
          %s324 = scalar_lea.hbm %s1, %s323
          %s325 = sshll.u32 %s314, 4
          %s326 = int_to_ptr.vmem [resolvable:$true] %s325
          %331 = dma.hbm_to_vmem [thread:$0]  %s324, 1024, %s326, %s311, 256, 256, 16
        $region40: #{tpu_custom_call.1} parent=35 // pred_fallthru
          _
        // Predicated region
        $region41: #{tpu_custom_call.1} parent=35 // pred_check
          %p332 = pneg %p92
        $region42: #{tpu_custom_call.1} parent=35 // pred_check_branch
          %334 = sbr.rel (%p332) target = $region44
        $region43: #{tpu_custom_call.1} parent=35 // pred_region
          %p335 = scmp.lt.s32.totalorder %s35, 1
          %s336 = scalar_select %p335, %s35, 1
          %s337 = smul.addr %s336, 4
          %s338 = scalar_lea.vmem %s2, %s337
        $region44: #{tpu_custom_call.1} parent=35 // pred_fallthru
          _
        // Predicated region
        $region45: #{tpu_custom_call.1} parent=35 // pred_check
          %p339 = pneg %p118
        $region46: #{tpu_custom_call.1} parent=35 // pred_check_branch
          %341 = sbr.rel (%p339) target = $region48
        $region47: #{tpu_custom_call.1} parent=35 // pred_region
          %p342 = scmp.lt.s32.totalorder %s35, 1
          %s343 = scalar_select %p342, %s35, 1
          %s344 = smul.addr %s343, 4
          %s345 = scalar_lea.vmem %s3, %s344
        $region48: #{tpu_custom_call.1} parent=35 // pred_fallthru
          _
      $region36: #{tpu_custom_call.1} parent=5 // pred_fallthru
        _
      %p346 = scmp.le.s32.totalorder 1, %s28
      %p347 = scmp.lt.s32.totalorder %s28, 11
      %p348 = pnand %p346, %p347
      %p349 = pneg %p348
      // Predicated region
      $region49: #{tpu_custom_call.1} parent=5 // pred_check
        _
      $region50: #{tpu_custom_call.1} parent=5 // pred_check_branch
        %351 = sbr.rel (%p348) target = $region52
      $region51: #{tpu_custom_call.1} parent=5 // pred_region
        %s352 = ssub.s32 %s28, 1
        %s353 = sand.u32 %s59, 1
        %s354 = scalar_lea.sflag [#allocation7], %s353
        %s355 = sand.u32 %s59, 1
        %s356 = smul.addr %s355, 64
        %s357 = scalar_lea.vmem [#allocation6], %s356
        // Predicated region
        $region53: #{tpu_custom_call.1} parent=51 // pred_check
          %p358 = pneg %p72
        $region54: #{tpu_custom_call.1} parent=51 // pred_check_branch
          %360 = sbr.rel (%p358) target = $region56
        $region55: #{tpu_custom_call.1} parent=51 // pred_region
          %361 = dma.done %s354, 1024
        $region56: #{tpu_custom_call.1} parent=51 // pred_fallthru
          _
        // Predicated region
        $region57: #{tpu_custom_call.1} parent=51 // pred_check
          %p362 = pneg %p145
        $region58: #{tpu_custom_call.1} parent=51 // pred_check_branch
          %364 = sbr.rel (%p362) target = $region60
        $region59: #{tpu_custom_call.1} parent=51 // pred_region
          %365 = dma.done [#allocation10], 512
        $region60: #{tpu_custom_call.1} parent=51 // pred_fallthru
          _
        %s366 = sand.u32 %s59, 1
        %s367 = scalar_lea.sflag [#allocation7], %s366
        %s368 = sand.u32 %s59, 1
        %s369 = smul.addr %s368, 64
        %s370 = scalar_lea.vmem [#allocation6], %s369
        %p371 = pneg %p72
        %p372 = pneg %p69
        %p373 = scmp.lt.s32.totalorder %s37, 1
        %s374 = scalar_select %p373, %s37, 1
        %s375 = smul.addr %s374, 4
        %s376 = scalar_lea.vmem %s2, %s375
        %p377 = pneg %p98
        %p378 = pneg %p95
        %p379 = scmp.lt.s32.totalorder %s37, 1
        %s380 = scalar_select %p379, %s37, 1
        %s381 = smul.addr %s380, 4
        %s382 = scalar_lea.vmem %s3, %s381
        %p383 = pneg %p124
        %p384 = pneg %p121
        %p385 = pneg %p145
        %p386 = pneg %p142
        %p387 = pneg %p166
        %p388 = pneg %p163
        %p389 = pneg %p187
        %p390 = pneg %p184
        %p391 = pneg %p208
        %p392 = pneg %p205
        %p393 = pneg %p229
        %p394 = pneg %p226
        %p395 = pneg %p263
        %p396 = pneg %p260
        %s397 = sand.u32 %s250, 1
        %s398 = scalar_lea.sflag [#allocation8], %s397
        %s399 = sand.u32 %s250, 1
        %s400 = smul.addr %s399, 128
        %s401 = scalar_lea.vmem [#allocation11], %s400
        %p402 = scmp.lt.s32.totalorder %s38, 3
        %s403 = scalar_select %p402, %s38, 3
        %p404 = scmp.lt.s32.totalorder %s37, 1
        %s405 = scalar_select %p404, %s37, 1
        %s406 = smul.addr %s405, 4
        %s407 = scalar_lea.vmem %s2, %s406
        %p408 = scmp.lt.s32.totalorder %s37, 1
        %s409 = scalar_select %p408, %s37, 1
        %s410 = smul.addr %s409, 4
        %s411 = scalar_lea.vmem %s3, %s410
        %s412 = ssub.s32 %s38, 1
        %p413 = scmp.gt.s32.totalorder %s412, 0
        %s414 = scalar_select %p413, %s412, 0
        %p416 = scmp.eq.s32.totalorder %s38, 0
        // Predicated region
        $region61: #{tpu_custom_call.1} parent=51 // pred_check
          %p417 = pneg %p416
        $region62: #{tpu_custom_call.1} parent=51 // pred_check_branch
          %419 = sbr.rel (%p417) target = $region64
        $region63: #{tpu_custom_call.1} parent=51 // pred_region
          %vm420 = vcmask 257024
          %421 = vst.msk [vmem:[#allocation2] sm:$0xf] %vm420, 0
          %422 = vst.msk [vmem:[#allocation2 + $0x4] sm:$0xf] %vm420, 0
          %423 = vst.msk [vmem:[#allocation2 + $0x8] sm:$0xf] %vm420, 0
          %vm424 = vcmask 253952
          %vm425 = vsmask.f32 256
          %vm426 = vmand %vm424, %vm425
          %v427 = vld [vmem:[#allocation2 + $0xc] sm:$0x1]
          %v428 = vsel %vm426, 0, %v427
          %429 = vst [vmem:[#allocation2 + $0xc] sm:$0x1] %v428
          %430 = vst.msk [vmem:[#allocation2 + $0x10] sm:$0xf] %vm420, 0
          %431 = vst.msk [vmem:[#allocation2 + $0x14] sm:$0xf] %vm420, 0
          %432 = vst.msk [vmem:[#allocation2 + $0x18] sm:$0xf] %vm420, 0
          %v433 = vld [vmem:[#allocation2 + $0x1c] sm:$0x1]
          %v434 = vsel %vm426, 0, %v433
          %435 = vst [vmem:[#allocation2 + $0x1c] sm:$0x1] %v434
          %436 = vst.msk [vmem:[#allocation2 + $0x20] sm:$0xf] %vm420, 0
          %437 = vst.msk [vmem:[#allocation2 + $0x24] sm:$0xf] %vm420, 0
          %438 = vst.msk [vmem:[#allocation2 + $0x28] sm:$0xf] %vm420, 0
          %v439 = vld [vmem:[#allocation2 + $0x2c] sm:$0x1]
          %v440 = vsel %vm426, 0, %v439
          %441 = vst [vmem:[#allocation2 + $0x2c] sm:$0x1] %v440
          %442 = vst.msk [vmem:[#allocation2 + $0x30] sm:$0xf] %vm420, 0
          %443 = vst.msk [vmem:[#allocation2 + $0x34] sm:$0xf] %vm420, 0
          %444 = vst.msk [vmem:[#allocation2 + $0x38] sm:$0xf] %vm420, 0
          %v445 = vld [vmem:[#allocation2 + $0x3c] sm:$0x1]
          %v446 = vsel %vm426, 0, %v445
          %447 = vst [vmem:[#allocation2 + $0x3c] sm:$0x1] %v446
          %448 = vst.msk [vmem:[#allocation2 + $0x40] sm:$0xf] %vm420, 0
          %449 = vst.msk [vmem:[#allocation2 + $0x44] sm:$0xf] %vm420, 0
          %450 = vst.msk [vmem:[#allocation2 + $0x48] sm:$0xf] %vm420, 0
          %v451 = vld [vmem:[#allocation2 + $0x4c] sm:$0x1]
          %v452 = vsel %vm426, 0, %v451
          %453 = vst [vmem:[#allocation2 + $0x4c] sm:$0x1] %v452
          %454 = vst.msk [vmem:[#allocation2 + $0x50] sm:$0xf] %vm420, 0
          %455 = vst.msk [vmem:[#allocation2 + $0x54] sm:$0xf] %vm420, 0
          %456 = vst.msk [vmem:[#allocation2 + $0x58] sm:$0xf] %vm420, 0
          %v457 = vld [vmem:[#allocation2 + $0x5c] sm:$0x1]
          %v458 = vsel %vm426, 0, %v457
          %459 = vst [vmem:[#allocation2 + $0x5c] sm:$0x1] %v458
          %460 = vst.msk [vmem:[#allocation2 + $0x60] sm:$0xf] %vm420, 0
          %461 = vst.msk [vmem:[#allocation2 + $0x64] sm:$0xf] %vm420, 0
          %462 = vst.msk [vmem:[#allocation2 + $0x68] sm:$0xf] %vm420, 0
          %v463 = vld [vmem:[#allocation2 + $0x6c] sm:$0x1]
          %v464 = vsel %vm426, 0, %v463
          %465 = vst [vmem:[#allocation2 + $0x6c] sm:$0x1] %v464
          %466 = vst.msk [vmem:[#allocation2 + $0x70] sm:$0xf] %vm420, 0
          %467 = vst.msk [vmem:[#allocation2 + $0x74] sm:$0xf] %vm420, 0
          %468 = vst.msk [vmem:[#allocation2 + $0x78] sm:$0xf] %vm420, 0
          %v469 = vld [vmem:[#allocation2 + $0x7c] sm:$0x1]
          %v470 = vsel %vm426, 0, %v469
          %471 = vst [vmem:[#allocation2 + $0x7c] sm:$0x1] %v470
          %472 = vst.msk [vmem:[#allocation2 + $0x80] sm:$0xf] %vm420, 0
          %473 = vst.msk [vmem:[#allocation2 + $0x84] sm:$0xf] %vm420, 0
          %474 = vst.msk [vmem:[#allocation2 + $0x88] sm:$0xf] %vm420, 0
          %v475 = vld [vmem:[#allocation2 + $0x8c] sm:$0x1]
          %v476 = vsel %vm426, 0, %v475
          %477 = vst [vmem:[#allocation2 + $0x8c] sm:$0x1] %v476
          %478 = vst.msk [vmem:[#allocation2 + $0x90] sm:$0xf] %vm420, 0
          %479 = vst.msk [vmem:[#allocation2 + $0x94] sm:$0xf] %vm420, 0
          %480 = vst.msk [vmem:[#allocation2 + $0x98] sm:$0xf] %vm420, 0
          %v481 = vld [vmem:[#allocation2 + $0x9c] sm:$0x1]
          %v482 = vsel %vm426, 0, %v481
          %483 = vst [vmem:[#allocation2 + $0x9c] sm:$0x1] %v482
          %484 = vst.msk [vmem:[#allocation2 + $0xa0] sm:$0xf] %vm420, 0
          %485 = vst.msk [vmem:[#allocation2 + $0xa4] sm:$0xf] %vm420, 0
          %486 = vst.msk [vmem:[#allocation2 + $0xa8] sm:$0xf] %vm420, 0
          %v487 = vld [vmem:[#allocation2 + $0xac] sm:$0x1]
          %v488 = vsel %vm426, 0, %v487
          %489 = vst [vmem:[#allocation2 + $0xac] sm:$0x1] %v488
          %490 = vst.msk [vmem:[#allocation2 + $0xb0] sm:$0xf] %vm420, 0
          %491 = vst.msk [vmem:[#allocation2 + $0xb4] sm:$0xf] %vm420, 0
          %492 = vst.msk [vmem:[#allocation2 + $0xb8] sm:$0xf] %vm420, 0
          %v493 = vld [vmem:[#allocation2 + $0xbc] sm:$0x1]
          %v494 = vsel %vm426, 0, %v493
          %495 = vst [vmem:[#allocation2 + $0xbc] sm:$0x1] %v494
          %496 = vst.msk [vmem:[#allocation2 + $0xc0] sm:$0xf] %vm420, 0
          %497 = vst.msk [vmem:[#allocation2 + $0xc4] sm:$0xf] %vm420, 0
          %498 = vst.msk [vmem:[#allocation2 + $0xc8] sm:$0xf] %vm420, 0
          %v499 = vld [vmem:[#allocation2 + $0xcc] sm:$0x1]
          %v500 = vsel %vm426, 0, %v499
          %501 = vst [vmem:[#allocation2 + $0xcc] sm:$0x1] %v500
          %502 = vst.msk [vmem:[#allocation2 + $0xd0] sm:$0xf] %vm420, 0
          %503 = vst.msk [vmem:[#allocation2 + $0xd4] sm:$0xf] %vm420, 0
          %504 = vst.msk [vmem:[#allocation2 + $0xd8] sm:$0xf] %vm420, 0
          %v505 = vld [vmem:[#allocation2 + $0xdc] sm:$0x1]
          %v506 = vsel %vm426, 0, %v505
          %507 = vst [vmem:[#allocation2 + $0xdc] sm:$0x1] %v506
          %508 = vst.msk [vmem:[#allocation2 + $0xe0] sm:$0xf] %vm420, 0
          %509 = vst.msk [vmem:[#allocation2 + $0xe4] sm:$0xf] %vm420, 0
          %510 = vst.msk [vmem:[#allocation2 + $0xe8] sm:$0xf] %vm420, 0
          %v511 = vld [vmem:[#allocation2 + $0xec] sm:$0x1]
          %v512 = vsel %vm426, 0, %v511
          %513 = vst [vmem:[#allocation2 + $0xec] sm:$0x1] %v512
          %514 = vst.msk [vmem:[#allocation2 + $0xf0] sm:$0xf] %vm420, 0
          %515 = vst.msk [vmem:[#allocation2 + $0xf4] sm:$0xf] %vm420, 0
          %516 = vst.msk [vmem:[#allocation2 + $0xf8] sm:$0xf] %vm420, 0
          %v517 = vld [vmem:[#allocation2 + $0xfc] sm:$0x1]
          %v518 = vsel %vm426, 0, %v517
          %519 = vst [vmem:[#allocation2 + $0xfc] sm:$0x1] %v518
          %520 = vst.msk [vmem:[#allocation2 + $0x100] sm:$0xf] %vm420, 0
          %521 = vst.msk [vmem:[#allocation2 + $0x104] sm:$0xf] %vm420, 0
          %522 = vst.msk [vmem:[#allocation2 + $0x108] sm:$0xf] %vm420, 0
          %v523 = vld [vmem:[#allocation2 + $0x10c] sm:$0x1]
          %v524 = vsel %vm426, 0, %v523
          %525 = vst [vmem:[#allocation2 + $0x10c] sm:$0x1] %v524
          %526 = vst.msk [vmem:[#allocation2 + $0x110] sm:$0xf] %vm420, 0
          %527 = vst.msk [vmem:[#allocation2 + $0x114] sm:$0xf] %vm420, 0
          %528 = vst.msk [vmem:[#allocation2 + $0x118] sm:$0xf] %vm420, 0
          %v529 = vld [vmem:[#allocation2 + $0x11c] sm:$0x1]
          %v530 = vsel %vm426, 0, %v529
          %531 = vst [vmem:[#allocation2 + $0x11c] sm:$0x1] %v530
          %vm532 = vcmask 519168
          %533 = vst.msk [vmem:[#allocation3] sm:$0xf] %vm532, 0
          %534 = vst.msk [vmem:[#allocation3 + $0x4] sm:$0xf] %vm532, 0
          %535 = vst.msk [vmem:[#allocation3 + $0x8] sm:$0xf] %vm532, 0
          %536 = vst.msk [vmem:[#allocation3 + $0xc] sm:$0xf] %vm532, 0
          %537 = vst.msk [vmem:[#allocation3 + $0x10] sm:$0xf] %vm532, 0
          %538 = vst.msk [vmem:[#allocation3 + $0x14] sm:$0xf] %vm532, 0
          %539 = vst.msk [vmem:[#allocation3 + $0x18] sm:$0xf] %vm532, 0
          %540 = vst.msk [vmem:[#allocation3 + $0x1c] sm:$0xf] %vm532, 0
          %541 = vst.msk [vmem:[#allocation3 + $0x20] sm:$0xf] %vm532, 0
          %542 = vst.msk [vmem:[#allocation3 + $0x24] sm:$0xf] %vm532, 0
          %543 = vst.msk [vmem:[#allocation3 + $0x28] sm:$0xf] %vm532, 0
          %544 = vst.msk [vmem:[#allocation3 + $0x2c] sm:$0xf] %vm532, 0
          %545 = vst.msk [vmem:[#allocation3 + $0x30] sm:$0xf] %vm532, 0
          %546 = vst.msk [vmem:[#allocation3 + $0x34] sm:$0xf] %vm532, 0
          %547 = vst.msk [vmem:[#allocation3 + $0x38] sm:$0xf] %vm532, 0
          %548 = vst.msk [vmem:[#allocation3 + $0x3c] sm:$0xf] %vm532, 0
          %549 = vst.msk [vmem:[#allocation3 + $0x40] sm:$0xf] %vm532, 0
          %550 = vst.msk [vmem:[#allocation3 + $0x44] sm:$0xf] %vm532, 0
          %551 = vst.msk [vmem:[#allocation3 + $0x48] sm:$0xf] %vm532, 0
          %552 = vst.msk [vmem:[#allocation3 + $0x4c] sm:$0xf] %vm532, 0
          %553 = vst.msk [vmem:[#allocation3 + $0x50] sm:$0xf] %vm532, 0
          %554 = vst.msk [vmem:[#allocation3 + $0x54] sm:$0xf] %vm532, 0
          %555 = vst.msk [vmem:[#allocation3 + $0x58] sm:$0xf] %vm532, 0
          %556 = vst.msk [vmem:[#allocation3 + $0x5c] sm:$0xf] %vm532, 0
          %557 = vst.msk [vmem:[#allocation3 + $0x60] sm:$0xf] %vm532, 0
          %558 = vst.msk [vmem:[#allocation3 + $0x64] sm:$0xf] %vm532, 0
          %559 = vst.msk [vmem:[#allocation3 + $0x68] sm:$0xf] %vm532, 0
          %560 = vst.msk [vmem:[#allocation3 + $0x6c] sm:$0xf] %vm532, 0
          %561 = vst.msk [vmem:[#allocation3 + $0x70] sm:$0xf] %vm532, 0
          %562 = vst.msk [vmem:[#allocation3 + $0x74] sm:$0xf] %vm532, 0
          %563 = vst.msk [vmem:[#allocation3 + $0x78] sm:$0xf] %vm532, 0
          %564 = vst.msk [vmem:[#allocation3 + $0x7c] sm:$0xf] %vm532, 0
          %565 = vst.msk [vmem:[#allocation3 + $0x80] sm:$0xf] %vm532, 0
          %566 = vst.msk [vmem:[#allocation3 + $0x84] sm:$0xf] %vm532, 0
          %567 = vst.msk [vmem:[#allocation3 + $0x88] sm:$0xf] %vm532, 0
          %568 = vst.msk [vmem:[#allocation3 + $0x8c] sm:$0xf] %vm532, 0
          %569 = vst.msk [vmem:[#allocation3 + $0x90] sm:$0xf] %vm532, 0
          %570 = vst.msk [vmem:[#allocation3 + $0x94] sm:$0xf] %vm532, 0
          %571 = vst.msk [vmem:[#allocation3 + $0x98] sm:$0xf] %vm532, 0
          %572 = vst.msk [vmem:[#allocation3 + $0x9c] sm:$0xf] %vm532, 0
          %573 = vst.msk [vmem:[#allocation3 + $0xa0] sm:$0xf] %vm532, 0
          %574 = vst.msk [vmem:[#allocation3 + $0xa4] sm:$0xf] %vm532, 0
          %575 = vst.msk [vmem:[#allocation3 + $0xa8] sm:$0xf] %vm532, 0
          %576 = vst.msk [vmem:[#allocation3 + $0xac] sm:$0xf] %vm532, 0
          %577 = vst.msk [vmem:[#allocation3 + $0xb0] sm:$0xf] %vm532, 0
          %578 = vst.msk [vmem:[#allocation3 + $0xb4] sm:$0xf] %vm532, 0
          %579 = vst.msk [vmem:[#allocation3 + $0xb8] sm:$0xf] %vm532, 0
          %580 = vst.msk [vmem:[#allocation3 + $0xbc] sm:$0xf] %vm532, 0
          %581 = vst.msk [vmem:[#allocation3 + $0xc0] sm:$0xf] %vm532, 0
          %582 = vst.msk [vmem:[#allocation3 + $0xc4] sm:$0xf] %vm532, 0
          %583 = vst.msk [vmem:[#allocation3 + $0xc8] sm:$0xf] %vm532, 0
          %584 = vst.msk [vmem:[#allocation3 + $0xcc] sm:$0xf] %vm532, 0
          %585 = vst.msk [vmem:[#allocation3 + $0xd0] sm:$0xf] %vm532, 0
          %586 = vst.msk [vmem:[#allocation3 + $0xd4] sm:$0xf] %vm532, 0
          %587 = vst.msk [vmem:[#allocation3 + $0xd8] sm:$0xf] %vm532, 0
          %588 = vst.msk [vmem:[#allocation3 + $0xdc] sm:$0xf] %vm532, 0
          %589 = vst.msk [vmem:[#allocation3 + $0xe0] sm:$0xf] %vm532, 0
          %590 = vst.msk [vmem:[#allocation3 + $0xe4] sm:$0xf] %vm532, 0
          %591 = vst.msk [vmem:[#allocation3 + $0xe8] sm:$0xf] %vm532, 0
          %592 = vst.msk [vmem:[#allocation3 + $0xec] sm:$0xf] %vm532, 0
          %593 = vst.msk [vmem:[#allocation3 + $0xf0] sm:$0xf] %vm532, 0
          %594 = vst.msk [vmem:[#allocation3 + $0xf4] sm:$0xf] %vm532, 0
          %595 = vst.msk [vmem:[#allocation3 + $0xf8] sm:$0xf] %vm532, 0
          %596 = vst.msk [vmem:[#allocation3 + $0xfc] sm:$0xf] %vm532, 0
          %597 = vst.msk [vmem:[#allocation3 + $0x100] sm:$0xf] %vm532, 0
          %598 = vst.msk [vmem:[#allocation3 + $0x104] sm:$0xf] %vm532, 0
          %599 = vst.msk [vmem:[#allocation3 + $0x108] sm:$0xf] %vm532, 0
          %600 = vst.msk [vmem:[#allocation3 + $0x10c] sm:$0xf] %vm532, 0
          %601 = vst.msk [vmem:[#allocation3 + $0x110] sm:$0xf] %vm532, 0
          %602 = vst.msk [vmem:[#allocation3 + $0x114] sm:$0xf] %vm532, 0
          %603 = vst.msk [vmem:[#allocation3 + $0x118] sm:$0xf] %vm532, 0
          %604 = vst.msk [vmem:[#allocation3 + $0x11c] sm:$0xf] %vm532, 0
          %605 = vst.msk [vmem:[#allocation3 + $0x120] sm:$0xf] %vm532, 0
          %606 = vst.msk [vmem:[#allocation3 + $0x124] sm:$0xf] %vm532, 0
          %607 = vst.msk [vmem:[#allocation3 + $0x128] sm:$0xf] %vm532, 0
          %608 = vst.msk [vmem:[#allocation3 + $0x12c] sm:$0xf] %vm532, 0
          %609 = vst.msk [vmem:[#allocation3 + $0x130] sm:$0xf] %vm532, 0
          %610 = vst.msk [vmem:[#allocation3 + $0x134] sm:$0xf] %vm532, 0
          %611 = vst.msk [vmem:[#allocation3 + $0x138] sm:$0xf] %vm532, 0
          %612 = vst.msk [vmem:[#allocation3 + $0x13c] sm:$0xf] %vm532, 0
          %613 = vst.msk [vmem:[#allocation3 + $0x140] sm:$0xf] %vm532, 0
          %614 = vst.msk [vmem:[#allocation3 + $0x144] sm:$0xf] %vm532, 0
          %615 = vst.msk [vmem:[#allocation3 + $0x148] sm:$0xf] %vm532, 0
          %616 = vst.msk [vmem:[#allocation3 + $0x14c] sm:$0xf] %vm532, 0
          %617 = vst.msk [vmem:[#allocation3 + $0x150] sm:$0xf] %vm532, 0
          %618 = vst.msk [vmem:[#allocation3 + $0x154] sm:$0xf] %vm532, 0
          %619 = vst.msk [vmem:[#allocation3 + $0x158] sm:$0xf] %vm532, 0
          %620 = vst.msk [vmem:[#allocation3 + $0x15c] sm:$0xf] %vm532, 0
          %621 = vst.msk [vmem:[#allocation3 + $0x160] sm:$0xf] %vm532, 0
          %622 = vst.msk [vmem:[#allocation3 + $0x164] sm:$0xf] %vm532, 0
          %623 = vst.msk [vmem:[#allocation3 + $0x168] sm:$0xf] %vm532, 0
          %624 = vst.msk [vmem:[#allocation3 + $0x16c] sm:$0xf] %vm532, 0
          %625 = vst.msk [vmem:[#allocation3 + $0x170] sm:$0xf] %vm532, 0
          %626 = vst.msk [vmem:[#allocation3 + $0x174] sm:$0xf] %vm532, 0
          %627 = vst.msk [vmem:[#allocation3 + $0x178] sm:$0xf] %vm532, 0
          %628 = vst.msk [vmem:[#allocation3 + $0x17c] sm:$0xf] %vm532, 0
        $region64: #{tpu_custom_call.1} parent=51 // pred_fallthru
          _
        %p629 = scmp.lt.s32.totalorder %s38, 4
        // Predicated region
        $region65: #{tpu_custom_call.1} parent=51 // pred_check
          %p630 = pneg %p629
        $region66: #{tpu_custom_call.1} parent=51 // pred_check_branch
          %632 = sbr.rel (%p630) target = $region68
        $region67: #{tpu_custom_call.1} parent=51 // pred_region
          %v633 = vld [vmem:[%s357] sm:$0xff]
          %v634 = vld [vmem:[%s357 + $0x8] sm:$0xff]
          %v635 = vld [vmem:[%s357 + $0x10] sm:$0xff]
          %v636 = vld [vmem:[%s357 + $0x18] sm:$0xff]
          %v637 = vld [vmem:[%s357 + $0x20] sm:$0xff]
          %v638 = vld [vmem:[%s357 + $0x28] sm:$0xff]
          %v639 = vld [vmem:[%s357 + $0x30] sm:$0xff]
          %v640 = vld [vmem:[%s357 + $0x38] sm:$0xff]
          %641 = vxpose.xlu0.b32.start [1/16] %v633, 128
          %642 = vxpose.xlu0.b32.cont [2/16] %v635, 128
          %643 = vxpose.xlu0.b32.cont [3/16] %v637, 128
          %644 = vxpose.xlu0.b32.cont [4/16] %v639, 128
          %645 = vxpose.xlu0.b32.cont [5/16] 0.0, 128
          %646 = vxpose.xlu0.b32.cont [6/16] 0.0, 128
          %647 = vxpose.xlu0.b32.cont [7/16] 0.0, 128
          %648 = vxpose.xlu0.b32.cont [8/16] 0.0, 128
          %649 = vxpose.xlu0.b32.cont [9/16] 0.0, 128
          %650 = vxpose.xlu0.b32.cont [10/16] 0.0, 128
          %651 = vxpose.xlu0.b32.cont [11/16] 0.0, 128
          %652 = vxpose.xlu0.b32.cont [12/16] 0.0, 128
          %653 = vxpose.xlu0.b32.cont [13/16] 0.0, 128
          %654 = vxpose.xlu0.b32.cont [14/16] 0.0, 128
          %655 = vxpose.xlu0.b32.cont [15/16] 0.0, 128
          %656 = vxpose.xlu0.b32.end [16/16] 0.0, 128
          %v657 = vpop.trf.xlu0
          %v658 = vpop.trf.xlu0
          %v659 = vpop.trf.xlu0
          %v660 = vpop.trf.xlu0
          %v661 = vpop.trf.xlu0
          %v662 = vpop.trf.xlu0
          %v663 = vpop.trf.xlu0
          %v664 = vpop.trf.xlu0
          %v665 = vpop.trf.xlu0
          %v666 = vpop.trf.xlu0
          %v667 = vpop.trf.xlu0
          %v668 = vpop.trf.xlu0
          %v669 = vpop.trf.xlu0
          %v670 = vpop.trf.xlu0
          %v671 = vpop.trf.xlu0
          %v672 = vpop.trf.xlu0
          %673 = vxpose.xlu0.b32.start [1/16] %v634, 128
          %674 = vxpose.xlu0.b32.cont [2/16] %v636, 128
          %675 = vxpose.xlu0.b32.cont [3/16] %v638, 128
          %676 = vxpose.xlu0.b32.cont [4/16] %v640, 128
          %677 = vxpose.xlu0.b32.cont [5/16] 0.0, 128
          %678 = vxpose.xlu0.b32.cont [6/16] 0.0, 128
          %679 = vxpose.xlu0.b32.cont [7/16] 0.0, 128
          %680 = vxpose.xlu0.b32.cont [8/16] 0.0, 128
          %681 = vxpose.xlu0.b32.cont [9/16] 0.0, 128
          %682 = vxpose.xlu0.b32.cont [10/16] 0.0, 128
          %683 = vxpose.xlu0.b32.cont [11/16] 0.0, 128
          %684 = vxpose.xlu0.b32.cont [12/16] 0.0, 128
          %685 = vxpose.xlu0.b32.cont [13/16] 0.0, 128
          %686 = vxpose.xlu0.b32.cont [14/16] 0.0, 128
          %687 = vxpose.xlu0.b32.cont [15/16] 0.0, 128
          %688 = vxpose.xlu0.b32.end [16/16] 0.0, 128
          %v689 = vpop.trf.xlu0
          %v690 = vpop.trf.xlu0
          %v691 = vpop.trf.xlu0
          %v692 = vpop.trf.xlu0
          %v693 = vpop.trf.xlu0
          %v694 = vpop.trf.xlu0
          %v695 = vpop.trf.xlu0
          %v696 = vpop.trf.xlu0
          %v697 = vpop.trf.xlu0
          %v698 = vpop.trf.xlu0
          %v699 = vpop.trf.xlu0
          %v700 = vpop.trf.xlu0
          %v701 = vpop.trf.xlu0
          %v702 = vpop.trf.xlu0
          %v703 = vpop.trf.xlu0
          %v704 = vpop.trf.xlu0
          %v705 = vld [vmem:[#allocation9] sm:$0xff]
          %v706 = vld [vmem:[#allocation9 + $0x8] sm:$0xff]
          %v707 = vld [vmem:[#allocation9 + $0x10] sm:$0xff]
          %v708 = vld [vmem:[#allocation9 + $0x18] sm:$0xff]
          %vm709 = vcmask 261120
          %v710 = vsel %vm709, %v657, 0.0
          %v711 = vsel %vm709, %v658, 0.0
          %v712 = vadd.f32 %v710, %v711
          %v713 = vsel %vm709, %v659, 0.0
          %v714 = vadd.f32 %v712, %v713
          %v715 = vsel %vm709, %v660, 0.0
          %v716 = vadd.f32 %v714, %v715
          %v717 = vsel %vm709, %v661, 0.0
          %v718 = vadd.f32 %v716, %v717
          %v719 = vsel %vm709, %v662, 0.0
          %v720 = vadd.f32 %v718, %v719
          %v721 = vsel %vm709, %v663, 0.0
          %v722 = vadd.f32 %v720, %v721
          %v723 = vsel %vm709, %v664, 0.0
          %v724 = vadd.f32 %v722, %v723
          %v725 = vsel %vm709, %v665, 0.0
          %v726 = vadd.f32 %v724, %v725
          %v727 = vsel %vm709, %v666, 0.0
          %v728 = vadd.f32 %v726, %v727
          %v729 = vsel %vm709, %v667, 0.0
          %v730 = vadd.f32 %v728, %v729
          %v731 = vsel %vm709, %v668, 0.0
          %v732 = vadd.f32 %v730, %v731
          %v733 = vsel %vm709, %v669, 0.0
          %v734 = vadd.f32 %v732, %v733
          %v735 = vsel %vm709, %v670, 0.0
          %v736 = vadd.f32 %v734, %v735
          %v737 = vsel %vm709, %v671, 0.0
          %v738 = vadd.f32 %v736, %v737
          %v739 = vsel %vm709, %v672, 0.0
          %v740 = vadd.f32 %v738, %v739
          %v741 = vsel %vm709, %v689, 0.0
          %v742 = vadd.f32 %v740, %v741
          %v743 = vsel %vm709, %v690, 0.0
          %v744 = vadd.f32 %v742, %v743
          %v745 = vsel %vm709, %v691, 0.0
          %v746 = vadd.f32 %v744, %v745
          %v747 = vsel %vm709, %v692, 0.0
          %v748 = vadd.f32 %v746, %v747
          %v749 = vsel %vm709, %v693, 0.0
          %v750 = vadd.f32 %v748, %v749
          %v751 = vsel %vm709, %v694, 0.0
          %v752 = vadd.f32 %v750, %v751
          %v753 = vsel %vm709, %v695, 0.0
          %v754 = vadd.f32 %v752, %v753
          %v755 = vsel %vm709, %v696, 0.0
          %v756 = vadd.f32 %v754, %v755
          %v757 = vsel %vm709, %v697, 0.0
          %v758 = vadd.f32 %v756, %v757
          %v759 = vsel %vm709, %v698, 0.0
          %v760 = vadd.f32 %v758, %v759
          %v761 = vsel %vm709, %v699, 0.0
          %v762 = vadd.f32 %v760, %v761
          %v763 = vsel %vm709, %v700, 0.0
          %v764 = vadd.f32 %v762, %v763
          %v765 = vsel %vm709, %v701, 0.0
          %v766 = vadd.f32 %v764, %v765
          %v767 = vsel %vm709, %v702, 0.0
          %v768 = vadd.f32 %v766, %v767
          %v769 = vsel %vm709, %v703, 0.0
          %v770 = vadd.f32 %v768, %v769
          %v771 = vsel %vm709, %v704, 0.0
          %v772 = vadd.f32 %v770, %v771
          %v773 = vrot.slane %v772, 4
          %v774 = vadd.f32 %v772, %v773
          %v775 = vrot.slane %v774, 2
          %v776 = vadd.f32 %v774, %v775
          %v777 = vrot.slane %v776, 1
          %v778 = vadd.f32 %v776, %v777
          %v780 = vsel %vm709, %v778, 0
          %782 = vmatprep.subr.mxu0 0.0
          %783 = vmatpush1.msra.mxu0 0.0
          %784 = vmatprep.subr.mxu0 0.0
          %785 = vmatpush1.msra.mxu0 0.0
          %786 = vmatprep.subr.mxu0 0.0
          %787 = vmatpush1.msra.mxu0 0.0
          %788 = vmatprep.subr.mxu0 0.0
          %789 = vmatpush1.msra.mxu0 0.0
          %790 = vmatprep.subr.mxu0 0.0
          %791 = vmatpush1.msra.mxu0 0.0
          %792 = vmatprep.subr.mxu0 0.0
          %793 = vmatpush1.msra.mxu0 0.0
          %794 = vmatprep.subr.mxu0 0.0
          %795 = vmatpush1.msra.mxu0 0.0
          %796 = vmatprep.subr.mxu0 0.0
          %797 = vmatpush1.msra.mxu0 0.0
          %798 = vmatprep.subr.mxu0 0.0
          %799 = vmatpush1.msra.mxu0 0.0
          %800 = vmatprep.subr.mxu0 0.0
          %801 = vmatpush1.msra.mxu0 0.0
          %802 = vmatprep.subr.mxu0 0.0
          %803 = vmatpush1.msra.mxu0 0.0
          %804 = vmatprep.subr.mxu0 0.0
          %805 = vmatpush1.msra.mxu0 0.0
          %806 = vmatprep.subr.mxu0 0.0
          %807 = vmatpush1.msra.mxu0 %v708
          %808 = vmatprep.subr.mxu0 0.0
          %809 = vmatpush1.msra.mxu0 %v707
          %810 = vmatprep.subr.mxu0 0.0
          %811 = vmatpush1.msra.mxu0 %v706
          %812 = vmatprep.subr.mxu0 0.0
          %813 = vmatpush1.msra.mxu0 %v705
          %814 = vmatprep.subr.mxu0 0.0
          %815 = vmatpush2.msra.mxu0 0.0
          %816 = vmatprep.subr.mxu0 0.0
          %817 = vmatpush2.msra.mxu0 0.0
          %818 = vmatprep.subr.mxu0 0.0
          %819 = vmatpush2.msra.mxu0 0.0
          %820 = vmatprep.subr.mxu0 0.0
          %821 = vmatpush2.msra.mxu0 0.0
          %822 = vmatprep.subr.mxu0 0.0
          %823 = vmatpush2.msra.mxu0 0.0
          %824 = vmatprep.subr.mxu0 0.0
          %825 = vmatpush2.msra.mxu0 0.0
          %826 = vmatprep.subr.mxu0 0.0
          %827 = vmatpush2.msra.mxu0 0.0
          %828 = vmatprep.subr.mxu0 0.0
          %829 = vmatpush2.msra.mxu0 0.0
          %830 = vmatprep.subr.mxu0 0.0
          %831 = vmatpush2.msra.mxu0 0.0
          %832 = vmatprep.subr.mxu0 0.0
          %833 = vmatpush2.msra.mxu0 0.0
          %834 = vmatprep.subr.mxu0 0.0
          %835 = vmatpush2.msra.mxu0 0.0
          %836 = vmatprep.subr.mxu0 0.0
          %837 = vmatpush2.msra.mxu0 0.0
          %838 = vmatprep.subr.mxu0 0.0
          %839 = vmatpush2.msra.mxu0 0.0
          %840 = vmatprep.subr.mxu0 0.0
          %841 = vmatpush2.msra.mxu0 0.0
          %842 = vmatprep.subr.mxu0 0.0
          %843 = vmatpush2.msra.mxu0 0.0
          %844 = vmatprep.subr.mxu0 0.0
          %845 = vmatpush2.msra.mxu0 0.0
          %846 = vmatprep.mubr.f32.mxu0 0.0
          %847 = vmatmul.mubr.f32.gmra.mxu0 %v780
          %v848 = vpop.f32.mrf.mxu0
          %v849 = vadd.f32 0.0, %v848
          %v850 = vpop.f32.mrf.mxu0
          %851 = vdwg.mxu0
          %v852 = vlaneseq
          %v853 = vshrl.u32 %v852, 7
          %v854 = vsub.s32 0, %v853
          %v855 = vrot.slane %v849, %v854
          %v856 = vsub.f32 %v657, %v855
          %v857 = vsub.f32 %v658, %v855
          %v858 = vsub.f32 %v659, %v855
          %v859 = vsub.f32 %v660, %v855
          %v860 = vsub.f32 %v661, %v855
          %v861 = vsub.f32 %v662, %v855
          %v862 = vsub.f32 %v663, %v855
          %v863 = vsub.f32 %v664, %v855
          %v864 = vsub.f32 %v665, %v855
          %v865 = vsub.f32 %v666, %v855
          %v866 = vsub.f32 %v667, %v855
          %v867 = vsub.f32 %v668, %v855
          %v868 = vsub.f32 %v669, %v855
          %v869 = vsub.f32 %v670, %v855
          %v870 = vsub.f32 %v671, %v855
          %v871 = vsub.f32 %v672, %v855
          %v872 = vsub.f32 %v689, %v855
          %v873 = vsub.f32 %v690, %v855
          %v874 = vsub.f32 %v691, %v855
          %v875 = vsub.f32 %v692, %v855
          %v876 = vsub.f32 %v693, %v855
          %v877 = vsub.f32 %v694, %v855
          %v878 = vsub.f32 %v695, %v855
          %v879 = vsub.f32 %v696, %v855
          %v880 = vsub.f32 %v697, %v855
          %v881 = vsub.f32 %v698, %v855
          %v882 = vsub.f32 %v699, %v855
          %v883 = vsub.f32 %v700, %v855
          %v884 = vsub.f32 %v701, %v855
          %v885 = vsub.f32 %v702, %v855
          %v886 = vsub.f32 %v703, %v855
          %v887 = vsub.f32 %v704, %v855
          %v888 = vmul.f32 %v856, %v856
          %v889 = vmul.f32 %v857, %v857
          %v890 = vmul.f32 %v858, %v858
          %v891 = vmul.f32 %v859, %v859
          %v892 = vmul.f32 %v860, %v860
          %v893 = vmul.f32 %v861, %v861
          %v894 = vmul.f32 %v862, %v862
          %v895 = vmul.f32 %v863, %v863
          %v896 = vmul.f32 %v864, %v864
          %v897 = vmul.f32 %v865, %v865
          %v898 = vmul.f32 %v866, %v866
          %v899 = vmul.f32 %v867, %v867
          %v900 = vmul.f32 %v868, %v868
          %v901 = vmul.f32 %v869, %v869
          %v902 = vmul.f32 %v870, %v870
          %v903 = vmul.f32 %v871, %v871
          %v904 = vmul.f32 %v872, %v872
          %v905 = vmul.f32 %v873, %v873
          %v906 = vmul.f32 %v874, %v874
          %v907 = vmul.f32 %v875, %v875
          %v908 = vmul.f32 %v876, %v876
          %v909 = vmul.f32 %v877, %v877
          %v910 = vmul.f32 %v878, %v878
          %v911 = vmul.f32 %v879, %v879
          %v912 = vmul.f32 %v880, %v880
          %v913 = vmul.f32 %v881, %v881
          %v914 = vmul.f32 %v882, %v882
          %v915 = vmul.f32 %v883, %v883
          %v916 = vmul.f32 %v884, %v884
          %v917 = vmul.f32 %v885, %v885
          %v918 = vmul.f32 %v886, %v886
          %v919 = vmul.f32 %v887, %v887
          %v920 = vsel %vm709, %v888, 0.0
          %v921 = vsel %vm709, %v889, 0.0
          %v922 = vadd.f32 %v920, %v921
          %v923 = vsel %vm709, %v890, 0.0
          %v924 = vadd.f32 %v922, %v923
          %v925 = vsel %vm709, %v891, 0.0
          %v926 = vadd.f32 %v924, %v925
          %v927 = vsel %vm709, %v892, 0.0
          %v928 = vadd.f32 %v926, %v927
          %v929 = vsel %vm709, %v893, 0.0
          %v930 = vadd.f32 %v928, %v929
          %v931 = vsel %vm709, %v894, 0.0
          %v932 = vadd.f32 %v930, %v931
          %v933 = vsel %vm709, %v895, 0.0
          %v934 = vadd.f32 %v932, %v933
          %v935 = vsel %vm709, %v896, 0.0
          %v936 = vadd.f32 %v934, %v935
          %v937 = vsel %vm709, %v897, 0.0
          %v938 = vadd.f32 %v936, %v937
          %v939 = vsel %vm709, %v898, 0.0
          %v940 = vadd.f32 %v938, %v939
          %v941 = vsel %vm709, %v899, 0.0
          %v942 = vadd.f32 %v940, %v941
          %v943 = vsel %vm709, %v900, 0.0
          %v944 = vadd.f32 %v942, %v943
          %v945 = vsel %vm709, %v901, 0.0
          %v946 = vadd.f32 %v944, %v945
          %v947 = vsel %vm709, %v902, 0.0
          %v948 = vadd.f32 %v946, %v947
          %v949 = vsel %vm709, %v903, 0.0
          %v950 = vadd.f32 %v948, %v949
          %v951 = vsel %vm709, %v904, 0.0
          %v952 = vadd.f32 %v950, %v951
          %v953 = vsel %vm709, %v905, 0.0
          %v954 = vadd.f32 %v952, %v953
          %v955 = vsel %vm709, %v906, 0.0
          %v956 = vadd.f32 %v954, %v955
          %v957 = vsel %vm709, %v907, 0.0
          %v958 = vadd.f32 %v956, %v957
          %v959 = vsel %vm709, %v908, 0.0
          %v960 = vadd.f32 %v958, %v959
          %v961 = vsel %vm709, %v909, 0.0
          %v962 = vadd.f32 %v960, %v961
          %v963 = vsel %vm709, %v910, 0.0
          %v964 = vadd.f32 %v962, %v963
          %v965 = vsel %vm709, %v911, 0.0
          %v966 = vadd.f32 %v964, %v965
          %v967 = vsel %vm709, %v912, 0.0
          %v968 = vadd.f32 %v966, %v967
          %v969 = vsel %vm709, %v913, 0.0
          %v970 = vadd.f32 %v968, %v969
          %v971 = vsel %vm709, %v914, 0.0
          %v972 = vadd.f32 %v970, %v971
          %v973 = vsel %vm709, %v915, 0.0
          %v974 = vadd.f32 %v972, %v973
          %v975 = vsel %vm709, %v916, 0.0
          %v976 = vadd.f32 %v974, %v975
          %v977 = vsel %vm709, %v917, 0.0
          %v978 = vadd.f32 %v976, %v977
          %v979 = vsel %vm709, %v918, 0.0
          %v980 = vadd.f32 %v978, %v979
          %v981 = vsel %vm709, %v919, 0.0
          %v982 = vadd.f32 %v980, %v981
          %v983 = vrot.slane %v982, 4
          %v984 = vadd.f32 %v982, %v983
          %v985 = vrot.slane %v984, 2
          %v986 = vadd.f32 %v984, %v985
          %v987 = vrot.slane %v986, 1
          %v988 = vadd.f32 %v986, %v987
          %p989 = scmp.lt.s32.totalorder %s38, 3
          %s990 = scalar_select %p989, %s38, 3
          %s991 = scalar_lea.vmem %s407, %s990
          %v992 = vld [vmem:[%s991] sm:$0x1]
          %v993 = vadd.f32 %v992, 1.0
          %s994 = scalar_lea.vmem %s411, %s990
          %v995 = vld [vmem:[%s994] sm:$0x1]
          %v997 = vsel %vm709, %v988, 0
          %999 = vmatprep.subr.mxu0 0.0
          %1000 = vmatpush1.msra.mxu0 0.0
          %1001 = vmatprep.subr.mxu0 0.0
          %1002 = vmatpush1.msra.mxu0 0.0
          %1003 = vmatprep.subr.mxu0 0.0
          %1004 = vmatpush1.msra.mxu0 0.0
          %1005 = vmatprep.subr.mxu0 0.0
          %1006 = vmatpush1.msra.mxu0 0.0
          %1007 = vmatprep.subr.mxu0 0.0
          %1008 = vmatpush1.msra.mxu0 0.0
          %1009 = vmatprep.subr.mxu0 0.0
          %1010 = vmatpush1.msra.mxu0 0.0
          %1011 = vmatprep.subr.mxu0 0.0
          %1012 = vmatpush1.msra.mxu0 0.0
          %1013 = vmatprep.subr.mxu0 0.0
          %1014 = vmatpush1.msra.mxu0 0.0
          %1015 = vmatprep.subr.mxu0 0.0
          %1016 = vmatpush1.msra.mxu0 0.0
          %1017 = vmatprep.subr.mxu0 0.0
          %1018 = vmatpush1.msra.mxu0 0.0
          %1019 = vmatprep.subr.mxu0 0.0
          %1020 = vmatpush1.msra.mxu0 0.0
          %1021 = vmatprep.subr.mxu0 0.0
          %1022 = vmatpush1.msra.mxu0 0.0
          %1023 = vmatprep.subr.mxu0 0.0
          %1024 = vmatpush1.msra.mxu0 %v708
          %1025 = vmatprep.subr.mxu0 0.0
          %1026 = vmatpush1.msra.mxu0 %v707
          %1027 = vmatprep.subr.mxu0 0.0
          %1028 = vmatpush1.msra.mxu0 %v706
          %1029 = vmatprep.subr.mxu0 0.0
          %1030 = vmatpush1.msra.mxu0 %v705
          %1031 = vmatprep.subr.mxu0 0.0
          %1032 = vmatpush2.msra.mxu0 0.0
          %1033 = vmatprep.subr.mxu0 0.0
          %1034 = vmatpush2.msra.mxu0 0.0
          %1035 = vmatprep.subr.mxu0 0.0
          %1036 = vmatpush2.msra.mxu0 0.0
          %1037 = vmatprep.subr.mxu0 0.0
          %1038 = vmatpush2.msra.mxu0 0.0
          %1039 = vmatprep.subr.mxu0 0.0
          %1040 = vmatpush2.msra.mxu0 0.0
          %1041 = vmatprep.subr.mxu0 0.0
          %1042 = vmatpush2.msra.mxu0 0.0
          %1043 = vmatprep.subr.mxu0 0.0
          %1044 = vmatpush2.msra.mxu0 0.0
          %1045 = vmatprep.subr.mxu0 0.0
          %1046 = vmatpush2.msra.mxu0 0.0
          %1047 = vmatprep.subr.mxu0 0.0
          %1048 = vmatpush2.msra.mxu0 0.0
          %1049 = vmatprep.subr.mxu0 0.0
          %1050 = vmatpush2.msra.mxu0 0.0
          %1051 = vmatprep.subr.mxu0 0.0
          %1052 = vmatpush2.msra.mxu0 0.0
          %1053 = vmatprep.subr.mxu0 0.0
          %1054 = vmatpush2.msra.mxu0 0.0
          %1055 = vmatprep.subr.mxu0 0.0
          %1056 = vmatpush2.msra.mxu0 0.0
          %1057 = vmatprep.subr.mxu0 0.0
          %1058 = vmatpush2.msra.mxu0 0.0
          %1059 = vmatprep.subr.mxu0 0.0
          %1060 = vmatpush2.msra.mxu0 0.0
          %1061 = vmatprep.subr.mxu0 0.0
          %1062 = vmatpush2.msra.mxu0 0.0
          %1063 = vmatprep.mubr.f32.mxu0 0.0
          %1064 = vmatmul.mubr.f32.gmra.mxu0 %v997
          %v1065 = vpop.f32.mrf.mxu0
          %v1066 = vadd.f32 1e-05, %v1065
          %v1067 = vpop.f32.mrf.mxu0
          %1068 = vdwg.mxu0
          %v1069 = vrsqrt.pop %v1066
          %v1070 = vmul.f32 %v1069, %v993
          %v1071 = vlaneseq
          %v1072 = vshrl.u32 %v1071, 7
          %v1073 = vsub.s32 0, %v1072
          %v1074 = vrot.slane %v1070, %v1073
          %v1075 = vmul.f32 %v856, %v1074
          %v1076 = vmul.f32 %v857, %v1074
          %v1077 = vmul.f32 %v858, %v1074
          %v1078 = vmul.f32 %v859, %v1074
          %v1079 = vmul.f32 %v860, %v1074
          %v1080 = vmul.f32 %v861, %v1074
          %v1081 = vmul.f32 %v862, %v1074
          %v1082 = vmul.f32 %v863, %v1074
          %v1083 = vmul.f32 %v864, %v1074
          %v1084 = vmul.f32 %v865, %v1074
          %v1085 = vmul.f32 %v866, %v1074
          %v1086 = vmul.f32 %v867, %v1074
          %v1087 = vmul.f32 %v868, %v1074
          %v1088 = vmul.f32 %v869, %v1074
          %v1089 = vmul.f32 %v870, %v1074
          %v1090 = vmul.f32 %v871, %v1074
          %v1091 = vmul.f32 %v872, %v1074
          %v1092 = vmul.f32 %v873, %v1074
          %v1093 = vmul.f32 %v874, %v1074
          %v1094 = vmul.f32 %v875, %v1074
          %v1095 = vmul.f32 %v876, %v1074
          %v1096 = vmul.f32 %v877, %v1074
          %v1097 = vmul.f32 %v878, %v1074
          %v1098 = vmul.f32 %v879, %v1074
          %v1099 = vmul.f32 %v880, %v1074
          %v1100 = vmul.f32 %v881, %v1074
          %v1101 = vmul.f32 %v882, %v1074
          %v1102 = vmul.f32 %v883, %v1074
          %v1103 = vmul.f32 %v884, %v1074
          %v1104 = vmul.f32 %v885, %v1074
          %v1105 = vmul.f32 %v886, %v1074
          %v1106 = vmul.f32 %v887, %v1074
          %v1107 = vlaneseq
          %v1108 = vshrl.u32 %v1107, 7
          %v1109 = vsub.s32 0, %v1108
          %v1110 = vrot.slane %v995, %v1109
          %v1111 = vadd.f32 %v1075, %v1110
          %v1112 = vadd.f32 %v1076, %v1110
          %v1113 = vadd.f32 %v1077, %v1110
          %v1114 = vadd.f32 %v1078, %v1110
          %v1115 = vadd.f32 %v1079, %v1110
          %v1116 = vadd.f32 %v1080, %v1110
          %v1117 = vadd.f32 %v1081, %v1110
          %v1118 = vadd.f32 %v1082, %v1110
          %v1119 = vadd.f32 %v1083, %v1110
          %v1120 = vadd.f32 %v1084, %v1110
          %v1121 = vadd.f32 %v1085, %v1110
          %v1122 = vadd.f32 %v1086, %v1110
          %v1123 = vadd.f32 %v1087, %v1110
          %v1124 = vadd.f32 %v1088, %v1110
          %v1125 = vadd.f32 %v1089, %v1110
          %v1126 = vadd.f32 %v1090, %v1110
          %v1127 = vadd.f32 %v1091, %v1110
          %v1128 = vadd.f32 %v1092, %v1110
          %v1129 = vadd.f32 %v1093, %v1110
          %v1130 = vadd.f32 %v1094, %v1110
          %v1131 = vadd.f32 %v1095, %v1110
          %v1132 = vadd.f32 %v1096, %v1110
          %v1133 = vadd.f32 %v1097, %v1110
          %v1134 = vadd.f32 %v1098, %v1110
          %v1135 = vadd.f32 %v1099, %v1110
          %v1136 = vadd.f32 %v1100, %v1110
          %v1137 = vadd.f32 %v1101, %v1110
          %v1138 = vadd.f32 %v1102, %v1110
          %v1139 = vadd.f32 %v1103, %v1110
          %v1140 = vadd.f32 %v1104, %v1110
          %v1141 = vadd.f32 %v1105, %v1110
          %v1142 = vadd.f32 %v1106, %v1110
          %v1143 = vxor.u32 %v1111, 2147483648
          %v1144 = vxor.u32 %v1112, 2147483648
          %v1145 = vxor.u32 %v1113, 2147483648
          %v1146 = vxor.u32 %v1114, 2147483648
          %v1147 = vxor.u32 %v1115, 2147483648
          %v1148 = vxor.u32 %v1116, 2147483648
          %v1149 = vxor.u32 %v1117, 2147483648
          %v1150 = vxor.u32 %v1118, 2147483648
          %v1151 = vxor.u32 %v1119, 2147483648
          %v1152 = vxor.u32 %v1120, 2147483648
          %v1153 = vxor.u32 %v1121, 2147483648
          %v1154 = vxor.u32 %v1122, 2147483648
          %v1155 = vxor.u32 %v1123, 2147483648
          %v1156 = vxor.u32 %v1124, 2147483648
          %v1157 = vxor.u32 %v1125, 2147483648
          %v1158 = vxor.u32 %v1126, 2147483648
          %v1159 = vxor.u32 %v1127, 2147483648
          %v1160 = vxor.u32 %v1128, 2147483648
          %v1161 = vxor.u32 %v1129, 2147483648
          %v1162 = vxor.u32 %v1130, 2147483648
          %v1163 = vxor.u32 %v1131, 2147483648
          %v1164 = vxor.u32 %v1132, 2147483648
          %v1165 = vxor.u32 %v1133, 2147483648
          %v1166 = vxor.u32 %v1134, 2147483648
          %v1167 = vxor.u32 %v1135, 2147483648
          %v1168 = vxor.u32 %v1136, 2147483648
          %v1169 = vxor.u32 %v1137, 2147483648
          %v1170 = vxor.u32 %v1138, 2147483648
          %v1171 = vxor.u32 %v1139, 2147483648
          %v1172 = vxor.u32 %v1140, 2147483648
          %v1173 = vxor.u32 %v1141, 2147483648
          %v1174 = vxor.u32 %v1142, 2147483648
          %v1175 = vmul.f32 %v1143, 1.442695
          %v1176 = vpow.pop %v1175
          %v1177 = vmul.f32 %v1144, 1.442695
          %v1178 = vpow.pop %v1177
          %v1179 = vmul.f32 %v1145, 1.442695
          %v1180 = vpow.pop %v1179
          %v1181 = vmul.f32 %v1146, 1.442695
          %v1182 = vpow.pop %v1181
          %v1183 = vmul.f32 %v1147, 1.442695
          %v1184 = vpow.pop %v1183
          %v1185 = vmul.f32 %v1148, 1.442695
          %v1186 = vpow.pop %v1185
          %v1187 = vmul.f32 %v1149, 1.442695
          %v1188 = vpow.pop %v1187
          %v1189 = vmul.f32 %v1150, 1.442695
          %v1190 = vpow.pop %v1189
          %v1191 = vmul.f32 %v1151, 1.442695
          %v1192 = vpow.pop %v1191
          %v1193 = vmul.f32 %v1152, 1.442695
          %v1194 = vpow.pop %v1193
          %v1195 = vmul.f32 %v1153, 1.442695
          %v1196 = vpow.pop %v1195
          %v1197 = vmul.f32 %v1154, 1.442695
          %v1198 = vpow.pop %v1197
          %v1199 = vmul.f32 %v1155, 1.442695
          %v1200 = vpow.pop %v1199
          %v1201 = vmul.f32 %v1156, 1.442695
          %v1202 = vpow.pop %v1201
          %v1203 = vmul.f32 %v1157, 1.442695
          %v1204 = vpow.pop %v1203
          %v1205 = vmul.f32 %v1158, 1.442695
          %v1206 = vpow.pop %v1205
          %v1207 = vmul.f32 %v1159, 1.442695
          %v1208 = vpow.pop %v1207
          %v1209 = vmul.f32 %v1160, 1.442695
          %v1210 = vpow.pop %v1209
          %v1211 = vmul.f32 %v1161, 1.442695
          %v1212 = vpow.pop %v1211
          %v1213 = vmul.f32 %v1162, 1.442695
          %v1214 = vpow.pop %v1213
          %v1215 = vmul.f32 %v1163, 1.442695
          %v1216 = vpow.pop %v1215
          %v1217 = vmul.f32 %v1164, 1.442695
          %v1218 = vpow.pop %v1217
          %v1219 = vmul.f32 %v1165, 1.442695
          %v1220 = vpow.pop %v1219
          %v1221 = vmul.f32 %v1166, 1.442695
          %v1222 = vpow.pop %v1221
          %v1223 = vmul.f32 %v1167, 1.442695
          %v1224 = vpow.pop %v1223
          %v1225 = vmul.f32 %v1168, 1.442695
          %v1226 = vpow.pop %v1225
          %v1227 = vmul.f32 %v1169, 1.442695
          %v1228 = vpow.pop %v1227
          %v1229 = vmul.f32 %v1170, 1.442695
          %v1230 = vpow.pop %v1229
          %v1231 = vmul.f32 %v1171, 1.442695
          %v1232 = vpow.pop %v1231
          %v1233 = vmul.f32 %v1172, 1.442695
          %v1234 = vpow.pop %v1233
          %v1235 = vmul.f32 %v1173, 1.442695
          %v1236 = vpow.pop %v1235
          %v1237 = vmul.f32 %v1174, 1.442695
          %v1238 = vpow.pop %v1237
          %v1239 = vadd.f32 %v1176, 1.0
          %v1240 = vadd.f32 %v1178, 1.0
          %v1241 = vadd.f32 %v1180, 1.0
          %v1242 = vadd.f32 %v1182, 1.0
          %v1243 = vadd.f32 %v1184, 1.0
          %v1244 = vadd.f32 %v1186, 1.0
          %v1245 = vadd.f32 %v1188, 1.0
          %v1246 = vadd.f32 %v1190, 1.0
          %v1247 = vadd.f32 %v1192, 1.0
          %v1248 = vadd.f32 %v1194, 1.0
          %v1249 = vadd.f32 %v1196, 1.0
          %v1250 = vadd.f32 %v1198, 1.0
          %v1251 = vadd.f32 %v1200, 1.0
          %v1252 = vadd.f32 %v1202, 1.0
          %v1253 = vadd.f32 %v1204, 1.0
          %v1254 = vadd.f32 %v1206, 1.0
          %v1255 = vadd.f32 %v1208, 1.0
          %v1256 = vadd.f32 %v1210, 1.0
          %v1257 = vadd.f32 %v1212, 1.0
          %v1258 = vadd.f32 %v1214, 1.0
          %v1259 = vadd.f32 %v1216, 1.0
          %v1260 = vadd.f32 %v1218, 1.0
          %v1261 = vadd.f32 %v1220, 1.0
          %v1262 = vadd.f32 %v1222, 1.0
          %v1263 = vadd.f32 %v1224, 1.0
          %v1264 = vadd.f32 %v1226, 1.0
          %v1265 = vadd.f32 %v1228, 1.0
          %v1266 = vadd.f32 %v1230, 1.0
          %v1267 = vadd.f32 %v1232, 1.0
          %v1268 = vadd.f32 %v1234, 1.0
          %v1269 = vadd.f32 %v1236, 1.0
          %v1270 = vadd.f32 %v1238, 1.0
          %v1271 = vrcp.pop %v1239
          %v1272 = vmul.f32 1.0, %v1271
          %v1273 = vrcp.pop %v1240
          %v1274 = vmul.f32 1.0, %v1273
          %v1275 = vrcp.pop %v1241
          %v1276 = vmul.f32 1.0, %v1275
          %v1277 = vrcp.pop %v1242
          %v1278 = vmul.f32 1.0, %v1277
          %v1279 = vrcp.pop %v1243
          %v1280 = vmul.f32 1.0, %v1279
          %v1281 = vrcp.pop %v1244
          %v1282 = vmul.f32 1.0, %v1281
          %v1283 = vrcp.pop %v1245
          %v1284 = vmul.f32 1.0, %v1283
          %v1285 = vrcp.pop %v1246
          %v1286 = vmul.f32 1.0, %v1285
          %v1287 = vrcp.pop %v1247
          %v1288 = vmul.f32 1.0, %v1287
          %v1289 = vrcp.pop %v1248
          %v1290 = vmul.f32 1.0, %v1289
          %v1291 = vrcp.pop %v1249
          %v1292 = vmul.f32 1.0, %v1291
          %v1293 = vrcp.pop %v1250
          %v1294 = vmul.f32 1.0, %v1293
          %v1295 = vrcp.pop %v1251
          %v1296 = vmul.f32 1.0, %v1295
          %v1297 = vrcp.pop %v1252
          %v1298 = vmul.f32 1.0, %v1297
          %v1299 = vrcp.pop %v1253
          %v1300 = vmul.f32 1.0, %v1299
          %v1301 = vrcp.pop %v1254
          %v1302 = vmul.f32 1.0, %v1301
          %v1303 = vrcp.pop %v1255
          %v1304 = vmul.f32 1.0, %v1303
          %v1305 = vrcp.pop %v1256
          %v1306 = vmul.f32 1.0, %v1305
          %v1307 = vrcp.pop %v1257
          %v1308 = vmul.f32 1.0, %v1307
          %v1309 = vrcp.pop %v1258
          %v1310 = vmul.f32 1.0, %v1309
          %v1311 = vrcp.pop %v1259
          %v1312 = vmul.f32 1.0, %v1311
          %v1313 = vrcp.pop %v1260
          %v1314 = vmul.f32 1.0, %v1313
          %v1315 = vrcp.pop %v1261
          %v1316 = vmul.f32 1.0, %v1315
          %v1317 = vrcp.pop %v1262
          %v1318 = vmul.f32 1.0, %v1317
          %v1319 = vrcp.pop %v1263
          %v1320 = vmul.f32 1.0, %v1319
          %v1321 = vrcp.pop %v1264
          %v1322 = vmul.f32 1.0, %v1321
          %v1323 = vrcp.pop %v1265
          %v1324 = vmul.f32 1.0, %v1323
          %v1325 = vrcp.pop %v1266
          %v1326 = vmul.f32 1.0, %v1325
          %v1327 = vrcp.pop %v1267
          %v1328 = vmul.f32 1.0, %v1327
          %v1329 = vrcp.pop %v1268
          %v1330 = vmul.f32 1.0, %v1329
          %v1331 = vrcp.pop %v1269
          %v1332 = vmul.f32 1.0, %v1331
          %v1333 = vrcp.pop %v1270
          %v1334 = vmul.f32 1.0, %v1333
          %v1335 = vmul.f32 %v1111, %v1272
          %v1336 = vmul.f32 %v1112, %v1274
          %v1337 = vmul.f32 %v1113, %v1276
          %v1338 = vmul.f32 %v1114, %v1278
          %v1339 = vmul.f32 %v1115, %v1280
          %v1340 = vmul.f32 %v1116, %v1282
          %v1341 = vmul.f32 %v1117, %v1284
          %v1342 = vmul.f32 %v1118, %v1286
          %v1343 = vmul.f32 %v1119, %v1288
          %v1344 = vmul.f32 %v1120, %v1290
          %v1345 = vmul.f32 %v1121, %v1292
          %v1346 = vmul.f32 %v1122, %v1294
          %v1347 = vmul.f32 %v1123, %v1296
          %v1348 = vmul.f32 %v1124, %v1298
          %v1349 = vmul.f32 %v1125, %v1300
          %v1350 = vmul.f32 %v1126, %v1302
          %v1351 = vmul.f32 %v1127, %v1304
          %v1352 = vmul.f32 %v1128, %v1306
          %v1353 = vmul.f32 %v1129, %v1308
          %v1354 = vmul.f32 %v1130, %v1310
          %v1355 = vmul.f32 %v1131, %v1312
          %v1356 = vmul.f32 %v1132, %v1314
          %v1357 = vmul.f32 %v1133, %v1316
          %v1358 = vmul.f32 %v1134, %v1318
          %v1359 = vmul.f32 %v1135, %v1320
          %v1360 = vmul.f32 %v1136, %v1322
          %v1361 = vmul.f32 %v1137, %v1324
          %v1362 = vmul.f32 %v1138, %v1326
          %v1363 = vmul.f32 %v1139, %v1328
          %v1364 = vmul.f32 %v1140, %v1330
          %v1365 = vmul.f32 %v1141, %v1332
          %v1366 = vmul.f32 %v1142, %v1334
          %v1367 = vpack.c.bf16 %v1336, %v1335
          %v1368 = vpack.c.bf16 %v1338, %v1337
          %v1369 = vpack.c.bf16 %v1340, %v1339
          %v1370 = vpack.c.bf16 %v1342, %v1341
          %v1371 = vpack.c.bf16 %v1344, %v1343
          %v1372 = vpack.c.bf16 %v1346, %v1345
          %v1373 = vpack.c.bf16 %v1348, %v1347
          %v1374 = vpack.c.bf16 %v1350, %v1349
          %v1375 = vpack.c.bf16 %v1352, %v1351
          %v1376 = vpack.c.bf16 %v1354, %v1353
          %v1377 = vpack.c.bf16 %v1356, %v1355
          %v1378 = vpack.c.bf16 %v1358, %v1357
          %v1379 = vpack.c.bf16 %v1360, %v1359
          %v1380 = vpack.c.bf16 %v1362, %v1361
          %v1381 = vpack.c.bf16 %v1364, %v1363
          %v1382 = vpack.c.bf16 %v1366, %v1365
          %v1399 = vunpack.c.l.b16 %v1367
          %v1400 = vunpack.c.h.b16 %v1367
          %v1401 = vunpack.c.l.b16 %v1368
          %v1402 = vunpack.c.h.b16 %v1368
          %v1403 = vunpack.c.l.b16 %v1369
          %v1404 = vunpack.c.h.b16 %v1369
          %v1405 = vunpack.c.l.b16 %v1370
          %v1406 = vunpack.c.h.b16 %v1370
          %v1407 = vunpack.c.l.b16 %v1371
          %v1408 = vunpack.c.h.b16 %v1371
          %v1409 = vunpack.c.l.b16 %v1372
          %v1410 = vunpack.c.h.b16 %v1372
          %v1411 = vunpack.c.l.b16 %v1373
          %v1412 = vunpack.c.h.b16 %v1373
          %v1413 = vunpack.c.l.b16 %v1374
          %v1414 = vunpack.c.h.b16 %v1374
          %v1415 = vunpack.c.l.b16 %v1375
          %v1416 = vunpack.c.h.b16 %v1375
          %v1417 = vunpack.c.l.b16 %v1376
          %v1418 = vunpack.c.h.b16 %v1376
          %v1419 = vunpack.c.l.b16 %v1377
          %v1420 = vunpack.c.h.b16 %v1377
          %v1421 = vunpack.c.l.b16 %v1378
          %v1422 = vunpack.c.h.b16 %v1378
          %v1423 = vunpack.c.l.b16 %v1379
          %v1424 = vunpack.c.h.b16 %v1379
          %v1425 = vunpack.c.l.b16 %v1380
          %v1426 = vunpack.c.h.b16 %v1380
          %v1427 = vunpack.c.l.b16 %v1381
          %v1428 = vunpack.c.h.b16 %v1381
          %v1429 = vunpack.c.l.b16 %v1382
          %v1430 = vunpack.c.h.b16 %v1382
          %v1431 = vpack.c.b16 %v1399, %v1399
          %v1432 = vpack.c.b16 %v1400, %v1400
          %v1433 = vpack.c.b16 %v1401, %v1401
          %v1434 = vpack.c.b16 %v1402, %v1402
          %v1435 = vpack.c.b16 %v1403, %v1403
          %v1436 = vpack.c.b16 %v1404, %v1404
          %v1437 = vpack.c.b16 %v1405, %v1405
          %v1438 = vpack.c.b16 %v1406, %v1406
          %v1439 = vpack.c.b16 %v1407, %v1407
          %v1440 = vpack.c.b16 %v1408, %v1408
          %v1441 = vpack.c.b16 %v1409, %v1409
          %v1442 = vpack.c.b16 %v1410, %v1410
          %v1443 = vpack.c.b16 %v1411, %v1411
          %v1444 = vpack.c.b16 %v1412, %v1412
          %v1445 = vpack.c.b16 %v1413, %v1413
          %v1446 = vpack.c.b16 %v1414, %v1414
          %v1447 = vpack.c.b16 %v1415, %v1415
          %v1448 = vpack.c.b16 %v1416, %v1416
          %v1449 = vpack.c.b16 %v1417, %v1417
          %v1450 = vpack.c.b16 %v1418, %v1418
          %v1451 = vpack.c.b16 %v1419, %v1419
          %v1452 = vpack.c.b16 %v1420, %v1420
          %v1453 = vpack.c.b16 %v1421, %v1421
          %v1454 = vpack.c.b16 %v1422, %v1422
          %v1455 = vpack.c.b16 %v1423, %v1423
          %v1456 = vpack.c.b16 %v1424, %v1424
          %v1457 = vpack.c.b16 %v1425, %v1425
          %v1458 = vpack.c.b16 %v1426, %v1426
          %v1459 = vpack.c.b16 %v1427, %v1427
          %v1460 = vpack.c.b16 %v1428, %v1428
          %v1461 = vpack.c.b16 %v1429, %v1429
          %v1462 = vpack.c.b16 %v1430, %v1430
          %s1495 = scalar_lea.vmem [#allocation2], 16
          %vm1496 = vcmask 257024
          %1497 = vst.msk [vmem:[%s1495 + $0x4] sm:$0xf] %vm1496, %v1431
          %1498 = vst.msk [vmem:[%s1495 + $0x8] sm:$0xf] %vm1496, %v1432
          %1499 = vst.msk [vmem:[%s1495 + $0x14] sm:$0xf] %vm1496, %v1433
          %1500 = vst.msk [vmem:[%s1495 + $0x18] sm:$0xf] %vm1496, %v1434
          %1501 = vst.msk [vmem:[%s1495 + $0x24] sm:$0xf] %vm1496, %v1435
          %1502 = vst.msk [vmem:[%s1495 + $0x28] sm:$0xf] %vm1496, %v1436
          %1503 = vst.msk [vmem:[%s1495 + $0x34] sm:$0xf] %vm1496, %v1437
          %1504 = vst.msk [vmem:[%s1495 + $0x38] sm:$0xf] %vm1496, %v1438
          %1505 = vst.msk [vmem:[%s1495 + $0x44] sm:$0xf] %vm1496, %v1439
          %1506 = vst.msk [vmem:[%s1495 + $0x48] sm:$0xf] %vm1496, %v1440
          %1507 = vst.msk [vmem:[%s1495 + $0x54] sm:$0xf] %vm1496, %v1441
          %1508 = vst.msk [vmem:[%s1495 + $0x58] sm:$0xf] %vm1496, %v1442
          %1509 = vst.msk [vmem:[%s1495 + $0x64] sm:$0xf] %vm1496, %v1443
          %1510 = vst.msk [vmem:[%s1495 + $0x68] sm:$0xf] %vm1496, %v1444
          %1511 = vst.msk [vmem:[%s1495 + $0x74] sm:$0xf] %vm1496, %v1445
          %1512 = vst.msk [vmem:[%s1495 + $0x78] sm:$0xf] %vm1496, %v1446
          %1513 = vst.msk [vmem:[%s1495 + $0x84] sm:$0xf] %vm1496, %v1447
          %1514 = vst.msk [vmem:[%s1495 + $0x88] sm:$0xf] %vm1496, %v1448
          %1515 = vst.msk [vmem:[%s1495 + $0x94] sm:$0xf] %vm1496, %v1449
          %1516 = vst.msk [vmem:[%s1495 + $0x98] sm:$0xf] %vm1496, %v1450
          %1517 = vst.msk [vmem:[%s1495 + $0xa4] sm:$0xf] %vm1496, %v1451
          %1518 = vst.msk [vmem:[%s1495 + $0xa8] sm:$0xf] %vm1496, %v1452
          %1519 = vst.msk [vmem:[%s1495 + $0xb4] sm:$0xf] %vm1496, %v1453
          %1520 = vst.msk [vmem:[%s1495 + $0xb8] sm:$0xf] %vm1496, %v1454
          %1521 = vst.msk [vmem:[%s1495 + $0xc4] sm:$0xf] %vm1496, %v1455
          %1522 = vst.msk [vmem:[%s1495 + $0xc8] sm:$0xf] %vm1496, %v1456
          %1523 = vst.msk [vmem:[%s1495 + $0xd4] sm:$0xf] %vm1496, %v1457
          %1524 = vst.msk [vmem:[%s1495 + $0xd8] sm:$0xf] %vm1496, %v1458
          %1525 = vst.msk [vmem:[%s1495 + $0xe4] sm:$0xf] %vm1496, %v1459
          %1526 = vst.msk [vmem:[%s1495 + $0xe8] sm:$0xf] %vm1496, %v1460
          %1527 = vst.msk [vmem:[%s1495 + $0xf4] sm:$0xf] %vm1496, %v1461
          %1528 = vst.msk [vmem:[%s1495 + $0xf8] sm:$0xf] %vm1496, %v1462
          %v1529 = vld [vmem:[#allocation2] sm:$0x8]
          %v1530 = vld [vmem:[#allocation2 + $0x4] sm:$0xf]
          %v1531 = vld [vmem:[#allocation2 + $0x8] sm:$0xf]
          %v1532 = vld [vmem:[#allocation2 + $0x10] sm:$0x8]
          %v1533 = vld [vmem:[#allocation2 + $0x14] sm:$0xf]
          %v1534 = vld [vmem:[#allocation2 + $0x18] sm:$0xf]
          %v1535 = vld [vmem:[#allocation2 + $0x20] sm:$0x8]
          %v1536 = vld [vmem:[#allocation2 + $0x24] sm:$0xf]
          %v1537 = vld [vmem:[#allocation2 + $0x28] sm:$0xf]
          %v1538 = vld [vmem:[#allocation2 + $0x30] sm:$0x8]
          %v1539 = vld [vmem:[#allocation2 + $0x34] sm:$0xf]
          %v1540 = vld [vmem:[#allocation2 + $0x38] sm:$0xf]
          %v1541 = vld [vmem:[#allocation2 + $0x40] sm:$0x8]
          %v1542 = vld [vmem:[#allocation2 + $0x44] sm:$0xf]
          %v1543 = vld [vmem:[#allocation2 + $0x48] sm:$0xf]
          %v1544 = vld [vmem:[#allocation2 + $0x50] sm:$0x8]
          %v1545 = vld [vmem:[#allocation2 + $0x54] sm:$0xf]
          %v1546 = vld [vmem:[#allocation2 + $0x58] sm:$0xf]
          %v1547 = vld [vmem:[#allocation2 + $0x60] sm:$0x8]
          %v1548 = vld [vmem:[#allocation2 + $0x64] sm:$0xf]
          %v1549 = vld [vmem:[#allocation2 + $0x68] sm:$0xf]
          %v1550 = vld [vmem:[#allocation2 + $0x70] sm:$0x8]
          %v1551 = vld [vmem:[#allocation2 + $0x74] sm:$0xf]
          %v1552 = vld [vmem:[#allocation2 + $0x78] sm:$0xf]
          %v1553 = vld [vmem:[#allocation2 + $0x80] sm:$0x8]
          %v1554 = vld [vmem:[#allocation2 + $0x84] sm:$0xf]
          %v1555 = vld [vmem:[#allocation2 + $0x88] sm:$0xf]
          %v1556 = vld [vmem:[#allocation2 + $0x90] sm:$0x8]
          %v1557 = vld [vmem:[#allocation2 + $0x94] sm:$0xf]
          %v1558 = vld [vmem:[#allocation2 + $0x98] sm:$0xf]
          %v1559 = vld [vmem:[#allocation2 + $0xa0] sm:$0x8]
          %v1560 = vld [vmem:[#allocation2 + $0xa4] sm:$0xf]
          %v1561 = vld [vmem:[#allocation2 + $0xa8] sm:$0xf]
          %v1562 = vld [vmem:[#allocation2 + $0xb0] sm:$0x8]
          %v1563 = vld [vmem:[#allocation2 + $0xb4] sm:$0xf]
          %v1564 = vld [vmem:[#allocation2 + $0xb8] sm:$0xf]
          %v1565 = vld [vmem:[#allocation2 + $0xc0] sm:$0x8]
          %v1566 = vld [vmem:[#allocation2 + $0xc4] sm:$0xf]
          %v1567 = vld [vmem:[#allocation2 + $0xc8] sm:$0xf]
          %v1568 = vld [vmem:[#allocation2 + $0xd0] sm:$0x8]
          %v1569 = vld [vmem:[#allocation2 + $0xd4] sm:$0xf]
          %v1570 = vld [vmem:[#allocation2 + $0xd8] sm:$0xf]
          %v1571 = vld [vmem:[#allocation2 + $0xe0] sm:$0x8]
          %v1572 = vld [vmem:[#allocation2 + $0xe4] sm:$0xf]
          %v1573 = vld [vmem:[#allocation2 + $0xe8] sm:$0xf]
          %v1574 = vld [vmem:[#allocation2 + $0xf0] sm:$0x8]
          %v1575 = vld [vmem:[#allocation2 + $0xf4] sm:$0xf]
          %v1576 = vld [vmem:[#allocation2 + $0xf8] sm:$0xf]
          %vm1577 = vsmask.f32 256
          %vm1578 = vsmask.f32 4368
          %vm1579 = vmor %vm1577, %vm1578
          %v1581 = vshrl.u32 %v1529, 16
          %v1583 = vrot.slane %v1581, 7
          %v1584 = vrot.slane %v1583, 4
          %v1586 = vshrl.u32 %v1530, 16
          %v1588 = vrot.slane %v1586, 7
          %v1589 = vshll.u32 %v1530, 16
          %v1591 = vor.u32 %v1588, %v1589
          %v1592 = vsel %vm1579, %v1584, %v1591
          %v1593 = vrot.slane %v1588, 4
          %v1595 = vshrl.u32 %v1531, 16
          %v1597 = vrot.slane %v1595, 7
          %v1598 = vshll.u32 %v1531, 16
          %v1600 = vor.u32 %v1597, %v1598
          %v1601 = vsel %vm1579, %v1593, %v1600
          %v1603 = vshrl.u32 %v1532, 16
          %v1605 = vrot.slane %v1603, 7
          %v1606 = vrot.slane %v1605, 4
          %v1608 = vshrl.u32 %v1533, 16
          %v1610 = vrot.slane %v1608, 7
          %v1611 = vshll.u32 %v1533, 16
          %v1613 = vor.u32 %v1610, %v1611
          %v1614 = vsel %vm1579, %v1606, %v1613
          %v1615 = vrot.slane %v1610, 4
          %v1617 = vshrl.u32 %v1534, 16
          %v1619 = vrot.slane %v1617, 7
          %v1620 = vshll.u32 %v1534, 16
          %v1622 = vor.u32 %v1619, %v1620
          %v1623 = vsel %vm1579, %v1615, %v1622
          %v1625 = vshrl.u32 %v1535, 16
          %v1627 = vrot.slane %v1625, 7
          %v1628 = vrot.slane %v1627, 4
          %v1630 = vshrl.u32 %v1536, 16
          %v1632 = vrot.slane %v1630, 7
          %v1633 = vshll.u32 %v1536, 16
          %v1635 = vor.u32 %v1632, %v1633
          %v1636 = vsel %vm1579, %v1628, %v1635
          %v1637 = vrot.slane %v1632, 4
          %v1639 = vshrl.u32 %v1537, 16
          %v1641 = vrot.slane %v1639, 7
          %v1642 = vshll.u32 %v1537, 16
          %v1644 = vor.u32 %v1641, %v1642
          %v1645 = vsel %vm1579, %v1637, %v1644
          %v1647 = vshrl.u32 %v1538, 16
          %v1649 = vrot.slane %v1647, 7
          %v1650 = vrot.slane %v1649, 4
          %v1652 = vshrl.u32 %v1539, 16
          %v1654 = vrot.slane %v1652, 7
          %v1655 = vshll.u32 %v1539, 16
          %v1657 = vor.u32 %v1654, %v1655
          %v1658 = vsel %vm1579, %v1650, %v1657
          %v1659 = vrot.slane %v1654, 4
          %v1661 = vshrl.u32 %v1540, 16
          %v1663 = vrot.slane %v1661, 7
          %v1664 = vshll.u32 %v1540, 16
          %v1666 = vor.u32 %v1663, %v1664
          %v1667 = vsel %vm1579, %v1659, %v1666
          %v1669 = vshrl.u32 %v1541, 16
          %v1671 = vrot.slane %v1669, 7
          %v1672 = vrot.slane %v1671, 4
          %v1674 = vshrl.u32 %v1542, 16
          %v1676 = vrot.slane %v1674, 7
          %v1677 = vshll.u32 %v1542, 16
          %v1679 = vor.u32 %v1676, %v1677
          %v1680 = vsel %vm1579, %v1672, %v1679
          %v1681 = vrot.slane %v1676, 4
          %v1683 = vshrl.u32 %v1543, 16
          %v1685 = vrot.slane %v1683, 7
          %v1686 = vshll.u32 %v1543, 16
          %v1688 = vor.u32 %v1685, %v1686
          %v1689 = vsel %vm1579, %v1681, %v1688
          %v1691 = vshrl.u32 %v1544, 16
          %v1693 = vrot.slane %v1691, 7
          %v1694 = vrot.slane %v1693, 4
          %v1696 = vshrl.u32 %v1545, 16
          %v1698 = vrot.slane %v1696, 7
          %v1699 = vshll.u32 %v1545, 16
          %v1701 = vor.u32 %v1698, %v1699
          %v1702 = vsel %vm1579, %v1694, %v1701
          %v1703 = vrot.slane %v1698, 4
          %v1705 = vshrl.u32 %v1546, 16
          %v1707 = vrot.slane %v1705, 7
          %v1708 = vshll.u32 %v1546, 16
          %v1710 = vor.u32 %v1707, %v1708
          %v1711 = vsel %vm1579, %v1703, %v1710
          %v1713 = vshrl.u32 %v1547, 16
          %v1715 = vrot.slane %v1713, 7
          %v1716 = vrot.slane %v1715, 4
          %v1718 = vshrl.u32 %v1548, 16
          %v1720 = vrot.slane %v1718, 7
          %v1721 = vshll.u32 %v1548, 16
          %v1723 = vor.u32 %v1720, %v1721
          %v1724 = vsel %vm1579, %v1716, %v1723
          %v1725 = vrot.slane %v1720, 4
          %v1727 = vshrl.u32 %v1549, 16
          %v1729 = vrot.slane %v1727, 7
          %v1730 = vshll.u32 %v1549, 16
          %v1732 = vor.u32 %v1729, %v1730
          %v1733 = vsel %vm1579, %v1725, %v1732
          %v1735 = vshrl.u32 %v1550, 16
          %v1737 = vrot.slane %v1735, 7
          %v1738 = vrot.slane %v1737, 4
          %v1740 = vshrl.u32 %v1551, 16
          %v1742 = vrot.slane %v1740, 7
          %v1743 = vshll.u32 %v1551, 16
          %v1745 = vor.u32 %v1742, %v1743
          %v1746 = vsel %vm1579, %v1738, %v1745
          %v1747 = vrot.slane %v1742, 4
          %v1749 = vshrl.u32 %v1552, 16
          %v1751 = vrot.slane %v1749, 7
          %v1752 = vshll.u32 %v1552, 16
          %v1754 = vor.u32 %v1751, %v1752
          %v1755 = vsel %vm1579, %v1747, %v1754
          %v1757 = vshrl.u32 %v1553, 16
          %v1759 = vrot.slane %v1757, 7
          %v1760 = vrot.slane %v1759, 4
          %v1762 = vshrl.u32 %v1554, 16
          %v1764 = vrot.slane %v1762, 7
          %v1765 = vshll.u32 %v1554, 16
          %v1767 = vor.u32 %v1764, %v1765
          %v1768 = vsel %vm1579, %v1760, %v1767
          %v1769 = vrot.slane %v1764, 4
          %v1771 = vshrl.u32 %v1555, 16
          %v1773 = vrot.slane %v1771, 7
          %v1774 = vshll.u32 %v1555, 16
          %v1776 = vor.u32 %v1773, %v1774
          %v1777 = vsel %vm1579, %v1769, %v1776
          %v1779 = vshrl.u32 %v1556, 16
          %v1781 = vrot.slane %v1779, 7
          %v1782 = vrot.slane %v1781, 4
          %v1784 = vshrl.u32 %v1557, 16
          %v1786 = vrot.slane %v1784, 7
          %v1787 = vshll.u32 %v1557, 16
          %v1789 = vor.u32 %v1786, %v1787
          %v1790 = vsel %vm1579, %v1782, %v1789
          %v1791 = vrot.slane %v1786, 4
          %v1793 = vshrl.u32 %v1558, 16
          %v1795 = vrot.slane %v1793, 7
          %v1796 = vshll.u32 %v1558, 16
          %v1798 = vor.u32 %v1795, %v1796
          %v1799 = vsel %vm1579, %v1791, %v1798
          %v1801 = vshrl.u32 %v1559, 16
          %v1803 = vrot.slane %v1801, 7
          %v1804 = vrot.slane %v1803, 4
          %v1806 = vshrl.u32 %v1560, 16
          %v1808 = vrot.slane %v1806, 7
          %v1809 = vshll.u32 %v1560, 16
          %v1811 = vor.u32 %v1808, %v1809
          %v1812 = vsel %vm1579, %v1804, %v1811
          %v1813 = vrot.slane %v1808, 4
          %v1815 = vshrl.u32 %v1561, 16
          %v1817 = vrot.slane %v1815, 7
          %v1818 = vshll.u32 %v1561, 16
          %v1820 = vor.u32 %v1817, %v1818
          %v1821 = vsel %vm1579, %v1813, %v1820
          %v1823 = vshrl.u32 %v1562, 16
          %v1825 = vrot.slane %v1823, 7
          %v1826 = vrot.slane %v1825, 4
          %v1828 = vshrl.u32 %v1563, 16
          %v1830 = vrot.slane %v1828, 7
          %v1831 = vshll.u32 %v1563, 16
          %v1833 = vor.u32 %v1830, %v1831
          %v1834 = vsel %vm1579, %v1826, %v1833
          %v1835 = vrot.slane %v1830, 4
          %v1837 = vshrl.u32 %v1564, 16
          %v1839 = vrot.slane %v1837, 7
          %v1840 = vshll.u32 %v1564, 16
          %v1842 = vor.u32 %v1839, %v1840
          %v1843 = vsel %vm1579, %v1835, %v1842
          %v1845 = vshrl.u32 %v1565, 16
          %v1847 = vrot.slane %v1845, 7
          %v1848 = vrot.slane %v1847, 4
          %v1850 = vshrl.u32 %v1566, 16
          %v1852 = vrot.slane %v1850, 7
          %v1853 = vshll.u32 %v1566, 16
          %v1855 = vor.u32 %v1852, %v1853
          %v1856 = vsel %vm1579, %v1848, %v1855
          %v1857 = vrot.slane %v1852, 4
          %v1859 = vshrl.u32 %v1567, 16
          %v1861 = vrot.slane %v1859, 7
          %v1862 = vshll.u32 %v1567, 16
          %v1864 = vor.u32 %v1861, %v1862
          %v1865 = vsel %vm1579, %v1857, %v1864
          %v1867 = vshrl.u32 %v1568, 16
          %v1869 = vrot.slane %v1867, 7
          %v1870 = vrot.slane %v1869, 4
          %v1872 = vshrl.u32 %v1569, 16
          %v1874 = vrot.slane %v1872, 7
          %v1875 = vshll.u32 %v1569, 16
          %v1877 = vor.u32 %v1874, %v1875
          %v1878 = vsel %vm1579, %v1870, %v1877
          %v1879 = vrot.slane %v1874, 4
          %v1881 = vshrl.u32 %v1570, 16
          %v1883 = vrot.slane %v1881, 7
          %v1884 = vshll.u32 %v1570, 16
          %v1886 = vor.u32 %v1883, %v1884
          %v1887 = vsel %vm1579, %v1879, %v1886
          %v1889 = vshrl.u32 %v1571, 16
          %v1891 = vrot.slane %v1889, 7
          %v1892 = vrot.slane %v1891, 4
          %v1894 = vshrl.u32 %v1572, 16
          %v1896 = vrot.slane %v1894, 7
          %v1897 = vshll.u32 %v1572, 16
          %v1899 = vor.u32 %v1896, %v1897
          %v1900 = vsel %vm1579, %v1892, %v1899
          %v1901 = vrot.slane %v1896, 4
          %v1903 = vshrl.u32 %v1573, 16
          %v1905 = vrot.slane %v1903, 7
          %v1906 = vshll.u32 %v1573, 16
          %v1908 = vor.u32 %v1905, %v1906
          %v1909 = vsel %vm1579, %v1901, %v1908
          %v1911 = vshrl.u32 %v1574, 16
          %v1913 = vrot.slane %v1911, 7
          %v1914 = vrot.slane %v1913, 4
          %v1916 = vshrl.u32 %v1575, 16
          %v1918 = vrot.slane %v1916, 7
          %v1919 = vshll.u32 %v1575, 16
          %v1921 = vor.u32 %v1918, %v1919
          %v1922 = vsel %vm1579, %v1914, %v1921
          %v1923 = vrot.slane %v1918, 4
          %v1925 = vshrl.u32 %v1576, 16
          %v1927 = vrot.slane %v1925, 7
          %v1928 = vshll.u32 %v1576, 16
          %v1930 = vor.u32 %v1927, %v1928
          %v1931 = vsel %vm1579, %v1923, %v1930
          %v1932 = vld [vmem:[%s5] sm:$0xf]
          %v1933 = vld [vmem:[%s5 + $0x4] sm:$0xf]
          %v1934 = vld [vmem:[%s5 + $0x8] sm:$0xf]
          %v1935 = vld [vmem:[%s5 + $0xc] sm:$0xf]
          %s1936 = scalar_lea.vmem %s5, 16
          %v1937 = vld [vmem:[%s1936] sm:$0xf]
          %v1938 = vld [vmem:[%s1936 + $0x4] sm:$0xf]
          %v1939 = vld [vmem:[%s1936 + $0x8] sm:$0xf]
          %v1940 = vld [vmem:[%s1936 + $0xc] sm:$0xf]
          %v1973 = vunpack.c.l.b16 %v1530
          %v1974 = vunpack.c.l.b16 %v1531
          %v1975 = vunpack.c.l.b16 %v1533
          %v1976 = vunpack.c.l.b16 %v1534
          %v1977 = vunpack.c.l.b16 %v1536
          %v1978 = vunpack.c.l.b16 %v1537
          %v1979 = vunpack.c.l.b16 %v1539
          %v1980 = vunpack.c.l.b16 %v1540
          %v1981 = vunpack.c.l.b16 %v1542
          %v1982 = vunpack.c.l.b16 %v1543
          %v1983 = vunpack.c.l.b16 %v1545
          %v1984 = vunpack.c.l.b16 %v1546
          %v1985 = vunpack.c.l.b16 %v1548
          %v1986 = vunpack.c.l.b16 %v1549
          %v1987 = vunpack.c.l.b16 %v1551
          %v1988 = vunpack.c.l.b16 %v1552
          %v1989 = vunpack.c.l.b16 %v1554
          %v1990 = vunpack.c.l.b16 %v1555
          %v1991 = vunpack.c.l.b16 %v1557
          %v1992 = vunpack.c.l.b16 %v1558
          %v1993 = vunpack.c.l.b16 %v1560
          %v1994 = vunpack.c.l.b16 %v1561
          %v1995 = vunpack.c.l.b16 %v1563
          %v1996 = vunpack.c.l.b16 %v1564
          %v1997 = vunpack.c.l.b16 %v1566
          %v1998 = vunpack.c.l.b16 %v1567
          %v1999 = vunpack.c.l.b16 %v1569
          %v2000 = vunpack.c.l.b16 %v1570
          %v2001 = vunpack.c.l.b16 %v1572
          %v2002 = vunpack.c.l.b16 %v1573
          %v2003 = vunpack.c.l.b16 %v1575
          %v2004 = vunpack.c.l.b16 %v1576
          %v2005 = vpack.c.b16 %v1974, %v1973
          %v2006 = vpack.c.b16 %v1976, %v1975
          %v2007 = vpack.c.b16 %v1978, %v1977
          %v2008 = vpack.c.b16 %v1980, %v1979
          %v2009 = vpack.c.b16 %v1982, %v1981
          %v2010 = vpack.c.b16 %v1984, %v1983
          %v2011 = vpack.c.b16 %v1986, %v1985
          %v2012 = vpack.c.b16 %v1988, %v1987
          %v2013 = vpack.c.b16 %v1990, %v1989
          %v2014 = vpack.c.b16 %v1992, %v1991
          %v2015 = vpack.c.b16 %v1994, %v1993
          %v2016 = vpack.c.b16 %v1996, %v1995
          %v2017 = vpack.c.b16 %v1998, %v1997
          %v2018 = vpack.c.b16 %v2000, %v1999
          %v2019 = vpack.c.b16 %v2002, %v2001
          %v2020 = vpack.c.b16 %v2004, %v2003
          %v2025 = vunpack.c.l.b16 %v1937
          %v2026 = vunpack.c.l.b16 %v1938
          %v2027 = vunpack.c.l.b16 %v1939
          %v2028 = vunpack.c.l.b16 %v1940
          %v2029 = vpack.c.b16 %v2026, %v2025
          %v2030 = vpack.c.b16 %v2028, %v2027
          %v2034 = vsel %vm709, %v2005, 0
          %v2037 = vsel %vm709, %v2006, 0
          %v2040 = vsel %vm709, %v2007, 0
          %v2043 = vsel %vm709, %v2008, 0
          %v2046 = vsel %vm709, %v2009, 0
          %v2049 = vsel %vm709, %v2010, 0
          %v2052 = vsel %vm709, %v2011, 0
          %v2055 = vsel %vm709, %v2012, 0
          %v2058 = vsel %vm709, %v2013, 0
          %v2061 = vsel %vm709, %v2014, 0
          %v2064 = vsel %vm709, %v2015, 0
          %v2067 = vsel %vm709, %v2016, 0
          %v2070 = vsel %vm709, %v2017, 0
          %v2073 = vsel %vm709, %v2018, 0
          %v2076 = vsel %vm709, %v2019, 0
          %v2079 = vsel %vm709, %v2020, 0
          %2081 = vmatprep.subr.bf16.mxu0 0
          %2082 = vmatpush1.bf16.msra.mxu0 0
          %2083 = vmatprep.subr.bf16.mxu0 0
          %2084 = vmatpush1.bf16.msra.mxu0 0
          %2085 = vmatprep.subr.bf16.mxu0 0
          %2086 = vmatpush1.bf16.msra.mxu0 0
          %2087 = vmatprep.subr.bf16.mxu0 0
          %2088 = vmatpush1.bf16.msra.mxu0 0
          %2089 = vmatprep.subr.bf16.mxu0 0
          %2090 = vmatpush1.bf16.msra.mxu0 0
          %2091 = vmatprep.subr.bf16.mxu0 0
          %2092 = vmatpush1.bf16.msra.mxu0 0
          %2093 = vmatprep.subr.bf16.mxu0 0
          %2094 = vmatpush1.bf16.msra.mxu0 %v2030
          %2095 = vmatprep.subr.bf16.mxu0 0
          %2096 = vmatpush1.bf16.msra.mxu0 %v2029
          %2097 = vmatprep.subr.bf16.mxu0 0
          %2098 = vmatpush2.bf16.msra.mxu0 0
          %2099 = vmatprep.subr.bf16.mxu0 0
          %2100 = vmatpush2.bf16.msra.mxu0 0
          %2101 = vmatprep.subr.bf16.mxu0 0
          %2102 = vmatpush2.bf16.msra.mxu0 0
          %2103 = vmatprep.subr.bf16.mxu0 0
          %2104 = vmatpush2.bf16.msra.mxu0 0
          %2105 = vmatprep.subr.bf16.mxu0 0
          %2106 = vmatpush2.bf16.msra.mxu0 0
          %2107 = vmatprep.subr.bf16.mxu0 0
          %2108 = vmatpush2.bf16.msra.mxu0 0
          %2109 = vmatprep.subr.bf16.mxu0 0
          %2110 = vmatpush2.bf16.msra.mxu0 0
          %2111 = vmatprep.subr.bf16.mxu0 0
          %2112 = vmatpush2.bf16.msra.mxu0 0
          %2113 = vmatprep.mubr.bf16.mxu0 0
          %2114 = vmatmul.mubr.bf16.gmra.mxu0 %v2034
          %v2115 = vpop.f32.mrf.mxu0
          %v2116 = vadd.f32 0.0, %v2115
          %v2117 = vpop.f32.mrf.mxu0
          %v2118 = vpop.f32.mrf.mxu0
          %v2119 = vadd.f32 0.0, %v2118
          %v2120 = vpop.f32.mrf.mxu0
          %2121 = vmatprep.mubr.bf16.mxu0 0
          %2122 = vmatmul.mubr.bf16.gmra.mxu0 %v2037
          %v2123 = vpop.f32.mrf.mxu0
          %v2124 = vadd.f32 0.0, %v2123
          %v2125 = vpop.f32.mrf.mxu0
          %v2126 = vpop.f32.mrf.mxu0
          %v2127 = vadd.f32 0.0, %v2126
          %v2128 = vpop.f32.mrf.mxu0
          %2129 = vmatprep.mubr.bf16.mxu0 0
          %2130 = vmatmul.mubr.bf16.gmra.mxu0 %v2040
          %v2131 = vpop.f32.mrf.mxu0
          %v2132 = vadd.f32 0.0, %v2131
          %v2133 = vpop.f32.mrf.mxu0
          %v2134 = vpop.f32.mrf.mxu0
          %v2135 = vadd.f32 0.0, %v2134
          %v2136 = vpop.f32.mrf.mxu0
          %2137 = vmatprep.mubr.bf16.mxu0 0
          %2138 = vmatmul.mubr.bf16.gmra.mxu0 %v2043
          %v2139 = vpop.f32.mrf.mxu0
          %v2140 = vadd.f32 0.0, %v2139
          %v2141 = vpop.f32.mrf.mxu0
          %v2142 = vpop.f32.mrf.mxu0
          %v2143 = vadd.f32 0.0, %v2142
          %v2144 = vpop.f32.mrf.mxu0
          %2145 = vmatprep.mubr.bf16.mxu0 0
          %2146 = vmatmul.mubr.bf16.gmra.mxu0 %v2046
          %v2147 = vpop.f32.mrf.mxu0
          %v2148 = vadd.f32 0.0, %v2147
          %v2149 = vpop.f32.mrf.mxu0
          %v2150 = vpop.f32.mrf.mxu0
          %v2151 = vadd.f32 0.0, %v2150
          %v2152 = vpop.f32.mrf.mxu0
          %2153 = vmatprep.mubr.bf16.mxu0 0
          %2154 = vmatmul.mubr.bf16.gmra.mxu0 %v2049
          %v2155 = vpop.f32.mrf.mxu0
          %v2156 = vadd.f32 0.0, %v2155
          %v2157 = vpop.f32.mrf.mxu0
          %v2158 = vpop.f32.mrf.mxu0
          %v2159 = vadd.f32 0.0, %v2158
          %v2160 = vpop.f32.mrf.mxu0
          %2161 = vmatprep.mubr.bf16.mxu0 0
          %2162 = vmatmul.mubr.bf16.gmra.mxu0 %v2052
          %v2163 = vpop.f32.mrf.mxu0
          %v2164 = vadd.f32 0.0, %v2163
          %v2165 = vpop.f32.mrf.mxu0
          %v2166 = vpop.f32.mrf.mxu0
          %v2167 = vadd.f32 0.0, %v2166
          %v2168 = vpop.f32.mrf.mxu0
          %2169 = vmatprep.mubr.bf16.mxu0 0
          %2170 = vmatmul.mubr.bf16.gmra.mxu0 %v2055
          %v2171 = vpop.f32.mrf.mxu0
          %v2172 = vadd.f32 0.0, %v2171
          %v2173 = vpop.f32.mrf.mxu0
          %v2174 = vpop.f32.mrf.mxu0
          %v2175 = vadd.f32 0.0, %v2174
          %v2176 = vpop.f32.mrf.mxu0
          %2177 = vmatprep.mubr.bf16.mxu0 0
          %2178 = vmatmul.mubr.bf16.gmra.mxu0 %v2058
          %v2179 = vpop.f32.mrf.mxu0
          %v2180 = vadd.f32 0.0, %v2179
          %v2181 = vpop.f32.mrf.mxu0
          %v2182 = vpop.f32.mrf.mxu0
          %v2183 = vadd.f32 0.0, %v2182
          %v2184 = vpop.f32.mrf.mxu0
          %2185 = vmatprep.mubr.bf16.mxu0 0
          %2186 = vmatmul.mubr.bf16.gmra.mxu0 %v2061
          %v2187 = vpop.f32.mrf.mxu0
          %v2188 = vadd.f32 0.0, %v2187
          %v2189 = vpop.f32.mrf.mxu0
          %v2190 = vpop.f32.mrf.mxu0
          %v2191 = vadd.f32 0.0, %v2190
          %v2192 = vpop.f32.mrf.mxu0
          %2193 = vmatprep.mubr.bf16.mxu0 0
          %2194 = vmatmul.mubr.bf16.gmra.mxu0 %v2064
          %v2195 = vpop.f32.mrf.mxu0
          %v2196 = vadd.f32 0.0, %v2195
          %v2197 = vpop.f32.mrf.mxu0
          %v2198 = vpop.f32.mrf.mxu0
          %v2199 = vadd.f32 0.0, %v2198
          %v2200 = vpop.f32.mrf.mxu0
          %2201 = vmatprep.mubr.bf16.mxu0 0
          %2202 = vmatmul.mubr.bf16.gmra.mxu0 %v2067
          %v2203 = vpop.f32.mrf.mxu0
          %v2204 = vadd.f32 0.0, %v2203
          %v2205 = vpop.f32.mrf.mxu0
          %v2206 = vpop.f32.mrf.mxu0
          %v2207 = vadd.f32 0.0, %v2206
          %v2208 = vpop.f32.mrf.mxu0
          %2209 = vmatprep.mubr.bf16.mxu0 0
          %2210 = vmatmul.mubr.bf16.gmra.mxu0 %v2070
          %v2211 = vpop.f32.mrf.mxu0
          %v2212 = vadd.f32 0.0, %v2211
          %v2213 = vpop.f32.mrf.mxu0
          %v2214 = vpop.f32.mrf.mxu0
          %v2215 = vadd.f32 0.0, %v2214
          %v2216 = vpop.f32.mrf.mxu0
          %2217 = vmatprep.mubr.bf16.mxu0 0
          %2218 = vmatmul.mubr.bf16.gmra.mxu0 %v2073
          %v2219 = vpop.f32.mrf.mxu0
          %v2220 = vadd.f32 0.0, %v2219
          %v2221 = vpop.f32.mrf.mxu0
          %v2222 = vpop.f32.mrf.mxu0
          %v2223 = vadd.f32 0.0, %v2222
          %v2224 = vpop.f32.mrf.mxu0
          %2225 = vmatprep.mubr.bf16.mxu0 0
          %2226 = vmatmul.mubr.bf16.gmra.mxu0 %v2076
          %v2227 = vpop.f32.mrf.mxu0
          %v2228 = vadd.f32 0.0, %v2227
          %v2229 = vpop.f32.mrf.mxu0
          %v2230 = vpop.f32.mrf.mxu0
          %v2231 = vadd.f32 0.0, %v2230
          %v2232 = vpop.f32.mrf.mxu0
          %2233 = vmatprep.mubr.bf16.mxu0 0
          %2234 = vmatmul.mubr.bf16.gmra.mxu0 %v2079
          %v2235 = vpop.f32.mrf.mxu0
          %v2236 = vadd.f32 0.0, %v2235
          %v2237 = vpop.f32.mrf.mxu0
          %v2238 = vpop.f32.mrf.mxu0
          %v2239 = vadd.f32 0.0, %v2238
          %v2240 = vpop.f32.mrf.mxu0
          %2241 = vdwg.mxu0
          %v2242 = vunpack.c.l.b16 %v1592
          %v2243 = vunpack.c.l.b16 %v1601
          %v2244 = vunpack.c.l.b16 %v1614
          %v2245 = vunpack.c.l.b16 %v1623
          %v2246 = vunpack.c.l.b16 %v1636
          %v2247 = vunpack.c.l.b16 %v1645
          %v2248 = vunpack.c.l.b16 %v1658
          %v2249 = vunpack.c.l.b16 %v1667
          %v2250 = vunpack.c.l.b16 %v1680
          %v2251 = vunpack.c.l.b16 %v1689
          %v2252 = vunpack.c.l.b16 %v1702
          %v2253 = vunpack.c.l.b16 %v1711
          %v2254 = vunpack.c.l.b16 %v1724
          %v2255 = vunpack.c.l.b16 %v1733
          %v2256 = vunpack.c.l.b16 %v1746
          %v2257 = vunpack.c.l.b16 %v1755
          %v2258 = vunpack.c.l.b16 %v1768
          %v2259 = vunpack.c.l.b16 %v1777
          %v2260 = vunpack.c.l.b16 %v1790
          %v2261 = vunpack.c.l.b16 %v1799
          %v2262 = vunpack.c.l.b16 %v1812
          %v2263 = vunpack.c.l.b16 %v1821
          %v2264 = vunpack.c.l.b16 %v1834
          %v2265 = vunpack.c.l.b16 %v1843
          %v2266 = vunpack.c.l.b16 %v1856
          %v2267 = vunpack.c.l.b16 %v1865
          %v2268 = vunpack.c.l.b16 %v1878
          %v2269 = vunpack.c.l.b16 %v1887
          %v2270 = vunpack.c.l.b16 %v1900
          %v2271 = vunpack.c.l.b16 %v1909
          %v2272 = vunpack.c.l.b16 %v1922
          %v2273 = vunpack.c.l.b16 %v1931
          %v2274 = vpack.c.b16 %v2243, %v2242
          %v2275 = vpack.c.b16 %v2245, %v2244
          %v2276 = vpack.c.b16 %v2247, %v2246
          %v2277 = vpack.c.b16 %v2249, %v2248
          %v2278 = vpack.c.b16 %v2251, %v2250
          %v2279 = vpack.c.b16 %v2253, %v2252
          %v2280 = vpack.c.b16 %v2255, %v2254
          %v2281 = vpack.c.b16 %v2257, %v2256
          %v2282 = vpack.c.b16 %v2259, %v2258
          %v2283 = vpack.c.b16 %v2261, %v2260
          %v2284 = vpack.c.b16 %v2263, %v2262
          %v2285 = vpack.c.b16 %v2265, %v2264
          %v2286 = vpack.c.b16 %v2267, %v2266
          %v2287 = vpack.c.b16 %v2269, %v2268
          %v2288 = vpack.c.b16 %v2271, %v2270
          %v2289 = vpack.c.b16 %v2273, %v2272
          %v2294 = vunpack.c.l.b16 %v1932
          %v2295 = vunpack.c.l.b16 %v1933
          %v2296 = vunpack.c.l.b16 %v1934
          %v2297 = vunpack.c.l.b16 %v1935
          %v2298 = vpack.c.b16 %v2295, %v2294
          %v2299 = vpack.c.b16 %v2297, %v2296
          %v2303 = vsel %vm709, %v2274, 0
          %v2306 = vsel %vm709, %v2275, 0
          %v2309 = vsel %vm709, %v2276, 0
          %v2312 = vsel %vm709, %v2277, 0
          %v2315 = vsel %vm709, %v2278, 0
          %v2318 = vsel %vm709, %v2279, 0
          %v2321 = vsel %vm709, %v2280, 0
          %v2324 = vsel %vm709, %v2281, 0
          %v2327 = vsel %vm709, %v2282, 0
          %v2330 = vsel %vm709, %v2283, 0
          %v2333 = vsel %vm709, %v2284, 0
          %v2336 = vsel %vm709, %v2285, 0
          %v2339 = vsel %vm709, %v2286, 0
          %v2342 = vsel %vm709, %v2287, 0
          %v2345 = vsel %vm709, %v2288, 0
          %v2348 = vsel %vm709, %v2289, 0
          %2350 = vmatprep.subr.bf16.mxu0 0
          %2351 = vmatpush1.bf16.msra.mxu0 0
          %2352 = vmatprep.subr.bf16.mxu0 0
          %2353 = vmatpush1.bf16.msra.mxu0 0
          %2354 = vmatprep.subr.bf16.mxu0 0
          %2355 = vmatpush1.bf16.msra.mxu0 0
          %2356 = vmatprep.subr.bf16.mxu0 0
          %2357 = vmatpush1.bf16.msra.mxu0 0
          %2358 = vmatprep.subr.bf16.mxu0 0
          %2359 = vmatpush1.bf16.msra.mxu0 0
          %2360 = vmatprep.subr.bf16.mxu0 0
          %2361 = vmatpush1.bf16.msra.mxu0 0
          %2362 = vmatprep.subr.bf16.mxu0 0
          %2363 = vmatpush1.bf16.msra.mxu0 %v2299
          %2364 = vmatprep.subr.bf16.mxu0 0
          %2365 = vmatpush1.bf16.msra.mxu0 %v2298
          %2366 = vmatprep.subr.bf16.mxu0 0
          %2367 = vmatpush2.bf16.msra.mxu0 0
          %2368 = vmatprep.subr.bf16.mxu0 0
          %2369 = vmatpush2.bf16.msra.mxu0 0
          %2370 = vmatprep.subr.bf16.mxu0 0
          %2371 = vmatpush2.bf16.msra.mxu0 0
          %2372 = vmatprep.subr.bf16.mxu0 0
          %2373 = vmatpush2.bf16.msra.mxu0 0
          %2374 = vmatprep.subr.bf16.mxu0 0
          %2375 = vmatpush2.bf16.msra.mxu0 0
          %2376 = vmatprep.subr.bf16.mxu0 0
          %2377 = vmatpush2.bf16.msra.mxu0 0
          %2378 = vmatprep.subr.bf16.mxu0 0
          %2379 = vmatpush2.bf16.msra.mxu0 0
          %2380 = vmatprep.subr.bf16.mxu0 0
          %2381 = vmatpush2.bf16.msra.mxu0 0
          %2382 = vmatprep.mubr.bf16.mxu0 0
          %2383 = vmatmul.mubr.bf16.gmra.mxu0 %v2303
          %v2384 = vpop.f32.mrf.mxu0
          %v2385 = vadd.f32 %v2116, %v2384
          %v2386 = vpop.f32.mrf.mxu0
          %v2387 = vpop.f32.mrf.mxu0
          %v2388 = vadd.f32 %v2119, %v2387
          %v2389 = vpop.f32.mrf.mxu0
          %2390 = vmatprep.mubr.bf16.mxu0 0
          %2391 = vmatmul.mubr.bf16.gmra.mxu0 %v2306
          %v2392 = vpop.f32.mrf.mxu0
          %v2393 = vadd.f32 %v2124, %v2392
          %v2394 = vpop.f32.mrf.mxu0
          %v2395 = vpop.f32.mrf.mxu0
          %v2396 = vadd.f32 %v2127, %v2395
          %v2397 = vpop.f32.mrf.mxu0
          %2398 = vmatprep.mubr.bf16.mxu0 0
          %2399 = vmatmul.mubr.bf16.gmra.mxu0 %v2309
          %v2400 = vpop.f32.mrf.mxu0
          %v2401 = vadd.f32 %v2132, %v2400
          %v2402 = vpop.f32.mrf.mxu0
          %v2403 = vpop.f32.mrf.mxu0
          %v2404 = vadd.f32 %v2135, %v2403
          %v2405 = vpop.f32.mrf.mxu0
          %2406 = vmatprep.mubr.bf16.mxu0 0
          %2407 = vmatmul.mubr.bf16.gmra.mxu0 %v2312
          %v2408 = vpop.f32.mrf.mxu0
          %v2409 = vadd.f32 %v2140, %v2408
          %v2410 = vpop.f32.mrf.mxu0
          %v2411 = vpop.f32.mrf.mxu0
          %v2412 = vadd.f32 %v2143, %v2411
          %v2413 = vpop.f32.mrf.mxu0
          %2414 = vmatprep.mubr.bf16.mxu0 0
          %2415 = vmatmul.mubr.bf16.gmra.mxu0 %v2315
          %v2416 = vpop.f32.mrf.mxu0
          %v2417 = vadd.f32 %v2148, %v2416
          %v2418 = vpop.f32.mrf.mxu0
          %v2419 = vpop.f32.mrf.mxu0
          %v2420 = vadd.f32 %v2151, %v2419
          %v2421 = vpop.f32.mrf.mxu0
          %2422 = vmatprep.mubr.bf16.mxu0 0
          %2423 = vmatmul.mubr.bf16.gmra.mxu0 %v2318
          %v2424 = vpop.f32.mrf.mxu0
          %v2425 = vadd.f32 %v2156, %v2424
          %v2426 = vpop.f32.mrf.mxu0
          %v2427 = vpop.f32.mrf.mxu0
          %v2428 = vadd.f32 %v2159, %v2427
          %v2429 = vpop.f32.mrf.mxu0
          %2430 = vmatprep.mubr.bf16.mxu0 0
          %2431 = vmatmul.mubr.bf16.gmra.mxu0 %v2321
          %v2432 = vpop.f32.mrf.mxu0
          %v2433 = vadd.f32 %v2164, %v2432
          %v2434 = vpop.f32.mrf.mxu0
          %v2435 = vpop.f32.mrf.mxu0
          %v2436 = vadd.f32 %v2167, %v2435
          %v2437 = vpop.f32.mrf.mxu0
          %2438 = vmatprep.mubr.bf16.mxu0 0
          %2439 = vmatmul.mubr.bf16.gmra.mxu0 %v2324
          %v2440 = vpop.f32.mrf.mxu0
          %v2441 = vadd.f32 %v2172, %v2440
          %v2442 = vpop.f32.mrf.mxu0
          %v2443 = vpop.f32.mrf.mxu0
          %v2444 = vadd.f32 %v2175, %v2443
          %v2445 = vpop.f32.mrf.mxu0
          %2446 = vmatprep.mubr.bf16.mxu0 0
          %2447 = vmatmul.mubr.bf16.gmra.mxu0 %v2327
          %v2448 = vpop.f32.mrf.mxu0
          %v2449 = vadd.f32 %v2180, %v2448
          %v2450 = vpop.f32.mrf.mxu0
          %v2451 = vpop.f32.mrf.mxu0
          %v2452 = vadd.f32 %v2183, %v2451
          %v2453 = vpop.f32.mrf.mxu0
          %2454 = vmatprep.mubr.bf16.mxu0 0
          %2455 = vmatmul.mubr.bf16.gmra.mxu0 %v2330
          %v2456 = vpop.f32.mrf.mxu0
          %v2457 = vadd.f32 %v2188, %v2456
          %v2458 = vpop.f32.mrf.mxu0
          %v2459 = vpop.f32.mrf.mxu0
          %v2460 = vadd.f32 %v2191, %v2459
          %v2461 = vpop.f32.mrf.mxu0
          %2462 = vmatprep.mubr.bf16.mxu0 0
          %2463 = vmatmul.mubr.bf16.gmra.mxu0 %v2333
          %v2464 = vpop.f32.mrf.mxu0
          %v2465 = vadd.f32 %v2196, %v2464
          %v2466 = vpop.f32.mrf.mxu0
          %v2467 = vpop.f32.mrf.mxu0
          %v2468 = vadd.f32 %v2199, %v2467
          %v2469 = vpop.f32.mrf.mxu0
          %2470 = vmatprep.mubr.bf16.mxu0 0
          %2471 = vmatmul.mubr.bf16.gmra.mxu0 %v2336
          %v2472 = vpop.f32.mrf.mxu0
          %v2473 = vadd.f32 %v2204, %v2472
          %v2474 = vpop.f32.mrf.mxu0
          %v2475 = vpop.f32.mrf.mxu0
          %v2476 = vadd.f32 %v2207, %v2475
          %v2477 = vpop.f32.mrf.mxu0
          %2478 = vmatprep.mubr.bf16.mxu0 0
          %2479 = vmatmul.mubr.bf16.gmra.mxu0 %v2339
          %v2480 = vpop.f32.mrf.mxu0
          %v2481 = vadd.f32 %v2212, %v2480
          %v2482 = vpop.f32.mrf.mxu0
          %v2483 = vpop.f32.mrf.mxu0
          %v2484 = vadd.f32 %v2215, %v2483
          %v2485 = vpop.f32.mrf.mxu0
          %2486 = vmatprep.mubr.bf16.mxu0 0
          %2487 = vmatmul.mubr.bf16.gmra.mxu0 %v2342
          %v2488 = vpop.f32.mrf.mxu0
          %v2489 = vadd.f32 %v2220, %v2488
          %v2490 = vpop.f32.mrf.mxu0
          %v2491 = vpop.f32.mrf.mxu0
          %v2492 = vadd.f32 %v2223, %v2491
          %v2493 = vpop.f32.mrf.mxu0
          %2494 = vmatprep.mubr.bf16.mxu0 0
          %2495 = vmatmul.mubr.bf16.gmra.mxu0 %v2345
          %v2496 = vpop.f32.mrf.mxu0
          %v2497 = vadd.f32 %v2228, %v2496
          %v2498 = vpop.f32.mrf.mxu0
          %v2499 = vpop.f32.mrf.mxu0
          %v2500 = vadd.f32 %v2231, %v2499
          %v2501 = vpop.f32.mrf.mxu0
          %2502 = vmatprep.mubr.bf16.mxu0 0
          %2503 = vmatmul.mubr.bf16.gmra.mxu0 %v2348
          %v2504 = vpop.f32.mrf.mxu0
          %v2505 = vadd.f32 %v2236, %v2504
          %v2506 = vpop.f32.mrf.mxu0
          %v2507 = vpop.f32.mrf.mxu0
          %v2508 = vadd.f32 %v2239, %v2507
          %v2509 = vpop.f32.mrf.mxu0
          %2510 = vdwg.mxu0
          %v2511 = vld [vmem:[#allocation2 + $0x4] sm:$0xf]
          %v2512 = vld [vmem:[#allocation2 + $0x8] sm:$0xf]
          %v2513 = vld [vmem:[#allocation2 + $0xc] sm:$0x1]
          %v2514 = vld [vmem:[#allocation2 + $0x14] sm:$0xf]
          %v2515 = vld [vmem:[#allocation2 + $0x18] sm:$0xf]
          %v2516 = vld [vmem:[#allocation2 + $0x1c] sm:$0x1]
          %v2517 = vld [vmem:[#allocation2 + $0x24] sm:$0xf]
          %v2518 = vld [vmem:[#allocation2 + $0x28] sm:$0xf]
          %v2519 = vld [vmem:[#allocation2 + $0x2c] sm:$0x1]
          %v2520 = vld [vmem:[#allocation2 + $0x34] sm:$0xf]
          %v2521 = vld [vmem:[#allocation2 + $0x38] sm:$0xf]
          %v2522 = vld [vmem:[#allocation2 + $0x3c] sm:$0x1]
          %v2523 = vld [vmem:[#allocation2 + $0x44] sm:$0xf]
          %v2524 = vld [vmem:[#allocation2 + $0x48] sm:$0xf]
          %v2525 = vld [vmem:[#allocation2 + $0x4c] sm:$0x1]
          %v2526 = vld [vmem:[#allocation2 + $0x54] sm:$0xf]
          %v2527 = vld [vmem:[#allocation2 + $0x58] sm:$0xf]
          %v2528 = vld [vmem:[#allocation2 + $0x5c] sm:$0x1]
          %v2529 = vld [vmem:[#allocation2 + $0x64] sm:$0xf]
          %v2530 = vld [vmem:[#allocation2 + $0x68] sm:$0xf]
          %v2531 = vld [vmem:[#allocation2 + $0x6c] sm:$0x1]
          %v2532 = vld [vmem:[#allocation2 + $0x74] sm:$0xf]
          %v2533 = vld [vmem:[#allocation2 + $0x78] sm:$0xf]
          %v2534 = vld [vmem:[#allocation2 + $0x7c] sm:$0x1]
          %v2535 = vld [vmem:[#allocation2 + $0x84] sm:$0xf]
          %v2536 = vld [vmem:[#allocation2 + $0x88] sm:$0xf]
          %v2537 = vld [vmem:[#allocation2 + $0x8c] sm:$0x1]
          %v2538 = vld [vmem:[#allocation2 + $0x94] sm:$0xf]
          %v2539 = vld [vmem:[#allocation2 + $0x98] sm:$0xf]
          %v2540 = vld [vmem:[#allocation2 + $0x9c] sm:$0x1]
          %v2541 = vld [vmem:[#allocation2 + $0xa4] sm:$0xf]
          %v2542 = vld [vmem:[#allocation2 + $0xa8] sm:$0xf]
          %v2543 = vld [vmem:[#allocation2 + $0xac] sm:$0x1]
          %v2544 = vld [vmem:[#allocation2 + $0xb4] sm:$0xf]
          %v2545 = vld [vmem:[#allocation2 + $0xb8] sm:$0xf]
          %v2546 = vld [vmem:[#allocation2 + $0xbc] sm:$0x1]
          %v2547 = vld [vmem:[#allocation2 + $0xc4] sm:$0xf]
          %v2548 = vld [vmem:[#allocation2 + $0xc8] sm:$0xf]
          %v2549 = vld [vmem:[#allocation2 + $0xcc] sm:$0x1]
          %v2550 = vld [vmem:[#allocation2 + $0xd4] sm:$0xf]
          %v2551 = vld [vmem:[#allocation2 + $0xd8] sm:$0xf]
          %v2552 = vld [vmem:[#allocation2 + $0xdc] sm:$0x1]
          %v2553 = vld [vmem:[#allocation2 + $0xe4] sm:$0xf]
          %v2554 = vld [vmem:[#allocation2 + $0xe8] sm:$0xf]
          %v2555 = vld [vmem:[#allocation2 + $0xec] sm:$0x1]
          %v2556 = vld [vmem:[#allocation2 + $0xf4] sm:$0xf]
          %v2557 = vld [vmem:[#allocation2 + $0xf8] sm:$0xf]
          %v2558 = vld [vmem:[#allocation2 + $0xfc] sm:$0x1]
          %vm2559 = vsmask.f32 3328
          %vm2560 = vsmask.f32 7440
          %vm2561 = vmor %vm2559, %vm2560
          %v2563 = vshrl.u32 %v2511, 16
          %v2565 = vrot.slane %v2563, 4
          %v2566 = vshll.u32 %v2511, 16
          %v2568 = vrot.slane %v2566, 5
          %v2569 = vor.u32 %v2565, %v2568
          %v2570 = vrot.slane %v2569, 4
          %v2572 = vshll.u32 %v2512, 16
          %v2574 = vrot.slane %v2572, 5
          %v2575 = vsel %vm2561, %v2570, %v2574
          %v2576 = vshrl.u32 %v2512, 16
          %v2578 = vrot.slane %v2576, 4
          %v2579 = vor.u32 %v2578, %v2574
          %v2580 = vrot.slane %v2579, 4
          %v2582 = vshll.u32 %v2513, 16
          %v2584 = vrot.slane %v2582, 5
          %v2585 = vsel %vm2561, %v2580, %v2584
          %v2587 = vshrl.u32 %v2514, 16
          %v2589 = vrot.slane %v2587, 4
          %v2590 = vshll.u32 %v2514, 16
          %v2592 = vrot.slane %v2590, 5
          %v2593 = vor.u32 %v2589, %v2592
          %v2594 = vrot.slane %v2593, 4
          %v2596 = vshll.u32 %v2515, 16
          %v2598 = vrot.slane %v2596, 5
          %v2599 = vsel %vm2561, %v2594, %v2598
          %v2600 = vshrl.u32 %v2515, 16
          %v2602 = vrot.slane %v2600, 4
          %v2603 = vor.u32 %v2602, %v2598
          %v2604 = vrot.slane %v2603, 4
          %v2606 = vshll.u32 %v2516, 16
          %v2608 = vrot.slane %v2606, 5
          %v2609 = vsel %vm2561, %v2604, %v2608
          %v2611 = vshrl.u32 %v2517, 16
          %v2613 = vrot.slane %v2611, 4
          %v2614 = vshll.u32 %v2517, 16
          %v2616 = vrot.slane %v2614, 5
          %v2617 = vor.u32 %v2613, %v2616
          %v2618 = vrot.slane %v2617, 4
          %v2620 = vshll.u32 %v2518, 16
          %v2622 = vrot.slane %v2620, 5
          %v2623 = vsel %vm2561, %v2618, %v2622
          %v2624 = vshrl.u32 %v2518, 16
          %v2626 = vrot.slane %v2624, 4
          %v2627 = vor.u32 %v2626, %v2622
          %v2628 = vrot.slane %v2627, 4
          %v2630 = vshll.u32 %v2519, 16
          %v2632 = vrot.slane %v2630, 5
          %v2633 = vsel %vm2561, %v2628, %v2632
          %v2635 = vshrl.u32 %v2520, 16
          %v2637 = vrot.slane %v2635, 4
          %v2638 = vshll.u32 %v2520, 16
          %v2640 = vrot.slane %v2638, 5
          %v2641 = vor.u32 %v2637, %v2640
          %v2642 = vrot.slane %v2641, 4
          %v2644 = vshll.u32 %v2521, 16
          %v2646 = vrot.slane %v2644, 5
          %v2647 = vsel %vm2561, %v2642, %v2646
          %v2648 = vshrl.u32 %v2521, 16
          %v2650 = vrot.slane %v2648, 4
          %v2651 = vor.u32 %v2650, %v2646
          %v2652 = vrot.slane %v2651, 4
          %v2654 = vshll.u32 %v2522, 16
          %v2656 = vrot.slane %v2654, 5
          %v2657 = vsel %vm2561, %v2652, %v2656
          %v2659 = vshrl.u32 %v2523, 16
          %v2661 = vrot.slane %v2659, 4
          %v2662 = vshll.u32 %v2523, 16
          %v2664 = vrot.slane %v2662, 5
          %v2665 = vor.u32 %v2661, %v2664
          %v2666 = vrot.slane %v2665, 4
          %v2668 = vshll.u32 %v2524, 16
          %v2670 = vrot.slane %v2668, 5
          %v2671 = vsel %vm2561, %v2666, %v2670
          %v2672 = vshrl.u32 %v2524, 16
          %v2674 = vrot.slane %v2672, 4
          %v2675 = vor.u32 %v2674, %v2670
          %v2676 = vrot.slane %v2675, 4
          %v2678 = vshll.u32 %v2525, 16
          %v2680 = vrot.slane %v2678, 5
          %v2681 = vsel %vm2561, %v2676, %v2680
          %v2683 = vshrl.u32 %v2526, 16
          %v2685 = vrot.slane %v2683, 4
          %v2686 = vshll.u32 %v2526, 16
          %v2688 = vrot.slane %v2686, 5
          %v2689 = vor.u32 %v2685, %v2688
          %v2690 = vrot.slane %v2689, 4
          %v2692 = vshll.u32 %v2527, 16
          %v2694 = vrot.slane %v2692, 5
          %v2695 = vsel %vm2561, %v2690, %v2694
          %v2696 = vshrl.u32 %v2527, 16
          %v2698 = vrot.slane %v2696, 4
          %v2699 = vor.u32 %v2698, %v2694
          %v2700 = vrot.slane %v2699, 4
          %v2702 = vshll.u32 %v2528, 16
          %v2704 = vrot.slane %v2702, 5
          %v2705 = vsel %vm2561, %v2700, %v2704
          %v2707 = vshrl.u32 %v2529, 16
          %v2709 = vrot.slane %v2707, 4
          %v2710 = vshll.u32 %v2529, 16
          %v2712 = vrot.slane %v2710, 5
          %v2713 = vor.u32 %v2709, %v2712
          %v2714 = vrot.slane %v2713, 4
          %v2716 = vshll.u32 %v2530, 16
          %v2718 = vrot.slane %v2716, 5
          %v2719 = vsel %vm2561, %v2714, %v2718
          %v2720 = vshrl.u32 %v2530, 16
          %v2722 = vrot.slane %v2720, 4
          %v2723 = vor.u32 %v2722, %v2718
          %v2724 = vrot.slane %v2723, 4
          %v2726 = vshll.u32 %v2531, 16
          %v2728 = vrot.slane %v2726, 5
          %v2729 = vsel %vm2561, %v2724, %v2728
          %v2731 = vshrl.u32 %v2532, 16
          %v2733 = vrot.slane %v2731, 4
          %v2734 = vshll.u32 %v2532, 16
          %v2736 = vrot.slane %v2734, 5
          %v2737 = vor.u32 %v2733, %v2736
          %v2738 = vrot.slane %v2737, 4
          %v2740 = vshll.u32 %v2533, 16
          %v2742 = vrot.slane %v2740, 5
          %v2743 = vsel %vm2561, %v2738, %v2742
          %v2744 = vshrl.u32 %v2533, 16
          %v2746 = vrot.slane %v2744, 4
          %v2747 = vor.u32 %v2746, %v2742
          %v2748 = vrot.slane %v2747, 4
          %v2750 = vshll.u32 %v2534, 16
          %v2752 = vrot.slane %v2750, 5
          %v2753 = vsel %vm2561, %v2748, %v2752
          %v2755 = vshrl.u32 %v2535, 16
          %v2757 = vrot.slane %v2755, 4
          %v2758 = vshll.u32 %v2535, 16
          %v2760 = vrot.slane %v2758, 5
          %v2761 = vor.u32 %v2757, %v2760
          %v2762 = vrot.slane %v2761, 4
          %v2764 = vshll.u32 %v2536, 16
          %v2766 = vrot.slane %v2764, 5
          %v2767 = vsel %vm2561, %v2762, %v2766
          %v2768 = vshrl.u32 %v2536, 16
          %v2770 = vrot.slane %v2768, 4
          %v2771 = vor.u32 %v2770, %v2766
          %v2772 = vrot.slane %v2771, 4
          %v2774 = vshll.u32 %v2537, 16
          %v2776 = vrot.slane %v2774, 5
          %v2777 = vsel %vm2561, %v2772, %v2776
          %v2779 = vshrl.u32 %v2538, 16
          %v2781 = vrot.slane %v2779, 4
          %v2782 = vshll.u32 %v2538, 16
          %v2784 = vrot.slane %v2782, 5
          %v2785 = vor.u32 %v2781, %v2784
          %v2786 = vrot.slane %v2785, 4
          %v2788 = vshll.u32 %v2539, 16
          %v2790 = vrot.slane %v2788, 5
          %v2791 = vsel %vm2561, %v2786, %v2790
          %v2792 = vshrl.u32 %v2539, 16
          %v2794 = vrot.slane %v2792, 4
          %v2795 = vor.u32 %v2794, %v2790
          %v2796 = vrot.slane %v2795, 4
          %v2798 = vshll.u32 %v2540, 16
          %v2800 = vrot.slane %v2798, 5
          %v2801 = vsel %vm2561, %v2796, %v2800
          %v2803 = vshrl.u32 %v2541, 16
          %v2805 = vrot.slane %v2803, 4
          %v2806 = vshll.u32 %v2541, 16
          %v2808 = vrot.slane %v2806, 5
          %v2809 = vor.u32 %v2805, %v2808
          %v2810 = vrot.slane %v2809, 4
          %v2812 = vshll.u32 %v2542, 16
          %v2814 = vrot.slane %v2812, 5
          %v2815 = vsel %vm2561, %v2810, %v2814
          %v2816 = vshrl.u32 %v2542, 16
          %v2818 = vrot.slane %v2816, 4
          %v2819 = vor.u32 %v2818, %v2814
          %v2820 = vrot.slane %v2819, 4
          %v2822 = vshll.u32 %v2543, 16
          %v2824 = vrot.slane %v2822, 5
          %v2825 = vsel %vm2561, %v2820, %v2824
          %v2827 = vshrl.u32 %v2544, 16
          %v2829 = vrot.slane %v2827, 4
          %v2830 = vshll.u32 %v2544, 16
          %v2832 = vrot.slane %v2830, 5
          %v2833 = vor.u32 %v2829, %v2832
          %v2834 = vrot.slane %v2833, 4
          %v2836 = vshll.u32 %v2545, 16
          %v2838 = vrot.slane %v2836, 5
          %v2839 = vsel %vm2561, %v2834, %v2838
          %v2840 = vshrl.u32 %v2545, 16
          %v2842 = vrot.slane %v2840, 4
          %v2843 = vor.u32 %v2842, %v2838
          %v2844 = vrot.slane %v2843, 4
          %v2846 = vshll.u32 %v2546, 16
          %v2848 = vrot.slane %v2846, 5
          %v2849 = vsel %vm2561, %v2844, %v2848
          %v2851 = vshrl.u32 %v2547, 16
          %v2853 = vrot.slane %v2851, 4
          %v2854 = vshll.u32 %v2547, 16
          %v2856 = vrot.slane %v2854, 5
          %v2857 = vor.u32 %v2853, %v2856
          %v2858 = vrot.slane %v2857, 4
          %v2860 = vshll.u32 %v2548, 16
          %v2862 = vrot.slane %v2860, 5
          %v2863 = vsel %vm2561, %v2858, %v2862
          %v2864 = vshrl.u32 %v2548, 16
          %v2866 = vrot.slane %v2864, 4
          %v2867 = vor.u32 %v2866, %v2862
          %v2868 = vrot.slane %v2867, 4
          %v2870 = vshll.u32 %v2549, 16
          %v2872 = vrot.slane %v2870, 5
          %v2873 = vsel %vm2561, %v2868, %v2872
          %v2875 = vshrl.u32 %v2550, 16
          %v2877 = vrot.slane %v2875, 4
          %v2878 = vshll.u32 %v2550, 16
          %v2880 = vrot.slane %v2878, 5
          %v2881 = vor.u32 %v2877, %v2880
          %v2882 = vrot.slane %v2881, 4
          %v2884 = vshll.u32 %v2551, 16
          %v2886 = vrot.slane %v2884, 5
          %v2887 = vsel %vm2561, %v2882, %v2886
          %v2888 = vshrl.u32 %v2551, 16
          %v2890 = vrot.slane %v2888, 4
          %v2891 = vor.u32 %v2890, %v2886
          %v2892 = vrot.slane %v2891, 4
          %v2894 = vshll.u32 %v2552, 16
          %v2896 = vrot.slane %v2894, 5
          %v2897 = vsel %vm2561, %v2892, %v2896
          %v2899 = vshrl.u32 %v2553, 16
          %v2901 = vrot.slane %v2899, 4
          %v2902 = vshll.u32 %v2553, 16
          %v2904 = vrot.slane %v2902, 5
          %v2905 = vor.u32 %v2901, %v2904
          %v2906 = vrot.slane %v2905, 4
          %v2908 = vshll.u32 %v2554, 16
          %v2910 = vrot.slane %v2908, 5
          %v2911 = vsel %vm2561, %v2906, %v2910
          %v2912 = vshrl.u32 %v2554, 16
          %v2914 = vrot.slane %v2912, 4
          %v2915 = vor.u32 %v2914, %v2910
          %v2916 = vrot.slane %v2915, 4
          %v2918 = vshll.u32 %v2555, 16
          %v2920 = vrot.slane %v2918, 5
          %v2921 = vsel %vm2561, %v2916, %v2920
          %v2923 = vshrl.u32 %v2556, 16
          %v2925 = vrot.slane %v2923, 4
          %v2926 = vshll.u32 %v2556, 16
          %v2928 = vrot.slane %v2926, 5
          %v2929 = vor.u32 %v2925, %v2928
          %v2930 = vrot.slane %v2929, 4
          %v2932 = vshll.u32 %v2557, 16
          %v2934 = vrot.slane %v2932, 5
          %v2935 = vsel %vm2561, %v2930, %v2934
          %v2936 = vshrl.u32 %v2557, 16
          %v2938 = vrot.slane %v2936, 4
          %v2939 = vor.u32 %v2938, %v2934
          %v2940 = vrot.slane %v2939, 4
          %v2942 = vshll.u32 %v2558, 16
          %v2944 = vrot.slane %v2942, 5
          %v2945 = vsel %vm2561, %v2940, %v2944
          %s2946 = scalar_lea.vmem %s5, 32
          %v2947 = vld [vmem:[%s2946] sm:$0xf]
          %v2948 = vld [vmem:[%s2946 + $0x4] sm:$0xf]
          %v2949 = vld [vmem:[%s2946 + $0x8] sm:$0xf]
          %v2950 = vld [vmem:[%s2946 + $0xc] sm:$0xf]
          %v2951 = vunpack.c.l.b16 %v2575
          %v2952 = vunpack.c.l.b16 %v2585
          %v2953 = vunpack.c.l.b16 %v2599
          %v2954 = vunpack.c.l.b16 %v2609
          %v2955 = vunpack.c.l.b16 %v2623
          %v2956 = vunpack.c.l.b16 %v2633
          %v2957 = vunpack.c.l.b16 %v2647
          %v2958 = vunpack.c.l.b16 %v2657
          %v2959 = vunpack.c.l.b16 %v2671
          %v2960 = vunpack.c.l.b16 %v2681
          %v2961 = vunpack.c.l.b16 %v2695
          %v2962 = vunpack.c.l.b16 %v2705
          %v2963 = vunpack.c.l.b16 %v2719
          %v2964 = vunpack.c.l.b16 %v2729
          %v2965 = vunpack.c.l.b16 %v2743
          %v2966 = vunpack.c.l.b16 %v2753
          %v2967 = vunpack.c.l.b16 %v2767
          %v2968 = vunpack.c.l.b16 %v2777
          %v2969 = vunpack.c.l.b16 %v2791
          %v2970 = vunpack.c.l.b16 %v2801
          %v2971 = vunpack.c.l.b16 %v2815
          %v2972 = vunpack.c.l.b16 %v2825
          %v2973 = vunpack.c.l.b16 %v2839
          %v2974 = vunpack.c.l.b16 %v2849
          %v2975 = vunpack.c.l.b16 %v2863
          %v2976 = vunpack.c.l.b16 %v2873
          %v2977 = vunpack.c.l.b16 %v2887
          %v2978 = vunpack.c.l.b16 %v2897
          %v2979 = vunpack.c.l.b16 %v2911
          %v2980 = vunpack.c.l.b16 %v2921
          %v2981 = vunpack.c.l.b16 %v2935
          %v2982 = vunpack.c.l.b16 %v2945
          %v2983 = vpack.c.b16 %v2952, %v2951
          %v2984 = vpack.c.b16 %v2954, %v2953
          %v2985 = vpack.c.b16 %v2956, %v2955
          %v2986 = vpack.c.b16 %v2958, %v2957
          %v2987 = vpack.c.b16 %v2960, %v2959
          %v2988 = vpack.c.b16 %v2962, %v2961
          %v2989 = vpack.c.b16 %v2964, %v2963
          %v2990 = vpack.c.b16 %v2966, %v2965
          %v2991 = vpack.c.b16 %v2968, %v2967
          %v2992 = vpack.c.b16 %v2970, %v2969
          %v2993 = vpack.c.b16 %v2972, %v2971
          %v2994 = vpack.c.b16 %v2974, %v2973
          %v2995 = vpack.c.b16 %v2976, %v2975
          %v2996 = vpack.c.b16 %v2978, %v2977
          %v2997 = vpack.c.b16 %v2980, %v2979
          %v2998 = vpack.c.b16 %v2982, %v2981
          %v3003 = vunpack.c.l.b16 %v2947
          %v3004 = vunpack.c.l.b16 %v2948
          %v3005 = vunpack.c.l.b16 %v2949
          %v3006 = vunpack.c.l.b16 %v2950
          %v3007 = vpack.c.b16 %v3004, %v3003
          %v3008 = vpack.c.b16 %v3006, %v3005
          %v3012 = vsel %vm709, %v2983, 0
          %v3015 = vsel %vm709, %v2984, 0
          %v3018 = vsel %vm709, %v2985, 0
          %v3021 = vsel %vm709, %v2986, 0
          %v3024 = vsel %vm709, %v2987, 0
          %v3027 = vsel %vm709, %v2988, 0
          %v3030 = vsel %vm709, %v2989, 0
          %v3033 = vsel %vm709, %v2990, 0
          %v3036 = vsel %vm709, %v2991, 0
          %v3039 = vsel %vm709, %v2992, 0
          %v3042 = vsel %vm709, %v2993, 0
          %v3045 = vsel %vm709, %v2994, 0
          %v3048 = vsel %vm709, %v2995, 0
          %v3051 = vsel %vm709, %v2996, 0
          %v3054 = vsel %vm709, %v2997, 0
          %v3057 = vsel %vm709, %v2998, 0
          %3059 = vmatprep.subr.bf16.mxu0 0
          %3060 = vmatpush1.bf16.msra.mxu0 0
          %3061 = vmatprep.subr.bf16.mxu0 0
          %3062 = vmatpush1.bf16.msra.mxu0 0
          %3063 = vmatprep.subr.bf16.mxu0 0
          %3064 = vmatpush1.bf16.msra.mxu0 0
          %3065 = vmatprep.subr.bf16.mxu0 0
          %3066 = vmatpush1.bf16.msra.mxu0 0
          %3067 = vmatprep.subr.bf16.mxu0 0
          %3068 = vmatpush1.bf16.msra.mxu0 0
          %3069 = vmatprep.subr.bf16.mxu0 0
          %3070 = vmatpush1.bf16.msra.mxu0 0
          %3071 = vmatprep.subr.bf16.mxu0 0
          %3072 = vmatpush1.bf16.msra.mxu0 %v3008
          %3073 = vmatprep.subr.bf16.mxu0 0
          %3074 = vmatpush1.bf16.msra.mxu0 %v3007
          %3075 = vmatprep.subr.bf16.mxu0 0
          %3076 = vmatpush2.bf16.msra.mxu0 0
          %3077 = vmatprep.subr.bf16.mxu0 0
          %3078 = vmatpush2.bf16.msra.mxu0 0
          %3079 = vmatprep.subr.bf16.mxu0 0
          %3080 = vmatpush2.bf16.msra.mxu0 0
          %3081 = vmatprep.subr.bf16.mxu0 0
          %3082 = vmatpush2.bf16.msra.mxu0 0
          %3083 = vmatprep.subr.bf16.mxu0 0
          %3084 = vmatpush2.bf16.msra.mxu0 0
          %3085 = vmatprep.subr.bf16.mxu0 0
          %3086 = vmatpush2.bf16.msra.mxu0 0
          %3087 = vmatprep.subr.bf16.mxu0 0
          %3088 = vmatpush2.bf16.msra.mxu0 0
          %3089 = vmatprep.subr.bf16.mxu0 0
          %3090 = vmatpush2.bf16.msra.mxu0 0
          %3091 = vmatprep.mubr.bf16.mxu0 0
          %3092 = vmatmul.mubr.bf16.gmra.mxu0 %v3012
          %v3093 = vpop.f32.mrf.mxu0
          %v3094 = vadd.f32 0.0, %v3093
          %v3095 = vpop.f32.mrf.mxu0
          %v3096 = vpop.f32.mrf.mxu0
          %v3097 = vadd.f32 0.0, %v3096
          %v3098 = vpop.f32.mrf.mxu0
          %3099 = vmatprep.mubr.bf16.mxu0 0
          %3100 = vmatmul.mubr.bf16.gmra.mxu0 %v3015
          %v3101 = vpop.f32.mrf.mxu0
          %v3102 = vadd.f32 0.0, %v3101
          %v3103 = vpop.f32.mrf.mxu0
          %v3104 = vpop.f32.mrf.mxu0
          %v3105 = vadd.f32 0.0, %v3104
          %v3106 = vpop.f32.mrf.mxu0
          %3107 = vmatprep.mubr.bf16.mxu0 0
          %3108 = vmatmul.mubr.bf16.gmra.mxu0 %v3018
          %v3109 = vpop.f32.mrf.mxu0
          %v3110 = vadd.f32 0.0, %v3109
          %v3111 = vpop.f32.mrf.mxu0
          %v3112 = vpop.f32.mrf.mxu0
          %v3113 = vadd.f32 0.0, %v3112
          %v3114 = vpop.f32.mrf.mxu0
          %3115 = vmatprep.mubr.bf16.mxu0 0
          %3116 = vmatmul.mubr.bf16.gmra.mxu0 %v3021
          %v3117 = vpop.f32.mrf.mxu0
          %v3118 = vadd.f32 0.0, %v3117
          %v3119 = vpop.f32.mrf.mxu0
          %v3120 = vpop.f32.mrf.mxu0
          %v3121 = vadd.f32 0.0, %v3120
          %v3122 = vpop.f32.mrf.mxu0
          %3123 = vmatprep.mubr.bf16.mxu0 0
          %3124 = vmatmul.mubr.bf16.gmra.mxu0 %v3024
          %v3125 = vpop.f32.mrf.mxu0
          %v3126 = vadd.f32 0.0, %v3125
          %v3127 = vpop.f32.mrf.mxu0
          %v3128 = vpop.f32.mrf.mxu0
          %v3129 = vadd.f32 0.0, %v3128
          %v3130 = vpop.f32.mrf.mxu0
          %3131 = vmatprep.mubr.bf16.mxu0 0
          %3132 = vmatmul.mubr.bf16.gmra.mxu0 %v3027
          %v3133 = vpop.f32.mrf.mxu0
          %v3134 = vadd.f32 0.0, %v3133
          %v3135 = vpop.f32.mrf.mxu0
          %v3136 = vpop.f32.mrf.mxu0
          %v3137 = vadd.f32 0.0, %v3136
          %v3138 = vpop.f32.mrf.mxu0
          %3139 = vmatprep.mubr.bf16.mxu0 0
          %3140 = vmatmul.mubr.bf16.gmra.mxu0 %v3030
          %v3141 = vpop.f32.mrf.mxu0
          %v3142 = vadd.f32 0.0, %v3141
          %v3143 = vpop.f32.mrf.mxu0
          %v3144 = vpop.f32.mrf.mxu0
          %v3145 = vadd.f32 0.0, %v3144
          %v3146 = vpop.f32.mrf.mxu0
          %3147 = vmatprep.mubr.bf16.mxu0 0
          %3148 = vmatmul.mubr.bf16.gmra.mxu0 %v3033
          %v3149 = vpop.f32.mrf.mxu0
          %v3150 = vadd.f32 0.0, %v3149
          %v3151 = vpop.f32.mrf.mxu0
          %v3152 = vpop.f32.mrf.mxu0
          %v3153 = vadd.f32 0.0, %v3152
          %v3154 = vpop.f32.mrf.mxu0
          %3155 = vmatprep.mubr.bf16.mxu0 0
          %3156 = vmatmul.mubr.bf16.gmra.mxu0 %v3036
          %v3157 = vpop.f32.mrf.mxu0
          %v3158 = vadd.f32 0.0, %v3157
          %v3159 = vpop.f32.mrf.mxu0
          %v3160 = vpop.f32.mrf.mxu0
          %v3161 = vadd.f32 0.0, %v3160
          %v3162 = vpop.f32.mrf.mxu0
          %3163 = vmatprep.mubr.bf16.mxu0 0
          %3164 = vmatmul.mubr.bf16.gmra.mxu0 %v3039
          %v3165 = vpop.f32.mrf.mxu0
          %v3166 = vadd.f32 0.0, %v3165
          %v3167 = vpop.f32.mrf.mxu0
          %v3168 = vpop.f32.mrf.mxu0
          %v3169 = vadd.f32 0.0, %v3168
          %v3170 = vpop.f32.mrf.mxu0
          %3171 = vmatprep.mubr.bf16.mxu0 0
          %3172 = vmatmul.mubr.bf16.gmra.mxu0 %v3042
          %v3173 = vpop.f32.mrf.mxu0
          %v3174 = vadd.f32 0.0, %v3173
          %v3175 = vpop.f32.mrf.mxu0
          %v3176 = vpop.f32.mrf.mxu0
          %v3177 = vadd.f32 0.0, %v3176
          %v3178 = vpop.f32.mrf.mxu0
          %3179 = vmatprep.mubr.bf16.mxu0 0
          %3180 = vmatmul.mubr.bf16.gmra.mxu0 %v3045
          %v3181 = vpop.f32.mrf.mxu0
          %v3182 = vadd.f32 0.0, %v3181
          %v3183 = vpop.f32.mrf.mxu0
          %v3184 = vpop.f32.mrf.mxu0
          %v3185 = vadd.f32 0.0, %v3184
          %v3186 = vpop.f32.mrf.mxu0
          %3187 = vmatprep.mubr.bf16.mxu0 0
          %3188 = vmatmul.mubr.bf16.gmra.mxu0 %v3048
          %v3189 = vpop.f32.mrf.mxu0
          %v3190 = vadd.f32 0.0, %v3189
          %v3191 = vpop.f32.mrf.mxu0
          %v3192 = vpop.f32.mrf.mxu0
          %v3193 = vadd.f32 0.0, %v3192
          %v3194 = vpop.f32.mrf.mxu0
          %3195 = vmatprep.mubr.bf16.mxu0 0
          %3196 = vmatmul.mubr.bf16.gmra.mxu0 %v3051
          %v3197 = vpop.f32.mrf.mxu0
          %v3198 = vadd.f32 0.0, %v3197
          %v3199 = vpop.f32.mrf.mxu0
          %v3200 = vpop.f32.mrf.mxu0
          %v3201 = vadd.f32 0.0, %v3200
          %v3202 = vpop.f32.mrf.mxu0
          %3203 = vmatprep.mubr.bf16.mxu0 0
          %3204 = vmatmul.mubr.bf16.gmra.mxu0 %v3054
          %v3205 = vpop.f32.mrf.mxu0
          %v3206 = vadd.f32 0.0, %v3205
          %v3207 = vpop.f32.mrf.mxu0
          %v3208 = vpop.f32.mrf.mxu0
          %v3209 = vadd.f32 0.0, %v3208
          %v3210 = vpop.f32.mrf.mxu0
          %3211 = vmatprep.mubr.bf16.mxu0 0
          %3212 = vmatmul.mubr.bf16.gmra.mxu0 %v3057
          %v3213 = vpop.f32.mrf.mxu0
          %v3214 = vadd.f32 0.0, %v3213
          %v3215 = vpop.f32.mrf.mxu0
          %v3216 = vpop.f32.mrf.mxu0
          %v3217 = vadd.f32 0.0, %v3216
          %v3218 = vpop.f32.mrf.mxu0
          %3219 = vdwg.mxu0
          %v3220 = vadd.f32 %v2385, %v3094
          %v3221 = vadd.f32 %v2388, %v3097
          %v3222 = vadd.f32 %v2393, %v3102
          %v3223 = vadd.f32 %v2396, %v3105
          %v3224 = vadd.f32 %v2401, %v3110
          %v3225 = vadd.f32 %v2404, %v3113
          %v3226 = vadd.f32 %v2409, %v3118
          %v3227 = vadd.f32 %v2412, %v3121
          %v3228 = vadd.f32 %v2417, %v3126
          %v3229 = vadd.f32 %v2420, %v3129
          %v3230 = vadd.f32 %v2425, %v3134
          %v3231 = vadd.f32 %v2428, %v3137
          %v3232 = vadd.f32 %v2433, %v3142
          %v3233 = vadd.f32 %v2436, %v3145
          %v3234 = vadd.f32 %v2441, %v3150
          %v3235 = vadd.f32 %v2444, %v3153
          %v3236 = vadd.f32 %v2449, %v3158
          %v3237 = vadd.f32 %v2452, %v3161
          %v3238 = vadd.f32 %v2457, %v3166
          %v3239 = vadd.f32 %v2460, %v3169
          %v3240 = vadd.f32 %v2465, %v3174
          %v3241 = vadd.f32 %v2468, %v3177
          %v3242 = vadd.f32 %v2473, %v3182
          %v3243 = vadd.f32 %v2476, %v3185
          %v3244 = vadd.f32 %v2481, %v3190
          %v3245 = vadd.f32 %v2484, %v3193
          %v3246 = vadd.f32 %v2489, %v3198
          %v3247 = vadd.f32 %v2492, %v3201
          %v3248 = vadd.f32 %v2497, %v3206
          %v3249 = vadd.f32 %v2500, %v3209
          %v3250 = vadd.f32 %v2505, %v3214
          %v3251 = vadd.f32 %v2508, %v3217
          %v3252 = vld [vmem:[%s1495] sm:$0x8]
          %v3253 = vld [vmem:[%s1495 + $0x4] sm:$0xf]
          %v3254 = vld [vmem:[%s1495 + $0x8] sm:$0xf]
          %v3255 = vld [vmem:[%s1495 + $0x10] sm:$0x8]
          %v3256 = vld [vmem:[%s1495 + $0x14] sm:$0xf]
          %v3257 = vld [vmem:[%s1495 + $0x18] sm:$0xf]
          %v3258 = vld [vmem:[%s1495 + $0x20] sm:$0x8]
          %v3259 = vld [vmem:[%s1495 + $0x24] sm:$0xf]
          %v3260 = vld [vmem:[%s1495 + $0x28] sm:$0xf]
          %v3261 = vld [vmem:[%s1495 + $0x30] sm:$0x8]
          %v3262 = vld [vmem:[%s1495 + $0x34] sm:$0xf]
          %v3263 = vld [vmem:[%s1495 + $0x38] sm:$0xf]
          %v3264 = vld [vmem:[%s1495 + $0x40] sm:$0x8]
          %v3265 = vld [vmem:[%s1495 + $0x44] sm:$0xf]
          %v3266 = vld [vmem:[%s1495 + $0x48] sm:$0xf]
          %v3267 = vld [vmem:[%s1495 + $0x50] sm:$0x8]
          %v3268 = vld [vmem:[%s1495 + $0x54] sm:$0xf]
          %v3269 = vld [vmem:[%s1495 + $0x58] sm:$0xf]
          %v3270 = vld [vmem:[%s1495 + $0x60] sm:$0x8]
          %v3271 = vld [vmem:[%s1495 + $0x64] sm:$0xf]
          %v3272 = vld [vmem:[%s1495 + $0x68] sm:$0xf]
          %v3273 = vld [vmem:[%s1495 + $0x70] sm:$0x8]
          %v3274 = vld [vmem:[%s1495 + $0x74] sm:$0xf]
          %v3275 = vld [vmem:[%s1495 + $0x78] sm:$0xf]
          %v3276 = vld [vmem:[%s1495 + $0x80] sm:$0x8]
          %v3277 = vld [vmem:[%s1495 + $0x84] sm:$0xf]
          %v3278 = vld [vmem:[%s1495 + $0x88] sm:$0xf]
          %v3279 = vld [vmem:[%s1495 + $0x90] sm:$0x8]
          %v3280 = vld [vmem:[%s1495 + $0x94] sm:$0xf]
          %v3281 = vld [vmem:[%s1495 + $0x98] sm:$0xf]
          %v3282 = vld [vmem:[%s1495 + $0xa0] sm:$0x8]
          %v3283 = vld [vmem:[%s1495 + $0xa4] sm:$0xf]
          %v3284 = vld [vmem:[%s1495 + $0xa8] sm:$0xf]
          %v3285 = vld [vmem:[%s1495 + $0xb0] sm:$0x8]
          %v3286 = vld [vmem:[%s1495 + $0xb4] sm:$0xf]
          %v3287 = vld [vmem:[%s1495 + $0xb8] sm:$0xf]
          %v3288 = vld [vmem:[%s1495 + $0xc0] sm:$0x8]
          %v3289 = vld [vmem:[%s1495 + $0xc4] sm:$0xf]
          %v3290 = vld [vmem:[%s1495 + $0xc8] sm:$0xf]
          %v3291 = vld [vmem:[%s1495 + $0xd0] sm:$0x8]
          %v3292 = vld [vmem:[%s1495 + $0xd4] sm:$0xf]
          %v3293 = vld [vmem:[%s1495 + $0xd8] sm:$0xf]
          %v3294 = vld [vmem:[%s1495 + $0xe0] sm:$0x8]
          %v3295 = vld [vmem:[%s1495 + $0xe4] sm:$0xf]
          %v3296 = vld [vmem:[%s1495 + $0xe8] sm:$0xf]
          %v3297 = vld [vmem:[%s1495 + $0xf0] sm:$0x8]
          %v3298 = vld [vmem:[%s1495 + $0xf4] sm:$0xf]
          %v3299 = vld [vmem:[%s1495 + $0xf8] sm:$0xf]
          %v3301 = vshrl.u32 %v3252, 16
          %v3303 = vrot.slane %v3301, 7
          %v3304 = vrot.slane %v3303, 4
          %v3306 = vshrl.u32 %v3253, 16
          %v3308 = vrot.slane %v3306, 7
          %v3309 = vshll.u32 %v3253, 16
          %v3311 = vor.u32 %v3308, %v3309
          %v3312 = vsel %vm1579, %v3304, %v3311
          %v3313 = vrot.slane %v3308, 4
          %v3315 = vshrl.u32 %v3254, 16
          %v3317 = vrot.slane %v3315, 7
          %v3318 = vshll.u32 %v3254, 16
          %v3320 = vor.u32 %v3317, %v3318
          %v3321 = vsel %vm1579, %v3313, %v3320
          %v3323 = vshrl.u32 %v3255, 16
          %v3325 = vrot.slane %v3323, 7
          %v3326 = vrot.slane %v3325, 4
          %v3328 = vshrl.u32 %v3256, 16
          %v3330 = vrot.slane %v3328, 7
          %v3331 = vshll.u32 %v3256, 16
          %v3333 = vor.u32 %v3330, %v3331
          %v3334 = vsel %vm1579, %v3326, %v3333
          %v3335 = vrot.slane %v3330, 4
          %v3337 = vshrl.u32 %v3257, 16
          %v3339 = vrot.slane %v3337, 7
          %v3340 = vshll.u32 %v3257, 16
          %v3342 = vor.u32 %v3339, %v3340
          %v3343 = vsel %vm1579, %v3335, %v3342
          %v3345 = vshrl.u32 %v3258, 16
          %v3347 = vrot.slane %v3345, 7
          %v3348 = vrot.slane %v3347, 4
          %v3350 = vshrl.u32 %v3259, 16
          %v3352 = vrot.slane %v3350, 7
          %v3353 = vshll.u32 %v3259, 16
          %v3355 = vor.u32 %v3352, %v3353
          %v3356 = vsel %vm1579, %v3348, %v3355
          %v3357 = vrot.slane %v3352, 4
          %v3359 = vshrl.u32 %v3260, 16
          %v3361 = vrot.slane %v3359, 7
          %v3362 = vshll.u32 %v3260, 16
          %v3364 = vor.u32 %v3361, %v3362
          %v3365 = vsel %vm1579, %v3357, %v3364
          %v3367 = vshrl.u32 %v3261, 16
          %v3369 = vrot.slane %v3367, 7
          %v3370 = vrot.slane %v3369, 4
          %v3372 = vshrl.u32 %v3262, 16
          %v3374 = vrot.slane %v3372, 7
          %v3375 = vshll.u32 %v3262, 16
          %v3377 = vor.u32 %v3374, %v3375
          %v3378 = vsel %vm1579, %v3370, %v3377
          %v3379 = vrot.slane %v3374, 4
          %v3381 = vshrl.u32 %v3263, 16
          %v3383 = vrot.slane %v3381, 7
          %v3384 = vshll.u32 %v3263, 16
          %v3386 = vor.u32 %v3383, %v3384
          %v3387 = vsel %vm1579, %v3379, %v3386
          %v3389 = vshrl.u32 %v3264, 16
          %v3391 = vrot.slane %v3389, 7
          %v3392 = vrot.slane %v3391, 4
          %v3394 = vshrl.u32 %v3265, 16
          %v3396 = vrot.slane %v3394, 7
          %v3397 = vshll.u32 %v3265, 16
          %v3399 = vor.u32 %v3396, %v3397
          %v3400 = vsel %vm1579, %v3392, %v3399
          %v3401 = vrot.slane %v3396, 4
          %v3403 = vshrl.u32 %v3266, 16
          %v3405 = vrot.slane %v3403, 7
          %v3406 = vshll.u32 %v3266, 16
          %v3408 = vor.u32 %v3405, %v3406
          %v3409 = vsel %vm1579, %v3401, %v3408
          %v3411 = vshrl.u32 %v3267, 16
          %v3413 = vrot.slane %v3411, 7
          %v3414 = vrot.slane %v3413, 4
          %v3416 = vshrl.u32 %v3268, 16
          %v3418 = vrot.slane %v3416, 7
          %v3419 = vshll.u32 %v3268, 16
          %v3421 = vor.u32 %v3418, %v3419
          %v3422 = vsel %vm1579, %v3414, %v3421
          %v3423 = vrot.slane %v3418, 4
          %v3425 = vshrl.u32 %v3269, 16
          %v3427 = vrot.slane %v3425, 7
          %v3428 = vshll.u32 %v3269, 16
          %v3430 = vor.u32 %v3427, %v3428
          %v3431 = vsel %vm1579, %v3423, %v3430
          %v3433 = vshrl.u32 %v3270, 16
          %v3435 = vrot.slane %v3433, 7
          %v3436 = vrot.slane %v3435, 4
          %v3438 = vshrl.u32 %v3271, 16
          %v3440 = vrot.slane %v3438, 7
          %v3441 = vshll.u32 %v3271, 16
          %v3443 = vor.u32 %v3440, %v3441
          %v3444 = vsel %vm1579, %v3436, %v3443
          %v3445 = vrot.slane %v3440, 4
          %v3447 = vshrl.u32 %v3272, 16
          %v3449 = vrot.slane %v3447, 7
          %v3450 = vshll.u32 %v3272, 16
          %v3452 = vor.u32 %v3449, %v3450
          %v3453 = vsel %vm1579, %v3445, %v3452
          %v3455 = vshrl.u32 %v3273, 16
          %v3457 = vrot.slane %v3455, 7
          %v3458 = vrot.slane %v3457, 4
          %v3460 = vshrl.u32 %v3274, 16
          %v3462 = vrot.slane %v3460, 7
          %v3463 = vshll.u32 %v3274, 16
          %v3465 = vor.u32 %v3462, %v3463
          %v3466 = vsel %vm1579, %v3458, %v3465
          %v3467 = vrot.slane %v3462, 4
          %v3469 = vshrl.u32 %v3275, 16
          %v3471 = vrot.slane %v3469, 7
          %v3472 = vshll.u32 %v3275, 16
          %v3474 = vor.u32 %v3471, %v3472
          %v3475 = vsel %vm1579, %v3467, %v3474
          %v3477 = vshrl.u32 %v3276, 16
          %v3479 = vrot.slane %v3477, 7
          %v3480 = vrot.slane %v3479, 4
          %v3482 = vshrl.u32 %v3277, 16
          %v3484 = vrot.slane %v3482, 7
          %v3485 = vshll.u32 %v3277, 16
          %v3487 = vor.u32 %v3484, %v3485
          %v3488 = vsel %vm1579, %v3480, %v3487
          %v3489 = vrot.slane %v3484, 4
          %v3491 = vshrl.u32 %v3278, 16
          %v3493 = vrot.slane %v3491, 7
          %v3494 = vshll.u32 %v3278, 16
          %v3496 = vor.u32 %v3493, %v3494
          %v3497 = vsel %vm1579, %v3489, %v3496
          %v3499 = vshrl.u32 %v3279, 16
          %v3501 = vrot.slane %v3499, 7
          %v3502 = vrot.slane %v3501, 4
          %v3504 = vshrl.u32 %v3280, 16
          %v3506 = vrot.slane %v3504, 7
          %v3507 = vshll.u32 %v3280, 16
          %v3509 = vor.u32 %v3506, %v3507
          %v3510 = vsel %vm1579, %v3502, %v3509
          %v3511 = vrot.slane %v3506, 4
          %v3513 = vshrl.u32 %v3281, 16
          %v3515 = vrot.slane %v3513, 7
          %v3516 = vshll.u32 %v3281, 16
          %v3518 = vor.u32 %v3515, %v3516
          %v3519 = vsel %vm1579, %v3511, %v3518
          %v3521 = vshrl.u32 %v3282, 16
          %v3523 = vrot.slane %v3521, 7
          %v3524 = vrot.slane %v3523, 4
          %v3526 = vshrl.u32 %v3283, 16
          %v3528 = vrot.slane %v3526, 7
          %v3529 = vshll.u32 %v3283, 16
          %v3531 = vor.u32 %v3528, %v3529
          %v3532 = vsel %vm1579, %v3524, %v3531
          %v3533 = vrot.slane %v3528, 4
          %v3535 = vshrl.u32 %v3284, 16
          %v3537 = vrot.slane %v3535, 7
          %v3538 = vshll.u32 %v3284, 16
          %v3540 = vor.u32 %v3537, %v3538
          %v3541 = vsel %vm1579, %v3533, %v3540
          %v3543 = vshrl.u32 %v3285, 16
          %v3545 = vrot.slane %v3543, 7
          %v3546 = vrot.slane %v3545, 4
          %v3548 = vshrl.u32 %v3286, 16
          %v3550 = vrot.slane %v3548, 7
          %v3551 = vshll.u32 %v3286, 16
          %v3553 = vor.u32 %v3550, %v3551
          %v3554 = vsel %vm1579, %v3546, %v3553
          %v3555 = vrot.slane %v3550, 4
          %v3557 = vshrl.u32 %v3287, 16
          %v3559 = vrot.slane %v3557, 7
          %v3560 = vshll.u32 %v3287, 16
          %v3562 = vor.u32 %v3559, %v3560
          %v3563 = vsel %vm1579, %v3555, %v3562
          %v3565 = vshrl.u32 %v3288, 16
          %v3567 = vrot.slane %v3565, 7
          %v3568 = vrot.slane %v3567, 4
          %v3570 = vshrl.u32 %v3289, 16
          %v3572 = vrot.slane %v3570, 7
          %v3573 = vshll.u32 %v3289, 16
          %v3575 = vor.u32 %v3572, %v3573
          %v3576 = vsel %vm1579, %v3568, %v3575
          %v3577 = vrot.slane %v3572, 4
          %v3579 = vshrl.u32 %v3290, 16
          %v3581 = vrot.slane %v3579, 7
          %v3582 = vshll.u32 %v3290, 16
          %v3584 = vor.u32 %v3581, %v3582
          %v3585 = vsel %vm1579, %v3577, %v3584
          %v3587 = vshrl.u32 %v3291, 16
          %v3589 = vrot.slane %v3587, 7
          %v3590 = vrot.slane %v3589, 4
          %v3592 = vshrl.u32 %v3292, 16
          %v3594 = vrot.slane %v3592, 7
          %v3595 = vshll.u32 %v3292, 16
          %v3597 = vor.u32 %v3594, %v3595
          %v3598 = vsel %vm1579, %v3590, %v3597
          %v3599 = vrot.slane %v3594, 4
          %v3601 = vshrl.u32 %v3293, 16
          %v3603 = vrot.slane %v3601, 7
          %v3604 = vshll.u32 %v3293, 16
          %v3606 = vor.u32 %v3603, %v3604
          %v3607 = vsel %vm1579, %v3599, %v3606
          %v3609 = vshrl.u32 %v3294, 16
          %v3611 = vrot.slane %v3609, 7
          %v3612 = vrot.slane %v3611, 4
          %v3614 = vshrl.u32 %v3295, 16
          %v3616 = vrot.slane %v3614, 7
          %v3617 = vshll.u32 %v3295, 16
          %v3619 = vor.u32 %v3616, %v3617
          %v3620 = vsel %vm1579, %v3612, %v3619
          %v3621 = vrot.slane %v3616, 4
          %v3623 = vshrl.u32 %v3296, 16
          %v3625 = vrot.slane %v3623, 7
          %v3626 = vshll.u32 %v3296, 16
          %v3628 = vor.u32 %v3625, %v3626
          %v3629 = vsel %vm1579, %v3621, %v3628
          %v3631 = vshrl.u32 %v3297, 16
          %v3633 = vrot.slane %v3631, 7
          %v3634 = vrot.slane %v3633, 4
          %v3636 = vshrl.u32 %v3298, 16
          %v3638 = vrot.slane %v3636, 7
          %v3639 = vshll.u32 %v3298, 16
          %v3641 = vor.u32 %v3638, %v3639
          %v3642 = vsel %vm1579, %v3634, %v3641
          %v3643 = vrot.slane %v3638, 4
          %v3645 = vshrl.u32 %v3299, 16
          %v3647 = vrot.slane %v3645, 7
          %v3648 = vshll.u32 %v3299, 16
          %v3650 = vor.u32 %v3647, %v3648
          %v3651 = vsel %vm1579, %v3643, %v3650
          %s3652 = scalar_lea.vmem %s5, 48
          %v3653 = vld [vmem:[%s3652] sm:$0xf]
          %v3654 = vld [vmem:[%s3652 + $0x4] sm:$0xf]
          %v3655 = vld [vmem:[%s3652 + $0x8] sm:$0xf]
          %v3656 = vld [vmem:[%s3652 + $0xc] sm:$0xf]
          %v3657 = vunpack.c.l.b16 %v3312
          %v3658 = vunpack.c.l.b16 %v3321
          %v3659 = vunpack.c.l.b16 %v3334
          %v3660 = vunpack.c.l.b16 %v3343
          %v3661 = vunpack.c.l.b16 %v3356
          %v3662 = vunpack.c.l.b16 %v3365
          %v3663 = vunpack.c.l.b16 %v3378
          %v3664 = vunpack.c.l.b16 %v3387
          %v3665 = vunpack.c.l.b16 %v3400
          %v3666 = vunpack.c.l.b16 %v3409
          %v3667 = vunpack.c.l.b16 %v3422
          %v3668 = vunpack.c.l.b16 %v3431
          %v3669 = vunpack.c.l.b16 %v3444
          %v3670 = vunpack.c.l.b16 %v3453
          %v3671 = vunpack.c.l.b16 %v3466
          %v3672 = vunpack.c.l.b16 %v3475
          %v3673 = vunpack.c.l.b16 %v3488
          %v3674 = vunpack.c.l.b16 %v3497
          %v3675 = vunpack.c.l.b16 %v3510
          %v3676 = vunpack.c.l.b16 %v3519
          %v3677 = vunpack.c.l.b16 %v3532
          %v3678 = vunpack.c.l.b16 %v3541
          %v3679 = vunpack.c.l.b16 %v3554
          %v3680 = vunpack.c.l.b16 %v3563
          %v3681 = vunpack.c.l.b16 %v3576
          %v3682 = vunpack.c.l.b16 %v3585
          %v3683 = vunpack.c.l.b16 %v3598
          %v3684 = vunpack.c.l.b16 %v3607
          %v3685 = vunpack.c.l.b16 %v3620
          %v3686 = vunpack.c.l.b16 %v3629
          %v3687 = vunpack.c.l.b16 %v3642
          %v3688 = vunpack.c.l.b16 %v3651
          %v3689 = vpack.c.b16 %v3658, %v3657
          %v3690 = vpack.c.b16 %v3660, %v3659
          %v3691 = vpack.c.b16 %v3662, %v3661
          %v3692 = vpack.c.b16 %v3664, %v3663
          %v3693 = vpack.c.b16 %v3666, %v3665
          %v3694 = vpack.c.b16 %v3668, %v3667
          %v3695 = vpack.c.b16 %v3670, %v3669
          %v3696 = vpack.c.b16 %v3672, %v3671
          %v3697 = vpack.c.b16 %v3674, %v3673
          %v3698 = vpack.c.b16 %v3676, %v3675
          %v3699 = vpack.c.b16 %v3678, %v3677
          %v3700 = vpack.c.b16 %v3680, %v3679
          %v3701 = vpack.c.b16 %v3682, %v3681
          %v3702 = vpack.c.b16 %v3684, %v3683
          %v3703 = vpack.c.b16 %v3686, %v3685
          %v3704 = vpack.c.b16 %v3688, %v3687
          %v3709 = vunpack.c.l.b16 %v3653
          %v3710 = vunpack.c.l.b16 %v3654
          %v3711 = vunpack.c.l.b16 %v3655
          %v3712 = vunpack.c.l.b16 %v3656
          %v3713 = vpack.c.b16 %v3710, %v3709
          %v3714 = vpack.c.b16 %v3712, %v3711
          %v3718 = vsel %vm709, %v3689, 0
          %v3721 = vsel %vm709, %v3690, 0
          %v3724 = vsel %vm709, %v3691, 0
          %v3727 = vsel %vm709, %v3692, 0
          %v3730 = vsel %vm709, %v3693, 0
          %v3733 = vsel %vm709, %v3694, 0
          %v3736 = vsel %vm709, %v3695, 0
          %v3739 = vsel %vm709, %v3696, 0
          %v3742 = vsel %vm709, %v3697, 0
          %v3745 = vsel %vm709, %v3698, 0
          %v3748 = vsel %vm709, %v3699, 0
          %v3751 = vsel %vm709, %v3700, 0
          %v3754 = vsel %vm709, %v3701, 0
          %v3757 = vsel %vm709, %v3702, 0
          %v3760 = vsel %vm709, %v3703, 0
          %v3763 = vsel %vm709, %v3704, 0
          %3765 = vmatprep.subr.bf16.mxu0 0
          %3766 = vmatpush1.bf16.msra.mxu0 0
          %3767 = vmatprep.subr.bf16.mxu0 0
          %3768 = vmatpush1.bf16.msra.mxu0 0
          %3769 = vmatprep.subr.bf16.mxu0 0
          %3770 = vmatpush1.bf16.msra.mxu0 0
          %3771 = vmatprep.subr.bf16.mxu0 0
          %3772 = vmatpush1.bf16.msra.mxu0 0
          %3773 = vmatprep.subr.bf16.mxu0 0
          %3774 = vmatpush1.bf16.msra.mxu0 0
          %3775 = vmatprep.subr.bf16.mxu0 0
          %3776 = vmatpush1.bf16.msra.mxu0 0
          %3777 = vmatprep.subr.bf16.mxu0 0
          %3778 = vmatpush1.bf16.msra.mxu0 %v3714
          %3779 = vmatprep.subr.bf16.mxu0 0
          %3780 = vmatpush1.bf16.msra.mxu0 %v3713
          %3781 = vmatprep.subr.bf16.mxu0 0
          %3782 = vmatpush2.bf16.msra.mxu0 0
          %3783 = vmatprep.subr.bf16.mxu0 0
          %3784 = vmatpush2.bf16.msra.mxu0 0
          %3785 = vmatprep.subr.bf16.mxu0 0
          %3786 = vmatpush2.bf16.msra.mxu0 0
          %3787 = vmatprep.subr.bf16.mxu0 0
          %3788 = vmatpush2.bf16.msra.mxu0 0
          %3789 = vmatprep.subr.bf16.mxu0 0
          %3790 = vmatpush2.bf16.msra.mxu0 0
          %3791 = vmatprep.subr.bf16.mxu0 0
          %3792 = vmatpush2.bf16.msra.mxu0 0
          %3793 = vmatprep.subr.bf16.mxu0 0
          %3794 = vmatpush2.bf16.msra.mxu0 0
          %3795 = vmatprep.subr.bf16.mxu0 0
          %3796 = vmatpush2.bf16.msra.mxu0 0
          %3797 = vmatprep.mubr.bf16.mxu0 0
          %3798 = vmatmul.mubr.bf16.gmra.mxu0 %v3718
          %v3799 = vpop.f32.mrf.mxu0
          %v3800 = vadd.f32 0.0, %v3799
          %v3801 = vpop.f32.mrf.mxu0
          %v3802 = vpop.f32.mrf.mxu0
          %v3803 = vadd.f32 0.0, %v3802
          %v3804 = vpop.f32.mrf.mxu0
          %3805 = vmatprep.mubr.bf16.mxu0 0
          %3806 = vmatmul.mubr.bf16.gmra.mxu0 %v3721
          %v3807 = vpop.f32.mrf.mxu0
          %v3808 = vadd.f32 0.0, %v3807
          %v3809 = vpop.f32.mrf.mxu0
          %v3810 = vpop.f32.mrf.mxu0
          %v3811 = vadd.f32 0.0, %v3810
          %v3812 = vpop.f32.mrf.mxu0
          %3813 = vmatprep.mubr.bf16.mxu0 0
          %3814 = vmatmul.mubr.bf16.gmra.mxu0 %v3724
          %v3815 = vpop.f32.mrf.mxu0
          %v3816 = vadd.f32 0.0, %v3815
          %v3817 = vpop.f32.mrf.mxu0
          %v3818 = vpop.f32.mrf.mxu0
          %v3819 = vadd.f32 0.0, %v3818
          %v3820 = vpop.f32.mrf.mxu0
          %3821 = vmatprep.mubr.bf16.mxu0 0
          %3822 = vmatmul.mubr.bf16.gmra.mxu0 %v3727
          %v3823 = vpop.f32.mrf.mxu0
          %v3824 = vadd.f32 0.0, %v3823
          %v3825 = vpop.f32.mrf.mxu0
          %v3826 = vpop.f32.mrf.mxu0
          %v3827 = vadd.f32 0.0, %v3826
          %v3828 = vpop.f32.mrf.mxu0
          %3829 = vmatprep.mubr.bf16.mxu0 0
          %3830 = vmatmul.mubr.bf16.gmra.mxu0 %v3730
          %v3831 = vpop.f32.mrf.mxu0
          %v3832 = vadd.f32 0.0, %v3831
          %v3833 = vpop.f32.mrf.mxu0
          %v3834 = vpop.f32.mrf.mxu0
          %v3835 = vadd.f32 0.0, %v3834
          %v3836 = vpop.f32.mrf.mxu0
          %3837 = vmatprep.mubr.bf16.mxu0 0
          %3838 = vmatmul.mubr.bf16.gmra.mxu0 %v3733
          %v3839 = vpop.f32.mrf.mxu0
          %v3840 = vadd.f32 0.0, %v3839
          %v3841 = vpop.f32.mrf.mxu0
          %v3842 = vpop.f32.mrf.mxu0
          %v3843 = vadd.f32 0.0, %v3842
          %v3844 = vpop.f32.mrf.mxu0
          %3845 = vmatprep.mubr.bf16.mxu0 0
          %3846 = vmatmul.mubr.bf16.gmra.mxu0 %v3736
          %v3847 = vpop.f32.mrf.mxu0
          %v3848 = vadd.f32 0.0, %v3847
          %v3849 = vpop.f32.mrf.mxu0
          %v3850 = vpop.f32.mrf.mxu0
          %v3851 = vadd.f32 0.0, %v3850
          %v3852 = vpop.f32.mrf.mxu0
          %3853 = vmatprep.mubr.bf16.mxu0 0
          %3854 = vmatmul.mubr.bf16.gmra.mxu0 %v3739
          %v3855 = vpop.f32.mrf.mxu0
          %v3856 = vadd.f32 0.0, %v3855
          %v3857 = vpop.f32.mrf.mxu0
          %v3858 = vpop.f32.mrf.mxu0
          %v3859 = vadd.f32 0.0, %v3858
          %v3860 = vpop.f32.mrf.mxu0
          %3861 = vmatprep.mubr.bf16.mxu0 0
          %3862 = vmatmul.mubr.bf16.gmra.mxu0 %v3742
          %v3863 = vpop.f32.mrf.mxu0
          %v3864 = vadd.f32 0.0, %v3863
          %v3865 = vpop.f32.mrf.mxu0
          %v3866 = vpop.f32.mrf.mxu0
          %v3867 = vadd.f32 0.0, %v3866
          %v3868 = vpop.f32.mrf.mxu0
          %3869 = vmatprep.mubr.bf16.mxu0 0
          %3870 = vmatmul.mubr.bf16.gmra.mxu0 %v3745
          %v3871 = vpop.f32.mrf.mxu0
          %v3872 = vadd.f32 0.0, %v3871
          %v3873 = vpop.f32.mrf.mxu0
          %v3874 = vpop.f32.mrf.mxu0
          %v3875 = vadd.f32 0.0, %v3874
          %v3876 = vpop.f32.mrf.mxu0
          %3877 = vmatprep.mubr.bf16.mxu0 0
          %3878 = vmatmul.mubr.bf16.gmra.mxu0 %v3748
          %v3879 = vpop.f32.mrf.mxu0
          %v3880 = vadd.f32 0.0, %v3879
          %v3881 = vpop.f32.mrf.mxu0
          %v3882 = vpop.f32.mrf.mxu0
          %v3883 = vadd.f32 0.0, %v3882
          %v3884 = vpop.f32.mrf.mxu0
          %3885 = vmatprep.mubr.bf16.mxu0 0
          %3886 = vmatmul.mubr.bf16.gmra.mxu0 %v3751
          %v3887 = vpop.f32.mrf.mxu0
          %v3888 = vadd.f32 0.0, %v3887
          %v3889 = vpop.f32.mrf.mxu0
          %v3890 = vpop.f32.mrf.mxu0
          %v3891 = vadd.f32 0.0, %v3890
          %v3892 = vpop.f32.mrf.mxu0
          %3893 = vmatprep.mubr.bf16.mxu0 0
          %3894 = vmatmul.mubr.bf16.gmra.mxu0 %v3754
          %v3895 = vpop.f32.mrf.mxu0
          %v3896 = vadd.f32 0.0, %v3895
          %v3897 = vpop.f32.mrf.mxu0
          %v3898 = vpop.f32.mrf.mxu0
          %v3899 = vadd.f32 0.0, %v3898
          %v3900 = vpop.f32.mrf.mxu0
          %3901 = vmatprep.mubr.bf16.mxu0 0
          %3902 = vmatmul.mubr.bf16.gmra.mxu0 %v3757
          %v3903 = vpop.f32.mrf.mxu0
          %v3904 = vadd.f32 0.0, %v3903
          %v3905 = vpop.f32.mrf.mxu0
          %v3906 = vpop.f32.mrf.mxu0
          %v3907 = vadd.f32 0.0, %v3906
          %v3908 = vpop.f32.mrf.mxu0
          %3909 = vmatprep.mubr.bf16.mxu0 0
          %3910 = vmatmul.mubr.bf16.gmra.mxu0 %v3760
          %v3911 = vpop.f32.mrf.mxu0
          %v3912 = vadd.f32 0.0, %v3911
          %v3913 = vpop.f32.mrf.mxu0
          %v3914 = vpop.f32.mrf.mxu0
          %v3915 = vadd.f32 0.0, %v3914
          %v3916 = vpop.f32.mrf.mxu0
          %3917 = vmatprep.mubr.bf16.mxu0 0
          %3918 = vmatmul.mubr.bf16.gmra.mxu0 %v3763
          %v3919 = vpop.f32.mrf.mxu0
          %v3920 = vadd.f32 0.0, %v3919
          %v3921 = vpop.f32.mrf.mxu0
          %v3922 = vpop.f32.mrf.mxu0
          %v3923 = vadd.f32 0.0, %v3922
          %v3924 = vpop.f32.mrf.mxu0
          %3925 = vdwg.mxu0
          %v3926 = vadd.f32 %v3220, %v3800
          %v3927 = vadd.f32 %v3221, %v3803
          %v3928 = vadd.f32 %v3222, %v3808
          %v3929 = vadd.f32 %v3223, %v3811
          %v3930 = vadd.f32 %v3224, %v3816
          %v3931 = vadd.f32 %v3225, %v3819
          %v3932 = vadd.f32 %v3226, %v3824
          %v3933 = vadd.f32 %v3227, %v3827
          %v3934 = vadd.f32 %v3228, %v3832
          %v3935 = vadd.f32 %v3229, %v3835
          %v3936 = vadd.f32 %v3230, %v3840
          %v3937 = vadd.f32 %v3231, %v3843
          %v3938 = vadd.f32 %v3232, %v3848
          %v3939 = vadd.f32 %v3233, %v3851
          %v3940 = vadd.f32 %v3234, %v3856
          %v3941 = vadd.f32 %v3235, %v3859
          %v3942 = vadd.f32 %v3236, %v3864
          %v3943 = vadd.f32 %v3237, %v3867
          %v3944 = vadd.f32 %v3238, %v3872
          %v3945 = vadd.f32 %v3239, %v3875
          %v3946 = vadd.f32 %v3240, %v3880
          %v3947 = vadd.f32 %v3241, %v3883
          %v3948 = vadd.f32 %v3242, %v3888
          %v3949 = vadd.f32 %v3243, %v3891
          %v3950 = vadd.f32 %v3244, %v3896
          %v3951 = vadd.f32 %v3245, %v3899
          %v3952 = vadd.f32 %v3246, %v3904
          %v3953 = vadd.f32 %v3247, %v3907
          %v3954 = vadd.f32 %v3248, %v3912
          %v3955 = vadd.f32 %v3249, %v3915
          %v3956 = vadd.f32 %v3250, %v3920
          %v3957 = vadd.f32 %v3251, %v3923
          %s3958 = scalar_lea.vmem %s5, 64
          %v3959 = vld [vmem:[%s3958] sm:$0xf]
          %v3960 = vld [vmem:[%s3958 + $0x4] sm:$0xf]
          %v3961 = vld [vmem:[%s3958 + $0x8] sm:$0xf]
          %v3962 = vld [vmem:[%s3958 + $0xc] sm:$0xf]
          %v3995 = vunpack.c.l.b16 %v3253
          %v3996 = vunpack.c.l.b16 %v3254
          %v3997 = vunpack.c.l.b16 %v3256
          %v3998 = vunpack.c.l.b16 %v3257
          %v3999 = vunpack.c.l.b16 %v3259
          %v4000 = vunpack.c.l.b16 %v3260
          %v4001 = vunpack.c.l.b16 %v3262
          %v4002 = vunpack.c.l.b16 %v3263
          %v4003 = vunpack.c.l.b16 %v3265
          %v4004 = vunpack.c.l.b16 %v3266
          %v4005 = vunpack.c.l.b16 %v3268
          %v4006 = vunpack.c.l.b16 %v3269
          %v4007 = vunpack.c.l.b16 %v3271
          %v4008 = vunpack.c.l.b16 %v3272
          %v4009 = vunpack.c.l.b16 %v3274
          %v4010 = vunpack.c.l.b16 %v3275
          %v4011 = vunpack.c.l.b16 %v3277
          %v4012 = vunpack.c.l.b16 %v3278
          %v4013 = vunpack.c.l.b16 %v3280
          %v4014 = vunpack.c.l.b16 %v3281
          %v4015 = vunpack.c.l.b16 %v3283
          %v4016 = vunpack.c.l.b16 %v3284
          %v4017 = vunpack.c.l.b16 %v3286
          %v4018 = vunpack.c.l.b16 %v3287
          %v4019 = vunpack.c.l.b16 %v3289
          %v4020 = vunpack.c.l.b16 %v3290
          %v4021 = vunpack.c.l.b16 %v3292
          %v4022 = vunpack.c.l.b16 %v3293
          %v4023 = vunpack.c.l.b16 %v3295
          %v4024 = vunpack.c.l.b16 %v3296
          %v4025 = vunpack.c.l.b16 %v3298
          %v4026 = vunpack.c.l.b16 %v3299
          %v4027 = vpack.c.b16 %v3996, %v3995
          %v4028 = vpack.c.b16 %v3998, %v3997
          %v4029 = vpack.c.b16 %v4000, %v3999
          %v4030 = vpack.c.b16 %v4002, %v4001
          %v4031 = vpack.c.b16 %v4004, %v4003
          %v4032 = vpack.c.b16 %v4006, %v4005
          %v4033 = vpack.c.b16 %v4008, %v4007
          %v4034 = vpack.c.b16 %v4010, %v4009
          %v4035 = vpack.c.b16 %v4012, %v4011
          %v4036 = vpack.c.b16 %v4014, %v4013
          %v4037 = vpack.c.b16 %v4016, %v4015
          %v4038 = vpack.c.b16 %v4018, %v4017
          %v4039 = vpack.c.b16 %v4020, %v4019
          %v4040 = vpack.c.b16 %v4022, %v4021
          %v4041 = vpack.c.b16 %v4024, %v4023
          %v4042 = vpack.c.b16 %v4026, %v4025
          %v4047 = vunpack.c.l.b16 %v3959
          %v4048 = vunpack.c.l.b16 %v3960
          %v4049 = vunpack.c.l.b16 %v3961
          %v4050 = vunpack.c.l.b16 %v3962
          %v4051 = vpack.c.b16 %v4048, %v4047
          %v4052 = vpack.c.b16 %v4050, %v4049
          %v4056 = vsel %vm709, %v4027, 0
          %v4059 = vsel %vm709, %v4028, 0
          %v4062 = vsel %vm709, %v4029, 0
          %v4065 = vsel %vm709, %v4030, 0
          %v4068 = vsel %vm709, %v4031, 0
          %v4071 = vsel %vm709, %v4032, 0
          %v4074 = vsel %vm709, %v4033, 0
          %v4077 = vsel %vm709, %v4034, 0
          %v4080 = vsel %vm709, %v4035, 0
          %v4083 = vsel %vm709, %v4036, 0
          %v4086 = vsel %vm709, %v4037, 0
          %v4089 = vsel %vm709, %v4038, 0
          %v4092 = vsel %vm709, %v4039, 0
          %v4095 = vsel %vm709, %v4040, 0
          %v4098 = vsel %vm709, %v4041, 0
          %v4101 = vsel %vm709, %v4042, 0
          %4103 = vmatprep.subr.bf16.mxu0 0
          %4104 = vmatpush1.bf16.msra.mxu0 0
          %4105 = vmatprep.subr.bf16.mxu0 0
          %4106 = vmatpush1.bf16.msra.mxu0 0
          %4107 = vmatprep.subr.bf16.mxu0 0
          %4108 = vmatpush1.bf16.msra.mxu0 0
          %4109 = vmatprep.subr.bf16.mxu0 0
          %4110 = vmatpush1.bf16.msra.mxu0 0
          %4111 = vmatprep.subr.bf16.mxu0 0
          %4112 = vmatpush1.bf16.msra.mxu0 0
          %4113 = vmatprep.subr.bf16.mxu0 0
          %4114 = vmatpush1.bf16.msra.mxu0 0
          %4115 = vmatprep.subr.bf16.mxu0 0
          %4116 = vmatpush1.bf16.msra.mxu0 %v4052
          %4117 = vmatprep.subr.bf16.mxu0 0
          %4118 = vmatpush1.bf16.msra.mxu0 %v4051
          %4119 = vmatprep.subr.bf16.mxu0 0
          %4120 = vmatpush2.bf16.msra.mxu0 0
          %4121 = vmatprep.subr.bf16.mxu0 0
          %4122 = vmatpush2.bf16.msra.mxu0 0
          %4123 = vmatprep.subr.bf16.mxu0 0
          %4124 = vmatpush2.bf16.msra.mxu0 0
          %4125 = vmatprep.subr.bf16.mxu0 0
          %4126 = vmatpush2.bf16.msra.mxu0 0
          %4127 = vmatprep.subr.bf16.mxu0 0
          %4128 = vmatpush2.bf16.msra.mxu0 0
          %4129 = vmatprep.subr.bf16.mxu0 0
          %4130 = vmatpush2.bf16.msra.mxu0 0
          %4131 = vmatprep.subr.bf16.mxu0 0
          %4132 = vmatpush2.bf16.msra.mxu0 0
          %4133 = vmatprep.subr.bf16.mxu0 0
          %4134 = vmatpush2.bf16.msra.mxu0 0
          %4135 = vmatprep.mubr.bf16.mxu0 0
          %4136 = vmatmul.mubr.bf16.gmra.mxu0 %v4056
          %v4137 = vpop.f32.mrf.mxu0
          %v4138 = vadd.f32 0.0, %v4137
          %v4139 = vpop.f32.mrf.mxu0
          %v4140 = vpop.f32.mrf.mxu0
          %v4141 = vadd.f32 0.0, %v4140
          %v4142 = vpop.f32.mrf.mxu0
          %4143 = vmatprep.mubr.bf16.mxu0 0
          %4144 = vmatmul.mubr.bf16.gmra.mxu0 %v4059
          %v4145 = vpop.f32.mrf.mxu0
          %v4146 = vadd.f32 0.0, %v4145
          %v4147 = vpop.f32.mrf.mxu0
          %v4148 = vpop.f32.mrf.mxu0
          %v4149 = vadd.f32 0.0, %v4148
          %v4150 = vpop.f32.mrf.mxu0
          %4151 = vmatprep.mubr.bf16.mxu0 0
          %4152 = vmatmul.mubr.bf16.gmra.mxu0 %v4062
          %v4153 = vpop.f32.mrf.mxu0
          %v4154 = vadd.f32 0.0, %v4153
          %v4155 = vpop.f32.mrf.mxu0
          %v4156 = vpop.f32.mrf.mxu0
          %v4157 = vadd.f32 0.0, %v4156
          %v4158 = vpop.f32.mrf.mxu0
          %4159 = vmatprep.mubr.bf16.mxu0 0
          %4160 = vmatmul.mubr.bf16.gmra.mxu0 %v4065
          %v4161 = vpop.f32.mrf.mxu0
          %v4162 = vadd.f32 0.0, %v4161
          %v4163 = vpop.f32.mrf.mxu0
          %v4164 = vpop.f32.mrf.mxu0
          %v4165 = vadd.f32 0.0, %v4164
          %v4166 = vpop.f32.mrf.mxu0
          %4167 = vmatprep.mubr.bf16.mxu0 0
          %4168 = vmatmul.mubr.bf16.gmra.mxu0 %v4068
          %v4169 = vpop.f32.mrf.mxu0
          %v4170 = vadd.f32 0.0, %v4169
          %v4171 = vpop.f32.mrf.mxu0
          %v4172 = vpop.f32.mrf.mxu0
          %v4173 = vadd.f32 0.0, %v4172
          %v4174 = vpop.f32.mrf.mxu0
          %4175 = vmatprep.mubr.bf16.mxu0 0
          %4176 = vmatmul.mubr.bf16.gmra.mxu0 %v4071
          %v4177 = vpop.f32.mrf.mxu0
          %v4178 = vadd.f32 0.0, %v4177
          %v4179 = vpop.f32.mrf.mxu0
          %v4180 = vpop.f32.mrf.mxu0
          %v4181 = vadd.f32 0.0, %v4180
          %v4182 = vpop.f32.mrf.mxu0
          %4183 = vmatprep.mubr.bf16.mxu0 0
          %4184 = vmatmul.mubr.bf16.gmra.mxu0 %v4074
          %v4185 = vpop.f32.mrf.mxu0
          %v4186 = vadd.f32 0.0, %v4185
          %v4187 = vpop.f32.mrf.mxu0
          %v4188 = vpop.f32.mrf.mxu0
          %v4189 = vadd.f32 0.0, %v4188
          %v4190 = vpop.f32.mrf.mxu0
          %4191 = vmatprep.mubr.bf16.mxu0 0
          %4192 = vmatmul.mubr.bf16.gmra.mxu0 %v4077
          %v4193 = vpop.f32.mrf.mxu0
          %v4194 = vadd.f32 0.0, %v4193
          %v4195 = vpop.f32.mrf.mxu0
          %v4196 = vpop.f32.mrf.mxu0
          %v4197 = vadd.f32 0.0, %v4196
          %v4198 = vpop.f32.mrf.mxu0
          %4199 = vmatprep.mubr.bf16.mxu0 0
          %4200 = vmatmul.mubr.bf16.gmra.mxu0 %v4080
          %v4201 = vpop.f32.mrf.mxu0
          %v4202 = vadd.f32 0.0, %v4201
          %v4203 = vpop.f32.mrf.mxu0
          %v4204 = vpop.f32.mrf.mxu0
          %v4205 = vadd.f32 0.0, %v4204
          %v4206 = vpop.f32.mrf.mxu0
          %4207 = vmatprep.mubr.bf16.mxu0 0
          %4208 = vmatmul.mubr.bf16.gmra.mxu0 %v4083
          %v4209 = vpop.f32.mrf.mxu0
          %v4210 = vadd.f32 0.0, %v4209
          %v4211 = vpop.f32.mrf.mxu0
          %v4212 = vpop.f32.mrf.mxu0
          %v4213 = vadd.f32 0.0, %v4212
          %v4214 = vpop.f32.mrf.mxu0
          %4215 = vmatprep.mubr.bf16.mxu0 0
          %4216 = vmatmul.mubr.bf16.gmra.mxu0 %v4086
          %v4217 = vpop.f32.mrf.mxu0
          %v4218 = vadd.f32 0.0, %v4217
          %v4219 = vpop.f32.mrf.mxu0
          %v4220 = vpop.f32.mrf.mxu0
          %v4221 = vadd.f32 0.0, %v4220
          %v4222 = vpop.f32.mrf.mxu0
          %4223 = vmatprep.mubr.bf16.mxu0 0
          %4224 = vmatmul.mubr.bf16.gmra.mxu0 %v4089
          %v4225 = vpop.f32.mrf.mxu0
          %v4226 = vadd.f32 0.0, %v4225
          %v4227 = vpop.f32.mrf.mxu0
          %v4228 = vpop.f32.mrf.mxu0
          %v4229 = vadd.f32 0.0, %v4228
          %v4230 = vpop.f32.mrf.mxu0
          %4231 = vmatprep.mubr.bf16.mxu0 0
          %4232 = vmatmul.mubr.bf16.gmra.mxu0 %v4092
          %v4233 = vpop.f32.mrf.mxu0
          %v4234 = vadd.f32 0.0, %v4233
          %v4235 = vpop.f32.mrf.mxu0
          %v4236 = vpop.f32.mrf.mxu0
          %v4237 = vadd.f32 0.0, %v4236
          %v4238 = vpop.f32.mrf.mxu0
          %4239 = vmatprep.mubr.bf16.mxu0 0
          %4240 = vmatmul.mubr.bf16.gmra.mxu0 %v4095
          %v4241 = vpop.f32.mrf.mxu0
          %v4242 = vadd.f32 0.0, %v4241
          %v4243 = vpop.f32.mrf.mxu0
          %v4244 = vpop.f32.mrf.mxu0
          %v4245 = vadd.f32 0.0, %v4244
          %v4246 = vpop.f32.mrf.mxu0
          %4247 = vmatprep.mubr.bf16.mxu0 0
          %4248 = vmatmul.mubr.bf16.gmra.mxu0 %v4098
          %v4249 = vpop.f32.mrf.mxu0
          %v4250 = vadd.f32 0.0, %v4249
          %v4251 = vpop.f32.mrf.mxu0
          %v4252 = vpop.f32.mrf.mxu0
          %v4253 = vadd.f32 0.0, %v4252
          %v4254 = vpop.f32.mrf.mxu0
          %4255 = vmatprep.mubr.bf16.mxu0 0
          %4256 = vmatmul.mubr.bf16.gmra.mxu0 %v4101
          %v4257 = vpop.f32.mrf.mxu0
          %v4258 = vadd.f32 0.0, %v4257
          %v4259 = vpop.f32.mrf.mxu0
          %v4260 = vpop.f32.mrf.mxu0
          %v4261 = vadd.f32 0.0, %v4260
          %v4262 = vpop.f32.mrf.mxu0
          %4263 = vdwg.mxu0
          %v4264 = vadd.f32 %v3926, %v4138
          %v4265 = vadd.f32 %v3927, %v4141
          %v4266 = vadd.f32 %v3928, %v4146
          %v4267 = vadd.f32 %v3929, %v4149
          %v4268 = vadd.f32 %v3930, %v4154
          %v4269 = vadd.f32 %v3931, %v4157
          %v4270 = vadd.f32 %v3932, %v4162
          %v4271 = vadd.f32 %v3933, %v4165
          %v4272 = vadd.f32 %v3934, %v4170
          %v4273 = vadd.f32 %v3935, %v4173
          %v4274 = vadd.f32 %v3936, %v4178
          %v4275 = vadd.f32 %v3937, %v4181
          %v4276 = vadd.f32 %v3938, %v4186
          %v4277 = vadd.f32 %v3939, %v4189
          %v4278 = vadd.f32 %v3940, %v4194
          %v4279 = vadd.f32 %v3941, %v4197
          %v4280 = vadd.f32 %v3942, %v4202
          %v4281 = vadd.f32 %v3943, %v4205
          %v4282 = vadd.f32 %v3944, %v4210
          %v4283 = vadd.f32 %v3945, %v4213
          %v4284 = vadd.f32 %v3946, %v4218
          %v4285 = vadd.f32 %v3947, %v4221
          %v4286 = vadd.f32 %v3948, %v4226
          %v4287 = vadd.f32 %v3949, %v4229
          %v4288 = vadd.f32 %v3950, %v4234
          %v4289 = vadd.f32 %v3951, %v4237
          %v4290 = vadd.f32 %v3952, %v4242
          %v4291 = vadd.f32 %v3953, %v4245
          %v4292 = vadd.f32 %v3954, %v4250
          %v4293 = vadd.f32 %v3955, %v4253
          %v4294 = vadd.f32 %v3956, %v4258
          %v4295 = vadd.f32 %v3957, %v4261
          %v4296 = vld [vmem:[%s1495 + $0x4] sm:$0xf]
          %v4297 = vld [vmem:[%s1495 + $0x8] sm:$0xf]
          %v4298 = vld [vmem:[%s1495 + $0xc] sm:$0x1]
          %v4299 = vld [vmem:[%s1495 + $0x14] sm:$0xf]
          %v4300 = vld [vmem:[%s1495 + $0x18] sm:$0xf]
          %v4301 = vld [vmem:[%s1495 + $0x1c] sm:$0x1]
          %v4302 = vld [vmem:[%s1495 + $0x24] sm:$0xf]
          %v4303 = vld [vmem:[%s1495 + $0x28] sm:$0xf]
          %v4304 = vld [vmem:[%s1495 + $0x2c] sm:$0x1]
          %v4305 = vld [vmem:[%s1495 + $0x34] sm:$0xf]
          %v4306 = vld [vmem:[%s1495 + $0x38] sm:$0xf]
          %v4307 = vld [vmem:[%s1495 + $0x3c] sm:$0x1]
          %v4308 = vld [vmem:[%s1495 + $0x44] sm:$0xf]
          %v4309 = vld [vmem:[%s1495 + $0x48] sm:$0xf]
          %v4310 = vld [vmem:[%s1495 + $0x4c] sm:$0x1]
          %v4311 = vld [vmem:[%s1495 + $0x54] sm:$0xf]
          %v4312 = vld [vmem:[%s1495 + $0x58] sm:$0xf]
          %v4313 = vld [vmem:[%s1495 + $0x5c] sm:$0x1]
          %v4314 = vld [vmem:[%s1495 + $0x64] sm:$0xf]
          %v4315 = vld [vmem:[%s1495 + $0x68] sm:$0xf]
          %v4316 = vld [vmem:[%s1495 + $0x6c] sm:$0x1]
          %v4317 = vld [vmem:[%s1495 + $0x74] sm:$0xf]
          %v4318 = vld [vmem:[%s1495 + $0x78] sm:$0xf]
          %v4319 = vld [vmem:[%s1495 + $0x7c] sm:$0x1]
          %v4320 = vld [vmem:[%s1495 + $0x84] sm:$0xf]
          %v4321 = vld [vmem:[%s1495 + $0x88] sm:$0xf]
          %v4322 = vld [vmem:[%s1495 + $0x8c] sm:$0x1]
          %v4323 = vld [vmem:[%s1495 + $0x94] sm:$0xf]
          %v4324 = vld [vmem:[%s1495 + $0x98] sm:$0xf]
          %v4325 = vld [vmem:[%s1495 + $0x9c] sm:$0x1]
          %v4326 = vld [vmem:[%s1495 + $0xa4] sm:$0xf]
          %v4327 = vld [vmem:[%s1495 + $0xa8] sm:$0xf]
          %v4328 = vld [vmem:[%s1495 + $0xac] sm:$0x1]
          %v4329 = vld [vmem:[%s1495 + $0xb4] sm:$0xf]
          %v4330 = vld [vmem:[%s1495 + $0xb8] sm:$0xf]
          %v4331 = vld [vmem:[%s1495 + $0xbc] sm:$0x1]
          %v4332 = vld [vmem:[%s1495 + $0xc4] sm:$0xf]
          %v4333 = vld [vmem:[%s1495 + $0xc8] sm:$0xf]
          %v4334 = vld [vmem:[%s1495 + $0xcc] sm:$0x1]
          %v4335 = vld [vmem:[%s1495 + $0xd4] sm:$0xf]
          %v4336 = vld [vmem:[%s1495 + $0xd8] sm:$0xf]
          %v4337 = vld [vmem:[%s1495 + $0xdc] sm:$0x1]
          %v4338 = vld [vmem:[%s1495 + $0xe4] sm:$0xf]
          %v4339 = vld [vmem:[%s1495 + $0xe8] sm:$0xf]
          %v4340 = vld [vmem:[%s1495 + $0xec] sm:$0x1]
          %v4341 = vld [vmem:[%s1495 + $0xf4] sm:$0xf]
          %v4342 = vld [vmem:[%s1495 + $0xf8] sm:$0xf]
          %v4343 = vld [vmem:[%s1495 + $0xfc] sm:$0x1]
          %v4345 = vshrl.u32 %v4296, 16
          %v4347 = vrot.slane %v4345, 4
          %v4348 = vshll.u32 %v4296, 16
          %v4350 = vrot.slane %v4348, 5
          %v4351 = vor.u32 %v4347, %v4350
          %v4352 = vrot.slane %v4351, 4
          %v4354 = vshll.u32 %v4297, 16
          %v4356 = vrot.slane %v4354, 5
          %v4357 = vsel %vm2561, %v4352, %v4356
          %v4358 = vshrl.u32 %v4297, 16
          %v4360 = vrot.slane %v4358, 4
          %v4361 = vor.u32 %v4360, %v4356
          %v4362 = vrot.slane %v4361, 4
          %v4364 = vshll.u32 %v4298, 16
          %v4366 = vrot.slane %v4364, 5
          %v4367 = vsel %vm2561, %v4362, %v4366
          %v4369 = vshrl.u32 %v4299, 16
          %v4371 = vrot.slane %v4369, 4
          %v4372 = vshll.u32 %v4299, 16
          %v4374 = vrot.slane %v4372, 5
          %v4375 = vor.u32 %v4371, %v4374
          %v4376 = vrot.slane %v4375, 4
          %v4378 = vshll.u32 %v4300, 16
          %v4380 = vrot.slane %v4378, 5
          %v4381 = vsel %vm2561, %v4376, %v4380
          %v4382 = vshrl.u32 %v4300, 16
          %v4384 = vrot.slane %v4382, 4
          %v4385 = vor.u32 %v4384, %v4380
          %v4386 = vrot.slane %v4385, 4
          %v4388 = vshll.u32 %v4301, 16
          %v4390 = vrot.slane %v4388, 5
          %v4391 = vsel %vm2561, %v4386, %v4390
          %v4393 = vshrl.u32 %v4302, 16
          %v4395 = vrot.slane %v4393, 4
          %v4396 = vshll.u32 %v4302, 16
          %v4398 = vrot.slane %v4396, 5
          %v4399 = vor.u32 %v4395, %v4398
          %v4400 = vrot.slane %v4399, 4
          %v4402 = vshll.u32 %v4303, 16
          %v4404 = vrot.slane %v4402, 5
          %v4405 = vsel %vm2561, %v4400, %v4404
          %v4406 = vshrl.u32 %v4303, 16
          %v4408 = vrot.slane %v4406, 4
          %v4409 = vor.u32 %v4408, %v4404
          %v4410 = vrot.slane %v4409, 4
          %v4412 = vshll.u32 %v4304, 16
          %v4414 = vrot.slane %v4412, 5
          %v4415 = vsel %vm2561, %v4410, %v4414
          %v4417 = vshrl.u32 %v4305, 16
          %v4419 = vrot.slane %v4417, 4
          %v4420 = vshll.u32 %v4305, 16
          %v4422 = vrot.slane %v4420, 5
          %v4423 = vor.u32 %v4419, %v4422
          %v4424 = vrot.slane %v4423, 4
          %v4426 = vshll.u32 %v4306, 16
          %v4428 = vrot.slane %v4426, 5
          %v4429 = vsel %vm2561, %v4424, %v4428
          %v4430 = vshrl.u32 %v4306, 16
          %v4432 = vrot.slane %v4430, 4
          %v4433 = vor.u32 %v4432, %v4428
          %v4434 = vrot.slane %v4433, 4
          %v4436 = vshll.u32 %v4307, 16
          %v4438 = vrot.slane %v4436, 5
          %v4439 = vsel %vm2561, %v4434, %v4438
          %v4441 = vshrl.u32 %v4308, 16
          %v4443 = vrot.slane %v4441, 4
          %v4444 = vshll.u32 %v4308, 16
          %v4446 = vrot.slane %v4444, 5
          %v4447 = vor.u32 %v4443, %v4446
          %v4448 = vrot.slane %v4447, 4
          %v4450 = vshll.u32 %v4309, 16
          %v4452 = vrot.slane %v4450, 5
          %v4453 = vsel %vm2561, %v4448, %v4452
          %v4454 = vshrl.u32 %v4309, 16
          %v4456 = vrot.slane %v4454, 4
          %v4457 = vor.u32 %v4456, %v4452
          %v4458 = vrot.slane %v4457, 4
          %v4460 = vshll.u32 %v4310, 16
          %v4462 = vrot.slane %v4460, 5
          %v4463 = vsel %vm2561, %v4458, %v4462
          %v4465 = vshrl.u32 %v4311, 16
          %v4467 = vrot.slane %v4465, 4
          %v4468 = vshll.u32 %v4311, 16
          %v4470 = vrot.slane %v4468, 5
          %v4471 = vor.u32 %v4467, %v4470
          %v4472 = vrot.slane %v4471, 4
          %v4474 = vshll.u32 %v4312, 16
          %v4476 = vrot.slane %v4474, 5
          %v4477 = vsel %vm2561, %v4472, %v4476
          %v4478 = vshrl.u32 %v4312, 16
          %v4480 = vrot.slane %v4478, 4
          %v4481 = vor.u32 %v4480, %v4476
          %v4482 = vrot.slane %v4481, 4
          %v4484 = vshll.u32 %v4313, 16
          %v4486 = vrot.slane %v4484, 5
          %v4487 = vsel %vm2561, %v4482, %v4486
          %v4489 = vshrl.u32 %v4314, 16
          %v4491 = vrot.slane %v4489, 4
          %v4492 = vshll.u32 %v4314, 16
          %v4494 = vrot.slane %v4492, 5
          %v4495 = vor.u32 %v4491, %v4494
          %v4496 = vrot.slane %v4495, 4
          %v4498 = vshll.u32 %v4315, 16
          %v4500 = vrot.slane %v4498, 5
          %v4501 = vsel %vm2561, %v4496, %v4500
          %v4502 = vshrl.u32 %v4315, 16
          %v4504 = vrot.slane %v4502, 4
          %v4505 = vor.u32 %v4504, %v4500
          %v4506 = vrot.slane %v4505, 4
          %v4508 = vshll.u32 %v4316, 16
          %v4510 = vrot.slane %v4508, 5
          %v4511 = vsel %vm2561, %v4506, %v4510
          %v4513 = vshrl.u32 %v4317, 16
          %v4515 = vrot.slane %v4513, 4
          %v4516 = vshll.u32 %v4317, 16
          %v4518 = vrot.slane %v4516, 5
          %v4519 = vor.u32 %v4515, %v4518
          %v4520 = vrot.slane %v4519, 4
          %v4522 = vshll.u32 %v4318, 16
          %v4524 = vrot.slane %v4522, 5
          %v4525 = vsel %vm2561, %v4520, %v4524
          %v4526 = vshrl.u32 %v4318, 16
          %v4528 = vrot.slane %v4526, 4
          %v4529 = vor.u32 %v4528, %v4524
          %v4530 = vrot.slane %v4529, 4
          %v4532 = vshll.u32 %v4319, 16
          %v4534 = vrot.slane %v4532, 5
          %v4535 = vsel %vm2561, %v4530, %v4534
          %v4537 = vshrl.u32 %v4320, 16
          %v4539 = vrot.slane %v4537, 4
          %v4540 = vshll.u32 %v4320, 16
          %v4542 = vrot.slane %v4540, 5
          %v4543 = vor.u32 %v4539, %v4542
          %v4544 = vrot.slane %v4543, 4
          %v4546 = vshll.u32 %v4321, 16
          %v4548 = vrot.slane %v4546, 5
          %v4549 = vsel %vm2561, %v4544, %v4548
          %v4550 = vshrl.u32 %v4321, 16
          %v4552 = vrot.slane %v4550, 4
          %v4553 = vor.u32 %v4552, %v4548
          %v4554 = vrot.slane %v4553, 4
          %v4556 = vshll.u32 %v4322, 16
          %v4558 = vrot.slane %v4556, 5
          %v4559 = vsel %vm2561, %v4554, %v4558
          %v4561 = vshrl.u32 %v4323, 16
          %v4563 = vrot.slane %v4561, 4
          %v4564 = vshll.u32 %v4323, 16
          %v4566 = vrot.slane %v4564, 5
          %v4567 = vor.u32 %v4563, %v4566
          %v4568 = vrot.slane %v4567, 4
          %v4570 = vshll.u32 %v4324, 16
          %v4572 = vrot.slane %v4570, 5
          %v4573 = vsel %vm2561, %v4568, %v4572
          %v4574 = vshrl.u32 %v4324, 16
          %v4576 = vrot.slane %v4574, 4
          %v4577 = vor.u32 %v4576, %v4572
          %v4578 = vrot.slane %v4577, 4
          %v4580 = vshll.u32 %v4325, 16
          %v4582 = vrot.slane %v4580, 5
          %v4583 = vsel %vm2561, %v4578, %v4582
          %v4585 = vshrl.u32 %v4326, 16
          %v4587 = vrot.slane %v4585, 4
          %v4588 = vshll.u32 %v4326, 16
          %v4590 = vrot.slane %v4588, 5
          %v4591 = vor.u32 %v4587, %v4590
          %v4592 = vrot.slane %v4591, 4
          %v4594 = vshll.u32 %v4327, 16
          %v4596 = vrot.slane %v4594, 5
          %v4597 = vsel %vm2561, %v4592, %v4596
          %v4598 = vshrl.u32 %v4327, 16
          %v4600 = vrot.slane %v4598, 4
          %v4601 = vor.u32 %v4600, %v4596
          %v4602 = vrot.slane %v4601, 4
          %v4604 = vshll.u32 %v4328, 16
          %v4606 = vrot.slane %v4604, 5
          %v4607 = vsel %vm2561, %v4602, %v4606
          %v4609 = vshrl.u32 %v4329, 16
          %v4611 = vrot.slane %v4609, 4
          %v4612 = vshll.u32 %v4329, 16
          %v4614 = vrot.slane %v4612, 5
          %v4615 = vor.u32 %v4611, %v4614
          %v4616 = vrot.slane %v4615, 4
          %v4618 = vshll.u32 %v4330, 16
          %v4620 = vrot.slane %v4618, 5
          %v4621 = vsel %vm2561, %v4616, %v4620
          %v4622 = vshrl.u32 %v4330, 16
          %v4624 = vrot.slane %v4622, 4
          %v4625 = vor.u32 %v4624, %v4620
          %v4626 = vrot.slane %v4625, 4
          %v4628 = vshll.u32 %v4331, 16
          %v4630 = vrot.slane %v4628, 5
          %v4631 = vsel %vm2561, %v4626, %v4630
          %v4633 = vshrl.u32 %v4332, 16
          %v4635 = vrot.slane %v4633, 4
          %v4636 = vshll.u32 %v4332, 16
          %v4638 = vrot.slane %v4636, 5
          %v4639 = vor.u32 %v4635, %v4638
          %v4640 = vrot.slane %v4639, 4
          %v4642 = vshll.u32 %v4333, 16
          %v4644 = vrot.slane %v4642, 5
          %v4645 = vsel %vm2561, %v4640, %v4644
          %v4646 = vshrl.u32 %v4333, 16
          %v4648 = vrot.slane %v4646, 4
          %v4649 = vor.u32 %v4648, %v4644
          %v4650 = vrot.slane %v4649, 4
          %v4652 = vshll.u32 %v4334, 16
          %v4654 = vrot.slane %v4652, 5
          %v4655 = vsel %vm2561, %v4650, %v4654
          %v4657 = vshrl.u32 %v4335, 16
          %v4659 = vrot.slane %v4657, 4
          %v4660 = vshll.u32 %v4335, 16
          %v4662 = vrot.slane %v4660, 5
          %v4663 = vor.u32 %v4659, %v4662
          %v4664 = vrot.slane %v4663, 4
          %v4666 = vshll.u32 %v4336, 16
          %v4668 = vrot.slane %v4666, 5
          %v4669 = vsel %vm2561, %v4664, %v4668
          %v4670 = vshrl.u32 %v4336, 16
          %v4672 = vrot.slane %v4670, 4
          %v4673 = vor.u32 %v4672, %v4668
          %v4674 = vrot.slane %v4673, 4
          %v4676 = vshll.u32 %v4337, 16
          %v4678 = vrot.slane %v4676, 5
          %v4679 = vsel %vm2561, %v4674, %v4678
          %v4681 = vshrl.u32 %v4338, 16
          %v4683 = vrot.slane %v4681, 4
          %v4684 = vshll.u32 %v4338, 16
          %v4686 = vrot.slane %v4684, 5
          %v4687 = vor.u32 %v4683, %v4686
          %v4688 = vrot.slane %v4687, 4
          %v4690 = vshll.u32 %v4339, 16
          %v4692 = vrot.slane %v4690, 5
          %v4693 = vsel %vm2561, %v4688, %v4692
          %v4694 = vshrl.u32 %v4339, 16
          %v4696 = vrot.slane %v4694, 4
          %v4697 = vor.u32 %v4696, %v4692
          %v4698 = vrot.slane %v4697, 4
          %v4700 = vshll.u32 %v4340, 16
          %v4702 = vrot.slane %v4700, 5
          %v4703 = vsel %vm2561, %v4698, %v4702
          %v4705 = vshrl.u32 %v4341, 16
          %v4707 = vrot.slane %v4705, 4
          %v4708 = vshll.u32 %v4341, 16
          %v4710 = vrot.slane %v4708, 5
          %v4711 = vor.u32 %v4707, %v4710
          %v4712 = vrot.slane %v4711, 4
          %v4714 = vshll.u32 %v4342, 16
          %v4716 = vrot.slane %v4714, 5
          %v4717 = vsel %vm2561, %v4712, %v4716
          %v4718 = vshrl.u32 %v4342, 16
          %v4720 = vrot.slane %v4718, 4
          %v4721 = vor.u32 %v4720, %v4716
          %v4722 = vrot.slane %v4721, 4
          %v4724 = vshll.u32 %v4343, 16
          %v4726 = vrot.slane %v4724, 5
          %v4727 = vsel %vm2561, %v4722, %v4726
          %s4728 = scalar_lea.vmem %s5, 80
          %v4729 = vld [vmem:[%s4728] sm:$0xf]
          %v4730 = vld [vmem:[%s4728 + $0x4] sm:$0xf]
          %v4731 = vld [vmem:[%s4728 + $0x8] sm:$0xf]
          %v4732 = vld [vmem:[%s4728 + $0xc] sm:$0xf]
          %v4733 = vunpack.c.l.b16 %v4357
          %v4734 = vunpack.c.l.b16 %v4367
          %v4735 = vunpack.c.l.b16 %v4381
          %v4736 = vunpack.c.l.b16 %v4391
          %v4737 = vunpack.c.l.b16 %v4405
          %v4738 = vunpack.c.l.b16 %v4415
          %v4739 = vunpack.c.l.b16 %v4429
          %v4740 = vunpack.c.l.b16 %v4439
          %v4741 = vunpack.c.l.b16 %v4453
          %v4742 = vunpack.c.l.b16 %v4463
          %v4743 = vunpack.c.l.b16 %v4477
          %v4744 = vunpack.c.l.b16 %v4487
          %v4745 = vunpack.c.l.b16 %v4501
          %v4746 = vunpack.c.l.b16 %v4511
          %v4747 = vunpack.c.l.b16 %v4525
          %v4748 = vunpack.c.l.b16 %v4535
          %v4749 = vunpack.c.l.b16 %v4549
          %v4750 = vunpack.c.l.b16 %v4559
          %v4751 = vunpack.c.l.b16 %v4573
          %v4752 = vunpack.c.l.b16 %v4583
          %v4753 = vunpack.c.l.b16 %v4597
          %v4754 = vunpack.c.l.b16 %v4607
          %v4755 = vunpack.c.l.b16 %v4621
          %v4756 = vunpack.c.l.b16 %v4631
          %v4757 = vunpack.c.l.b16 %v4645
          %v4758 = vunpack.c.l.b16 %v4655
          %v4759 = vunpack.c.l.b16 %v4669
          %v4760 = vunpack.c.l.b16 %v4679
          %v4761 = vunpack.c.l.b16 %v4693
          %v4762 = vunpack.c.l.b16 %v4703
          %v4763 = vunpack.c.l.b16 %v4717
          %v4764 = vunpack.c.l.b16 %v4727
          %v4765 = vpack.c.b16 %v4734, %v4733
          %v4766 = vpack.c.b16 %v4736, %v4735
          %v4767 = vpack.c.b16 %v4738, %v4737
          %v4768 = vpack.c.b16 %v4740, %v4739
          %v4769 = vpack.c.b16 %v4742, %v4741
          %v4770 = vpack.c.b16 %v4744, %v4743
          %v4771 = vpack.c.b16 %v4746, %v4745
          %v4772 = vpack.c.b16 %v4748, %v4747
          %v4773 = vpack.c.b16 %v4750, %v4749
          %v4774 = vpack.c.b16 %v4752, %v4751
          %v4775 = vpack.c.b16 %v4754, %v4753
          %v4776 = vpack.c.b16 %v4756, %v4755
          %v4777 = vpack.c.b16 %v4758, %v4757
          %v4778 = vpack.c.b16 %v4760, %v4759
          %v4779 = vpack.c.b16 %v4762, %v4761
          %v4780 = vpack.c.b16 %v4764, %v4763
          %v4785 = vunpack.c.l.b16 %v4729
          %v4786 = vunpack.c.l.b16 %v4730
          %v4787 = vunpack.c.l.b16 %v4731
          %v4788 = vunpack.c.l.b16 %v4732
          %v4789 = vpack.c.b16 %v4786, %v4785
          %v4790 = vpack.c.b16 %v4788, %v4787
          %v4794 = vsel %vm709, %v4765, 0
          %v4797 = vsel %vm709, %v4766, 0
          %v4800 = vsel %vm709, %v4767, 0
          %v4803 = vsel %vm709, %v4768, 0
          %v4806 = vsel %vm709, %v4769, 0
          %v4809 = vsel %vm709, %v4770, 0
          %v4812 = vsel %vm709, %v4771, 0
          %v4815 = vsel %vm709, %v4772, 0
          %v4818 = vsel %vm709, %v4773, 0
          %v4821 = vsel %vm709, %v4774, 0
          %v4824 = vsel %vm709, %v4775, 0
          %v4827 = vsel %vm709, %v4776, 0
          %v4830 = vsel %vm709, %v4777, 0
          %v4833 = vsel %vm709, %v4778, 0
          %v4836 = vsel %vm709, %v4779, 0
          %v4839 = vsel %vm709, %v4780, 0
          %4841 = vmatprep.subr.bf16.mxu0 0
          %4842 = vmatpush1.bf16.msra.mxu0 0
          %4843 = vmatprep.subr.bf16.mxu0 0
          %4844 = vmatpush1.bf16.msra.mxu0 0
          %4845 = vmatprep.subr.bf16.mxu0 0
          %4846 = vmatpush1.bf16.msra.mxu0 0
          %4847 = vmatprep.subr.bf16.mxu0 0
          %4848 = vmatpush1.bf16.msra.mxu0 0
          %4849 = vmatprep.subr.bf16.mxu0 0
          %4850 = vmatpush1.bf16.msra.mxu0 0
          %4851 = vmatprep.subr.bf16.mxu0 0
          %4852 = vmatpush1.bf16.msra.mxu0 0
          %4853 = vmatprep.subr.bf16.mxu0 0
          %4854 = vmatpush1.bf16.msra.mxu0 %v4790
          %4855 = vmatprep.subr.bf16.mxu0 0
          %4856 = vmatpush1.bf16.msra.mxu0 %v4789
          %4857 = vmatprep.subr.bf16.mxu0 0
          %4858 = vmatpush2.bf16.msra.mxu0 0
          %4859 = vmatprep.subr.bf16.mxu0 0
          %4860 = vmatpush2.bf16.msra.mxu0 0
          %4861 = vmatprep.subr.bf16.mxu0 0
          %4862 = vmatpush2.bf16.msra.mxu0 0
          %4863 = vmatprep.subr.bf16.mxu0 0
          %4864 = vmatpush2.bf16.msra.mxu0 0
          %4865 = vmatprep.subr.bf16.mxu0 0
          %4866 = vmatpush2.bf16.msra.mxu0 0
          %4867 = vmatprep.subr.bf16.mxu0 0
          %4868 = vmatpush2.bf16.msra.mxu0 0
          %4869 = vmatprep.subr.bf16.mxu0 0
          %4870 = vmatpush2.bf16.msra.mxu0 0
          %4871 = vmatprep.subr.bf16.mxu0 0
          %4872 = vmatpush2.bf16.msra.mxu0 0
          %4873 = vmatprep.mubr.bf16.mxu0 0
          %4874 = vmatmul.mubr.bf16.gmra.mxu0 %v4794
          %v4875 = vpop.f32.mrf.mxu0
          %v4876 = vadd.f32 0.0, %v4875
          %v4877 = vpop.f32.mrf.mxu0
          %v4878 = vpop.f32.mrf.mxu0
          %v4879 = vadd.f32 0.0, %v4878
          %v4880 = vpop.f32.mrf.mxu0
          %4881 = vmatprep.mubr.bf16.mxu0 0
          %4882 = vmatmul.mubr.bf16.gmra.mxu0 %v4797
          %v4883 = vpop.f32.mrf.mxu0
          %v4884 = vadd.f32 0.0, %v4883
          %v4885 = vpop.f32.mrf.mxu0
          %v4886 = vpop.f32.mrf.mxu0
          %v4887 = vadd.f32 0.0, %v4886
          %v4888 = vpop.f32.mrf.mxu0
          %4889 = vmatprep.mubr.bf16.mxu0 0
          %4890 = vmatmul.mubr.bf16.gmra.mxu0 %v4800
          %v4891 = vpop.f32.mrf.mxu0
          %v4892 = vadd.f32 0.0, %v4891
          %v4893 = vpop.f32.mrf.mxu0
          %v4894 = vpop.f32.mrf.mxu0
          %v4895 = vadd.f32 0.0, %v4894
          %v4896 = vpop.f32.mrf.mxu0
          %4897 = vmatprep.mubr.bf16.mxu0 0
          %4898 = vmatmul.mubr.bf16.gmra.mxu0 %v4803
          %v4899 = vpop.f32.mrf.mxu0
          %v4900 = vadd.f32 0.0, %v4899
          %v4901 = vpop.f32.mrf.mxu0
          %v4902 = vpop.f32.mrf.mxu0
          %v4903 = vadd.f32 0.0, %v4902
          %v4904 = vpop.f32.mrf.mxu0
          %4905 = vmatprep.mubr.bf16.mxu0 0
          %4906 = vmatmul.mubr.bf16.gmra.mxu0 %v4806
          %v4907 = vpop.f32.mrf.mxu0
          %v4908 = vadd.f32 0.0, %v4907
          %v4909 = vpop.f32.mrf.mxu0
          %v4910 = vpop.f32.mrf.mxu0
          %v4911 = vadd.f32 0.0, %v4910
          %v4912 = vpop.f32.mrf.mxu0
          %4913 = vmatprep.mubr.bf16.mxu0 0
          %4914 = vmatmul.mubr.bf16.gmra.mxu0 %v4809
          %v4915 = vpop.f32.mrf.mxu0
          %v4916 = vadd.f32 0.0, %v4915
          %v4917 = vpop.f32.mrf.mxu0
          %v4918 = vpop.f32.mrf.mxu0
          %v4919 = vadd.f32 0.0, %v4918
          %v4920 = vpop.f32.mrf.mxu0
          %4921 = vmatprep.mubr.bf16.mxu0 0
          %4922 = vmatmul.mubr.bf16.gmra.mxu0 %v4812
          %v4923 = vpop.f32.mrf.mxu0
          %v4924 = vadd.f32 0.0, %v4923
          %v4925 = vpop.f32.mrf.mxu0
          %v4926 = vpop.f32.mrf.mxu0
          %v4927 = vadd.f32 0.0, %v4926
          %v4928 = vpop.f32.mrf.mxu0
          %4929 = vmatprep.mubr.bf16.mxu0 0
          %4930 = vmatmul.mubr.bf16.gmra.mxu0 %v4815
          %v4931 = vpop.f32.mrf.mxu0
          %v4932 = vadd.f32 0.0, %v4931
          %v4933 = vpop.f32.mrf.mxu0
          %v4934 = vpop.f32.mrf.mxu0
          %v4935 = vadd.f32 0.0, %v4934
          %v4936 = vpop.f32.mrf.mxu0
          %4937 = vmatprep.mubr.bf16.mxu0 0
          %4938 = vmatmul.mubr.bf16.gmra.mxu0 %v4818
          %v4939 = vpop.f32.mrf.mxu0
          %v4940 = vadd.f32 0.0, %v4939
          %v4941 = vpop.f32.mrf.mxu0
          %v4942 = vpop.f32.mrf.mxu0
          %v4943 = vadd.f32 0.0, %v4942
          %v4944 = vpop.f32.mrf.mxu0
          %4945 = vmatprep.mubr.bf16.mxu0 0
          %4946 = vmatmul.mubr.bf16.gmra.mxu0 %v4821
          %v4947 = vpop.f32.mrf.mxu0
          %v4948 = vadd.f32 0.0, %v4947
          %v4949 = vpop.f32.mrf.mxu0
          %v4950 = vpop.f32.mrf.mxu0
          %v4951 = vadd.f32 0.0, %v4950
          %v4952 = vpop.f32.mrf.mxu0
          %4953 = vmatprep.mubr.bf16.mxu0 0
          %4954 = vmatmul.mubr.bf16.gmra.mxu0 %v4824
          %v4955 = vpop.f32.mrf.mxu0
          %v4956 = vadd.f32 0.0, %v4955
          %v4957 = vpop.f32.mrf.mxu0
          %v4958 = vpop.f32.mrf.mxu0
          %v4959 = vadd.f32 0.0, %v4958
          %v4960 = vpop.f32.mrf.mxu0
          %4961 = vmatprep.mubr.bf16.mxu0 0
          %4962 = vmatmul.mubr.bf16.gmra.mxu0 %v4827
          %v4963 = vpop.f32.mrf.mxu0
          %v4964 = vadd.f32 0.0, %v4963
          %v4965 = vpop.f32.mrf.mxu0
          %v4966 = vpop.f32.mrf.mxu0
          %v4967 = vadd.f32 0.0, %v4966
          %v4968 = vpop.f32.mrf.mxu0
          %4969 = vmatprep.mubr.bf16.mxu0 0
          %4970 = vmatmul.mubr.bf16.gmra.mxu0 %v4830
          %v4971 = vpop.f32.mrf.mxu0
          %v4972 = vadd.f32 0.0, %v4971
          %v4973 = vpop.f32.mrf.mxu0
          %v4974 = vpop.f32.mrf.mxu0
          %v4975 = vadd.f32 0.0, %v4974
          %v4976 = vpop.f32.mrf.mxu0
          %4977 = vmatprep.mubr.bf16.mxu0 0
          %4978 = vmatmul.mubr.bf16.gmra.mxu0 %v4833
          %v4979 = vpop.f32.mrf.mxu0
          %v4980 = vadd.f32 0.0, %v4979
          %v4981 = vpop.f32.mrf.mxu0
          %v4982 = vpop.f32.mrf.mxu0
          %v4983 = vadd.f32 0.0, %v4982
          %v4984 = vpop.f32.mrf.mxu0
          %4985 = vmatprep.mubr.bf16.mxu0 0
          %4986 = vmatmul.mubr.bf16.gmra.mxu0 %v4836
          %v4987 = vpop.f32.mrf.mxu0
          %v4988 = vadd.f32 0.0, %v4987
          %v4989 = vpop.f32.mrf.mxu0
          %v4990 = vpop.f32.mrf.mxu0
          %v4991 = vadd.f32 0.0, %v4990
          %v4992 = vpop.f32.mrf.mxu0
          %4993 = vmatprep.mubr.bf16.mxu0 0
          %4994 = vmatmul.mubr.bf16.gmra.mxu0 %v4839
          %v4995 = vpop.f32.mrf.mxu0
          %v4996 = vadd.f32 0.0, %v4995
          %v4997 = vpop.f32.mrf.mxu0
          %v4998 = vpop.f32.mrf.mxu0
          %v4999 = vadd.f32 0.0, %v4998
          %v5000 = vpop.f32.mrf.mxu0
          %5001 = vdwg.mxu0
          %v5002 = vadd.f32 %v4264, %v4876
          %v5003 = vadd.f32 %v4265, %v4879
          %v5004 = vadd.f32 %v4266, %v4884
          %v5005 = vadd.f32 %v4267, %v4887
          %v5006 = vadd.f32 %v4268, %v4892
          %v5007 = vadd.f32 %v4269, %v4895
          %v5008 = vadd.f32 %v4270, %v4900
          %v5009 = vadd.f32 %v4271, %v4903
          %v5010 = vadd.f32 %v4272, %v4908
          %v5011 = vadd.f32 %v4273, %v4911
          %v5012 = vadd.f32 %v4274, %v4916
          %v5013 = vadd.f32 %v4275, %v4919
          %v5014 = vadd.f32 %v4276, %v4924
          %v5015 = vadd.f32 %v4277, %v4927
          %v5016 = vadd.f32 %v4278, %v4932
          %v5017 = vadd.f32 %v4279, %v4935
          %v5018 = vadd.f32 %v4280, %v4940
          %v5019 = vadd.f32 %v4281, %v4943
          %v5020 = vadd.f32 %v4282, %v4948
          %v5021 = vadd.f32 %v4283, %v4951
          %v5022 = vadd.f32 %v4284, %v4956
          %v5023 = vadd.f32 %v4285, %v4959
          %v5024 = vadd.f32 %v4286, %v4964
          %v5025 = vadd.f32 %v4287, %v4967
          %v5026 = vadd.f32 %v4288, %v4972
          %v5027 = vadd.f32 %v4289, %v4975
          %v5028 = vadd.f32 %v4290, %v4980
          %v5029 = vadd.f32 %v4291, %v4983
          %v5030 = vadd.f32 %v4292, %v4988
          %v5031 = vadd.f32 %v4293, %v4991
          %v5032 = vadd.f32 %v4294, %v4996
          %v5033 = vadd.f32 %v4295, %v4999
          %s5034 = scalar_lea.vmem [#allocation2], 32
          %v5035 = vld [vmem:[%s5034] sm:$0x8]
          %v5036 = vld [vmem:[%s5034 + $0x4] sm:$0xf]
          %v5037 = vld [vmem:[%s5034 + $0x8] sm:$0xf]
          %v5038 = vld [vmem:[%s5034 + $0x10] sm:$0x8]
          %v5039 = vld [vmem:[%s5034 + $0x14] sm:$0xf]
          %v5040 = vld [vmem:[%s5034 + $0x18] sm:$0xf]
          %v5041 = vld [vmem:[%s5034 + $0x20] sm:$0x8]
          %v5042 = vld [vmem:[%s5034 + $0x24] sm:$0xf]
          %v5043 = vld [vmem:[%s5034 + $0x28] sm:$0xf]
          %v5044 = vld [vmem:[%s5034 + $0x30] sm:$0x8]
          %v5045 = vld [vmem:[%s5034 + $0x34] sm:$0xf]
          %v5046 = vld [vmem:[%s5034 + $0x38] sm:$0xf]
          %v5047 = vld [vmem:[%s5034 + $0x40] sm:$0x8]
          %v5048 = vld [vmem:[%s5034 + $0x44] sm:$0xf]
          %v5049 = vld [vmem:[%s5034 + $0x48] sm:$0xf]
          %v5050 = vld [vmem:[%s5034 + $0x50] sm:$0x8]
          %v5051 = vld [vmem:[%s5034 + $0x54] sm:$0xf]
          %v5052 = vld [vmem:[%s5034 + $0x58] sm:$0xf]
          %v5053 = vld [vmem:[%s5034 + $0x60] sm:$0x8]
          %v5054 = vld [vmem:[%s5034 + $0x64] sm:$0xf]
          %v5055 = vld [vmem:[%s5034 + $0x68] sm:$0xf]
          %v5056 = vld [vmem:[%s5034 + $0x70] sm:$0x8]
          %v5057 = vld [vmem:[%s5034 + $0x74] sm:$0xf]
          %v5058 = vld [vmem:[%s5034 + $0x78] sm:$0xf]
          %v5059 = vld [vmem:[%s5034 + $0x80] sm:$0x8]
          %v5060 = vld [vmem:[%s5034 + $0x84] sm:$0xf]
          %v5061 = vld [vmem:[%s5034 + $0x88] sm:$0xf]
          %v5062 = vld [vmem:[%s5034 + $0x90] sm:$0x8]
          %v5063 = vld [vmem:[%s5034 + $0x94] sm:$0xf]
          %v5064 = vld [vmem:[%s5034 + $0x98] sm:$0xf]
          %v5065 = vld [vmem:[%s5034 + $0xa0] sm:$0x8]
          %v5066 = vld [vmem:[%s5034 + $0xa4] sm:$0xf]
          %v5067 = vld [vmem:[%s5034 + $0xa8] sm:$0xf]
          %v5068 = vld [vmem:[%s5034 + $0xb0] sm:$0x8]
          %v5069 = vld [vmem:[%s5034 + $0xb4] sm:$0xf]
          %v5070 = vld [vmem:[%s5034 + $0xb8] sm:$0xf]
          %v5071 = vld [vmem:[%s5034 + $0xc0] sm:$0x8]
          %v5072 = vld [vmem:[%s5034 + $0xc4] sm:$0xf]
          %v5073 = vld [vmem:[%s5034 + $0xc8] sm:$0xf]
          %v5074 = vld [vmem:[%s5034 + $0xd0] sm:$0x8]
          %v5075 = vld [vmem:[%s5034 + $0xd4] sm:$0xf]
          %v5076 = vld [vmem:[%s5034 + $0xd8] sm:$0xf]
          %v5077 = vld [vmem:[%s5034 + $0xe0] sm:$0x8]
          %v5078 = vld [vmem:[%s5034 + $0xe4] sm:$0xf]
          %v5079 = vld [vmem:[%s5034 + $0xe8] sm:$0xf]
          %v5080 = vld [vmem:[%s5034 + $0xf0] sm:$0x8]
          %v5081 = vld [vmem:[%s5034 + $0xf4] sm:$0xf]
          %v5082 = vld [vmem:[%s5034 + $0xf8] sm:$0xf]
          %v5084 = vshrl.u32 %v5035, 16
          %v5086 = vrot.slane %v5084, 7
          %v5087 = vrot.slane %v5086, 4
          %v5089 = vshrl.u32 %v5036, 16
          %v5091 = vrot.slane %v5089, 7
          %v5092 = vshll.u32 %v5036, 16
          %v5094 = vor.u32 %v5091, %v5092
          %v5095 = vsel %vm1579, %v5087, %v5094
          %v5096 = vrot.slane %v5091, 4
          %v5098 = vshrl.u32 %v5037, 16
          %v5100 = vrot.slane %v5098, 7
          %v5101 = vshll.u32 %v5037, 16
          %v5103 = vor.u32 %v5100, %v5101
          %v5104 = vsel %vm1579, %v5096, %v5103
          %v5106 = vshrl.u32 %v5038, 16
          %v5108 = vrot.slane %v5106, 7
          %v5109 = vrot.slane %v5108, 4
          %v5111 = vshrl.u32 %v5039, 16
          %v5113 = vrot.slane %v5111, 7
          %v5114 = vshll.u32 %v5039, 16
          %v5116 = vor.u32 %v5113, %v5114
          %v5117 = vsel %vm1579, %v5109, %v5116
          %v5118 = vrot.slane %v5113, 4
          %v5120 = vshrl.u32 %v5040, 16
          %v5122 = vrot.slane %v5120, 7
          %v5123 = vshll.u32 %v5040, 16
          %v5125 = vor.u32 %v5122, %v5123
          %v5126 = vsel %vm1579, %v5118, %v5125
          %v5128 = vshrl.u32 %v5041, 16
          %v5130 = vrot.slane %v5128, 7
          %v5131 = vrot.slane %v5130, 4
          %v5133 = vshrl.u32 %v5042, 16
          %v5135 = vrot.slane %v5133, 7
          %v5136 = vshll.u32 %v5042, 16
          %v5138 = vor.u32 %v5135, %v5136
          %v5139 = vsel %vm1579, %v5131, %v5138
          %v5140 = vrot.slane %v5135, 4
          %v5142 = vshrl.u32 %v5043, 16
          %v5144 = vrot.slane %v5142, 7
          %v5145 = vshll.u32 %v5043, 16
          %v5147 = vor.u32 %v5144, %v5145
          %v5148 = vsel %vm1579, %v5140, %v5147
          %v5150 = vshrl.u32 %v5044, 16
          %v5152 = vrot.slane %v5150, 7
          %v5153 = vrot.slane %v5152, 4
          %v5155 = vshrl.u32 %v5045, 16
          %v5157 = vrot.slane %v5155, 7
          %v5158 = vshll.u32 %v5045, 16
          %v5160 = vor.u32 %v5157, %v5158
          %v5161 = vsel %vm1579, %v5153, %v5160
          %v5162 = vrot.slane %v5157, 4
          %v5164 = vshrl.u32 %v5046, 16
          %v5166 = vrot.slane %v5164, 7
          %v5167 = vshll.u32 %v5046, 16
          %v5169 = vor.u32 %v5166, %v5167
          %v5170 = vsel %vm1579, %v5162, %v5169
          %v5172 = vshrl.u32 %v5047, 16
          %v5174 = vrot.slane %v5172, 7
          %v5175 = vrot.slane %v5174, 4
          %v5177 = vshrl.u32 %v5048, 16
          %v5179 = vrot.slane %v5177, 7
          %v5180 = vshll.u32 %v5048, 16
          %v5182 = vor.u32 %v5179, %v5180
          %v5183 = vsel %vm1579, %v5175, %v5182
          %v5184 = vrot.slane %v5179, 4
          %v5186 = vshrl.u32 %v5049, 16
          %v5188 = vrot.slane %v5186, 7
          %v5189 = vshll.u32 %v5049, 16
          %v5191 = vor.u32 %v5188, %v5189
          %v5192 = vsel %vm1579, %v5184, %v5191
          %v5194 = vshrl.u32 %v5050, 16
          %v5196 = vrot.slane %v5194, 7
          %v5197 = vrot.slane %v5196, 4
          %v5199 = vshrl.u32 %v5051, 16
          %v5201 = vrot.slane %v5199, 7
          %v5202 = vshll.u32 %v5051, 16
          %v5204 = vor.u32 %v5201, %v5202
          %v5205 = vsel %vm1579, %v5197, %v5204
          %v5206 = vrot.slane %v5201, 4
          %v5208 = vshrl.u32 %v5052, 16
          %v5210 = vrot.slane %v5208, 7
          %v5211 = vshll.u32 %v5052, 16
          %v5213 = vor.u32 %v5210, %v5211
          %v5214 = vsel %vm1579, %v5206, %v5213
          %v5216 = vshrl.u32 %v5053, 16
          %v5218 = vrot.slane %v5216, 7
          %v5219 = vrot.slane %v5218, 4
          %v5221 = vshrl.u32 %v5054, 16
          %v5223 = vrot.slane %v5221, 7
          %v5224 = vshll.u32 %v5054, 16
          %v5226 = vor.u32 %v5223, %v5224
          %v5227 = vsel %vm1579, %v5219, %v5226
          %v5228 = vrot.slane %v5223, 4
          %v5230 = vshrl.u32 %v5055, 16
          %v5232 = vrot.slane %v5230, 7
          %v5233 = vshll.u32 %v5055, 16
          %v5235 = vor.u32 %v5232, %v5233
          %v5236 = vsel %vm1579, %v5228, %v5235
          %v5238 = vshrl.u32 %v5056, 16
          %v5240 = vrot.slane %v5238, 7
          %v5241 = vrot.slane %v5240, 4
          %v5243 = vshrl.u32 %v5057, 16
          %v5245 = vrot.slane %v5243, 7
          %v5246 = vshll.u32 %v5057, 16
          %v5248 = vor.u32 %v5245, %v5246
          %v5249 = vsel %vm1579, %v5241, %v5248
          %v5250 = vrot.slane %v5245, 4
          %v5252 = vshrl.u32 %v5058, 16
          %v5254 = vrot.slane %v5252, 7
          %v5255 = vshll.u32 %v5058, 16
          %v5257 = vor.u32 %v5254, %v5255
          %v5258 = vsel %vm1579, %v5250, %v5257
          %v5260 = vshrl.u32 %v5059, 16
          %v5262 = vrot.slane %v5260, 7
          %v5263 = vrot.slane %v5262, 4
          %v5265 = vshrl.u32 %v5060, 16
          %v5267 = vrot.slane %v5265, 7
          %v5268 = vshll.u32 %v5060, 16
          %v5270 = vor.u32 %v5267, %v5268
          %v5271 = vsel %vm1579, %v5263, %v5270
          %v5272 = vrot.slane %v5267, 4
          %v5274 = vshrl.u32 %v5061, 16
          %v5276 = vrot.slane %v5274, 7
          %v5277 = vshll.u32 %v5061, 16
          %v5279 = vor.u32 %v5276, %v5277
          %v5280 = vsel %vm1579, %v5272, %v5279
          %v5282 = vshrl.u32 %v5062, 16
          %v5284 = vrot.slane %v5282, 7
          %v5285 = vrot.slane %v5284, 4
          %v5287 = vshrl.u32 %v5063, 16
          %v5289 = vrot.slane %v5287, 7
          %v5290 = vshll.u32 %v5063, 16
          %v5292 = vor.u32 %v5289, %v5290
          %v5293 = vsel %vm1579, %v5285, %v5292
          %v5294 = vrot.slane %v5289, 4
          %v5296 = vshrl.u32 %v5064, 16
          %v5298 = vrot.slane %v5296, 7
          %v5299 = vshll.u32 %v5064, 16
          %v5301 = vor.u32 %v5298, %v5299
          %v5302 = vsel %vm1579, %v5294, %v5301
          %v5304 = vshrl.u32 %v5065, 16
          %v5306 = vrot.slane %v5304, 7
          %v5307 = vrot.slane %v5306, 4
          %v5309 = vshrl.u32 %v5066, 16
          %v5311 = vrot.slane %v5309, 7
          %v5312 = vshll.u32 %v5066, 16
          %v5314 = vor.u32 %v5311, %v5312
          %v5315 = vsel %vm1579, %v5307, %v5314
          %v5316 = vrot.slane %v5311, 4
          %v5318 = vshrl.u32 %v5067, 16
          %v5320 = vrot.slane %v5318, 7
          %v5321 = vshll.u32 %v5067, 16
          %v5323 = vor.u32 %v5320, %v5321
          %v5324 = vsel %vm1579, %v5316, %v5323
          %v5326 = vshrl.u32 %v5068, 16
          %v5328 = vrot.slane %v5326, 7
          %v5329 = vrot.slane %v5328, 4
          %v5331 = vshrl.u32 %v5069, 16
          %v5333 = vrot.slane %v5331, 7
          %v5334 = vshll.u32 %v5069, 16
          %v5336 = vor.u32 %v5333, %v5334
          %v5337 = vsel %vm1579, %v5329, %v5336
          %v5338 = vrot.slane %v5333, 4
          %v5340 = vshrl.u32 %v5070, 16
          %v5342 = vrot.slane %v5340, 7
          %v5343 = vshll.u32 %v5070, 16
          %v5345 = vor.u32 %v5342, %v5343
          %v5346 = vsel %vm1579, %v5338, %v5345
          %v5348 = vshrl.u32 %v5071, 16
          %v5350 = vrot.slane %v5348, 7
          %v5351 = vrot.slane %v5350, 4
          %v5353 = vshrl.u32 %v5072, 16
          %v5355 = vrot.slane %v5353, 7
          %v5356 = vshll.u32 %v5072, 16
          %v5358 = vor.u32 %v5355, %v5356
          %v5359 = vsel %vm1579, %v5351, %v5358
          %v5360 = vrot.slane %v5355, 4
          %v5362 = vshrl.u32 %v5073, 16
          %v5364 = vrot.slane %v5362, 7
          %v5365 = vshll.u32 %v5073, 16
          %v5367 = vor.u32 %v5364, %v5365
          %v5368 = vsel %vm1579, %v5360, %v5367
          %v5370 = vshrl.u32 %v5074, 16
          %v5372 = vrot.slane %v5370, 7
          %v5373 = vrot.slane %v5372, 4
          %v5375 = vshrl.u32 %v5075, 16
          %v5377 = vrot.slane %v5375, 7
          %v5378 = vshll.u32 %v5075, 16
          %v5380 = vor.u32 %v5377, %v5378
          %v5381 = vsel %vm1579, %v5373, %v5380
          %v5382 = vrot.slane %v5377, 4
          %v5384 = vshrl.u32 %v5076, 16
          %v5386 = vrot.slane %v5384, 7
          %v5387 = vshll.u32 %v5076, 16
          %v5389 = vor.u32 %v5386, %v5387
          %v5390 = vsel %vm1579, %v5382, %v5389
          %v5392 = vshrl.u32 %v5077, 16
          %v5394 = vrot.slane %v5392, 7
          %v5395 = vrot.slane %v5394, 4
          %v5397 = vshrl.u32 %v5078, 16
          %v5399 = vrot.slane %v5397, 7
          %v5400 = vshll.u32 %v5078, 16
          %v5402 = vor.u32 %v5399, %v5400
          %v5403 = vsel %vm1579, %v5395, %v5402
          %v5404 = vrot.slane %v5399, 4
          %v5406 = vshrl.u32 %v5079, 16
          %v5408 = vrot.slane %v5406, 7
          %v5409 = vshll.u32 %v5079, 16
          %v5411 = vor.u32 %v5408, %v5409
          %v5412 = vsel %vm1579, %v5404, %v5411
          %v5414 = vshrl.u32 %v5080, 16
          %v5416 = vrot.slane %v5414, 7
          %v5417 = vrot.slane %v5416, 4
          %v5419 = vshrl.u32 %v5081, 16
          %v5421 = vrot.slane %v5419, 7
          %v5422 = vshll.u32 %v5081, 16
          %v5424 = vor.u32 %v5421, %v5422
          %v5425 = vsel %vm1579, %v5417, %v5424
          %v5426 = vrot.slane %v5421, 4
          %v5428 = vshrl.u32 %v5082, 16
          %v5430 = vrot.slane %v5428, 7
          %v5431 = vshll.u32 %v5082, 16
          %v5433 = vor.u32 %v5430, %v5431
          %v5434 = vsel %vm1579, %v5426, %v5433
          %s5435 = scalar_lea.vmem %s5, 96
          %v5436 = vld [vmem:[%s5435] sm:$0xf]
          %v5437 = vld [vmem:[%s5435 + $0x4] sm:$0xf]
          %v5438 = vld [vmem:[%s5435 + $0x8] sm:$0xf]
          %v5439 = vld [vmem:[%s5435 + $0xc] sm:$0xf]
          %v5440 = vunpack.c.l.b16 %v5095
          %v5441 = vunpack.c.l.b16 %v5104
          %v5442 = vunpack.c.l.b16 %v5117
          %v5443 = vunpack.c.l.b16 %v5126
          %v5444 = vunpack.c.l.b16 %v5139
          %v5445 = vunpack.c.l.b16 %v5148
          %v5446 = vunpack.c.l.b16 %v5161
          %v5447 = vunpack.c.l.b16 %v5170
          %v5448 = vunpack.c.l.b16 %v5183
          %v5449 = vunpack.c.l.b16 %v5192
          %v5450 = vunpack.c.l.b16 %v5205
          %v5451 = vunpack.c.l.b16 %v5214
          %v5452 = vunpack.c.l.b16 %v5227
          %v5453 = vunpack.c.l.b16 %v5236
          %v5454 = vunpack.c.l.b16 %v5249
          %v5455 = vunpack.c.l.b16 %v5258
          %v5456 = vunpack.c.l.b16 %v5271
          %v5457 = vunpack.c.l.b16 %v5280
          %v5458 = vunpack.c.l.b16 %v5293
          %v5459 = vunpack.c.l.b16 %v5302
          %v5460 = vunpack.c.l.b16 %v5315
          %v5461 = vunpack.c.l.b16 %v5324
          %v5462 = vunpack.c.l.b16 %v5337
          %v5463 = vunpack.c.l.b16 %v5346
          %v5464 = vunpack.c.l.b16 %v5359
          %v5465 = vunpack.c.l.b16 %v5368
          %v5466 = vunpack.c.l.b16 %v5381
          %v5467 = vunpack.c.l.b16 %v5390
          %v5468 = vunpack.c.l.b16 %v5403
          %v5469 = vunpack.c.l.b16 %v5412
          %v5470 = vunpack.c.l.b16 %v5425
          %v5471 = vunpack.c.l.b16 %v5434
          %v5472 = vpack.c.b16 %v5441, %v5440
          %v5473 = vpack.c.b16 %v5443, %v5442
          %v5474 = vpack.c.b16 %v5445, %v5444
          %v5475 = vpack.c.b16 %v5447, %v5446
          %v5476 = vpack.c.b16 %v5449, %v5448
          %v5477 = vpack.c.b16 %v5451, %v5450
          %v5478 = vpack.c.b16 %v5453, %v5452
          %v5479 = vpack.c.b16 %v5455, %v5454
          %v5480 = vpack.c.b16 %v5457, %v5456
          %v5481 = vpack.c.b16 %v5459, %v5458
          %v5482 = vpack.c.b16 %v5461, %v5460
          %v5483 = vpack.c.b16 %v5463, %v5462
          %v5484 = vpack.c.b16 %v5465, %v5464
          %v5485 = vpack.c.b16 %v5467, %v5466
          %v5486 = vpack.c.b16 %v5469, %v5468
          %v5487 = vpack.c.b16 %v5471, %v5470
          %v5492 = vunpack.c.l.b16 %v5436
          %v5493 = vunpack.c.l.b16 %v5437
          %v5494 = vunpack.c.l.b16 %v5438
          %v5495 = vunpack.c.l.b16 %v5439
          %v5496 = vpack.c.b16 %v5493, %v5492
          %v5497 = vpack.c.b16 %v5495, %v5494
          %v5501 = vsel %vm709, %v5472, 0
          %v5504 = vsel %vm709, %v5473, 0
          %v5507 = vsel %vm709, %v5474, 0
          %v5510 = vsel %vm709, %v5475, 0
          %v5513 = vsel %vm709, %v5476, 0
          %v5516 = vsel %vm709, %v5477, 0
          %v5519 = vsel %vm709, %v5478, 0
          %v5522 = vsel %vm709, %v5479, 0
          %v5525 = vsel %vm709, %v5480, 0
          %v5528 = vsel %vm709, %v5481, 0
          %v5531 = vsel %vm709, %v5482, 0
          %v5534 = vsel %vm709, %v5483, 0
          %v5537 = vsel %vm709, %v5484, 0
          %v5540 = vsel %vm709, %v5485, 0
          %v5543 = vsel %vm709, %v5486, 0
          %v5546 = vsel %vm709, %v5487, 0
          %5548 = vmatprep.subr.bf16.mxu0 0
          %5549 = vmatpush1.bf16.msra.mxu0 0
          %5550 = vmatprep.subr.bf16.mxu0 0
          %5551 = vmatpush1.bf16.msra.mxu0 0
          %5552 = vmatprep.subr.bf16.mxu0 0
          %5553 = vmatpush1.bf16.msra.mxu0 0
          %5554 = vmatprep.subr.bf16.mxu0 0
          %5555 = vmatpush1.bf16.msra.mxu0 0
          %5556 = vmatprep.subr.bf16.mxu0 0
          %5557 = vmatpush1.bf16.msra.mxu0 0
          %5558 = vmatprep.subr.bf16.mxu0 0
          %5559 = vmatpush1.bf16.msra.mxu0 0
          %5560 = vmatprep.subr.bf16.mxu0 0
          %5561 = vmatpush1.bf16.msra.mxu0 %v5497
          %5562 = vmatprep.subr.bf16.mxu0 0
          %5563 = vmatpush1.bf16.msra.mxu0 %v5496
          %5564 = vmatprep.subr.bf16.mxu0 0
          %5565 = vmatpush2.bf16.msra.mxu0 0
          %5566 = vmatprep.subr.bf16.mxu0 0
          %5567 = vmatpush2.bf16.msra.mxu0 0
          %5568 = vmatprep.subr.bf16.mxu0 0
          %5569 = vmatpush2.bf16.msra.mxu0 0
          %5570 = vmatprep.subr.bf16.mxu0 0
          %5571 = vmatpush2.bf16.msra.mxu0 0
          %5572 = vmatprep.subr.bf16.mxu0 0
          %5573 = vmatpush2.bf16.msra.mxu0 0
          %5574 = vmatprep.subr.bf16.mxu0 0
          %5575 = vmatpush2.bf16.msra.mxu0 0
          %5576 = vmatprep.subr.bf16.mxu0 0
          %5577 = vmatpush2.bf16.msra.mxu0 0
          %5578 = vmatprep.subr.bf16.mxu0 0
          %5579 = vmatpush2.bf16.msra.mxu0 0
          %5580 = vmatprep.mubr.bf16.mxu0 0
          %5581 = vmatmul.mubr.bf16.gmra.mxu0 %v5501
          %v5582 = vpop.f32.mrf.mxu0
          %v5583 = vadd.f32 0.0, %v5582
          %v5584 = vpop.f32.mrf.mxu0
          %v5585 = vpop.f32.mrf.mxu0
          %v5586 = vadd.f32 0.0, %v5585
          %v5587 = vpop.f32.mrf.mxu0
          %5588 = vmatprep.mubr.bf16.mxu0 0
          %5589 = vmatmul.mubr.bf16.gmra.mxu0 %v5504
          %v5590 = vpop.f32.mrf.mxu0
          %v5591 = vadd.f32 0.0, %v5590
          %v5592 = vpop.f32.mrf.mxu0
          %v5593 = vpop.f32.mrf.mxu0
          %v5594 = vadd.f32 0.0, %v5593
          %v5595 = vpop.f32.mrf.mxu0
          %5596 = vmatprep.mubr.bf16.mxu0 0
          %5597 = vmatmul.mubr.bf16.gmra.mxu0 %v5507
          %v5598 = vpop.f32.mrf.mxu0
          %v5599 = vadd.f32 0.0, %v5598
          %v5600 = vpop.f32.mrf.mxu0
          %v5601 = vpop.f32.mrf.mxu0
          %v5602 = vadd.f32 0.0, %v5601
          %v5603 = vpop.f32.mrf.mxu0
          %5604 = vmatprep.mubr.bf16.mxu0 0
          %5605 = vmatmul.mubr.bf16.gmra.mxu0 %v5510
          %v5606 = vpop.f32.mrf.mxu0
          %v5607 = vadd.f32 0.0, %v5606
          %v5608 = vpop.f32.mrf.mxu0
          %v5609 = vpop.f32.mrf.mxu0
          %v5610 = vadd.f32 0.0, %v5609
          %v5611 = vpop.f32.mrf.mxu0
          %5612 = vmatprep.mubr.bf16.mxu0 0
          %5613 = vmatmul.mubr.bf16.gmra.mxu0 %v5513
          %v5614 = vpop.f32.mrf.mxu0
          %v5615 = vadd.f32 0.0, %v5614
          %v5616 = vpop.f32.mrf.mxu0
          %v5617 = vpop.f32.mrf.mxu0
          %v5618 = vadd.f32 0.0, %v5617
          %v5619 = vpop.f32.mrf.mxu0
          %5620 = vmatprep.mubr.bf16.mxu0 0
          %5621 = vmatmul.mubr.bf16.gmra.mxu0 %v5516
          %v5622 = vpop.f32.mrf.mxu0
          %v5623 = vadd.f32 0.0, %v5622
          %v5624 = vpop.f32.mrf.mxu0
          %v5625 = vpop.f32.mrf.mxu0
          %v5626 = vadd.f32 0.0, %v5625
          %v5627 = vpop.f32.mrf.mxu0
          %5628 = vmatprep.mubr.bf16.mxu0 0
          %5629 = vmatmul.mubr.bf16.gmra.mxu0 %v5519
          %v5630 = vpop.f32.mrf.mxu0
          %v5631 = vadd.f32 0.0, %v5630
          %v5632 = vpop.f32.mrf.mxu0
          %v5633 = vpop.f32.mrf.mxu0
          %v5634 = vadd.f32 0.0, %v5633
          %v5635 = vpop.f32.mrf.mxu0
          %5636 = vmatprep.mubr.bf16.mxu0 0
          %5637 = vmatmul.mubr.bf16.gmra.mxu0 %v5522
          %v5638 = vpop.f32.mrf.mxu0
          %v5639 = vadd.f32 0.0, %v5638
          %v5640 = vpop.f32.mrf.mxu0
          %v5641 = vpop.f32.mrf.mxu0
          %v5642 = vadd.f32 0.0, %v5641
          %v5643 = vpop.f32.mrf.mxu0
          %5644 = vmatprep.mubr.bf16.mxu0 0
          %5645 = vmatmul.mubr.bf16.gmra.mxu0 %v5525
          %v5646 = vpop.f32.mrf.mxu0
          %v5647 = vadd.f32 0.0, %v5646
          %v5648 = vpop.f32.mrf.mxu0
          %v5649 = vpop.f32.mrf.mxu0
          %v5650 = vadd.f32 0.0, %v5649
          %v5651 = vpop.f32.mrf.mxu0
          %5652 = vmatprep.mubr.bf16.mxu0 0
          %5653 = vmatmul.mubr.bf16.gmra.mxu0 %v5528
          %v5654 = vpop.f32.mrf.mxu0
          %v5655 = vadd.f32 0.0, %v5654
          %v5656 = vpop.f32.mrf.mxu0
          %v5657 = vpop.f32.mrf.mxu0
          %v5658 = vadd.f32 0.0, %v5657
          %v5659 = vpop.f32.mrf.mxu0
          %5660 = vmatprep.mubr.bf16.mxu0 0
          %5661 = vmatmul.mubr.bf16.gmra.mxu0 %v5531
          %v5662 = vpop.f32.mrf.mxu0
          %v5663 = vadd.f32 0.0, %v5662
          %v5664 = vpop.f32.mrf.mxu0
          %v5665 = vpop.f32.mrf.mxu0
          %v5666 = vadd.f32 0.0, %v5665
          %v5667 = vpop.f32.mrf.mxu0
          %5668 = vmatprep.mubr.bf16.mxu0 0
          %5669 = vmatmul.mubr.bf16.gmra.mxu0 %v5534
          %v5670 = vpop.f32.mrf.mxu0
          %v5671 = vadd.f32 0.0, %v5670
          %v5672 = vpop.f32.mrf.mxu0
          %v5673 = vpop.f32.mrf.mxu0
          %v5674 = vadd.f32 0.0, %v5673
          %v5675 = vpop.f32.mrf.mxu0
          %5676 = vmatprep.mubr.bf16.mxu0 0
          %5677 = vmatmul.mubr.bf16.gmra.mxu0 %v5537
          %v5678 = vpop.f32.mrf.mxu0
          %v5679 = vadd.f32 0.0, %v5678
          %v5680 = vpop.f32.mrf.mxu0
          %v5681 = vpop.f32.mrf.mxu0
          %v5682 = vadd.f32 0.0, %v5681
          %v5683 = vpop.f32.mrf.mxu0
          %5684 = vmatprep.mubr.bf16.mxu0 0
          %5685 = vmatmul.mubr.bf16.gmra.mxu0 %v5540
          %v5686 = vpop.f32.mrf.mxu0
          %v5687 = vadd.f32 0.0, %v5686
          %v5688 = vpop.f32.mrf.mxu0
          %v5689 = vpop.f32.mrf.mxu0
          %v5690 = vadd.f32 0.0, %v5689
          %v5691 = vpop.f32.mrf.mxu0
          %5692 = vmatprep.mubr.bf16.mxu0 0
          %5693 = vmatmul.mubr.bf16.gmra.mxu0 %v5543
          %v5694 = vpop.f32.mrf.mxu0
          %v5695 = vadd.f32 0.0, %v5694
          %v5696 = vpop.f32.mrf.mxu0
          %v5697 = vpop.f32.mrf.mxu0
          %v5698 = vadd.f32 0.0, %v5697
          %v5699 = vpop.f32.mrf.mxu0
          %5700 = vmatprep.mubr.bf16.mxu0 0
          %5701 = vmatmul.mubr.bf16.gmra.mxu0 %v5546
          %v5702 = vpop.f32.mrf.mxu0
          %v5703 = vadd.f32 0.0, %v5702
          %v5704 = vpop.f32.mrf.mxu0
          %v5705 = vpop.f32.mrf.mxu0
          %v5706 = vadd.f32 0.0, %v5705
          %v5707 = vpop.f32.mrf.mxu0
          %5708 = vdwg.mxu0
          %v5709 = vadd.f32 %v5002, %v5583
          %v5710 = vadd.f32 %v5003, %v5586
          %v5711 = vadd.f32 %v5004, %v5591
          %v5712 = vadd.f32 %v5005, %v5594
          %v5713 = vadd.f32 %v5006, %v5599
          %v5714 = vadd.f32 %v5007, %v5602
          %v5715 = vadd.f32 %v5008, %v5607
          %v5716 = vadd.f32 %v5009, %v5610
          %v5717 = vadd.f32 %v5010, %v5615
          %v5718 = vadd.f32 %v5011, %v5618
          %v5719 = vadd.f32 %v5012, %v5623
          %v5720 = vadd.f32 %v5013, %v5626
          %v5721 = vadd.f32 %v5014, %v5631
          %v5722 = vadd.f32 %v5015, %v5634
          %v5723 = vadd.f32 %v5016, %v5639
          %v5724 = vadd.f32 %v5017, %v5642
          %v5725 = vadd.f32 %v5018, %v5647
          %v5726 = vadd.f32 %v5019, %v5650
          %v5727 = vadd.f32 %v5020, %v5655
          %v5728 = vadd.f32 %v5021, %v5658
          %v5729 = vadd.f32 %v5022, %v5663
          %v5730 = vadd.f32 %v5023, %v5666
          %v5731 = vadd.f32 %v5024, %v5671
          %v5732 = vadd.f32 %v5025, %v5674
          %v5733 = vadd.f32 %v5026, %v5679
          %v5734 = vadd.f32 %v5027, %v5682
          %v5735 = vadd.f32 %v5028, %v5687
          %v5736 = vadd.f32 %v5029, %v5690
          %v5737 = vadd.f32 %v5030, %v5695
          %v5738 = vadd.f32 %v5031, %v5698
          %v5739 = vadd.f32 %v5032, %v5703
          %v5740 = vadd.f32 %v5033, %v5706
          %s5741 = scalar_lea.vmem %s5, 112
          %v5742 = vld [vmem:[%s5741] sm:$0xf]
          %v5743 = vld [vmem:[%s5741 + $0x4] sm:$0xf]
          %v5744 = vld [vmem:[%s5741 + $0x8] sm:$0xf]
          %v5745 = vld [vmem:[%s5741 + $0xc] sm:$0xf]
          %v5778 = vunpack.c.l.b16 %v5036
          %v5779 = vunpack.c.l.b16 %v5037
          %v5780 = vunpack.c.l.b16 %v5039
          %v5781 = vunpack.c.l.b16 %v5040
          %v5782 = vunpack.c.l.b16 %v5042
          %v5783 = vunpack.c.l.b16 %v5043
          %v5784 = vunpack.c.l.b16 %v5045
          %v5785 = vunpack.c.l.b16 %v5046
          %v5786 = vunpack.c.l.b16 %v5048
          %v5787 = vunpack.c.l.b16 %v5049
          %v5788 = vunpack.c.l.b16 %v5051
          %v5789 = vunpack.c.l.b16 %v5052
          %v5790 = vunpack.c.l.b16 %v5054
          %v5791 = vunpack.c.l.b16 %v5055
          %v5792 = vunpack.c.l.b16 %v5057
          %v5793 = vunpack.c.l.b16 %v5058
          %v5794 = vunpack.c.l.b16 %v5060
          %v5795 = vunpack.c.l.b16 %v5061
          %v5796 = vunpack.c.l.b16 %v5063
          %v5797 = vunpack.c.l.b16 %v5064
          %v5798 = vunpack.c.l.b16 %v5066
          %v5799 = vunpack.c.l.b16 %v5067
          %v5800 = vunpack.c.l.b16 %v5069
          %v5801 = vunpack.c.l.b16 %v5070
          %v5802 = vunpack.c.l.b16 %v5072
          %v5803 = vunpack.c.l.b16 %v5073
          %v5804 = vunpack.c.l.b16 %v5075
          %v5805 = vunpack.c.l.b16 %v5076
          %v5806 = vunpack.c.l.b16 %v5078
          %v5807 = vunpack.c.l.b16 %v5079
          %v5808 = vunpack.c.l.b16 %v5081
          %v5809 = vunpack.c.l.b16 %v5082
          %v5810 = vpack.c.b16 %v5779, %v5778
          %v5811 = vpack.c.b16 %v5781, %v5780
          %v5812 = vpack.c.b16 %v5783, %v5782
          %v5813 = vpack.c.b16 %v5785, %v5784
          %v5814 = vpack.c.b16 %v5787, %v5786
          %v5815 = vpack.c.b16 %v5789, %v5788
          %v5816 = vpack.c.b16 %v5791, %v5790
          %v5817 = vpack.c.b16 %v5793, %v5792
          %v5818 = vpack.c.b16 %v5795, %v5794
          %v5819 = vpack.c.b16 %v5797, %v5796
          %v5820 = vpack.c.b16 %v5799, %v5798
          %v5821 = vpack.c.b16 %v5801, %v5800
          %v5822 = vpack.c.b16 %v5803, %v5802
          %v5823 = vpack.c.b16 %v5805, %v5804
          %v5824 = vpack.c.b16 %v5807, %v5806
          %v5825 = vpack.c.b16 %v5809, %v5808
          %v5830 = vunpack.c.l.b16 %v5742
          %v5831 = vunpack.c.l.b16 %v5743
          %v5832 = vunpack.c.l.b16 %v5744
          %v5833 = vunpack.c.l.b16 %v5745
          %v5834 = vpack.c.b16 %v5831, %v5830
          %v5835 = vpack.c.b16 %v5833, %v5832
          %v5839 = vsel %vm709, %v5810, 0
          %v5842 = vsel %vm709, %v5811, 0
          %v5845 = vsel %vm709, %v5812, 0
          %v5848 = vsel %vm709, %v5813, 0
          %v5851 = vsel %vm709, %v5814, 0
          %v5854 = vsel %vm709, %v5815, 0
          %v5857 = vsel %vm709, %v5816, 0
          %v5860 = vsel %vm709, %v5817, 0
          %v5863 = vsel %vm709, %v5818, 0
          %v5866 = vsel %vm709, %v5819, 0
          %v5869 = vsel %vm709, %v5820, 0
          %v5872 = vsel %vm709, %v5821, 0
          %v5875 = vsel %vm709, %v5822, 0
          %v5878 = vsel %vm709, %v5823, 0
          %v5881 = vsel %vm709, %v5824, 0
          %v5884 = vsel %vm709, %v5825, 0
          %5886 = vmatprep.subr.bf16.mxu0 0
          %5887 = vmatpush1.bf16.msra.mxu0 0
          %5888 = vmatprep.subr.bf16.mxu0 0
          %5889 = vmatpush1.bf16.msra.mxu0 0
          %5890 = vmatprep.subr.bf16.mxu0 0
          %5891 = vmatpush1.bf16.msra.mxu0 0
          %5892 = vmatprep.subr.bf16.mxu0 0
          %5893 = vmatpush1.bf16.msra.mxu0 0
          %5894 = vmatprep.subr.bf16.mxu0 0
          %5895 = vmatpush1.bf16.msra.mxu0 0
          %5896 = vmatprep.subr.bf16.mxu0 0
          %5897 = vmatpush1.bf16.msra.mxu0 0
          %5898 = vmatprep.subr.bf16.mxu0 0
          %5899 = vmatpush1.bf16.msra.mxu0 %v5835
          %5900 = vmatprep.subr.bf16.mxu0 0
          %5901 = vmatpush1.bf16.msra.mxu0 %v5834
          %5902 = vmatprep.subr.bf16.mxu0 0
          %5903 = vmatpush2.bf16.msra.mxu0 0
          %5904 = vmatprep.subr.bf16.mxu0 0
          %5905 = vmatpush2.bf16.msra.mxu0 0
          %5906 = vmatprep.subr.bf16.mxu0 0
          %5907 = vmatpush2.bf16.msra.mxu0 0
          %5908 = vmatprep.subr.bf16.mxu0 0
          %5909 = vmatpush2.bf16.msra.mxu0 0
          %5910 = vmatprep.subr.bf16.mxu0 0
          %5911 = vmatpush2.bf16.msra.mxu0 0
          %5912 = vmatprep.subr.bf16.mxu0 0
          %5913 = vmatpush2.bf16.msra.mxu0 0
          %5914 = vmatprep.subr.bf16.mxu0 0
          %5915 = vmatpush2.bf16.msra.mxu0 0
          %5916 = vmatprep.subr.bf16.mxu0 0
          %5917 = vmatpush2.bf16.msra.mxu0 0
          %5918 = vmatprep.mubr.bf16.mxu0 0
          %5919 = vmatmul.mubr.bf16.gmra.mxu0 %v5839
          %v5920 = vpop.f32.mrf.mxu0
          %v5921 = vadd.f32 0.0, %v5920
          %v5922 = vpop.f32.mrf.mxu0
          %v5923 = vpop.f32.mrf.mxu0
          %v5924 = vadd.f32 0.0, %v5923
          %v5925 = vpop.f32.mrf.mxu0
          %5926 = vmatprep.mubr.bf16.mxu0 0
          %5927 = vmatmul.mubr.bf16.gmra.mxu0 %v5842
          %v5928 = vpop.f32.mrf.mxu0
          %v5929 = vadd.f32 0.0, %v5928
          %v5930 = vpop.f32.mrf.mxu0
          %v5931 = vpop.f32.mrf.mxu0
          %v5932 = vadd.f32 0.0, %v5931
          %v5933 = vpop.f32.mrf.mxu0
          %5934 = vmatprep.mubr.bf16.mxu0 0
          %5935 = vmatmul.mubr.bf16.gmra.mxu0 %v5845
          %v5936 = vpop.f32.mrf.mxu0
          %v5937 = vadd.f32 0.0, %v5936
          %v5938 = vpop.f32.mrf.mxu0
          %v5939 = vpop.f32.mrf.mxu0
          %v5940 = vadd.f32 0.0, %v5939
          %v5941 = vpop.f32.mrf.mxu0
          %5942 = vmatprep.mubr.bf16.mxu0 0
          %5943 = vmatmul.mubr.bf16.gmra.mxu0 %v5848
          %v5944 = vpop.f32.mrf.mxu0
          %v5945 = vadd.f32 0.0, %v5944
          %v5946 = vpop.f32.mrf.mxu0
          %v5947 = vpop.f32.mrf.mxu0
          %v5948 = vadd.f32 0.0, %v5947
          %v5949 = vpop.f32.mrf.mxu0
          %5950 = vmatprep.mubr.bf16.mxu0 0
          %5951 = vmatmul.mubr.bf16.gmra.mxu0 %v5851
          %v5952 = vpop.f32.mrf.mxu0
          %v5953 = vadd.f32 0.0, %v5952
          %v5954 = vpop.f32.mrf.mxu0
          %v5955 = vpop.f32.mrf.mxu0
          %v5956 = vadd.f32 0.0, %v5955
          %v5957 = vpop.f32.mrf.mxu0
          %5958 = vmatprep.mubr.bf16.mxu0 0
          %5959 = vmatmul.mubr.bf16.gmra.mxu0 %v5854
          %v5960 = vpop.f32.mrf.mxu0
          %v5961 = vadd.f32 0.0, %v5960
          %v5962 = vpop.f32.mrf.mxu0
          %v5963 = vpop.f32.mrf.mxu0
          %v5964 = vadd.f32 0.0, %v5963
          %v5965 = vpop.f32.mrf.mxu0
          %5966 = vmatprep.mubr.bf16.mxu0 0
          %5967 = vmatmul.mubr.bf16.gmra.mxu0 %v5857
          %v5968 = vpop.f32.mrf.mxu0
          %v5969 = vadd.f32 0.0, %v5968
          %v5970 = vpop.f32.mrf.mxu0
          %v5971 = vpop.f32.mrf.mxu0
          %v5972 = vadd.f32 0.0, %v5971
          %v5973 = vpop.f32.mrf.mxu0
          %5974 = vmatprep.mubr.bf16.mxu0 0
          %5975 = vmatmul.mubr.bf16.gmra.mxu0 %v5860
          %v5976 = vpop.f32.mrf.mxu0
          %v5977 = vadd.f32 0.0, %v5976
          %v5978 = vpop.f32.mrf.mxu0
          %v5979 = vpop.f32.mrf.mxu0
          %v5980 = vadd.f32 0.0, %v5979
          %v5981 = vpop.f32.mrf.mxu0
          %5982 = vmatprep.mubr.bf16.mxu0 0
          %5983 = vmatmul.mubr.bf16.gmra.mxu0 %v5863
          %v5984 = vpop.f32.mrf.mxu0
          %v5985 = vadd.f32 0.0, %v5984
          %v5986 = vpop.f32.mrf.mxu0
          %v5987 = vpop.f32.mrf.mxu0
          %v5988 = vadd.f32 0.0, %v5987
          %v5989 = vpop.f32.mrf.mxu0
          %5990 = vmatprep.mubr.bf16.mxu0 0
          %5991 = vmatmul.mubr.bf16.gmra.mxu0 %v5866
          %v5992 = vpop.f32.mrf.mxu0
          %v5993 = vadd.f32 0.0, %v5992
          %v5994 = vpop.f32.mrf.mxu0
          %v5995 = vpop.f32.mrf.mxu0
          %v5996 = vadd.f32 0.0, %v5995
          %v5997 = vpop.f32.mrf.mxu0
          %5998 = vmatprep.mubr.bf16.mxu0 0
          %5999 = vmatmul.mubr.bf16.gmra.mxu0 %v5869
          %v6000 = vpop.f32.mrf.mxu0
          %v6001 = vadd.f32 0.0, %v6000
          %v6002 = vpop.f32.mrf.mxu0
          %v6003 = vpop.f32.mrf.mxu0
          %v6004 = vadd.f32 0.0, %v6003
          %v6005 = vpop.f32.mrf.mxu0
          %6006 = vmatprep.mubr.bf16.mxu0 0
          %6007 = vmatmul.mubr.bf16.gmra.mxu0 %v5872
          %v6008 = vpop.f32.mrf.mxu0
          %v6009 = vadd.f32 0.0, %v6008
          %v6010 = vpop.f32.mrf.mxu0
          %v6011 = vpop.f32.mrf.mxu0
          %v6012 = vadd.f32 0.0, %v6011
          %v6013 = vpop.f32.mrf.mxu0
          %6014 = vmatprep.mubr.bf16.mxu0 0
          %6015 = vmatmul.mubr.bf16.gmra.mxu0 %v5875
          %v6016 = vpop.f32.mrf.mxu0
          %v6017 = vadd.f32 0.0, %v6016
          %v6018 = vpop.f32.mrf.mxu0
          %v6019 = vpop.f32.mrf.mxu0
          %v6020 = vadd.f32 0.0, %v6019
          %v6021 = vpop.f32.mrf.mxu0
          %6022 = vmatprep.mubr.bf16.mxu0 0
          %6023 = vmatmul.mubr.bf16.gmra.mxu0 %v5878
          %v6024 = vpop.f32.mrf.mxu0
          %v6025 = vadd.f32 0.0, %v6024
          %v6026 = vpop.f32.mrf.mxu0
          %v6027 = vpop.f32.mrf.mxu0
          %v6028 = vadd.f32 0.0, %v6027
          %v6029 = vpop.f32.mrf.mxu0
          %6030 = vmatprep.mubr.bf16.mxu0 0
          %6031 = vmatmul.mubr.bf16.gmra.mxu0 %v5881
          %v6032 = vpop.f32.mrf.mxu0
          %v6033 = vadd.f32 0.0, %v6032
          %v6034 = vpop.f32.mrf.mxu0
          %v6035 = vpop.f32.mrf.mxu0
          %v6036 = vadd.f32 0.0, %v6035
          %v6037 = vpop.f32.mrf.mxu0
          %6038 = vmatprep.mubr.bf16.mxu0 0
          %6039 = vmatmul.mubr.bf16.gmra.mxu0 %v5884
          %v6040 = vpop.f32.mrf.mxu0
          %v6041 = vadd.f32 0.0, %v6040
          %v6042 = vpop.f32.mrf.mxu0
          %v6043 = vpop.f32.mrf.mxu0
          %v6044 = vadd.f32 0.0, %v6043
          %v6045 = vpop.f32.mrf.mxu0
          %6046 = vdwg.mxu0
          %v6047 = vadd.f32 %v5709, %v5921
          %v6048 = vadd.f32 %v5710, %v5924
          %v6049 = vadd.f32 %v5711, %v5929
          %v6050 = vadd.f32 %v5712, %v5932
          %v6051 = vadd.f32 %v5713, %v5937
          %v6052 = vadd.f32 %v5714, %v5940
          %v6053 = vadd.f32 %v5715, %v5945
          %v6054 = vadd.f32 %v5716, %v5948
          %v6055 = vadd.f32 %v5717, %v5953
          %v6056 = vadd.f32 %v5718, %v5956
          %v6057 = vadd.f32 %v5719, %v5961
          %v6058 = vadd.f32 %v5720, %v5964
          %v6059 = vadd.f32 %v5721, %v5969
          %v6060 = vadd.f32 %v5722, %v5972
          %v6061 = vadd.f32 %v5723, %v5977
          %v6062 = vadd.f32 %v5724, %v5980
          %v6063 = vadd.f32 %v5725, %v5985
          %v6064 = vadd.f32 %v5726, %v5988
          %v6065 = vadd.f32 %v5727, %v5993
          %v6066 = vadd.f32 %v5728, %v5996
          %v6067 = vadd.f32 %v5729, %v6001
          %v6068 = vadd.f32 %v5730, %v6004
          %v6069 = vadd.f32 %v5731, %v6009
          %v6070 = vadd.f32 %v5732, %v6012
          %v6071 = vadd.f32 %v5733, %v6017
          %v6072 = vadd.f32 %v5734, %v6020
          %v6073 = vadd.f32 %v5735, %v6025
          %v6074 = vadd.f32 %v5736, %v6028
          %v6075 = vadd.f32 %v5737, %v6033
          %v6076 = vadd.f32 %v5738, %v6036
          %v6077 = vadd.f32 %v5739, %v6041
          %v6078 = vadd.f32 %v5740, %v6044
          %v6079 = vld [vmem:[%s5034 + $0x4] sm:$0xf]
          %v6080 = vld [vmem:[%s5034 + $0x8] sm:$0xf]
          %v6081 = vld [vmem:[%s5034 + $0xc] sm:$0x1]
          %v6082 = vld [vmem:[%s5034 + $0x14] sm:$0xf]
          %v6083 = vld [vmem:[%s5034 + $0x18] sm:$0xf]
          %v6084 = vld [vmem:[%s5034 + $0x1c] sm:$0x1]
          %v6085 = vld [vmem:[%s5034 + $0x24] sm:$0xf]
          %v6086 = vld [vmem:[%s5034 + $0x28] sm:$0xf]
          %v6087 = vld [vmem:[%s5034 + $0x2c] sm:$0x1]
          %v6088 = vld [vmem:[%s5034 + $0x34] sm:$0xf]
          %v6089 = vld [vmem:[%s5034 + $0x38] sm:$0xf]
          %v6090 = vld [vmem:[%s5034 + $0x3c] sm:$0x1]
          %v6091 = vld [vmem:[%s5034 + $0x44] sm:$0xf]
          %v6092 = vld [vmem:[%s5034 + $0x48] sm:$0xf]
          %v6093 = vld [vmem:[%s5034 + $0x4c] sm:$0x1]
          %v6094 = vld [vmem:[%s5034 + $0x54] sm:$0xf]
          %v6095 = vld [vmem:[%s5034 + $0x58] sm:$0xf]
          %v6096 = vld [vmem:[%s5034 + $0x5c] sm:$0x1]
          %v6097 = vld [vmem:[%s5034 + $0x64] sm:$0xf]
          %v6098 = vld [vmem:[%s5034 + $0x68] sm:$0xf]
          %v6099 = vld [vmem:[%s5034 + $0x6c] sm:$0x1]
          %v6100 = vld [vmem:[%s5034 + $0x74] sm:$0xf]
          %v6101 = vld [vmem:[%s5034 + $0x78] sm:$0xf]
          %v6102 = vld [vmem:[%s5034 + $0x7c] sm:$0x1]
          %v6103 = vld [vmem:[%s5034 + $0x84] sm:$0xf]
          %v6104 = vld [vmem:[%s5034 + $0x88] sm:$0xf]
          %v6105 = vld [vmem:[%s5034 + $0x8c] sm:$0x1]
          %v6106 = vld [vmem:[%s5034 + $0x94] sm:$0xf]
          %v6107 = vld [vmem:[%s5034 + $0x98] sm:$0xf]
          %v6108 = vld [vmem:[%s5034 + $0x9c] sm:$0x1]
          %v6109 = vld [vmem:[%s5034 + $0xa4] sm:$0xf]
          %v6110 = vld [vmem:[%s5034 + $0xa8] sm:$0xf]
          %v6111 = vld [vmem:[%s5034 + $0xac] sm:$0x1]
          %v6112 = vld [vmem:[%s5034 + $0xb4] sm:$0xf]
          %v6113 = vld [vmem:[%s5034 + $0xb8] sm:$0xf]
          %v6114 = vld [vmem:[%s5034 + $0xbc] sm:$0x1]
          %v6115 = vld [vmem:[%s5034 + $0xc4] sm:$0xf]
          %v6116 = vld [vmem:[%s5034 + $0xc8] sm:$0xf]
          %v6117 = vld [vmem:[%s5034 + $0xcc] sm:$0x1]
          %v6118 = vld [vmem:[%s5034 + $0xd4] sm:$0xf]
          %v6119 = vld [vmem:[%s5034 + $0xd8] sm:$0xf]
          %v6120 = vld [vmem:[%s5034 + $0xdc] sm:$0x1]
          %v6121 = vld [vmem:[%s5034 + $0xe4] sm:$0xf]
          %v6122 = vld [vmem:[%s5034 + $0xe8] sm:$0xf]
          %v6123 = vld [vmem:[%s5034 + $0xec] sm:$0x1]
          %v6124 = vld [vmem:[%s5034 + $0xf4] sm:$0xf]
          %v6125 = vld [vmem:[%s5034 + $0xf8] sm:$0xf]
          %v6126 = vld [vmem:[%s5034 + $0xfc] sm:$0x1]
          %v6128 = vshrl.u32 %v6079, 16
          %v6130 = vrot.slane %v6128, 4
          %v6131 = vshll.u32 %v6079, 16
          %v6133 = vrot.slane %v6131, 5
          %v6134 = vor.u32 %v6130, %v6133
          %v6135 = vrot.slane %v6134, 4
          %v6137 = vshll.u32 %v6080, 16
          %v6139 = vrot.slane %v6137, 5
          %v6140 = vsel %vm2561, %v6135, %v6139
          %v6141 = vshrl.u32 %v6080, 16
          %v6143 = vrot.slane %v6141, 4
          %v6144 = vor.u32 %v6143, %v6139
          %v6145 = vrot.slane %v6144, 4
          %v6147 = vshll.u32 %v6081, 16
          %v6149 = vrot.slane %v6147, 5
          %v6150 = vsel %vm2561, %v6145, %v6149
          %v6152 = vshrl.u32 %v6082, 16
          %v6154 = vrot.slane %v6152, 4
          %v6155 = vshll.u32 %v6082, 16
          %v6157 = vrot.slane %v6155, 5
          %v6158 = vor.u32 %v6154, %v6157
          %v6159 = vrot.slane %v6158, 4
          %v6161 = vshll.u32 %v6083, 16
          %v6163 = vrot.slane %v6161, 5
          %v6164 = vsel %vm2561, %v6159, %v6163
          %v6165 = vshrl.u32 %v6083, 16
          %v6167 = vrot.slane %v6165, 4
          %v6168 = vor.u32 %v6167, %v6163
          %v6169 = vrot.slane %v6168, 4
          %v6171 = vshll.u32 %v6084, 16
          %v6173 = vrot.slane %v6171, 5
          %v6174 = vsel %vm2561, %v6169, %v6173
          %v6176 = vshrl.u32 %v6085, 16
          %v6178 = vrot.slane %v6176, 4
          %v6179 = vshll.u32 %v6085, 16
          %v6181 = vrot.slane %v6179, 5
          %v6182 = vor.u32 %v6178, %v6181
          %v6183 = vrot.slane %v6182, 4
          %v6185 = vshll.u32 %v6086, 16
          %v6187 = vrot.slane %v6185, 5
          %v6188 = vsel %vm2561, %v6183, %v6187
          %v6189 = vshrl.u32 %v6086, 16
          %v6191 = vrot.slane %v6189, 4
          %v6192 = vor.u32 %v6191, %v6187
          %v6193 = vrot.slane %v6192, 4
          %v6195 = vshll.u32 %v6087, 16
          %v6197 = vrot.slane %v6195, 5
          %v6198 = vsel %vm2561, %v6193, %v6197
          %v6200 = vshrl.u32 %v6088, 16
          %v6202 = vrot.slane %v6200, 4
          %v6203 = vshll.u32 %v6088, 16
          %v6205 = vrot.slane %v6203, 5
          %v6206 = vor.u32 %v6202, %v6205
          %v6207 = vrot.slane %v6206, 4
          %v6209 = vshll.u32 %v6089, 16
          %v6211 = vrot.slane %v6209, 5
          %v6212 = vsel %vm2561, %v6207, %v6211
          %v6213 = vshrl.u32 %v6089, 16
          %v6215 = vrot.slane %v6213, 4
          %v6216 = vor.u32 %v6215, %v6211
          %v6217 = vrot.slane %v6216, 4
          %v6219 = vshll.u32 %v6090, 16
          %v6221 = vrot.slane %v6219, 5
          %v6222 = vsel %vm2561, %v6217, %v6221
          %v6224 = vshrl.u32 %v6091, 16
          %v6226 = vrot.slane %v6224, 4
          %v6227 = vshll.u32 %v6091, 16
          %v6229 = vrot.slane %v6227, 5
          %v6230 = vor.u32 %v6226, %v6229
          %v6231 = vrot.slane %v6230, 4
          %v6233 = vshll.u32 %v6092, 16
          %v6235 = vrot.slane %v6233, 5
          %v6236 = vsel %vm2561, %v6231, %v6235
          %v6237 = vshrl.u32 %v6092, 16
          %v6239 = vrot.slane %v6237, 4
          %v6240 = vor.u32 %v6239, %v6235
          %v6241 = vrot.slane %v6240, 4
          %v6243 = vshll.u32 %v6093, 16
          %v6245 = vrot.slane %v6243, 5
          %v6246 = vsel %vm2561, %v6241, %v6245
          %v6248 = vshrl.u32 %v6094, 16
          %v6250 = vrot.slane %v6248, 4
          %v6251 = vshll.u32 %v6094, 16
          %v6253 = vrot.slane %v6251, 5
          %v6254 = vor.u32 %v6250, %v6253
          %v6255 = vrot.slane %v6254, 4
          %v6257 = vshll.u32 %v6095, 16
          %v6259 = vrot.slane %v6257, 5
          %v6260 = vsel %vm2561, %v6255, %v6259
          %v6261 = vshrl.u32 %v6095, 16
          %v6263 = vrot.slane %v6261, 4
          %v6264 = vor.u32 %v6263, %v6259
          %v6265 = vrot.slane %v6264, 4
          %v6267 = vshll.u32 %v6096, 16
          %v6269 = vrot.slane %v6267, 5
          %v6270 = vsel %vm2561, %v6265, %v6269
          %v6272 = vshrl.u32 %v6097, 16
          %v6274 = vrot.slane %v6272, 4
          %v6275 = vshll.u32 %v6097, 16
          %v6277 = vrot.slane %v6275, 5
          %v6278 = vor.u32 %v6274, %v6277
          %v6279 = vrot.slane %v6278, 4
          %v6281 = vshll.u32 %v6098, 16
          %v6283 = vrot.slane %v6281, 5
          %v6284 = vsel %vm2561, %v6279, %v6283
          %v6285 = vshrl.u32 %v6098, 16
          %v6287 = vrot.slane %v6285, 4
          %v6288 = vor.u32 %v6287, %v6283
          %v6289 = vrot.slane %v6288, 4
          %v6291 = vshll.u32 %v6099, 16
          %v6293 = vrot.slane %v6291, 5
          %v6294 = vsel %vm2561, %v6289, %v6293
          %v6296 = vshrl.u32 %v6100, 16
          %v6298 = vrot.slane %v6296, 4
          %v6299 = vshll.u32 %v6100, 16
          %v6301 = vrot.slane %v6299, 5
          %v6302 = vor.u32 %v6298, %v6301
          %v6303 = vrot.slane %v6302, 4
          %v6305 = vshll.u32 %v6101, 16
          %v6307 = vrot.slane %v6305, 5
          %v6308 = vsel %vm2561, %v6303, %v6307
          %v6309 = vshrl.u32 %v6101, 16
          %v6311 = vrot.slane %v6309, 4
          %v6312 = vor.u32 %v6311, %v6307
          %v6313 = vrot.slane %v6312, 4
          %v6315 = vshll.u32 %v6102, 16
          %v6317 = vrot.slane %v6315, 5
          %v6318 = vsel %vm2561, %v6313, %v6317
          %v6320 = vshrl.u32 %v6103, 16
          %v6322 = vrot.slane %v6320, 4
          %v6323 = vshll.u32 %v6103, 16
          %v6325 = vrot.slane %v6323, 5
          %v6326 = vor.u32 %v6322, %v6325
          %v6327 = vrot.slane %v6326, 4
          %v6329 = vshll.u32 %v6104, 16
          %v6331 = vrot.slane %v6329, 5
          %v6332 = vsel %vm2561, %v6327, %v6331
          %v6333 = vshrl.u32 %v6104, 16
          %v6335 = vrot.slane %v6333, 4
          %v6336 = vor.u32 %v6335, %v6331
          %v6337 = vrot.slane %v6336, 4
          %v6339 = vshll.u32 %v6105, 16
          %v6341 = vrot.slane %v6339, 5
          %v6342 = vsel %vm2561, %v6337, %v6341
          %v6344 = vshrl.u32 %v6106, 16
          %v6346 = vrot.slane %v6344, 4
          %v6347 = vshll.u32 %v6106, 16
          %v6349 = vrot.slane %v6347, 5
          %v6350 = vor.u32 %v6346, %v6349
          %v6351 = vrot.slane %v6350, 4
          %v6353 = vshll.u32 %v6107, 16
          %v6355 = vrot.slane %v6353, 5
          %v6356 = vsel %vm2561, %v6351, %v6355
          %v6357 = vshrl.u32 %v6107, 16
          %v6359 = vrot.slane %v6357, 4
          %v6360 = vor.u32 %v6359, %v6355
          %v6361 = vrot.slane %v6360, 4
          %v6363 = vshll.u32 %v6108, 16
          %v6365 = vrot.slane %v6363, 5
          %v6366 = vsel %vm2561, %v6361, %v6365
          %v6368 = vshrl.u32 %v6109, 16
          %v6370 = vrot.slane %v6368, 4
          %v6371 = vshll.u32 %v6109, 16
          %v6373 = vrot.slane %v6371, 5
          %v6374 = vor.u32 %v6370, %v6373
          %v6375 = vrot.slane %v6374, 4
          %v6377 = vshll.u32 %v6110, 16
          %v6379 = vrot.slane %v6377, 5
          %v6380 = vsel %vm2561, %v6375, %v6379
          %v6381 = vshrl.u32 %v6110, 16
          %v6383 = vrot.slane %v6381, 4
          %v6384 = vor.u32 %v6383, %v6379
          %v6385 = vrot.slane %v6384, 4
          %v6387 = vshll.u32 %v6111, 16
          %v6389 = vrot.slane %v6387, 5
          %v6390 = vsel %vm2561, %v6385, %v6389
          %v6392 = vshrl.u32 %v6112, 16
          %v6394 = vrot.slane %v6392, 4
          %v6395 = vshll.u32 %v6112, 16
          %v6397 = vrot.slane %v6395, 5
          %v6398 = vor.u32 %v6394, %v6397
          %v6399 = vrot.slane %v6398, 4
          %v6401 = vshll.u32 %v6113, 16
          %v6403 = vrot.slane %v6401, 5
          %v6404 = vsel %vm2561, %v6399, %v6403
          %v6405 = vshrl.u32 %v6113, 16
          %v6407 = vrot.slane %v6405, 4
          %v6408 = vor.u32 %v6407, %v6403
          %v6409 = vrot.slane %v6408, 4
          %v6411 = vshll.u32 %v6114, 16
          %v6413 = vrot.slane %v6411, 5
          %v6414 = vsel %vm2561, %v6409, %v6413
          %v6416 = vshrl.u32 %v6115, 16
          %v6418 = vrot.slane %v6416, 4
          %v6419 = vshll.u32 %v6115, 16
          %v6421 = vrot.slane %v6419, 5
          %v6422 = vor.u32 %v6418, %v6421
          %v6423 = vrot.slane %v6422, 4
          %v6425 = vshll.u32 %v6116, 16
          %v6427 = vrot.slane %v6425, 5
          %v6428 = vsel %vm2561, %v6423, %v6427
          %v6429 = vshrl.u32 %v6116, 16
          %v6431 = vrot.slane %v6429, 4
          %v6432 = vor.u32 %v6431, %v6427
          %v6433 = vrot.slane %v6432, 4
          %v6435 = vshll.u32 %v6117, 16
          %v6437 = vrot.slane %v6435, 5
          %v6438 = vsel %vm2561, %v6433, %v6437
          %v6440 = vshrl.u32 %v6118, 16
          %v6442 = vrot.slane %v6440, 4
          %v6443 = vshll.u32 %v6118, 16
          %v6445 = vrot.slane %v6443, 5
          %v6446 = vor.u32 %v6442, %v6445
          %v6447 = vrot.slane %v6446, 4
          %v6449 = vshll.u32 %v6119, 16
          %v6451 = vrot.slane %v6449, 5
          %v6452 = vsel %vm2561, %v6447, %v6451
          %v6453 = vshrl.u32 %v6119, 16
          %v6455 = vrot.slane %v6453, 4
          %v6456 = vor.u32 %v6455, %v6451
          %v6457 = vrot.slane %v6456, 4
          %v6459 = vshll.u32 %v6120, 16
          %v6461 = vrot.slane %v6459, 5
          %v6462 = vsel %vm2561, %v6457, %v6461
          %v6464 = vshrl.u32 %v6121, 16
          %v6466 = vrot.slane %v6464, 4
          %v6467 = vshll.u32 %v6121, 16
          %v6469 = vrot.slane %v6467, 5
          %v6470 = vor.u32 %v6466, %v6469
          %v6471 = vrot.slane %v6470, 4
          %v6473 = vshll.u32 %v6122, 16
          %v6475 = vrot.slane %v6473, 5
          %v6476 = vsel %vm2561, %v6471, %v6475
          %v6477 = vshrl.u32 %v6122, 16
          %v6479 = vrot.slane %v6477, 4
          %v6480 = vor.u32 %v6479, %v6475
          %v6481 = vrot.slane %v6480, 4
          %v6483 = vshll.u32 %v6123, 16
          %v6485 = vrot.slane %v6483, 5
          %v6486 = vsel %vm2561, %v6481, %v6485
          %v6488 = vshrl.u32 %v6124, 16
          %v6490 = vrot.slane %v6488, 4
          %v6491 = vshll.u32 %v6124, 16
          %v6493 = vrot.slane %v6491, 5
          %v6494 = vor.u32 %v6490, %v6493
          %v6495 = vrot.slane %v6494, 4
          %v6497 = vshll.u32 %v6125, 16
          %v6499 = vrot.slane %v6497, 5
          %v6500 = vsel %vm2561, %v6495, %v6499
          %v6501 = vshrl.u32 %v6125, 16
          %v6503 = vrot.slane %v6501, 4
          %v6504 = vor.u32 %v6503, %v6499
          %v6505 = vrot.slane %v6504, 4
          %v6507 = vshll.u32 %v6126, 16
          %v6509 = vrot.slane %v6507, 5
          %v6510 = vsel %vm2561, %v6505, %v6509
          %s6511 = scalar_lea.vmem %s5, 128
          %v6512 = vld [vmem:[%s6511] sm:$0xf]
          %v6513 = vld [vmem:[%s6511 + $0x4] sm:$0xf]
          %v6514 = vld [vmem:[%s6511 + $0x8] sm:$0xf]
          %v6515 = vld [vmem:[%s6511 + $0xc] sm:$0xf]
          %v6516 = vunpack.c.l.b16 %v6140
          %v6517 = vunpack.c.l.b16 %v6150
          %v6518 = vunpack.c.l.b16 %v6164
          %v6519 = vunpack.c.l.b16 %v6174
          %v6520 = vunpack.c.l.b16 %v6188
          %v6521 = vunpack.c.l.b16 %v6198
          %v6522 = vunpack.c.l.b16 %v6212
          %v6523 = vunpack.c.l.b16 %v6222
          %v6524 = vunpack.c.l.b16 %v6236
          %v6525 = vunpack.c.l.b16 %v6246
          %v6526 = vunpack.c.l.b16 %v6260
          %v6527 = vunpack.c.l.b16 %v6270
          %v6528 = vunpack.c.l.b16 %v6284
          %v6529 = vunpack.c.l.b16 %v6294
          %v6530 = vunpack.c.l.b16 %v6308
          %v6531 = vunpack.c.l.b16 %v6318
          %v6532 = vunpack.c.l.b16 %v6332
          %v6533 = vunpack.c.l.b16 %v6342
          %v6534 = vunpack.c.l.b16 %v6356
          %v6535 = vunpack.c.l.b16 %v6366
          %v6536 = vunpack.c.l.b16 %v6380
          %v6537 = vunpack.c.l.b16 %v6390
          %v6538 = vunpack.c.l.b16 %v6404
          %v6539 = vunpack.c.l.b16 %v6414
          %v6540 = vunpack.c.l.b16 %v6428
          %v6541 = vunpack.c.l.b16 %v6438
          %v6542 = vunpack.c.l.b16 %v6452
          %v6543 = vunpack.c.l.b16 %v6462
          %v6544 = vunpack.c.l.b16 %v6476
          %v6545 = vunpack.c.l.b16 %v6486
          %v6546 = vunpack.c.l.b16 %v6500
          %v6547 = vunpack.c.l.b16 %v6510
          %v6548 = vpack.c.b16 %v6517, %v6516
          %v6549 = vpack.c.b16 %v6519, %v6518
          %v6550 = vpack.c.b16 %v6521, %v6520
          %v6551 = vpack.c.b16 %v6523, %v6522
          %v6552 = vpack.c.b16 %v6525, %v6524
          %v6553 = vpack.c.b16 %v6527, %v6526
          %v6554 = vpack.c.b16 %v6529, %v6528
          %v6555 = vpack.c.b16 %v6531, %v6530
          %v6556 = vpack.c.b16 %v6533, %v6532
          %v6557 = vpack.c.b16 %v6535, %v6534
          %v6558 = vpack.c.b16 %v6537, %v6536
          %v6559 = vpack.c.b16 %v6539, %v6538
          %v6560 = vpack.c.b16 %v6541, %v6540
          %v6561 = vpack.c.b16 %v6543, %v6542
          %v6562 = vpack.c.b16 %v6545, %v6544
          %v6563 = vpack.c.b16 %v6547, %v6546
          %v6568 = vunpack.c.l.b16 %v6512
          %v6569 = vunpack.c.l.b16 %v6513
          %v6570 = vunpack.c.l.b16 %v6514
          %v6571 = vunpack.c.l.b16 %v6515
          %v6572 = vpack.c.b16 %v6569, %v6568
          %v6573 = vpack.c.b16 %v6571, %v6570
          %v6577 = vsel %vm709, %v6548, 0
          %v6580 = vsel %vm709, %v6549, 0
          %v6583 = vsel %vm709, %v6550, 0
          %v6586 = vsel %vm709, %v6551, 0
          %v6589 = vsel %vm709, %v6552, 0
          %v6592 = vsel %vm709, %v6553, 0
          %v6595 = vsel %vm709, %v6554, 0
          %v6598 = vsel %vm709, %v6555, 0
          %v6601 = vsel %vm709, %v6556, 0
          %v6604 = vsel %vm709, %v6557, 0
          %v6607 = vsel %vm709, %v6558, 0
          %v6610 = vsel %vm709, %v6559, 0
          %v6613 = vsel %vm709, %v6560, 0
          %v6616 = vsel %vm709, %v6561, 0
          %v6619 = vsel %vm709, %v6562, 0
          %v6622 = vsel %vm709, %v6563, 0
          %6624 = vmatprep.subr.bf16.mxu0 0
          %6625 = vmatpush1.bf16.msra.mxu0 0
          %6626 = vmatprep.subr.bf16.mxu0 0
          %6627 = vmatpush1.bf16.msra.mxu0 0
          %6628 = vmatprep.subr.bf16.mxu0 0
          %6629 = vmatpush1.bf16.msra.mxu0 0
          %6630 = vmatprep.subr.bf16.mxu0 0
          %6631 = vmatpush1.bf16.msra.mxu0 0
          %6632 = vmatprep.subr.bf16.mxu0 0
          %6633 = vmatpush1.bf16.msra.mxu0 0
          %6634 = vmatprep.subr.bf16.mxu0 0
          %6635 = vmatpush1.bf16.msra.mxu0 0
          %6636 = vmatprep.subr.bf16.mxu0 0
          %6637 = vmatpush1.bf16.msra.mxu0 %v6573
          %6638 = vmatprep.subr.bf16.mxu0 0
          %6639 = vmatpush1.bf16.msra.mxu0 %v6572
          %6640 = vmatprep.subr.bf16.mxu0 0
          %6641 = vmatpush2.bf16.msra.mxu0 0
          %6642 = vmatprep.subr.bf16.mxu0 0
          %6643 = vmatpush2.bf16.msra.mxu0 0
          %6644 = vmatprep.subr.bf16.mxu0 0
          %6645 = vmatpush2.bf16.msra.mxu0 0
          %6646 = vmatprep.subr.bf16.mxu0 0
          %6647 = vmatpush2.bf16.msra.mxu0 0
          %6648 = vmatprep.subr.bf16.mxu0 0
          %6649 = vmatpush2.bf16.msra.mxu0 0
          %6650 = vmatprep.subr.bf16.mxu0 0
          %6651 = vmatpush2.bf16.msra.mxu0 0
          %6652 = vmatprep.subr.bf16.mxu0 0
          %6653 = vmatpush2.bf16.msra.mxu0 0
          %6654 = vmatprep.subr.bf16.mxu0 0
          %6655 = vmatpush2.bf16.msra.mxu0 0
          %6656 = vmatprep.mubr.bf16.mxu0 0
          %6657 = vmatmul.mubr.bf16.gmra.mxu0 %v6577
          %v6658 = vpop.f32.mrf.mxu0
          %v6659 = vadd.f32 0.0, %v6658
          %v6660 = vpop.f32.mrf.mxu0
          %v6661 = vpop.f32.mrf.mxu0
          %v6662 = vadd.f32 0.0, %v6661
          %v6663 = vpop.f32.mrf.mxu0
          %6664 = vmatprep.mubr.bf16.mxu0 0
          %6665 = vmatmul.mubr.bf16.gmra.mxu0 %v6580
          %v6666 = vpop.f32.mrf.mxu0
          %v6667 = vadd.f32 0.0, %v6666
          %v6668 = vpop.f32.mrf.mxu0
          %v6669 = vpop.f32.mrf.mxu0
          %v6670 = vadd.f32 0.0, %v6669
          %v6671 = vpop.f32.mrf.mxu0
          %6672 = vmatprep.mubr.bf16.mxu0 0
          %6673 = vmatmul.mubr.bf16.gmra.mxu0 %v6583
          %v6674 = vpop.f32.mrf.mxu0
          %v6675 = vadd.f32 0.0, %v6674
          %v6676 = vpop.f32.mrf.mxu0
          %v6677 = vpop.f32.mrf.mxu0
          %v6678 = vadd.f32 0.0, %v6677
          %v6679 = vpop.f32.mrf.mxu0
          %6680 = vmatprep.mubr.bf16.mxu0 0
          %6681 = vmatmul.mubr.bf16.gmra.mxu0 %v6586
          %v6682 = vpop.f32.mrf.mxu0
          %v6683 = vadd.f32 0.0, %v6682
          %v6684 = vpop.f32.mrf.mxu0
          %v6685 = vpop.f32.mrf.mxu0
          %v6686 = vadd.f32 0.0, %v6685
          %v6687 = vpop.f32.mrf.mxu0
          %6688 = vmatprep.mubr.bf16.mxu0 0
          %6689 = vmatmul.mubr.bf16.gmra.mxu0 %v6589
          %v6690 = vpop.f32.mrf.mxu0
          %v6691 = vadd.f32 0.0, %v6690
          %v6692 = vpop.f32.mrf.mxu0
          %v6693 = vpop.f32.mrf.mxu0
          %v6694 = vadd.f32 0.0, %v6693
          %v6695 = vpop.f32.mrf.mxu0
          %6696 = vmatprep.mubr.bf16.mxu0 0
          %6697 = vmatmul.mubr.bf16.gmra.mxu0 %v6592
          %v6698 = vpop.f32.mrf.mxu0
          %v6699 = vadd.f32 0.0, %v6698
          %v6700 = vpop.f32.mrf.mxu0
          %v6701 = vpop.f32.mrf.mxu0
          %v6702 = vadd.f32 0.0, %v6701
          %v6703 = vpop.f32.mrf.mxu0
          %6704 = vmatprep.mubr.bf16.mxu0 0
          %6705 = vmatmul.mubr.bf16.gmra.mxu0 %v6595
          %v6706 = vpop.f32.mrf.mxu0
          %v6707 = vadd.f32 0.0, %v6706
          %v6708 = vpop.f32.mrf.mxu0
          %v6709 = vpop.f32.mrf.mxu0
          %v6710 = vadd.f32 0.0, %v6709
          %v6711 = vpop.f32.mrf.mxu0
          %6712 = vmatprep.mubr.bf16.mxu0 0
          %6713 = vmatmul.mubr.bf16.gmra.mxu0 %v6598
          %v6714 = vpop.f32.mrf.mxu0
          %v6715 = vadd.f32 0.0, %v6714
          %v6716 = vpop.f32.mrf.mxu0
          %v6717 = vpop.f32.mrf.mxu0
          %v6718 = vadd.f32 0.0, %v6717
          %v6719 = vpop.f32.mrf.mxu0
          %6720 = vmatprep.mubr.bf16.mxu0 0
          %6721 = vmatmul.mubr.bf16.gmra.mxu0 %v6601
          %v6722 = vpop.f32.mrf.mxu0
          %v6723 = vadd.f32 0.0, %v6722
          %v6724 = vpop.f32.mrf.mxu0
          %v6725 = vpop.f32.mrf.mxu0
          %v6726 = vadd.f32 0.0, %v6725
          %v6727 = vpop.f32.mrf.mxu0
          %6728 = vmatprep.mubr.bf16.mxu0 0
          %6729 = vmatmul.mubr.bf16.gmra.mxu0 %v6604
          %v6730 = vpop.f32.mrf.mxu0
          %v6731 = vadd.f32 0.0, %v6730
          %v6732 = vpop.f32.mrf.mxu0
          %v6733 = vpop.f32.mrf.mxu0
          %v6734 = vadd.f32 0.0, %v6733
          %v6735 = vpop.f32.mrf.mxu0
          %6736 = vmatprep.mubr.bf16.mxu0 0
          %6737 = vmatmul.mubr.bf16.gmra.mxu0 %v6607
          %v6738 = vpop.f32.mrf.mxu0
          %v6739 = vadd.f32 0.0, %v6738
          %v6740 = vpop.f32.mrf.mxu0
          %v6741 = vpop.f32.mrf.mxu0
          %v6742 = vadd.f32 0.0, %v6741
          %v6743 = vpop.f32.mrf.mxu0
          %6744 = vmatprep.mubr.bf16.mxu0 0
          %6745 = vmatmul.mubr.bf16.gmra.mxu0 %v6610
          %v6746 = vpop.f32.mrf.mxu0
          %v6747 = vadd.f32 0.0, %v6746
          %v6748 = vpop.f32.mrf.mxu0
          %v6749 = vpop.f32.mrf.mxu0
          %v6750 = vadd.f32 0.0, %v6749
          %v6751 = vpop.f32.mrf.mxu0
          %6752 = vmatprep.mubr.bf16.mxu0 0
          %6753 = vmatmul.mubr.bf16.gmra.mxu0 %v6613
          %v6754 = vpop.f32.mrf.mxu0
          %v6755 = vadd.f32 0.0, %v6754
          %v6756 = vpop.f32.mrf.mxu0
          %v6757 = vpop.f32.mrf.mxu0
          %v6758 = vadd.f32 0.0, %v6757
          %v6759 = vpop.f32.mrf.mxu0
          %6760 = vmatprep.mubr.bf16.mxu0 0
          %6761 = vmatmul.mubr.bf16.gmra.mxu0 %v6616
          %v6762 = vpop.f32.mrf.mxu0
          %v6763 = vadd.f32 0.0, %v6762
          %v6764 = vpop.f32.mrf.mxu0
          %v6765 = vpop.f32.mrf.mxu0
          %v6766 = vadd.f32 0.0, %v6765
          %v6767 = vpop.f32.mrf.mxu0
          %6768 = vmatprep.mubr.bf16.mxu0 0
          %6769 = vmatmul.mubr.bf16.gmra.mxu0 %v6619
          %v6770 = vpop.f32.mrf.mxu0
          %v6771 = vadd.f32 0.0, %v6770
          %v6772 = vpop.f32.mrf.mxu0
          %v6773 = vpop.f32.mrf.mxu0
          %v6774 = vadd.f32 0.0, %v6773
          %v6775 = vpop.f32.mrf.mxu0
          %6776 = vmatprep.mubr.bf16.mxu0 0
          %6777 = vmatmul.mubr.bf16.gmra.mxu0 %v6622
          %v6778 = vpop.f32.mrf.mxu0
          %v6779 = vadd.f32 0.0, %v6778
          %v6780 = vpop.f32.mrf.mxu0
          %v6781 = vpop.f32.mrf.mxu0
          %v6782 = vadd.f32 0.0, %v6781
          %v6783 = vpop.f32.mrf.mxu0
          %6784 = vdwg.mxu0
          %v6785 = vadd.f32 %v6047, %v6659
          %v6786 = vadd.f32 %v6048, %v6662
          %v6787 = vadd.f32 %v6049, %v6667
          %v6788 = vadd.f32 %v6050, %v6670
          %v6789 = vadd.f32 %v6051, %v6675
          %v6790 = vadd.f32 %v6052, %v6678
          %v6791 = vadd.f32 %v6053, %v6683
          %v6792 = vadd.f32 %v6054, %v6686
          %v6793 = vadd.f32 %v6055, %v6691
          %v6794 = vadd.f32 %v6056, %v6694
          %v6795 = vadd.f32 %v6057, %v6699
          %v6796 = vadd.f32 %v6058, %v6702
          %v6797 = vadd.f32 %v6059, %v6707
          %v6798 = vadd.f32 %v6060, %v6710
          %v6799 = vadd.f32 %v6061, %v6715
          %v6800 = vadd.f32 %v6062, %v6718
          %v6801 = vadd.f32 %v6063, %v6723
          %v6802 = vadd.f32 %v6064, %v6726
          %v6803 = vadd.f32 %v6065, %v6731
          %v6804 = vadd.f32 %v6066, %v6734
          %v6805 = vadd.f32 %v6067, %v6739
          %v6806 = vadd.f32 %v6068, %v6742
          %v6807 = vadd.f32 %v6069, %v6747
          %v6808 = vadd.f32 %v6070, %v6750
          %v6809 = vadd.f32 %v6071, %v6755
          %v6810 = vadd.f32 %v6072, %v6758
          %v6811 = vadd.f32 %v6073, %v6763
          %v6812 = vadd.f32 %v6074, %v6766
          %v6813 = vadd.f32 %v6075, %v6771
          %v6814 = vadd.f32 %v6076, %v6774
          %v6815 = vadd.f32 %v6077, %v6779
          %v6816 = vadd.f32 %v6078, %v6782
          %v6817 = vld [vmem:[%s6] sm:$0x1]
          %v6819 = vlaneseq
          %v6820 = vshrl.u32 %v6819, 7
          %v6821 = vsub.s32 0, %v6820
          %v6822 = vrot.slane %v6817, %v6821
          %v6824 = vadd.f32 %v6785, %v6822
          %v6825 = vadd.f32 %v6786, %v6822
          %v6826 = vadd.f32 %v6787, %v6822
          %v6827 = vadd.f32 %v6788, %v6822
          %v6828 = vadd.f32 %v6789, %v6822
          %v6829 = vadd.f32 %v6790, %v6822
          %v6830 = vadd.f32 %v6791, %v6822
          %v6831 = vadd.f32 %v6792, %v6822
          %v6832 = vadd.f32 %v6793, %v6822
          %v6833 = vadd.f32 %v6794, %v6822
          %v6834 = vadd.f32 %v6795, %v6822
          %v6835 = vadd.f32 %v6796, %v6822
          %v6836 = vadd.f32 %v6797, %v6822
          %v6837 = vadd.f32 %v6798, %v6822
          %v6838 = vadd.f32 %v6799, %v6822
          %v6839 = vadd.f32 %v6800, %v6822
          %v6840 = vadd.f32 %v6801, %v6822
          %v6841 = vadd.f32 %v6802, %v6822
          %v6842 = vadd.f32 %v6803, %v6822
          %v6843 = vadd.f32 %v6804, %v6822
          %v6844 = vadd.f32 %v6805, %v6822
          %v6845 = vadd.f32 %v6806, %v6822
          %v6846 = vadd.f32 %v6807, %v6822
          %v6847 = vadd.f32 %v6808, %v6822
          %v6848 = vadd.f32 %v6809, %v6822
          %v6849 = vadd.f32 %v6810, %v6822
          %v6850 = vadd.f32 %v6811, %v6822
          %v6851 = vadd.f32 %v6812, %v6822
          %v6852 = vadd.f32 %v6813, %v6822
          %v6853 = vadd.f32 %v6814, %v6822
          %v6854 = vadd.f32 %v6815, %v6822
          %v6855 = vadd.f32 %v6816, %v6822
          %v6856 = vpack.c.bf16 %v6825, %v6824
          %v6857 = vpack.c.bf16 %v6827, %v6826
          %v6858 = vpack.c.bf16 %v6829, %v6828
          %v6859 = vpack.c.bf16 %v6831, %v6830
          %v6860 = vpack.c.bf16 %v6833, %v6832
          %v6861 = vpack.c.bf16 %v6835, %v6834
          %v6862 = vpack.c.bf16 %v6837, %v6836
          %v6863 = vpack.c.bf16 %v6839, %v6838
          %v6864 = vpack.c.bf16 %v6841, %v6840
          %v6865 = vpack.c.bf16 %v6843, %v6842
          %v6866 = vpack.c.bf16 %v6845, %v6844
          %v6867 = vpack.c.bf16 %v6847, %v6846
          %v6868 = vpack.c.bf16 %v6849, %v6848
          %v6869 = vpack.c.bf16 %v6851, %v6850
          %v6870 = vpack.c.bf16 %v6853, %v6852
          %v6871 = vpack.c.bf16 %v6855, %v6854
          %p6872 = scmp.lt.s32.totalorder %s38, 0
          %s6873 = ssub.s32 0, %s38
          %s6874 = scalar_select %p6872, %s6873, %s38
          %s6875 = sdiv.u32.pop %s6874, 3
          %s6876 = srem.u32.pop %s6874, 3
          %s6877 = ssub.s32 0, %s6876
          %s6878 = scalar_select %p6872, %s6877, %s6876
          %p6879 = scmp.ne.s32.totalorder %s6878, 0
          %p6880 = scmp.lt.s32.totalorder %s6878, 0
          %p6881 = pnand %p6880, %p6879
          %p6882 = pneg %p6881
          %s6883 = sadd.s32 %s6878, 3
          %s6884 = scalar_select %p6882, %s6883, %s6878
          %v6901 = vunpack.c.l.b16 %v6856
          %v6902 = vunpack.c.h.b16 %v6856
          %v6903 = vunpack.c.l.b16 %v6857
          %v6904 = vunpack.c.h.b16 %v6857
          %v6905 = vunpack.c.l.b16 %v6858
          %v6906 = vunpack.c.h.b16 %v6858
          %v6907 = vunpack.c.l.b16 %v6859
          %v6908 = vunpack.c.h.b16 %v6859
          %v6909 = vunpack.c.l.b16 %v6860
          %v6910 = vunpack.c.h.b16 %v6860
          %v6911 = vunpack.c.l.b16 %v6861
          %v6912 = vunpack.c.h.b16 %v6861
          %v6913 = vunpack.c.l.b16 %v6862
          %v6914 = vunpack.c.h.b16 %v6862
          %v6915 = vunpack.c.l.b16 %v6863
          %v6916 = vunpack.c.h.b16 %v6863
          %v6917 = vunpack.c.l.b16 %v6864
          %v6918 = vunpack.c.h.b16 %v6864
          %v6919 = vunpack.c.l.b16 %v6865
          %v6920 = vunpack.c.h.b16 %v6865
          %v6921 = vunpack.c.l.b16 %v6866
          %v6922 = vunpack.c.h.b16 %v6866
          %v6923 = vunpack.c.l.b16 %v6867
          %v6924 = vunpack.c.h.b16 %v6867
          %v6925 = vunpack.c.l.b16 %v6868
          %v6926 = vunpack.c.h.b16 %v6868
          %v6927 = vunpack.c.l.b16 %v6869
          %v6928 = vunpack.c.h.b16 %v6869
          %v6929 = vunpack.c.l.b16 %v6870
          %v6930 = vunpack.c.h.b16 %v6870
          %v6931 = vunpack.c.l.b16 %v6871
          %v6932 = vunpack.c.h.b16 %v6871
          %v6933 = vpack.c.b16 %v6901, %v6901
          %v6934 = vpack.c.b16 %v6902, %v6902
          %v6935 = vpack.c.b16 %v6903, %v6903
          %v6936 = vpack.c.b16 %v6904, %v6904
          %v6937 = vpack.c.b16 %v6905, %v6905
          %v6938 = vpack.c.b16 %v6906, %v6906
          %v6939 = vpack.c.b16 %v6907, %v6907
          %v6940 = vpack.c.b16 %v6908, %v6908
          %v6941 = vpack.c.b16 %v6909, %v6909
          %v6942 = vpack.c.b16 %v6910, %v6910
          %v6943 = vpack.c.b16 %v6911, %v6911
          %v6944 = vpack.c.b16 %v6912, %v6912
          %v6945 = vpack.c.b16 %v6913, %v6913
          %v6946 = vpack.c.b16 %v6914, %v6914
          %v6947 = vpack.c.b16 %v6915, %v6915
          %v6948 = vpack.c.b16 %v6916, %v6916
          %v6949 = vpack.c.b16 %v6917, %v6917
          %v6950 = vpack.c.b16 %v6918, %v6918
          %v6951 = vpack.c.b16 %v6919, %v6919
          %v6952 = vpack.c.b16 %v6920, %v6920
          %v6953 = vpack.c.b16 %v6921, %v6921
          %v6954 = vpack.c.b16 %v6922, %v6922
          %v6955 = vpack.c.b16 %v6923, %v6923
          %v6956 = vpack.c.b16 %v6924, %v6924
          %v6957 = vpack.c.b16 %v6925, %v6925
          %v6958 = vpack.c.b16 %v6926, %v6926
          %v6959 = vpack.c.b16 %v6927, %v6927
          %v6960 = vpack.c.b16 %v6928, %v6928
          %v6961 = vpack.c.b16 %v6929, %v6929
          %v6962 = vpack.c.b16 %v6930, %v6930
          %v6963 = vpack.c.b16 %v6931, %v6931
          %v6964 = vpack.c.b16 %v6932, %v6932
          %s6997 = smul.u32 %s6884, 32
          %s6998 = smul.addr %s6997, 4
          %s6999 = scalar_lea.vmem [#allocation3], %s6998
          %vm7000 = vcmask 519168
          %7001 = vst.msk [vmem:[%s6999] sm:$0xf] %vm7000, %v6933
          %7002 = vst.msk [vmem:[%s6999 + $0x4] sm:$0xf] %vm7000, %v6934
          %7003 = vst.msk [vmem:[%s6999 + $0x8] sm:$0xf] %vm7000, %v6935
          %7004 = vst.msk [vmem:[%s6999 + $0xc] sm:$0xf] %vm7000, %v6936
          %7005 = vst.msk [vmem:[%s6999 + $0x10] sm:$0xf] %vm7000, %v6937
          %7006 = vst.msk [vmem:[%s6999 + $0x14] sm:$0xf] %vm7000, %v6938
          %7007 = vst.msk [vmem:[%s6999 + $0x18] sm:$0xf] %vm7000, %v6939
          %7008 = vst.msk [vmem:[%s6999 + $0x1c] sm:$0xf] %vm7000, %v6940
          %7009 = vst.msk [vmem:[%s6999 + $0x20] sm:$0xf] %vm7000, %v6941
          %7010 = vst.msk [vmem:[%s6999 + $0x24] sm:$0xf] %vm7000, %v6942
          %7011 = vst.msk [vmem:[%s6999 + $0x28] sm:$0xf] %vm7000, %v6943
          %7012 = vst.msk [vmem:[%s6999 + $0x2c] sm:$0xf] %vm7000, %v6944
          %7013 = vst.msk [vmem:[%s6999 + $0x30] sm:$0xf] %vm7000, %v6945
          %7014 = vst.msk [vmem:[%s6999 + $0x34] sm:$0xf] %vm7000, %v6946
          %7015 = vst.msk [vmem:[%s6999 + $0x38] sm:$0xf] %vm7000, %v6947
          %7016 = vst.msk [vmem:[%s6999 + $0x3c] sm:$0xf] %vm7000, %v6948
          %7017 = vst.msk [vmem:[%s6999 + $0x40] sm:$0xf] %vm7000, %v6949
          %7018 = vst.msk [vmem:[%s6999 + $0x44] sm:$0xf] %vm7000, %v6950
          %7019 = vst.msk [vmem:[%s6999 + $0x48] sm:$0xf] %vm7000, %v6951
          %7020 = vst.msk [vmem:[%s6999 + $0x4c] sm:$0xf] %vm7000, %v6952
          %7021 = vst.msk [vmem:[%s6999 + $0x50] sm:$0xf] %vm7000, %v6953
          %7022 = vst.msk [vmem:[%s6999 + $0x54] sm:$0xf] %vm7000, %v6954
          %7023 = vst.msk [vmem:[%s6999 + $0x58] sm:$0xf] %vm7000, %v6955
          %7024 = vst.msk [vmem:[%s6999 + $0x5c] sm:$0xf] %vm7000, %v6956
          %7025 = vst.msk [vmem:[%s6999 + $0x60] sm:$0xf] %vm7000, %v6957
          %7026 = vst.msk [vmem:[%s6999 + $0x64] sm:$0xf] %vm7000, %v6958
          %7027 = vst.msk [vmem:[%s6999 + $0x68] sm:$0xf] %vm7000, %v6959
          %7028 = vst.msk [vmem:[%s6999 + $0x6c] sm:$0xf] %vm7000, %v6960
          %7029 = vst.msk [vmem:[%s6999 + $0x70] sm:$0xf] %vm7000, %v6961
          %7030 = vst.msk [vmem:[%s6999 + $0x74] sm:$0xf] %vm7000, %v6962
          %7031 = vst.msk [vmem:[%s6999 + $0x78] sm:$0xf] %vm7000, %v6963
          %7032 = vst.msk [vmem:[%s6999 + $0x7c] sm:$0xf] %vm7000, %v6964
        $region68: #{tpu_custom_call.1} parent=51 // pred_fallthru
          _
        %p7033 = scmp.eq.s32.totalorder %s38, 4
        // Predicated region
        $region69: #{tpu_custom_call.1} parent=51 // pred_check
          %p7034 = pneg %p7033
        $region70: #{tpu_custom_call.1} parent=51 // pred_check_branch
          %7036 = sbr.rel (%p7034) target = $region72
        $region71: #{tpu_custom_call.1} parent=51 // pred_region
          %s7037 = scalar_lea.vmem [#allocation3], 128
          %vm7038 = vcmask 519168
          %7039 = vst.msk [vmem:[%s7037] sm:$0xf] %vm7038, 0
          %7040 = vst.msk [vmem:[%s7037 + $0x4] sm:$0xf] %vm7038, 0
          %7041 = vst.msk [vmem:[%s7037 + $0x8] sm:$0xf] %vm7038, 0
          %7042 = vst.msk [vmem:[%s7037 + $0xc] sm:$0xf] %vm7038, 0
          %7043 = vst.msk [vmem:[%s7037 + $0x10] sm:$0xf] %vm7038, 0
          %7044 = vst.msk [vmem:[%s7037 + $0x14] sm:$0xf] %vm7038, 0
          %7045 = vst.msk [vmem:[%s7037 + $0x18] sm:$0xf] %vm7038, 0
          %7046 = vst.msk [vmem:[%s7037 + $0x1c] sm:$0xf] %vm7038, 0
          %7047 = vst.msk [vmem:[%s7037 + $0x20] sm:$0xf] %vm7038, 0
          %7048 = vst.msk [vmem:[%s7037 + $0x24] sm:$0xf] %vm7038, 0
          %7049 = vst.msk [vmem:[%s7037 + $0x28] sm:$0xf] %vm7038, 0
          %7050 = vst.msk [vmem:[%s7037 + $0x2c] sm:$0xf] %vm7038, 0
          %7051 = vst.msk [vmem:[%s7037 + $0x30] sm:$0xf] %vm7038, 0
          %7052 = vst.msk [vmem:[%s7037 + $0x34] sm:$0xf] %vm7038, 0
          %7053 = vst.msk [vmem:[%s7037 + $0x38] sm:$0xf] %vm7038, 0
          %7054 = vst.msk [vmem:[%s7037 + $0x3c] sm:$0xf] %vm7038, 0
          %7055 = vst.msk [vmem:[%s7037 + $0x40] sm:$0xf] %vm7038, 0
          %7056 = vst.msk [vmem:[%s7037 + $0x44] sm:$0xf] %vm7038, 0
          %7057 = vst.msk [vmem:[%s7037 + $0x48] sm:$0xf] %vm7038, 0
          %7058 = vst.msk [vmem:[%s7037 + $0x4c] sm:$0xf] %vm7038, 0
          %7059 = vst.msk [vmem:[%s7037 + $0x50] sm:$0xf] %vm7038, 0
          %7060 = vst.msk [vmem:[%s7037 + $0x54] sm:$0xf] %vm7038, 0
          %7061 = vst.msk [vmem:[%s7037 + $0x58] sm:$0xf] %vm7038, 0
          %7062 = vst.msk [vmem:[%s7037 + $0x5c] sm:$0xf] %vm7038, 0
          %7063 = vst.msk [vmem:[%s7037 + $0x60] sm:$0xf] %vm7038, 0
          %7064 = vst.msk [vmem:[%s7037 + $0x64] sm:$0xf] %vm7038, 0
          %7065 = vst.msk [vmem:[%s7037 + $0x68] sm:$0xf] %vm7038, 0
          %7066 = vst.msk [vmem:[%s7037 + $0x6c] sm:$0xf] %vm7038, 0
          %7067 = vst.msk [vmem:[%s7037 + $0x70] sm:$0xf] %vm7038, 0
          %7068 = vst.msk [vmem:[%s7037 + $0x74] sm:$0xf] %vm7038, 0
          %7069 = vst.msk [vmem:[%s7037 + $0x78] sm:$0xf] %vm7038, 0
          %7070 = vst.msk [vmem:[%s7037 + $0x7c] sm:$0xf] %vm7038, 0
        $region72: #{tpu_custom_call.1} parent=51 // pred_fallthru
          _
        %s7071 = ssub.s32 %s38, 1
        %p7072 = scmp.gt.s32.totalorder %s7071, 0
        %s7073 = scalar_select %p7072, %s7071, 0
        %s7074 = sadd.s32 %s38, 1
        %p7075 = scmp.lt.s32.totalorder %s7074, 0
        %s7076 = ssub.s32 0, %s7074
        %s7077 = scalar_select %p7075, %s7076, %s7074
        %s7078 = sdiv.u32.pop %s7077, 3
        %s7079 = srem.u32.pop %s7077, 3
        %s7080 = ssub.s32 0, %s7079
        %s7081 = scalar_select %p7075, %s7080, %s7079
        %p7082 = scmp.ne.s32.totalorder %s7081, 0
        %p7083 = scmp.lt.s32.totalorder %s7081, 0
        %p7084 = pnand %p7083, %p7082
        %p7085 = pneg %p7084
        %s7086 = sadd.s32 %s7081, 3
        %s7087 = scalar_select %p7085, %s7086, %s7081
        %s7088 = smul.u32 %s7087, 32
        %s7089 = smul.addr %s7088, 4
        %s7090 = scalar_lea.vmem [#allocation3], %s7089
        %v7091 = vld [vmem:[%s7090] sm:$0xf]
        %v7092 = vld [vmem:[%s7090 + $0x4] sm:$0xf]
        %v7093 = vld [vmem:[%s7090 + $0x8] sm:$0xf]
        %v7094 = vld [vmem:[%s7090 + $0xc] sm:$0xf]
        %v7095 = vld [vmem:[%s7090 + $0x10] sm:$0xf]
        %v7096 = vld [vmem:[%s7090 + $0x14] sm:$0xf]
        %v7097 = vld [vmem:[%s7090 + $0x18] sm:$0xf]
        %v7098 = vld [vmem:[%s7090 + $0x1c] sm:$0xf]
        %v7099 = vld [vmem:[%s7090 + $0x20] sm:$0xf]
        %v7100 = vld [vmem:[%s7090 + $0x24] sm:$0xf]
        %v7101 = vld [vmem:[%s7090 + $0x28] sm:$0xf]
        %v7102 = vld [vmem:[%s7090 + $0x2c] sm:$0xf]
        %v7103 = vld [vmem:[%s7090 + $0x30] sm:$0xf]
        %v7104 = vld [vmem:[%s7090 + $0x34] sm:$0xf]
        %v7105 = vld [vmem:[%s7090 + $0x38] sm:$0xf]
        %v7106 = vld [vmem:[%s7090 + $0x3c] sm:$0xf]
        %v7107 = vld [vmem:[%s7090 + $0x40] sm:$0xf]
        %v7108 = vld [vmem:[%s7090 + $0x44] sm:$0xf]
        %v7109 = vld [vmem:[%s7090 + $0x48] sm:$0xf]
        %v7110 = vld [vmem:[%s7090 + $0x4c] sm:$0xf]
        %v7111 = vld [vmem:[%s7090 + $0x50] sm:$0xf]
        %v7112 = vld [vmem:[%s7090 + $0x54] sm:$0xf]
        %v7113 = vld [vmem:[%s7090 + $0x58] sm:$0xf]
        %v7114 = vld [vmem:[%s7090 + $0x5c] sm:$0xf]
        %v7115 = vld [vmem:[%s7090 + $0x60] sm:$0xf]
        %v7116 = vld [vmem:[%s7090 + $0x64] sm:$0xf]
        %v7117 = vld [vmem:[%s7090 + $0x68] sm:$0xf]
        %v7118 = vld [vmem:[%s7090 + $0x6c] sm:$0xf]
        %v7119 = vld [vmem:[%s7090 + $0x70] sm:$0xf]
        %v7120 = vld [vmem:[%s7090 + $0x74] sm:$0xf]
        %v7121 = vld [vmem:[%s7090 + $0x78] sm:$0xf]
        %v7122 = vld [vmem:[%s7090 + $0x7c] sm:$0xf]
        %s7123 = sadd.s32 %s38, 2
        %p7124 = scmp.lt.s32.totalorder %s7123, 0
        %s7125 = ssub.s32 0, %s7123
        %s7126 = scalar_select %p7124, %s7125, %s7123
        %s7127 = sdiv.u32.pop %s7126, 3
        %s7128 = srem.u32.pop %s7126, 3
        %s7129 = ssub.s32 0, %s7128
        %s7130 = scalar_select %p7124, %s7129, %s7128
        %p7131 = scmp.ne.s32.totalorder %s7130, 0
        %p7132 = scmp.lt.s32.totalorder %s7130, 0
        %p7133 = pnand %p7132, %p7131
        %p7134 = pneg %p7133
        %s7135 = sadd.s32 %s7130, 3
        %s7136 = scalar_select %p7134, %s7135, %s7130
        %s7137 = smul.u32 %s7136, 32
        %s7138 = smul.addr %s7137, 4
        %s7139 = scalar_lea.vmem [#allocation3], %s7138
        %v7140 = vld [vmem:[%s7139] sm:$0xf]
        %v7141 = vld [vmem:[%s7139 + $0x4] sm:$0xf]
        %v7142 = vld [vmem:[%s7139 + $0x8] sm:$0xf]
        %v7143 = vld [vmem:[%s7139 + $0xc] sm:$0xf]
        %v7144 = vld [vmem:[%s7139 + $0x10] sm:$0xf]
        %v7145 = vld [vmem:[%s7139 + $0x14] sm:$0xf]
        %v7146 = vld [vmem:[%s7139 + $0x18] sm:$0xf]
        %v7147 = vld [vmem:[%s7139 + $0x1c] sm:$0xf]
        %v7148 = vld [vmem:[%s7139 + $0x20] sm:$0xf]
        %v7149 = vld [vmem:[%s7139 + $0x24] sm:$0xf]
        %v7150 = vld [vmem:[%s7139 + $0x28] sm:$0xf]
        %v7151 = vld [vmem:[%s7139 + $0x2c] sm:$0xf]
        %v7152 = vld [vmem:[%s7139 + $0x30] sm:$0xf]
        %v7153 = vld [vmem:[%s7139 + $0x34] sm:$0xf]
        %v7154 = vld [vmem:[%s7139 + $0x38] sm:$0xf]
        %v7155 = vld [vmem:[%s7139 + $0x3c] sm:$0xf]
        %v7156 = vld [vmem:[%s7139 + $0x40] sm:$0xf]
        %v7157 = vld [vmem:[%s7139 + $0x44] sm:$0xf]
        %v7158 = vld [vmem:[%s7139 + $0x48] sm:$0xf]
        %v7159 = vld [vmem:[%s7139 + $0x4c] sm:$0xf]
        %v7160 = vld [vmem:[%s7139 + $0x50] sm:$0xf]
        %v7161 = vld [vmem:[%s7139 + $0x54] sm:$0xf]
        %v7162 = vld [vmem:[%s7139 + $0x58] sm:$0xf]
        %v7163 = vld [vmem:[%s7139 + $0x5c] sm:$0xf]
        %v7164 = vld [vmem:[%s7139 + $0x60] sm:$0xf]
        %v7165 = vld [vmem:[%s7139 + $0x64] sm:$0xf]
        %v7166 = vld [vmem:[%s7139 + $0x68] sm:$0xf]
        %v7167 = vld [vmem:[%s7139 + $0x6c] sm:$0xf]
        %v7168 = vld [vmem:[%s7139 + $0x70] sm:$0xf]
        %v7169 = vld [vmem:[%s7139 + $0x74] sm:$0xf]
        %v7170 = vld [vmem:[%s7139 + $0x78] sm:$0xf]
        %v7171 = vld [vmem:[%s7139 + $0x7c] sm:$0xf]
        %p7172 = scmp.lt.s32.totalorder %s38, 0
        %s7173 = ssub.s32 0, %s38
        %s7174 = scalar_select %p7172, %s7173, %s38
        %s7175 = sdiv.u32.pop %s7174, 3
        %s7176 = srem.u32.pop %s7174, 3
        %s7177 = ssub.s32 0, %s7176
        %s7178 = scalar_select %p7172, %s7177, %s7176
        %p7179 = scmp.ne.s32.totalorder %s7178, 0
        %p7180 = scmp.lt.s32.totalorder %s7178, 0
        %p7181 = pnand %p7180, %p7179
        %p7182 = pneg %p7181
        %s7183 = sadd.s32 %s7178, 3
        %s7184 = scalar_select %p7182, %s7183, %s7178
        %s7185 = smul.u32 %s7184, 32
        %s7186 = smul.addr %s7185, 4
        %s7187 = scalar_lea.vmem [#allocation3], %s7186
        %v7188 = vld [vmem:[%s7187] sm:$0xf]
        %v7189 = vld [vmem:[%s7187 + $0x4] sm:$0xf]
        %v7190 = vld [vmem:[%s7187 + $0x8] sm:$0xf]
        %v7191 = vld [vmem:[%s7187 + $0xc] sm:$0xf]
        %v7192 = vld [vmem:[%s7187 + $0x10] sm:$0xf]
        %v7193 = vld [vmem:[%s7187 + $0x14] sm:$0xf]
        %v7194 = vld [vmem:[%s7187 + $0x18] sm:$0xf]
        %v7195 = vld [vmem:[%s7187 + $0x1c] sm:$0xf]
        %v7196 = vld [vmem:[%s7187 + $0x20] sm:$0xf]
        %v7197 = vld [vmem:[%s7187 + $0x24] sm:$0xf]
        %v7198 = vld [vmem:[%s7187 + $0x28] sm:$0xf]
        %v7199 = vld [vmem:[%s7187 + $0x2c] sm:$0xf]
        %v7200 = vld [vmem:[%s7187 + $0x30] sm:$0xf]
        %v7201 = vld [vmem:[%s7187 + $0x34] sm:$0xf]
        %v7202 = vld [vmem:[%s7187 + $0x38] sm:$0xf]
        %v7203 = vld [vmem:[%s7187 + $0x3c] sm:$0xf]
        %v7204 = vld [vmem:[%s7187 + $0x40] sm:$0xf]
        %v7205 = vld [vmem:[%s7187 + $0x44] sm:$0xf]
        %v7206 = vld [vmem:[%s7187 + $0x48] sm:$0xf]
        %v7207 = vld [vmem:[%s7187 + $0x4c] sm:$0xf]
        %v7208 = vld [vmem:[%s7187 + $0x50] sm:$0xf]
        %v7209 = vld [vmem:[%s7187 + $0x54] sm:$0xf]
        %v7210 = vld [vmem:[%s7187 + $0x58] sm:$0xf]
        %v7211 = vld [vmem:[%s7187 + $0x5c] sm:$0xf]
        %v7212 = vld [vmem:[%s7187 + $0x60] sm:$0xf]
        %v7213 = vld [vmem:[%s7187 + $0x64] sm:$0xf]
        %v7214 = vld [vmem:[%s7187 + $0x68] sm:$0xf]
        %v7215 = vld [vmem:[%s7187 + $0x6c] sm:$0xf]
        %v7216 = vld [vmem:[%s7187 + $0x70] sm:$0xf]
        %v7217 = vld [vmem:[%s7187 + $0x74] sm:$0xf]
        %v7218 = vld [vmem:[%s7187 + $0x78] sm:$0xf]
        %v7219 = vld [vmem:[%s7187 + $0x7c] sm:$0xf]
        %v7252 = vunpack.c.l.b16 %v7091
        %v7253 = vunpack.c.l.b16 %v7092
        %v7254 = vunpack.c.l.b16 %v7093
        %v7255 = vunpack.c.l.b16 %v7094
        %v7256 = vunpack.c.l.b16 %v7095
        %v7257 = vunpack.c.l.b16 %v7096
        %v7258 = vunpack.c.l.b16 %v7097
        %v7259 = vunpack.c.l.b16 %v7098
        %v7260 = vunpack.c.l.b16 %v7099
        %v7261 = vunpack.c.l.b16 %v7100
        %v7262 = vunpack.c.l.b16 %v7101
        %v7263 = vunpack.c.l.b16 %v7102
        %v7264 = vunpack.c.l.b16 %v7103
        %v7265 = vunpack.c.l.b16 %v7104
        %v7266 = vunpack.c.l.b16 %v7105
        %v7267 = vunpack.c.l.b16 %v7106
        %v7268 = vunpack.c.l.b16 %v7107
        %v7269 = vunpack.c.l.b16 %v7108
        %v7270 = vunpack.c.l.b16 %v7109
        %v7271 = vunpack.c.l.b16 %v7110
        %v7272 = vunpack.c.l.b16 %v7111
        %v7273 = vunpack.c.l.b16 %v7112
        %v7274 = vunpack.c.l.b16 %v7113
        %v7275 = vunpack.c.l.b16 %v7114
        %v7276 = vunpack.c.l.b16 %v7115
        %v7277 = vunpack.c.l.b16 %v7116
        %v7278 = vunpack.c.l.b16 %v7117
        %v7279 = vunpack.c.l.b16 %v7118
        %v7280 = vunpack.c.l.b16 %v7119
        %v7281 = vunpack.c.l.b16 %v7120
        %v7282 = vunpack.c.l.b16 %v7121
        %v7283 = vunpack.c.l.b16 %v7122
        %v7284 = vpack.c.b16 %v7253, %v7252
        %v7285 = vpack.c.b16 %v7255, %v7254
        %v7286 = vpack.c.b16 %v7257, %v7256
        %v7287 = vpack.c.b16 %v7259, %v7258
        %v7288 = vpack.c.b16 %v7261, %v7260
        %v7289 = vpack.c.b16 %v7263, %v7262
        %v7290 = vpack.c.b16 %v7265, %v7264
        %v7291 = vpack.c.b16 %v7267, %v7266
        %v7292 = vpack.c.b16 %v7269, %v7268
        %v7293 = vpack.c.b16 %v7271, %v7270
        %v7294 = vpack.c.b16 %v7273, %v7272
        %v7295 = vpack.c.b16 %v7275, %v7274
        %v7296 = vpack.c.b16 %v7277, %v7276
        %v7297 = vpack.c.b16 %v7279, %v7278
        %v7298 = vpack.c.b16 %v7281, %v7280
        %v7299 = vpack.c.b16 %v7283, %v7282
        %v7332 = vunpack.c.l.b16 %v7140
        %v7333 = vunpack.c.l.b16 %v7141
        %v7334 = vunpack.c.l.b16 %v7142
        %v7335 = vunpack.c.l.b16 %v7143
        %v7336 = vunpack.c.l.b16 %v7144
        %v7337 = vunpack.c.l.b16 %v7145
        %v7338 = vunpack.c.l.b16 %v7146
        %v7339 = vunpack.c.l.b16 %v7147
        %v7340 = vunpack.c.l.b16 %v7148
        %v7341 = vunpack.c.l.b16 %v7149
        %v7342 = vunpack.c.l.b16 %v7150
        %v7343 = vunpack.c.l.b16 %v7151
        %v7344 = vunpack.c.l.b16 %v7152
        %v7345 = vunpack.c.l.b16 %v7153
        %v7346 = vunpack.c.l.b16 %v7154
        %v7347 = vunpack.c.l.b16 %v7155
        %v7348 = vunpack.c.l.b16 %v7156
        %v7349 = vunpack.c.l.b16 %v7157
        %v7350 = vunpack.c.l.b16 %v7158
        %v7351 = vunpack.c.l.b16 %v7159
        %v7352 = vunpack.c.l.b16 %v7160
        %v7353 = vunpack.c.l.b16 %v7161
        %v7354 = vunpack.c.l.b16 %v7162
        %v7355 = vunpack.c.l.b16 %v7163
        %v7356 = vunpack.c.l.b16 %v7164
        %v7357 = vunpack.c.l.b16 %v7165
        %v7358 = vunpack.c.l.b16 %v7166
        %v7359 = vunpack.c.l.b16 %v7167
        %v7360 = vunpack.c.l.b16 %v7168
        %v7361 = vunpack.c.l.b16 %v7169
        %v7362 = vunpack.c.l.b16 %v7170
        %v7363 = vunpack.c.l.b16 %v7171
        %v7364 = vpack.c.b16 %v7333, %v7332
        %v7365 = vpack.c.b16 %v7335, %v7334
        %v7366 = vpack.c.b16 %v7337, %v7336
        %v7367 = vpack.c.b16 %v7339, %v7338
        %v7368 = vpack.c.b16 %v7341, %v7340
        %v7369 = vpack.c.b16 %v7343, %v7342
        %v7370 = vpack.c.b16 %v7345, %v7344
        %v7371 = vpack.c.b16 %v7347, %v7346
        %v7372 = vpack.c.b16 %v7349, %v7348
        %v7373 = vpack.c.b16 %v7351, %v7350
        %v7374 = vpack.c.b16 %v7353, %v7352
        %v7375 = vpack.c.b16 %v7355, %v7354
        %v7376 = vpack.c.b16 %v7357, %v7356
        %v7377 = vpack.c.b16 %v7359, %v7358
        %v7378 = vpack.c.b16 %v7361, %v7360
        %v7379 = vpack.c.b16 %v7363, %v7362
        %7380 = vrot.lane.b32.xlu0 %v7364, 64
        %v7381 = vpop.permute.xlu0 %7380
        %7382 = vrot.lane.b32.xlu0 %v7365, 64
        %v7383 = vpop.permute.xlu0 %7382
        %7384 = vrot.lane.b32.xlu0 %v7366, 64
        %v7385 = vpop.permute.xlu0 %7384
        %7386 = vrot.lane.b32.xlu0 %v7367, 64
        %v7387 = vpop.permute.xlu0 %7386
        %7388 = vrot.lane.b32.xlu0 %v7368, 64
        %v7389 = vpop.permute.xlu0 %7388
        %7390 = vrot.lane.b32.xlu0 %v7369, 64
        %v7391 = vpop.permute.xlu0 %7390
        %7392 = vrot.lane.b32.xlu0 %v7370, 64
        %v7393 = vpop.permute.xlu0 %7392
        %7394 = vrot.lane.b32.xlu0 %v7371, 64
        %v7395 = vpop.permute.xlu0 %7394
        %7396 = vrot.lane.b32.xlu0 %v7372, 64
        %v7397 = vpop.permute.xlu0 %7396
        %7398 = vrot.lane.b32.xlu0 %v7373, 64
        %v7399 = vpop.permute.xlu0 %7398
        %7400 = vrot.lane.b32.xlu0 %v7374, 64
        %v7401 = vpop.permute.xlu0 %7400
        %7402 = vrot.lane.b32.xlu0 %v7375, 64
        %v7403 = vpop.permute.xlu0 %7402
        %7404 = vrot.lane.b32.xlu0 %v7376, 64
        %v7405 = vpop.permute.xlu0 %7404
        %7406 = vrot.lane.b32.xlu0 %v7377, 64
        %v7407 = vpop.permute.xlu0 %7406
        %7408 = vrot.lane.b32.xlu0 %v7378, 64
        %v7409 = vpop.permute.xlu0 %7408
        %7410 = vrot.lane.b32.xlu0 %v7379, 64
        %v7411 = vpop.permute.xlu0 %7410
        %v7444 = vunpack.c.l.b16 %v7188
        %v7445 = vunpack.c.l.b16 %v7189
        %v7446 = vunpack.c.l.b16 %v7190
        %v7447 = vunpack.c.l.b16 %v7191
        %v7448 = vunpack.c.l.b16 %v7192
        %v7449 = vunpack.c.l.b16 %v7193
        %v7450 = vunpack.c.l.b16 %v7194
        %v7451 = vunpack.c.l.b16 %v7195
        %v7452 = vunpack.c.l.b16 %v7196
        %v7453 = vunpack.c.l.b16 %v7197
        %v7454 = vunpack.c.l.b16 %v7198
        %v7455 = vunpack.c.l.b16 %v7199
        %v7456 = vunpack.c.l.b16 %v7200
        %v7457 = vunpack.c.l.b16 %v7201
        %v7458 = vunpack.c.l.b16 %v7202
        %v7459 = vunpack.c.l.b16 %v7203
        %v7460 = vunpack.c.l.b16 %v7204
        %v7461 = vunpack.c.l.b16 %v7205
        %v7462 = vunpack.c.l.b16 %v7206
        %v7463 = vunpack.c.l.b16 %v7207
        %v7464 = vunpack.c.l.b16 %v7208
        %v7465 = vunpack.c.l.b16 %v7209
        %v7466 = vunpack.c.l.b16 %v7210
        %v7467 = vunpack.c.l.b16 %v7211
        %v7468 = vunpack.c.l.b16 %v7212
        %v7469 = vunpack.c.l.b16 %v7213
        %v7470 = vunpack.c.l.b16 %v7214
        %v7471 = vunpack.c.l.b16 %v7215
        %v7472 = vunpack.c.l.b16 %v7216
        %v7473 = vunpack.c.l.b16 %v7217
        %v7474 = vunpack.c.l.b16 %v7218
        %v7475 = vunpack.c.l.b16 %v7219
        %v7476 = vpack.c.b16 %v7445, %v7444
        %v7477 = vpack.c.b16 %v7447, %v7446
        %v7478 = vpack.c.b16 %v7449, %v7448
        %v7479 = vpack.c.b16 %v7451, %v7450
        %v7480 = vpack.c.b16 %v7453, %v7452
        %v7481 = vpack.c.b16 %v7455, %v7454
        %v7482 = vpack.c.b16 %v7457, %v7456
        %v7483 = vpack.c.b16 %v7459, %v7458
        %v7484 = vpack.c.b16 %v7461, %v7460
        %v7485 = vpack.c.b16 %v7463, %v7462
        %v7486 = vpack.c.b16 %v7465, %v7464
        %v7487 = vpack.c.b16 %v7467, %v7466
        %v7488 = vpack.c.b16 %v7469, %v7468
        %v7489 = vpack.c.b16 %v7471, %v7470
        %v7490 = vpack.c.b16 %v7473, %v7472
        %v7491 = vpack.c.b16 %v7475, %v7474
        %vm7492 = vcmask 523264
        %v7495 = vsel %vm7492, %v7284, %v7381
        %v7499 = vsel %vm7492, %v7285, %v7383
        %v7503 = vsel %vm7492, %v7286, %v7385
        %v7507 = vsel %vm7492, %v7287, %v7387
        %v7511 = vsel %vm7492, %v7288, %v7389
        %v7515 = vsel %vm7492, %v7289, %v7391
        %v7519 = vsel %vm7492, %v7290, %v7393
        %v7523 = vsel %vm7492, %v7291, %v7395
        %v7527 = vsel %vm7492, %v7292, %v7397
        %v7531 = vsel %vm7492, %v7293, %v7399
        %v7535 = vsel %vm7492, %v7294, %v7401
        %v7539 = vsel %vm7492, %v7295, %v7403
        %v7543 = vsel %vm7492, %v7296, %v7405
        %v7547 = vsel %vm7492, %v7297, %v7407
        %v7551 = vsel %vm7492, %v7298, %v7409
        %v7555 = vsel %vm7492, %v7299, %v7411
        %v7557 = vld [vmem:[%s7] sm:$0xf]
        %v7558 = vld [vmem:[%s7 + $0x4] sm:$0xf]
        %v7559 = vld [vmem:[%s7 + $0x8] sm:$0xf]
        %v7560 = vld [vmem:[%s7 + $0xc] sm:$0xf]
        %v7561 = vld [vmem:[%s7 + $0x10] sm:$0xf]
        %v7562 = vld [vmem:[%s7 + $0x14] sm:$0xf]
        %v7563 = vld [vmem:[%s7 + $0x18] sm:$0xf]
        %v7564 = vld [vmem:[%s7 + $0x1c] sm:$0xf]
        %v7565 = vld [vmem:[%s7 + $0x20] sm:$0xf]
        %v7566 = vld [vmem:[%s7 + $0x24] sm:$0xf]
        %v7567 = vld [vmem:[%s7 + $0x28] sm:$0xf]
        %v7568 = vld [vmem:[%s7 + $0x2c] sm:$0xf]
        %v7569 = vld [vmem:[%s7 + $0x30] sm:$0xf]
        %v7570 = vld [vmem:[%s7 + $0x34] sm:$0xf]
        %v7571 = vld [vmem:[%s7 + $0x38] sm:$0xf]
        %v7572 = vld [vmem:[%s7 + $0x3c] sm:$0xf]
        %v7573 = vld [vmem:[%s7 + $0x40] sm:$0xf]
        %v7574 = vld [vmem:[%s7 + $0x44] sm:$0xf]
        %v7575 = vld [vmem:[%s7 + $0x48] sm:$0xf]
        %v7576 = vld [vmem:[%s7 + $0x4c] sm:$0xf]
        %v7577 = vld [vmem:[%s7 + $0x50] sm:$0xf]
        %v7578 = vld [vmem:[%s7 + $0x54] sm:$0xf]
        %v7579 = vld [vmem:[%s7 + $0x58] sm:$0xf]
        %v7580 = vld [vmem:[%s7 + $0x5c] sm:$0xf]
        %v7581 = vld [vmem:[%s8] sm:$0x1]
        %v7583 = vlaneseq
        %v7584 = vshrl.u32 %v7583, 7
        %v7585 = vsub.s32 0, %v7584
        %v7586 = vrot.slane %v7581, %v7585
        %v7612 = vunpack.c.l.b16 %v7557
        %v7613 = vunpack.c.l.b16 %v7558
        %v7614 = vunpack.c.l.b16 %v7559
        %v7615 = vunpack.c.l.b16 %v7560
        %v7616 = vunpack.c.l.b16 %v7561
        %v7617 = vunpack.c.l.b16 %v7562
        %v7618 = vunpack.c.l.b16 %v7563
        %v7619 = vunpack.c.l.b16 %v7564
        %v7620 = vunpack.c.l.b16 %v7565
        %v7621 = vunpack.c.l.b16 %v7566
        %v7622 = vunpack.c.l.b16 %v7567
        %v7623 = vunpack.c.l.b16 %v7568
        %v7624 = vunpack.c.l.b16 %v7569
        %v7625 = vunpack.c.l.b16 %v7570
        %v7626 = vunpack.c.l.b16 %v7571
        %v7627 = vunpack.c.l.b16 %v7572
        %v7628 = vunpack.c.l.b16 %v7573
        %v7629 = vunpack.c.l.b16 %v7574
        %v7630 = vunpack.c.l.b16 %v7575
        %v7631 = vunpack.c.l.b16 %v7576
        %v7632 = vunpack.c.l.b16 %v7577
        %v7633 = vunpack.c.l.b16 %v7578
        %v7634 = vunpack.c.l.b16 %v7579
        %v7635 = vunpack.c.l.b16 %v7580
        %v7636 = vpack.c.b16 %v7613, %v7612
        %v7637 = vpack.c.b16 %v7615, %v7614
        %v7638 = vpack.c.b16 %v7617, %v7616
        %v7639 = vpack.c.b16 %v7619, %v7618
        %v7640 = vpack.c.b16 %v7621, %v7620
        %v7641 = vpack.c.b16 %v7623, %v7622
        %v7642 = vpack.c.b16 %v7625, %v7624
        %v7643 = vpack.c.b16 %v7627, %v7626
        %v7644 = vpack.c.b16 %v7629, %v7628
        %v7645 = vpack.c.b16 %v7631, %v7630
        %v7646 = vpack.c.b16 %v7633, %v7632
        %v7647 = vpack.c.b16 %v7635, %v7634
        %v7661 = vsel %vm7492, %v7476, 0
        %v7664 = vsel %vm7492, %v7477, 0
        %v7667 = vsel %vm7492, %v7478, 0
        %v7670 = vsel %vm7492, %v7479, 0
        %v7673 = vsel %vm7492, %v7480, 0
        %v7676 = vsel %vm7492, %v7481, 0
        %v7679 = vsel %vm7492, %v7482, 0
        %v7682 = vsel %vm7492, %v7483, 0
        %v7685 = vsel %vm7492, %v7484, 0
        %v7688 = vsel %vm7492, %v7485, 0
        %v7691 = vsel %vm7492, %v7486, 0
        %v7694 = vsel %vm7492, %v7487, 0
        %v7697 = vsel %vm7492, %v7488, 0
        %v7700 = vsel %vm7492, %v7489, 0
        %v7703 = vsel %vm7492, %v7490, 0
        %v7706 = vsel %vm7492, %v7491, 0
        %7708 = vmatprep.subr.bf16.mxu0 0
        %7709 = vmatpush1.bf16.msra.mxu0 %v7643
        %7710 = vmatprep.subr.bf16.mxu0 0
        %7711 = vmatpush1.bf16.msra.mxu0 %v7642
        %7712 = vmatprep.subr.bf16.mxu0 0
        %7713 = vmatpush1.bf16.msra.mxu0 %v7641
        %7714 = vmatprep.subr.bf16.mxu0 0
        %7715 = vmatpush1.bf16.msra.mxu0 %v7640
        %7716 = vmatprep.subr.bf16.mxu0 0
        %7717 = vmatpush1.bf16.msra.mxu0 %v7639
        %7718 = vmatprep.subr.bf16.mxu0 0
        %7719 = vmatpush1.bf16.msra.mxu0 %v7638
        %7720 = vmatprep.subr.bf16.mxu0 0
        %7721 = vmatpush1.bf16.msra.mxu0 %v7637
        %7722 = vmatprep.subr.bf16.mxu0 0
        %7723 = vmatpush1.bf16.msra.mxu0 %v7636
        %7724 = vmatprep.subr.bf16.mxu0 0
        %7725 = vmatpush2.bf16.msra.mxu0 0
        %7726 = vmatprep.subr.bf16.mxu0 0
        %7727 = vmatpush2.bf16.msra.mxu0 0
        %7728 = vmatprep.subr.bf16.mxu0 0
        %7729 = vmatpush2.bf16.msra.mxu0 0
        %7730 = vmatprep.subr.bf16.mxu0 0
        %7731 = vmatpush2.bf16.msra.mxu0 0
        %7732 = vmatprep.subr.bf16.mxu0 0
        %7733 = vmatpush2.bf16.msra.mxu0 %v7647
        %7734 = vmatprep.subr.bf16.mxu0 0
        %7735 = vmatpush2.bf16.msra.mxu0 %v7646
        %7736 = vmatprep.subr.bf16.mxu0 0
        %7737 = vmatpush2.bf16.msra.mxu0 %v7645
        %7738 = vmatprep.subr.bf16.mxu0 0
        %7739 = vmatpush2.bf16.msra.mxu0 %v7644
        %7740 = vmatprep.mubr.bf16.mxu0 %v7661
        %7741 = vmatmul.mubr.bf16.gmra.mxu0 %v7495
        %v7742 = vpop.f32.mrf.mxu0
        %v7743 = vadd.f32 %v7586, %v7742
        %v7744 = vpop.f32.mrf.mxu0
        %v7745 = vpop.f32.mrf.mxu0
        %v7746 = vadd.f32 %v7586, %v7745
        %v7747 = vpop.f32.mrf.mxu0
        %7748 = vmatprep.mubr.bf16.mxu0 %v7664
        %7749 = vmatmul.mubr.bf16.gmra.mxu0 %v7499
        %v7750 = vpop.f32.mrf.mxu0
        %v7751 = vadd.f32 %v7586, %v7750
        %v7752 = vpop.f32.mrf.mxu0
        %v7753 = vpop.f32.mrf.mxu0
        %v7754 = vadd.f32 %v7586, %v7753
        %v7755 = vpop.f32.mrf.mxu0
        %7756 = vmatprep.mubr.bf16.mxu0 %v7667
        %7757 = vmatmul.mubr.bf16.gmra.mxu0 %v7503
        %v7758 = vpop.f32.mrf.mxu0
        %v7759 = vadd.f32 %v7586, %v7758
        %v7760 = vpop.f32.mrf.mxu0
        %v7761 = vpop.f32.mrf.mxu0
        %v7762 = vadd.f32 %v7586, %v7761
        %v7763 = vpop.f32.mrf.mxu0
        %7764 = vmatprep.mubr.bf16.mxu0 %v7670
        %7765 = vmatmul.mubr.bf16.gmra.mxu0 %v7507
        %v7766 = vpop.f32.mrf.mxu0
        %v7767 = vadd.f32 %v7586, %v7766
        %v7768 = vpop.f32.mrf.mxu0
        %v7769 = vpop.f32.mrf.mxu0
        %v7770 = vadd.f32 %v7586, %v7769
        %v7771 = vpop.f32.mrf.mxu0
        %7772 = vmatprep.mubr.bf16.mxu0 %v7673
        %7773 = vmatmul.mubr.bf16.gmra.mxu0 %v7511
        %v7774 = vpop.f32.mrf.mxu0
        %v7775 = vadd.f32 %v7586, %v7774
        %v7776 = vpop.f32.mrf.mxu0
        %v7777 = vpop.f32.mrf.mxu0
        %v7778 = vadd.f32 %v7586, %v7777
        %v7779 = vpop.f32.mrf.mxu0
        %7780 = vmatprep.mubr.bf16.mxu0 %v7676
        %7781 = vmatmul.mubr.bf16.gmra.mxu0 %v7515
        %v7782 = vpop.f32.mrf.mxu0
        %v7783 = vadd.f32 %v7586, %v7782
        %v7784 = vpop.f32.mrf.mxu0
        %v7785 = vpop.f32.mrf.mxu0
        %v7786 = vadd.f32 %v7586, %v7785
        %v7787 = vpop.f32.mrf.mxu0
        %7788 = vmatprep.mubr.bf16.mxu0 %v7679
        %7789 = vmatmul.mubr.bf16.gmra.mxu0 %v7519
        %v7790 = vpop.f32.mrf.mxu0
        %v7791 = vadd.f32 %v7586, %v7790
        %v7792 = vpop.f32.mrf.mxu0
        %v7793 = vpop.f32.mrf.mxu0
        %v7794 = vadd.f32 %v7586, %v7793
        %v7795 = vpop.f32.mrf.mxu0
        %7796 = vmatprep.mubr.bf16.mxu0 %v7682
        %7797 = vmatmul.mubr.bf16.gmra.mxu0 %v7523
        %v7798 = vpop.f32.mrf.mxu0
        %v7799 = vadd.f32 %v7586, %v7798
        %v7800 = vpop.f32.mrf.mxu0
        %v7801 = vpop.f32.mrf.mxu0
        %v7802 = vadd.f32 %v7586, %v7801
        %v7803 = vpop.f32.mrf.mxu0
        %7804 = vmatprep.mubr.bf16.mxu0 %v7685
        %7805 = vmatmul.mubr.bf16.gmra.mxu0 %v7527
        %v7806 = vpop.f32.mrf.mxu0
        %v7807 = vadd.f32 %v7586, %v7806
        %v7808 = vpop.f32.mrf.mxu0
        %v7809 = vpop.f32.mrf.mxu0
        %v7810 = vadd.f32 %v7586, %v7809
        %v7811 = vpop.f32.mrf.mxu0
        %7812 = vmatprep.mubr.bf16.mxu0 %v7688
        %7813 = vmatmul.mubr.bf16.gmra.mxu0 %v7531
        %v7814 = vpop.f32.mrf.mxu0
        %v7815 = vadd.f32 %v7586, %v7814
        %v7816 = vpop.f32.mrf.mxu0
        %v7817 = vpop.f32.mrf.mxu0
        %v7818 = vadd.f32 %v7586, %v7817
        %v7819 = vpop.f32.mrf.mxu0
        %7820 = vmatprep.mubr.bf16.mxu0 %v7691
        %7821 = vmatmul.mubr.bf16.gmra.mxu0 %v7535
        %v7822 = vpop.f32.mrf.mxu0
        %v7823 = vadd.f32 %v7586, %v7822
        %v7824 = vpop.f32.mrf.mxu0
        %v7825 = vpop.f32.mrf.mxu0
        %v7826 = vadd.f32 %v7586, %v7825
        %v7827 = vpop.f32.mrf.mxu0
        %7828 = vmatprep.mubr.bf16.mxu0 %v7694
        %7829 = vmatmul.mubr.bf16.gmra.mxu0 %v7539
        %v7830 = vpop.f32.mrf.mxu0
        %v7831 = vadd.f32 %v7586, %v7830
        %v7832 = vpop.f32.mrf.mxu0
        %v7833 = vpop.f32.mrf.mxu0
        %v7834 = vadd.f32 %v7586, %v7833
        %v7835 = vpop.f32.mrf.mxu0
        %7836 = vmatprep.mubr.bf16.mxu0 %v7697
        %7837 = vmatmul.mubr.bf16.gmra.mxu0 %v7543
        %v7838 = vpop.f32.mrf.mxu0
        %v7839 = vadd.f32 %v7586, %v7838
        %v7840 = vpop.f32.mrf.mxu0
        %v7841 = vpop.f32.mrf.mxu0
        %v7842 = vadd.f32 %v7586, %v7841
        %v7843 = vpop.f32.mrf.mxu0
        %7844 = vmatprep.mubr.bf16.mxu0 %v7700
        %7845 = vmatmul.mubr.bf16.gmra.mxu0 %v7547
        %v7846 = vpop.f32.mrf.mxu0
        %v7847 = vadd.f32 %v7586, %v7846
        %v7848 = vpop.f32.mrf.mxu0
        %v7849 = vpop.f32.mrf.mxu0
        %v7850 = vadd.f32 %v7586, %v7849
        %v7851 = vpop.f32.mrf.mxu0
        %7852 = vmatprep.mubr.bf16.mxu0 %v7703
        %7853 = vmatmul.mubr.bf16.gmra.mxu0 %v7551
        %v7854 = vpop.f32.mrf.mxu0
        %v7855 = vadd.f32 %v7586, %v7854
        %v7856 = vpop.f32.mrf.mxu0
        %v7857 = vpop.f32.mrf.mxu0
        %v7858 = vadd.f32 %v7586, %v7857
        %v7859 = vpop.f32.mrf.mxu0
        %7860 = vmatprep.mubr.bf16.mxu0 %v7706
        %7861 = vmatmul.mubr.bf16.gmra.mxu0 %v7555
        %v7862 = vpop.f32.mrf.mxu0
        %v7863 = vadd.f32 %v7586, %v7862
        %v7864 = vpop.f32.mrf.mxu0
        %v7865 = vpop.f32.mrf.mxu0
        %v7866 = vadd.f32 %v7586, %v7865
        %v7867 = vpop.f32.mrf.mxu0
        %7868 = vdwg.mxu0
        %s7869 = sshra.s32 %s7073, 7
        %s7870 = sand.u32 %s7073, 127
        %s7871 = sadd.s32 %s7869, %s37
        %s7872 = smul.u32 %s7871, 128
        %s7873 = sshra.s32 %s7073, 7
        %s7874 = sand.u32 %s7073, 127
        %s7875 = sadd.s32 %s7872, %s7874
        %s7876 = sld [smem:[#allocation5 + %s7875]]
        %s7877 = ssub.f32 1.0, %s7876
        %v7878 = vunpack.c.l.bf16 %v7140
        %v7879 = vunpack.c.l.bf16 %v7141
        %v7880 = vunpack.c.l.bf16 %v7142
        %v7881 = vunpack.c.l.bf16 %v7143
        %v7882 = vunpack.c.l.bf16 %v7144
        %v7883 = vunpack.c.l.bf16 %v7145
        %v7884 = vunpack.c.l.bf16 %v7146
        %v7885 = vunpack.c.l.bf16 %v7147
        %v7886 = vunpack.c.l.bf16 %v7148
        %v7887 = vunpack.c.l.bf16 %v7149
        %v7888 = vunpack.c.l.bf16 %v7150
        %v7889 = vunpack.c.l.bf16 %v7151
        %v7890 = vunpack.c.l.bf16 %v7152
        %v7891 = vunpack.c.l.bf16 %v7153
        %v7892 = vunpack.c.l.bf16 %v7154
        %v7893 = vunpack.c.l.bf16 %v7155
        %v7894 = vunpack.c.l.bf16 %v7156
        %v7895 = vunpack.c.l.bf16 %v7157
        %v7896 = vunpack.c.l.bf16 %v7158
        %v7897 = vunpack.c.l.bf16 %v7159
        %v7898 = vunpack.c.l.bf16 %v7160
        %v7899 = vunpack.c.l.bf16 %v7161
        %v7900 = vunpack.c.l.bf16 %v7162
        %v7901 = vunpack.c.l.bf16 %v7163
        %v7902 = vunpack.c.l.bf16 %v7164
        %v7903 = vunpack.c.l.bf16 %v7165
        %v7904 = vunpack.c.l.bf16 %v7166
        %v7905 = vunpack.c.l.bf16 %v7167
        %v7906 = vunpack.c.l.bf16 %v7168
        %v7907 = vunpack.c.l.bf16 %v7169
        %v7908 = vunpack.c.l.bf16 %v7170
        %v7909 = vunpack.c.l.bf16 %v7171
        %v7910 = vstv %s7877
        %v7911 = vmul.f32 %v7910, %v7878
        %v7912 = vmul.f32 %v7910, %v7879
        %v7913 = vmul.f32 %v7910, %v7880
        %v7914 = vmul.f32 %v7910, %v7881
        %v7915 = vmul.f32 %v7910, %v7882
        %v7916 = vmul.f32 %v7910, %v7883
        %v7917 = vmul.f32 %v7910, %v7884
        %v7918 = vmul.f32 %v7910, %v7885
        %v7919 = vmul.f32 %v7910, %v7886
        %v7920 = vmul.f32 %v7910, %v7887
        %v7921 = vmul.f32 %v7910, %v7888
        %v7922 = vmul.f32 %v7910, %v7889
        %v7923 = vmul.f32 %v7910, %v7890
        %v7924 = vmul.f32 %v7910, %v7891
        %v7925 = vmul.f32 %v7910, %v7892
        %v7926 = vmul.f32 %v7910, %v7893
        %v7927 = vmul.f32 %v7910, %v7894
        %v7928 = vmul.f32 %v7910, %v7895
        %v7929 = vmul.f32 %v7910, %v7896
        %v7930 = vmul.f32 %v7910, %v7897
        %v7931 = vmul.f32 %v7910, %v7898
        %v7932 = vmul.f32 %v7910, %v7899
        %v7933 = vmul.f32 %v7910, %v7900
        %v7934 = vmul.f32 %v7910, %v7901
        %v7935 = vmul.f32 %v7910, %v7902
        %v7936 = vmul.f32 %v7910, %v7903
        %v7937 = vmul.f32 %v7910, %v7904
        %v7938 = vmul.f32 %v7910, %v7905
        %v7939 = vmul.f32 %v7910, %v7906
        %v7940 = vmul.f32 %v7910, %v7907
        %v7941 = vmul.f32 %v7910, %v7908
        %v7942 = vmul.f32 %v7910, %v7909
        %v7943 = vstv %s7876
        %v7944 = vmul.f32 %v7943, %v7743
        %v7945 = vmul.f32 %v7943, %v7746
        %v7946 = vmul.f32 %v7943, %v7751
        %v7947 = vmul.f32 %v7943, %v7754
        %v7948 = vmul.f32 %v7943, %v7759
        %v7949 = vmul.f32 %v7943, %v7762
        %v7950 = vmul.f32 %v7943, %v7767
        %v7951 = vmul.f32 %v7943, %v7770
        %v7952 = vmul.f32 %v7943, %v7775
        %v7953 = vmul.f32 %v7943, %v7778
        %v7954 = vmul.f32 %v7943, %v7783
        %v7955 = vmul.f32 %v7943, %v7786
        %v7956 = vmul.f32 %v7943, %v7791
        %v7957 = vmul.f32 %v7943, %v7794
        %v7958 = vmul.f32 %v7943, %v7799
        %v7959 = vmul.f32 %v7943, %v7802
        %v7960 = vmul.f32 %v7943, %v7807
        %v7961 = vmul.f32 %v7943, %v7810
        %v7962 = vmul.f32 %v7943, %v7815
        %v7963 = vmul.f32 %v7943, %v7818
        %v7964 = vmul.f32 %v7943, %v7823
        %v7965 = vmul.f32 %v7943, %v7826
        %v7966 = vmul.f32 %v7943, %v7831
        %v7967 = vmul.f32 %v7943, %v7834
        %v7968 = vmul.f32 %v7943, %v7839
        %v7969 = vmul.f32 %v7943, %v7842
        %v7970 = vmul.f32 %v7943, %v7847
        %v7971 = vmul.f32 %v7943, %v7850
        %v7972 = vmul.f32 %v7943, %v7855
        %v7973 = vmul.f32 %v7943, %v7858
        %v7974 = vmul.f32 %v7943, %v7863
        %v7975 = vmul.f32 %v7943, %v7866
        %v7976 = vadd.f32 %v7911, %v7944
        %v7977 = vadd.f32 %v7912, %v7945
        %v7978 = vadd.f32 %v7913, %v7946
        %v7979 = vadd.f32 %v7914, %v7947
        %v7980 = vadd.f32 %v7915, %v7948
        %v7981 = vadd.f32 %v7916, %v7949
        %v7982 = vadd.f32 %v7917, %v7950
        %v7983 = vadd.f32 %v7918, %v7951
        %v7984 = vadd.f32 %v7919, %v7952
        %v7985 = vadd.f32 %v7920, %v7953
        %v7986 = vadd.f32 %v7921, %v7954
        %v7987 = vadd.f32 %v7922, %v7955
        %v7988 = vadd.f32 %v7923, %v7956
        %v7989 = vadd.f32 %v7924, %v7957
        %v7990 = vadd.f32 %v7925, %v7958
        %v7991 = vadd.f32 %v7926, %v7959
        %v7992 = vadd.f32 %v7927, %v7960
        %v7993 = vadd.f32 %v7928, %v7961
        %v7994 = vadd.f32 %v7929, %v7962
        %v7995 = vadd.f32 %v7930, %v7963
        %v7996 = vadd.f32 %v7931, %v7964
        %v7997 = vadd.f32 %v7932, %v7965
        %v7998 = vadd.f32 %v7933, %v7966
        %v7999 = vadd.f32 %v7934, %v7967
        %v8000 = vadd.f32 %v7935, %v7968
        %v8001 = vadd.f32 %v7936, %v7969
        %v8002 = vadd.f32 %v7937, %v7970
        %v8003 = vadd.f32 %v7938, %v7971
        %v8004 = vadd.f32 %v7939, %v7972
        %v8005 = vadd.f32 %v7940, %v7973
        %v8006 = vadd.f32 %v7941, %v7974
        %v8007 = vadd.f32 %v7942, %v7975
        %8008 = vxpose.xlu0.b32.start [1/16] %v7976, 128
        %8009 = vxpose.xlu0.b32.cont [2/16] %v7977, 128
        %8010 = vxpose.xlu0.b32.cont [3/16] %v7978, 128
        %8011 = vxpose.xlu0.b32.cont [4/16] %v7979, 128
        %8012 = vxpose.xlu0.b32.cont [5/16] %v7980, 128
        %8013 = vxpose.xlu0.b32.cont [6/16] %v7981, 128
        %8014 = vxpose.xlu0.b32.cont [7/16] %v7982, 128
        %8015 = vxpose.xlu0.b32.cont [8/16] %v7983, 128
        %8016 = vxpose.xlu0.b32.cont [9/16] %v7984, 128
        %8017 = vxpose.xlu0.b32.cont [10/16] %v7985, 128
        %8018 = vxpose.xlu0.b32.cont [11/16] %v7986, 128
        %8019 = vxpose.xlu0.b32.cont [12/16] %v7987, 128
        %8020 = vxpose.xlu0.b32.cont [13/16] %v7988, 128
        %8021 = vxpose.xlu0.b32.cont [14/16] %v7989, 128
        %8022 = vxpose.xlu0.b32.cont [15/16] %v7990, 128
        %8023 = vxpose.xlu0.b32.end [16/16] %v7991, 128
        %v8024 = vpop.trf.xlu0
        %v8025 = vpop.trf.xlu0
        %v8026 = vpop.trf.xlu0
        %v8027 = vpop.trf.xlu0
        %v8028 = vpop.trf.xlu0
        %v8029 = vpop.trf.xlu0
        %v8030 = vpop.trf.xlu0
        %v8031 = vpop.trf.xlu0
        %v8032 = vpop.trf.xlu0
        %v8033 = vpop.trf.xlu0
        %v8034 = vpop.trf.xlu0
        %v8035 = vpop.trf.xlu0
        %v8036 = vpop.trf.xlu0
        %v8037 = vpop.trf.xlu0
        %v8038 = vpop.trf.xlu0
        %v8039 = vpop.trf.xlu0
        %8040 = vxpose.xlu0.b32.start [1/16] %v7992, 128
        %8041 = vxpose.xlu0.b32.cont [2/16] %v7993, 128
        %8042 = vxpose.xlu0.b32.cont [3/16] %v7994, 128
        %8043 = vxpose.xlu0.b32.cont [4/16] %v7995, 128
        %8044 = vxpose.xlu0.b32.cont [5/16] %v7996, 128
        %8045 = vxpose.xlu0.b32.cont [6/16] %v7997, 128
        %8046 = vxpose.xlu0.b32.cont [7/16] %v7998, 128
        %8047 = vxpose.xlu0.b32.cont [8/16] %v7999, 128
        %8048 = vxpose.xlu0.b32.cont [9/16] %v8000, 128
        %8049 = vxpose.xlu0.b32.cont [10/16] %v8001, 128
        %8050 = vxpose.xlu0.b32.cont [11/16] %v8002, 128
        %8051 = vxpose.xlu0.b32.cont [12/16] %v8003, 128
        %8052 = vxpose.xlu0.b32.cont [13/16] %v8004, 128
        %8053 = vxpose.xlu0.b32.cont [14/16] %v8005, 128
        %8054 = vxpose.xlu0.b32.cont [15/16] %v8006, 128
        %8055 = vxpose.xlu0.b32.end [16/16] %v8007, 128
        %v8056 = vpop.trf.xlu0
        %v8057 = vpop.trf.xlu0
        %v8058 = vpop.trf.xlu0
        %v8059 = vpop.trf.xlu0
        %v8060 = vpop.trf.xlu0
        %v8061 = vpop.trf.xlu0
        %v8062 = vpop.trf.xlu0
        %v8063 = vpop.trf.xlu0
        %v8064 = vpop.trf.xlu0
        %v8065 = vpop.trf.xlu0
        %v8066 = vpop.trf.xlu0
        %v8067 = vpop.trf.xlu0
        %v8068 = vpop.trf.xlu0
        %v8069 = vpop.trf.xlu0
        %v8070 = vpop.trf.xlu0
        %v8071 = vpop.trf.xlu0
        %8072 = vst [vmem:[%s401] sm:$0xff] %v8024
        %8073 = vst [vmem:[%s401 + $0x8] sm:$0xff] %v8056
        %8074 = vst [vmem:[%s401 + $0x10] sm:$0xff] %v8025
        %8075 = vst [vmem:[%s401 + $0x18] sm:$0xff] %v8057
        %8076 = vst [vmem:[%s401 + $0x20] sm:$0xff] %v8026
        %8077 = vst [vmem:[%s401 + $0x28] sm:$0xff] %v8058
        %8078 = vst [vmem:[%s401 + $0x30] sm:$0xff] %v8027
        %8079 = vst [vmem:[%s401 + $0x38] sm:$0xff] %v8059
        %8080 = vst [vmem:[%s401 + $0x40] sm:$0xff] %v8028
        %8081 = vst [vmem:[%s401 + $0x48] sm:$0xff] %v8060
        %8082 = vst [vmem:[%s401 + $0x50] sm:$0xff] %v8029
        %8083 = vst [vmem:[%s401 + $0x58] sm:$0xff] %v8061
        %8084 = vst [vmem:[%s401 + $0x60] sm:$0xff] %v8030
        %8085 = vst [vmem:[%s401 + $0x68] sm:$0xff] %v8062
        %8086 = vst [vmem:[%s401 + $0x70] sm:$0xff] %v8031
        %8087 = vst [vmem:[%s401 + $0x78] sm:$0xff] %v8063
        %s8088 = sand.u32 %s250, 1
        %s8089 = scalar_lea.sflag [#allocation8], %s8088
        %s8090 = sand.u32 %s250, 1
        %s8091 = smul.addr %s8090, 128
        %s8092 = scalar_lea.vmem [#allocation11], %s8091
        // Predicated region
        $region73: #{tpu_custom_call.1} parent=51 // pred_check
          %p8093 = pneg %p260
        $region74: #{tpu_custom_call.1} parent=51 // pred_check_branch
          %8095 = sbr.rel (%p8093) target = $region76
        $region75: #{tpu_custom_call.1} parent=51 // pred_region
          %s8096 = ssub.s32 %s38, 1
          %p8097 = scmp.gt.s32.totalorder %s8096, 0
          %s8098 = scalar_select %p8097, %s8096, 0
          %s8100 = ssub.s32 2048, 2048
          %8101 = vsyncadd %s8089, %s8100
          %s8102 = smul.addr %s8098, 16
          %s8103 = smul.addr %s37, 64
          %s8104 = sadd.s32 %s8102, %s8103
          %s8105 = smul.addr %s8104, 128
          %s8106 = scalar_lea.hbm %s9, %s8105
          %s8107 = sshll.u32 %s8092, 4
          %s8108 = int_to_ptr.vmem [resolvable:$true] %s8107
          %8113 = dma.vmem_to_hbm [thread:$0]  %s8108, 2048, %s8106, %s8089, 256, 256, 16
        $region76: #{tpu_custom_call.1} parent=51 // pred_fallthru
          _
      $region52: #{tpu_custom_call.1} parent=5 // pred_fallthru
        _
      %p8114 = scmp.le.s32.totalorder 2, %s28
      // Predicated region
      $region77: #{tpu_custom_call.1} parent=5 // pred_check
        %p8115 = pneg %p8114
      $region78: #{tpu_custom_call.1} parent=5 // pred_check_branch
        %8117 = sbr.rel (%p8115) target = $region80
      $region79: #{tpu_custom_call.1} parent=5 // pred_region
        %s8118 = ssub.s32 %s28, 2
        // Predicated region
        $region81: #{tpu_custom_call.1} parent=79 // pred_check
          %p8119 = pneg %p266
        $region82: #{tpu_custom_call.1} parent=79 // pred_check_branch
          %8121 = sbr.rel (%p8119) target = $region84
        $region83: #{tpu_custom_call.1} parent=79 // pred_region
          %s8122 = sand.u32 %s251, 1
          %s8123 = scalar_lea.sflag [#allocation8], %s8122
          %s8124 = sand.u32 %s251, 1
          %s8125 = smul.addr %s8124, 128
          %s8126 = scalar_lea.vmem [#allocation11], %s8125
          %8127 = dma.done %s8123, 2048
        $region84: #{tpu_custom_call.1} parent=79 // pred_fallthru
          _
      $region80: #{tpu_custom_call.1} parent=5 // pred_fallthru
        _
    $region6: #{tpu_custom_call.1} parent=1 // loop_footer
      %s32 = sadd.s32 1, %s28
    $region7: #{tpu_custom_call.1} parent=1 // loop_footer_branch
      %27 = sbr.rel target = $region3
    $region8: #{tpu_custom_call.1} parent=1 // loop_exit
      _
    %8128 = vsyncpa [#allocation7], 1
    %s8129 = scalar_lea.sflag [#allocation7], 1
    %8130 = vsyncpa %s8129, 1
    %8131 = vsyncpa [#allocation10], 1
    %8132 = vsyncpa [#allocation8], 1
    %s8133 = scalar_lea.sflag [#allocation8], 1
    %8134 = vsyncpa %s8133, 1

</llo_original>
